<compile_context>
chip_gen: v7x
topology: tpu7x:2x2x1
jax: 0.10.0
libtpu: 0.0.40
codegen_flags: <defaults>
</compile_context>

<pallas_src>
import functools
import math

import jax
import jax.numpy as jnp
from jax.experimental import pallas as pl
from jax.experimental.pallas import tpu as pltpu

_EPS = 1e-5
_SLOPE = 0.01


def _inorm(a):
    mu = jnp.mean(a, axis=0, keepdims=True)
    var = jnp.mean(jnp.square(a - mu), axis=0, keepdims=True)
    return (a - mu) * jax.lax.rsqrt(var + _EPS)


def _lrelu(a):
    return jnp.where(a >= 0, a, _SLOPE * a)


def _sigmoid(a):
    return 1.0 / (1.0 + jnp.exp(-a))


def _im2col(src, w_idx, H, W, C):
    """Zero-padded 3x3 im2col of src (H*W, C) f32 -> (H*W, 9*C) f32.

    Tap order is (dh, dw) row-major, matching the (3,3,C,Cout)->(9*C,Cout)
    weight reshape.  Each tap is a sublane roll of the flat image plus a
    validity mask (out-of-image rows and w-wrap rows are zeroed), so the whole
    3x3 conv collapses to a single MXU matmul afterwards.
    """
    HW = H * W
    p = jax.lax.broadcasted_iota(jnp.int32, (HW, 1), 0)   # flat output row idx
    cols = []
    for oh in (-1, 0, 1):
        for ow in (-1, 0, 1):
            d = oh * W + ow
            if d == 0:
                cols.append(src)
                continue
            shifted = pltpu.roll(src, (-d) % HW, axis=0)   # shifted[p]=src[p+d]
            ok = jnp.logical_and(p + oh * W >= 0, p + oh * W <= HW - 1)
            if ow < 0:
                ok = jnp.logical_and(ok, w_idx >= 1)
            elif ow > 0:
                ok = jnp.logical_and(ok, w_idx <= W - 2)
            cols.append(jnp.where(ok, shifted, 0.0))
    return jnp.concatenate(cols, axis=-1)


# ----------------------------------------------------------------------------
# Fused UnetResSEBlock kernel (kernel_size=3, stride=1), one image per step.
# ----------------------------------------------------------------------------
def _res_se_kernel(*refs, H, W, downsample):
    if downsample:
        (x_ref, widx_ref, w1_ref, w2_ref, sw1_ref, sw2_ref, w3_ref,
         out_ref) = refs
    else:
        (x_ref, widx_ref, w1_ref, w2_ref, sw1_ref, sw2_ref, out_ref) = refs
        w3_ref = None

    cin = x_ref.shape[-1]
    cout = out_ref.shape[-1]
    w_idx = widx_ref[...]                     # (H*W, 1) int32 w-coordinates
    x_f32 = x_ref[0]                          # (H*W, cin) float32

    # conv1: 3x3 same, no bias -> single bf16 MXU matmul (contraction 9*cin).
    col1 = _im2col(x_f32, w_idx, H, W, cin)
    c1 = jnp.dot(col1.astype(jnp.bfloat16), w1_ref[...],
                 preferred_element_type=jnp.float32)
    h1 = _lrelu(_inorm(c1))

    # conv2: 3x3 same, no bias -> single bf16 MXU matmul (contraction 9*cout).
    col2 = _im2col(h1, w_idx, H, W, cout)
    c2 = jnp.dot(col2.astype(jnp.bfloat16), w2_ref[...],
                 preferred_element_type=jnp.float32)
    h2 = _inorm(c2)

    # Squeeze-and-Excitation: GAP -> fc(no bias) -> ReLU -> fc -> sigmoid.
    y = jnp.mean(h2, axis=0, keepdims=True)                     # (1, cout)
    z = jnp.maximum(jnp.dot(y.astype(jnp.bfloat16), sw1_ref[...],
                            preferred_element_type=jnp.float32), 0.0)
    s = _sigmoid(jnp.dot(z.astype(jnp.bfloat16), sw2_ref[...],
                         preferred_element_type=jnp.float32))
    h2 = h2 * s

    # Residual path.
    if downsample:
        r = _inorm(jnp.dot(x_f32.astype(jnp.bfloat16), w3_ref[...],
                           preferred_element_type=jnp.float32))
    else:
        r = x_f32                              # cin == cout: identity residual

    out_ref[0] = _lrelu(h2 + r)


def unet_res_se_block(x2d, w_idx, params, H, W):
    """x2d: (B, H*W, Cin) f32 channels-minor.  Returns (B, H*W, Cout) f32."""
    B, HW, cin = x2d.shape
    cout = params["w1m"].shape[-1]
    cr = params["sw1"].shape[-1]
    downsample = "w3" in params

    inputs = [x2d, w_idx, params["w1m"], params["w2m"],
              params["sw1"], params["sw2"]]
    in_specs = [
        pl.BlockSpec((1, HW, cin), lambda b: (b, 0, 0)),
        pl.BlockSpec((HW, 1), lambda b: (0, 0)),
        pl.BlockSpec((9 * cin, cout), lambda b: (0, 0)),
        pl.BlockSpec((9 * cout, cout), lambda b: (0, 0)),
        pl.BlockSpec((cout, cr), lambda b: (0, 0)),
        pl.BlockSpec((cr, cout), lambda b: (0, 0)),
    ]
    if downsample:
        inputs.append(params["w3"])
        in_specs.append(pl.BlockSpec((cin, cout), lambda b: (0, 0)))

    # Grid is (B,): InstanceNorm and SE need the full H*W reduction per image.
    kernel = functools.partial(_res_se_kernel, H=H, W=W, downsample=downsample)
    return pl.pallas_call(
        kernel,
        out_shape=jax.ShapeDtypeStruct((B, HW, cout), jnp.float32),
        grid=(B,),
        in_specs=in_specs,
        out_specs=pl.BlockSpec((1, HW, cout), lambda b: (b, 0, 0)),
        compiler_params=pltpu.CompilerParams(
            dimension_semantics=("parallel",)),
    )(*inputs)


# ----------------------------------------------------------------------------
# Transposed conv with kernel_size == stride == K, pixel shuffle fused.
# ----------------------------------------------------------------------------
def _upsample_kernel(x_ref, wt_ref, out_ref, *, K):
    _, th, W, cin = x_ref.shape
    kc = wt_ref.shape[1] // K                 # = K * cout
    x = x_ref[0].reshape(th * W, cin).astype(jnp.bfloat16)
    # (th*W, cin) @ (cin, K*K*cout): full-width MXU matmul (N=128 for K=2,C=32)
    y = jnp.dot(x, wt_ref[...], preferred_element_type=jnp.float32)
    # Fused pixel shuffle: input row r scatters to output rows r*K + dh; the
    # (dw, co) interleave is already encoded in the packed weight columns.
    for r in range(th):
        rows = y[r * W:(r + 1) * W, :]
        for dh in range(K):
            out_ref[0, r * K + dh, :, :] = rows[:, dh * kc:(dh + 1) * kc]


def conv_transpose_upsample(x2d, wt_packed, B, H, W, K):
    """ConvTranspose2d(kernel=stride=K, padding=0, no bias) + pixel shuffle.

    x2d: (B, H*W, Cin) f32.  wt_packed: (Cin, K*K*Cout) bf16, columns ordered
    (dh, dw, co).  Returns (B, (H*K)*(W*K), Cout) f32.
    """
    cin = x2d.shape[-1]
    cout = wt_packed.shape[1] // (K * K)
    x4 = x2d.reshape(B, H, W, cin)
    th = math.gcd(H, 8)                       # row tile -> more grid steps
    out = pl.pallas_call(
        functools.partial(_upsample_kernel, K=K),
        out_shape=jax.ShapeDtypeStruct((B, H * K, W, K * cout), jnp.float32),
        grid=(B, H // th),
        in_specs=[pl.BlockSpec((1, th, W, cin), lambda b, t: (b, t, 0, 0)),
                  pl.BlockSpec((cin, K * K * cout), lambda b, t: (0, 0))],
        out_specs=pl.BlockSpec((1, th * K, W, K * cout),
                               lambda b, t: (b, t, 0, 0)),
        compiler_params=pltpu.CompilerParams(
            dimension_semantics=("parallel", "parallel")),
    )(x4, wt_packed)
    # (B, H*K, W, K*cout) is memory-identical to NHWC (B, H*K, W*K, cout):
    # this reshape is a free view, no transpose / extra HBM pass.
    return out.reshape(B, H * K * W * K, cout)


# ----------------------------------------------------------------------------
# PreUpBlock forward + deterministic parameter init.
# ----------------------------------------------------------------------------
def pre_up_block(x_nchw, params, K):
    """PreUpBlock forward.  x_nchw: (B, Cin, H, W) -> (B, Cout, H', W')."""
    B, _, H, W = x_nchw.shape
    x = jnp.transpose(x_nchw, (0, 2, 3, 1)).astype(jnp.float32)  # NCHW -> NHWC
    x = x.reshape(B, H * W, -1)

    def wpos(h, w):  # per-row w coordinate, used for conv border masks
        return (jnp.arange(h * w, dtype=jnp.int32) % w)[:, None]

    x = unet_res_se_block(x, wpos(H, W), params["block_init"], H, W)
    for lp in params["layers"]:
        x = conv_transpose_upsample(x, lp["wt_packed"], B, H, W, K)
        H, W = H * K, W * K
        x = unet_res_se_block(x, wpos(H, W), lp["res"], H, W)

    cout = x.shape[-1]
    x = x.reshape(B, H, W, cout)
    return jnp.transpose(x, (0, 3, 1, 2))                        # NHWC -> NCHW


def init_res_se_params(key, cin, cout, reduction=16):
    cr = max(cout // reduction, 1)
    ks = jax.random.split(key, 5)
    # Conv weights in (kh, kw, cin, cout) layout (= PyTorch Conv2d weight
    # (cout, cin, kh, kw) transposed (2, 3, 1, 0)), reshaped to (9*cin, cout)
    # to match the kernel's im2col column order; stored bf16.
    w1 = 0.1 * jax.random.normal(ks[0], (3, 3, cin, cout), jnp.float32)
    w2 = 0.1 * jax.random.normal(ks[1], (3, 3, cout, cout), jnp.float32)
    p = {
        "w1m": w1.reshape(9 * cin, cout).astype(jnp.bfloat16),
        "w2m": w2.reshape(9 * cout, cout).astype(jnp.bfloat16),
        # SE fc weights in (in, out) layout, bias-free (matches the spec).
        "sw1": (0.1 * jax.random.normal(ks[2], (cout, cr),
                                        jnp.float32)).astype(jnp.bfloat16),
        "sw2": (0.1 * jax.random.normal(ks[3], (cr, cout),
                                        jnp.float32)).astype(jnp.bfloat16),
    }
    if cin != cout:   # downsample residual: 1x1 conv + InstanceNorm
        p["w3"] = (0.1 * jax.random.normal(ks[4], (cin, cout),
                                           jnp.float32)).astype(jnp.bfloat16)
    return p


def init_pre_up_block_params(key, cin, cout, K, num_layer):
    k0, key = jax.random.split(key)
    params = {"block_init": init_res_se_params(k0, cin, cout), "layers": []}
    for _ in range(num_layer):
        kt, kr, key = jax.random.split(key, 3)
        # PyTorch ConvTranspose2d weight (cin, cout, K, K) -> (cin, K*K*cout),
        # columns ordered (dh, dw, co); stored bf16.
        wt = 0.1 * jax.random.normal(kt, (cout, cout, K, K), jnp.float32)
        wt_packed = jnp.transpose(wt, (0, 2, 3, 1)).reshape(
            cout, K * K * cout).astype(jnp.bfloat16)
        params["layers"].append({
            "wt_packed": wt_packed,
            "res": init_res_se_params(kr, cout, cout),
        })
    return params


if __name__ == "__main__":
    key = jax.random.PRNGKey(0)
    B, Cin, H, W = 2, 16, 8, 8          # NCHW input, like the PyTorch module
    Cout, K, num_layer = 32, 2, 1       # upsample_kernel_size = 2

    kx, kp = jax.random.split(key)
    x = jax.random.normal(kx, (B, Cin, H, W), jnp.float32)
    params = init_pre_up_block_params(kp, Cin, Cout, K, num_layer)

    fwd = jax.jit(functools.partial(pre_up_block, K=K))
    out = jax.block_until_ready(fwd(x, params))

    expected = (B, Cout, H * (K ** num_layer), W * (K ** num_layer))
    assert out.shape == expected, (out.shape, expected)
    assert bool(jnp.all(jnp.isfinite(out)))
    print("KERNEL_OK")
</pallas_src>

<mosaic_0001>
module attributes {stable_mosaic.version = 11 : i64} {
  func.func @_upsample_kernel(%arg0: i32, %arg1: i32, %arg2: memref<1x8x8x32xf32, #tpu.memory_space<vmem>>, %arg3: memref<32x128xbf16, #tpu.memory_space<vmem>>, %arg4: memref<1x16x8x64xf32, #tpu.memory_space<vmem>>) attributes {dimension_semantics = [#tpu.dimension_semantics<parallel>, #tpu.dimension_semantics<parallel>], iteration_bounds = array<i64: 2, 1>, scalar_prefetch = 0 : i64, scratch_operands = 0 : i64, tpu.core_type = #tpu.core_type<tc>, window_params = [{transform_indices = @transform_0, window_bounds = array<i64: 1, 8, 8, 32>}, {pipeline_mode = #tpu.pipeline_mode<synchronous>, transform_indices = @transform_1, window_bounds = array<i64: 32, 128>}, {transform_indices = @transform_2, window_bounds = array<i64: 1, 16, 8, 64>}]} {
    %c0 = arith.constant 0 : index
    %c0_0 = arith.constant 0 : index
    %c0_1 = arith.constant 0 : index
    %c0_2 = arith.constant 0 : index
    %0 = vector.load %arg2[%c0, %c0_0, %c0_1, %c0_2] : memref<1x8x8x32xf32, #tpu.memory_space<vmem>>, vector<1x8x8x32xf32>
    %1 = vector.shape_cast %0 : vector<1x8x8x32xf32> to vector<8x8x32xf32>
    %2 = vector.shape_cast %1 : vector<8x8x32xf32> to vector<64x32xf32>
    %3 = arith.truncf %2 : vector<64x32xf32> to vector<64x32xbf16>
    %c0_3 = arith.constant 0 : index
    %c0_4 = arith.constant 0 : index
    %4 = vector.load %arg3[%c0_3, %c0_4] : memref<32x128xbf16, #tpu.memory_space<vmem>>, vector<32x128xbf16>
    %cst = arith.constant dense<0.000000e+00> : vector<64x128xf32>
    %5 = tpu.matmul %3, %4, %cst {dimension_numbers = #tpu.dot_dimension_numbers<[1], [0], [0], [1], [0, 0, 1, 1], [], []>} : vector<64x32xbf16>, vector<32x128xbf16>, vector<64x128xf32> -> vector<64x128xf32>
    %6 = vector.extract_strided_slice %5 {offsets = [0, 0], sizes = [8, 128], strides = [1, 1]} : vector<64x128xf32> to vector<8x128xf32>
    %7 = vector.extract_strided_slice %6 {offsets = [0, 0], sizes = [8, 64], strides = [1, 1]} : vector<8x128xf32> to vector<8x64xf32>
    %c0_5 = arith.constant 0 : index
    %c0_6 = arith.constant 0 : index
    %c0_7 = arith.constant 0 : index
    %c0_8 = arith.constant 0 : index
    %8 = vector.load %arg4[%c0_5, %c0_6, %c0_7, %c0_8] : memref<1x16x8x64xf32, #tpu.memory_space<vmem>>, vector<1x1x8x64xf32>
    %9 = vector.shape_cast %8 : vector<1x1x8x64xf32> to vector<8x64xf32>
    %10 = vector.shape_cast %7 : vector<8x64xf32> to vector<1x1x8x64xf32>
    tpu.vector_store %arg4[%c0_5, %c0_6, %c0_7, %c0_8], %10 {strides = array<i32>} : memref<1x16x8x64xf32, #tpu.memory_space<vmem>>, vector<1x1x8x64xf32>,
    %11 = vector.extract_strided_slice %6 {offsets = [0, 64], sizes = [8, 64], strides = [1, 1]} : vector<8x128xf32> to vector<8x64xf32>
    %c0_9 = arith.constant 0 : index
    %c1 = arith.constant 1 : index
    %c0_10 = arith.constant 0 : index
    %c0_11 = arith.constant 0 : index
    %12 = vector.load %arg4[%c0_9, %c1, %c0_10, %c0_11] : memref<1x16x8x64xf32, #tpu.memory_space<vmem>>, vector<1x1x8x64xf32>
    %13 = vector.shape_cast %12 : vector<1x1x8x64xf32> to vector<8x64xf32>
    %14 = vector.shape_cast %11 : vector<8x64xf32> to vector<1x1x8x64xf32>
    tpu.vector_store %arg4[%c0_9, %c1, %c0_10, %c0_11], %14 {strides = array<i32>} : memref<1x16x8x64xf32, #tpu.memory_space<vmem>>, vector<1x1x8x64xf32>,
    %15 = vector.extract_strided_slice %5 {offsets = [8, 0], sizes = [8, 128], strides = [1, 1]} : vector<64x128xf32> to vector<8x128xf32>
    %16 = vector.extract_strided_slice %15 {offsets = [0, 0], sizes = [8, 64], strides = [1, 1]} : vector<8x128xf32> to vector<8x64xf32>
    %c0_12 = arith.constant 0 : index
    %c2 = arith.constant 2 : index
    %c0_13 = arith.constant 0 : index
    %c0_14 = arith.constant 0 : index
    %17 = vector.load %arg4[%c0_12, %c2, %c0_13, %c0_14] : memref<1x16x8x64xf32, #tpu.memory_space<vmem>>, vector<1x1x8x64xf32>
    %18 = vector.shape_cast %17 : vector<1x1x8x64xf32> to vector<8x64xf32>
    %19 = vector.shape_cast %16 : vector<8x64xf32> to vector<1x1x8x64xf32>
    tpu.vector_store %arg4[%c0_12, %c2, %c0_13, %c0_14], %19 {strides = array<i32>} : memref<1x16x8x64xf32, #tpu.memory_space<vmem>>, vector<1x1x8x64xf32>,
    %20 = vector.extract_strided_slice %15 {offsets = [0, 64], sizes = [8, 64], strides = [1, 1]} : vector<8x128xf32> to vector<8x64xf32>
    %c0_15 = arith.constant 0 : index
    %c3 = arith.constant 3 : index
    %c0_16 = arith.constant 0 : index
    %c0_17 = arith.constant 0 : index
    %21 = vector.load %arg4[%c0_15, %c3, %c0_16, %c0_17] : memref<1x16x8x64xf32, #tpu.memory_space<vmem>>, vector<1x1x8x64xf32>
    %22 = vector.shape_cast %21 : vector<1x1x8x64xf32> to vector<8x64xf32>
    %23 = vector.shape_cast %20 : vector<8x64xf32> to vector<1x1x8x64xf32>
    tpu.vector_store %arg4[%c0_15, %c3, %c0_16, %c0_17], %23 {strides = array<i32>} : memref<1x16x8x64xf32, #tpu.memory_space<vmem>>, vector<1x1x8x64xf32>,
    %24 = vector.extract_strided_slice %5 {offsets = [16, 0], sizes = [8, 128], strides = [1, 1]} : vector<64x128xf32> to vector<8x128xf32>
    %25 = vector.extract_strided_slice %24 {offsets = [0, 0], sizes = [8, 64], strides = [1, 1]} : vector<8x128xf32> to vector<8x64xf32>
    %c0_18 = arith.constant 0 : index
    %c4 = arith.constant 4 : index
    %c0_19 = arith.constant 0 : index
    %c0_20 = arith.constant 0 : index
    %26 = vector.load %arg4[%c0_18, %c4, %c0_19, %c0_20] : memref<1x16x8x64xf32, #tpu.memory_space<vmem>>, vector<1x1x8x64xf32>
    %27 = vector.shape_cast %26 : vector<1x1x8x64xf32> to vector<8x64xf32>
    %28 = vector.shape_cast %25 : vector<8x64xf32> to vector<1x1x8x64xf32>
    tpu.vector_store %arg4[%c0_18, %c4, %c0_19, %c0_20], %28 {strides = array<i32>} : memref<1x16x8x64xf32, #tpu.memory_space<vmem>>, vector<1x1x8x64xf32>,
    %29 = vector.extract_strided_slice %24 {offsets = [0, 64], sizes = [8, 64], strides = [1, 1]} : vector<8x128xf32> to vector<8x64xf32>
    %c0_21 = arith.constant 0 : index
    %c5 = arith.constant 5 : index
    %c0_22 = arith.constant 0 : index
    %c0_23 = arith.constant 0 : index
    %30 = vector.load %arg4[%c0_21, %c5, %c0_22, %c0_23] : memref<1x16x8x64xf32, #tpu.memory_space<vmem>>, vector<1x1x8x64xf32>
    %31 = vector.shape_cast %30 : vector<1x1x8x64xf32> to vector<8x64xf32>
    %32 = vector.shape_cast %29 : vector<8x64xf32> to vector<1x1x8x64xf32>
    tpu.vector_store %arg4[%c0_21, %c5, %c0_22, %c0_23], %32 {strides = array<i32>} : memref<1x16x8x64xf32, #tpu.memory_space<vmem>>, vector<1x1x8x64xf32>,
    %33 = vector.extract_strided_slice %5 {offsets = [24, 0], sizes = [8, 128], strides = [1, 1]} : vector<64x128xf32> to vector<8x128xf32>
    %34 = vector.extract_strided_slice %33 {offsets = [0, 0], sizes = [8, 64], strides = [1, 1]} : vector<8x128xf32> to vector<8x64xf32>
    %c0_24 = arith.constant 0 : index
    %c6 = arith.constant 6 : index
    %c0_25 = arith.constant 0 : index
    %c0_26 = arith.constant 0 : index
    %35 = vector.load %arg4[%c0_24, %c6, %c0_25, %c0_26] : memref<1x16x8x64xf32, #tpu.memory_space<vmem>>, vector<1x1x8x64xf32>
    %36 = vector.shape_cast %35 : vector<1x1x8x64xf32> to vector<8x64xf32>
    %37 = vector.shape_cast %34 : vector<8x64xf32> to vector<1x1x8x64xf32>
    tpu.vector_store %arg4[%c0_24, %c6, %c0_25, %c0_26], %37 {strides = array<i32>} : memref<1x16x8x64xf32, #tpu.memory_space<vmem>>, vector<1x1x8x64xf32>,
    %38 = vector.extract_strided_slice %33 {offsets = [0, 64], sizes = [8, 64], strides = [1, 1]} : vector<8x128xf32> to vector<8x64xf32>
    %c0_27 = arith.constant 0 : index
    %c7 = arith.constant 7 : index
    %c0_28 = arith.constant 0 : index
    %c0_29 = arith.constant 0 : index
    %39 = vector.load %arg4[%c0_27, %c7, %c0_28, %c0_29] : memref<1x16x8x64xf32, #tpu.memory_space<vmem>>, vector<1x1x8x64xf32>
    %40 = vector.shape_cast %39 : vector<1x1x8x64xf32> to vector<8x64xf32>
    %41 = vector.shape_cast %38 : vector<8x64xf32> to vector<1x1x8x64xf32>
    tpu.vector_store %arg4[%c0_27, %c7, %c0_28, %c0_29], %41 {strides = array<i32>} : memref<1x16x8x64xf32, #tpu.memory_space<vmem>>, vector<1x1x8x64xf32>,
    %42 = vector.extract_strided_slice %5 {offsets = [32, 0], sizes = [8, 128], strides = [1, 1]} : vector<64x128xf32> to vector<8x128xf32>
    %43 = vector.extract_strided_slice %42 {offsets = [0, 0], sizes = [8, 64], strides = [1, 1]} : vector<8x128xf32> to vector<8x64xf32>
    %c0_30 = arith.constant 0 : index
    %c8 = arith.constant 8 : index
    %c0_31 = arith.constant 0 : index
    %c0_32 = arith.constant 0 : index
    %44 = vector.load %arg4[%c0_30, %c8, %c0_31, %c0_32] : memref<1x16x8x64xf32, #tpu.memory_space<vmem>>, vector<1x1x8x64xf32>
    %45 = vector.shape_cast %44 : vector<1x1x8x64xf32> to vector<8x64xf32>
    %46 = vector.shape_cast %43 : vector<8x64xf32> to vector<1x1x8x64xf32>
    tpu.vector_store %arg4[%c0_30, %c8, %c0_31, %c0_32], %46 {strides = array<i32>} : memref<1x16x8x64xf32, #tpu.memory_space<vmem>>, vector<1x1x8x64xf32>,
    %47 = vector.extract_strided_slice %42 {offsets = [0, 64], sizes = [8, 64], strides = [1, 1]} : vector<8x128xf32> to vector<8x64xf32>
    %c0_33 = arith.constant 0 : index
    %c9 = arith.constant 9 : index
    %c0_34 = arith.constant 0 : index
    %c0_35 = arith.constant 0 : index
    %48 = vector.load %arg4[%c0_33, %c9, %c0_34, %c0_35] : memref<1x16x8x64xf32, #tpu.memory_space<vmem>>, vector<1x1x8x64xf32>
    %49 = vector.shape_cast %48 : vector<1x1x8x64xf32> to vector<8x64xf32>
    %50 = vector.shape_cast %47 : vector<8x64xf32> to vector<1x1x8x64xf32>
    tpu.vector_store %arg4[%c0_33, %c9, %c0_34, %c0_35], %50 {strides = array<i32>} : memref<1x16x8x64xf32, #tpu.memory_space<vmem>>, vector<1x1x8x64xf32>,
    %51 = vector.extract_strided_slice %5 {offsets = [40, 0], sizes = [8, 128], strides = [1, 1]} : vector<64x128xf32> to vector<8x128xf32>
    %52 = vector.extract_strided_slice %51 {offsets = [0, 0], sizes = [8, 64], strides = [1, 1]} : vector<8x128xf32> to vector<8x64xf32>
    %c0_36 = arith.constant 0 : index
    %c10 = arith.constant 10 : index
    %c0_37 = arith.constant 0 : index
    %c0_38 = arith.constant 0 : index
    %53 = vector.load %arg4[%c0_36, %c10, %c0_37, %c0_38] : memref<1x16x8x64xf32, #tpu.memory_space<vmem>>, vector<1x1x8x64xf32>
    %54 = vector.shape_cast %53 : vector<1x1x8x64xf32> to vector<8x64xf32>
    %55 = vector.shape_cast %52 : vector<8x64xf32> to vector<1x1x8x64xf32>
    tpu.vector_store %arg4[%c0_36, %c10, %c0_37, %c0_38], %55 {strides = array<i32>} : memref<1x16x8x64xf32, #tpu.memory_space<vmem>>, vector<1x1x8x64xf32>,
    %56 = vector.extract_strided_slice %51 {offsets = [0, 64], sizes = [8, 64], strides = [1, 1]} : vector<8x128xf32> to vector<8x64xf32>
    %c0_39 = arith.constant 0 : index
    %c11 = arith.constant 11 : index
    %c0_40 = arith.constant 0 : index
    %c0_41 = arith.constant 0 : index
    %57 = vector.load %arg4[%c0_39, %c11, %c0_40, %c0_41] : memref<1x16x8x64xf32, #tpu.memory_space<vmem>>, vector<1x1x8x64xf32>
    %58 = vector.shape_cast %57 : vector<1x1x8x64xf32> to vector<8x64xf32>
    %59 = vector.shape_cast %56 : vector<8x64xf32> to vector<1x1x8x64xf32>
    tpu.vector_store %arg4[%c0_39, %c11, %c0_40, %c0_41], %59 {strides = array<i32>} : memref<1x16x8x64xf32, #tpu.memory_space<vmem>>, vector<1x1x8x64xf32>,
    %60 = vector.extract_strided_slice %5 {offsets = [48, 0], sizes = [8, 128], strides = [1, 1]} : vector<64x128xf32> to vector<8x128xf32>
    %61 = vector.extract_strided_slice %60 {offsets = [0, 0], sizes = [8, 64], strides = [1, 1]} : vector<8x128xf32> to vector<8x64xf32>
    %c0_42 = arith.constant 0 : index
    %c12 = arith.constant 12 : index
    %c0_43 = arith.constant 0 : index
    %c0_44 = arith.constant 0 : index
    %62 = vector.load %arg4[%c0_42, %c12, %c0_43, %c0_44] : memref<1x16x8x64xf32, #tpu.memory_space<vmem>>, vector<1x1x8x64xf32>
    %63 = vector.shape_cast %62 : vector<1x1x8x64xf32> to vector<8x64xf32>
    %64 = vector.shape_cast %61 : vector<8x64xf32> to vector<1x1x8x64xf32>
    tpu.vector_store %arg4[%c0_42, %c12, %c0_43, %c0_44], %64 {strides = array<i32>} : memref<1x16x8x64xf32, #tpu.memory_space<vmem>>, vector<1x1x8x64xf32>,
    %65 = vector.extract_strided_slice %60 {offsets = [0, 64], sizes = [8, 64], strides = [1, 1]} : vector<8x128xf32> to vector<8x64xf32>
    %c0_45 = arith.constant 0 : index
    %c13 = arith.constant 13 : index
    %c0_46 = arith.constant 0 : index
    %c0_47 = arith.constant 0 : index
    %66 = vector.load %arg4[%c0_45, %c13, %c0_46, %c0_47] : memref<1x16x8x64xf32, #tpu.memory_space<vmem>>, vector<1x1x8x64xf32>
    %67 = vector.shape_cast %66 : vector<1x1x8x64xf32> to vector<8x64xf32>
    %68 = vector.shape_cast %65 : vector<8x64xf32> to vector<1x1x8x64xf32>
    tpu.vector_store %arg4[%c0_45, %c13, %c0_46, %c0_47], %68 {strides = array<i32>} : memref<1x16x8x64xf32, #tpu.memory_space<vmem>>, vector<1x1x8x64xf32>,
    %69 = vector.extract_strided_slice %5 {offsets = [56, 0], sizes = [8, 128], strides = [1, 1]} : vector<64x128xf32> to vector<8x128xf32>
    %70 = vector.extract_strided_slice %69 {offsets = [0, 0], sizes = [8, 64], strides = [1, 1]} : vector<8x128xf32> to vector<8x64xf32>
    %c0_48 = arith.constant 0 : index
    %c14 = arith.constant 14 : index
    %c0_49 = arith.constant 0 : index
    %c0_50 = arith.constant 0 : index
    %71 = vector.load %arg4[%c0_48, %c14, %c0_49, %c0_50] : memref<1x16x8x64xf32, #tpu.memory_space<vmem>>, vector<1x1x8x64xf32>
    %72 = vector.shape_cast %71 : vector<1x1x8x64xf32> to vector<8x64xf32>
    %73 = vector.shape_cast %70 : vector<8x64xf32> to vector<1x1x8x64xf32>
    tpu.vector_store %arg4[%c0_48, %c14, %c0_49, %c0_50], %73 {strides = array<i32>} : memref<1x16x8x64xf32, #tpu.memory_space<vmem>>, vector<1x1x8x64xf32>,
    %74 = vector.extract_strided_slice %69 {offsets = [0, 64], sizes = [8, 64], strides = [1, 1]} : vector<8x128xf32> to vector<8x64xf32>
    %c0_51 = arith.constant 0 : index
    %c15 = arith.constant 15 : index
    %c0_52 = arith.constant 0 : index
    %c0_53 = arith.constant 0 : index
    %75 = vector.load %arg4[%c0_51, %c15, %c0_52, %c0_53] : memref<1x16x8x64xf32, #tpu.memory_space<vmem>>, vector<1x1x8x64xf32>
    %76 = vector.shape_cast %75 : vector<1x1x8x64xf32> to vector<8x64xf32>
    %77 = vector.shape_cast %74 : vector<8x64xf32> to vector<1x1x8x64xf32>
    tpu.vector_store %arg4[%c0_51, %c15, %c0_52, %c0_53], %77 {strides = array<i32>} : memref<1x16x8x64xf32, #tpu.memory_space<vmem>>, vector<1x1x8x64xf32>,
    return
  }
  func.func @transform_0(%arg0: i32, %arg1: i32) -> (i32, i32, i32, i32) {
    %c0_i32 = arith.constant 0 : i32
    %c0_i32_0 = arith.constant 0 : i32
    %c0_i32_1 = arith.constant 0 : i32
    return %arg0, %arg1, %c0_i32, %c0_i32_0 : i32, i32, i32, i32
  }
  func.func @transform_1(%arg0: i32, %arg1: i32) -> (i32, i32) {
    %c0_i32 = arith.constant 0 : i32
    %c0_i32_0 = arith.constant 0 : i32
    %c0_i32_1 = arith.constant 0 : i32
    return %c0_i32, %c0_i32_0 : i32, i32
  }
  func.func @transform_2(%arg0: i32, %arg1: i32) -> (i32, i32, i32, i32) {
    %c0_i32 = arith.constant 0 : i32
    %c0_i32_0 = arith.constant 0 : i32
    %c0_i32_1 = arith.constant 0 : i32
    return %arg0, %arg1, %c0_i32, %c0_i32_0 : i32, i32, i32, i32
  }
}

module attributes {stable_mosaic.version = 11 : i64} {
  func.func @_res_se_kernel(%arg0: i32, %arg1: memref<1x64x16xf32, #tpu.memory_space<vmem>>, %arg2: memref<64x1xi32, #tpu.memory_space<vmem>>, %arg3: memref<144x32xbf16, #tpu.memory_space<vmem>>, %arg4: memref<288x32xbf16, #tpu.memory_space<vmem>>, %arg5: memref<32x2xbf16, #tpu.memory_space<vmem>>, %arg6: memref<2x32xbf16, #tpu.memory_space<vmem>>, %arg7: memref<16x32xbf16, #tpu.memory_space<vmem>>, %arg8: memref<1x64x32xf32, #tpu.memory_space<vmem>>) attributes {dimension_semantics = [#tpu.dimension_semantics<parallel>], iteration_bounds = array<i64: 2>, scalar_prefetch = 0 : i64, scratch_operands = 0 : i64, tpu.core_type = #tpu.core_type<tc>, window_params = [{transform_indices = @transform_0, window_bounds = array<i64: 1, 64, 16>}, {pipeline_mode = #tpu.pipeline_mode<synchronous>, transform_indices = @transform_1, window_bounds = array<i64: 64, 1>}, {pipeline_mode = #tpu.pipeline_mode<synchronous>, transform_indices = @transform_2, window_bounds = array<i64: 144, 32>}, {pipeline_mode = #tpu.pipeline_mode<synchronous>, transform_indices = @transform_3, window_bounds = array<i64: 288, 32>}, {pipeline_mode = #tpu.pipeline_mode<synchronous>, transform_indices = @transform_4, window_bounds = array<i64: 32, 2>}, {pipeline_mode = #tpu.pipeline_mode<synchronous>, transform_indices = @transform_5, window_bounds = array<i64: 2, 32>}, {pipeline_mode = #tpu.pipeline_mode<synchronous>, transform_indices = @transform_6, window_bounds = array<i64: 16, 32>}, {transform_indices = @transform_7, window_bounds = array<i64: 1, 64, 32>}]} {
    %c0 = arith.constant 0 : index
    %c0_0 = arith.constant 0 : index
    %0 = vector.load %arg2[%c0, %c0_0] : memref<64x1xi32, #tpu.memory_space<vmem>>, vector<64x1xi32>
    %c0_1 = arith.constant 0 : index
    %c0_2 = arith.constant 0 : index
    %c0_3 = arith.constant 0 : index
    %1 = vector.load %arg1[%c0_1, %c0_2, %c0_3] : memref<1x64x16xf32, #tpu.memory_space<vmem>>, vector<1x64x16xf32>
    %2 = vector.shape_cast %1 : vector<1x64x16xf32> to vector<64x16xf32>
    %3 = tpu.iota {dimensions = array<i32: 0>} : vector<64x1xi32>
    %c9_i32 = arith.constant 9 : i32
    %4 = tpu.dynamic_rotate %2 by %c9_i32 dim 0 : vector<64x16xf32>, i32 -> vector<64x16xf32>
    %c-8_i32 = arith.constant -8 : i32
    %5 = vector.broadcast %c-8_i32 : i32 to vector<64x1xi32>
    %6 = arith.addi %3, %5 : vector<64x1xi32>
    %c0_i32 = arith.constant 0 : i32
    %7 = vector.broadcast %c0_i32 : i32 to vector<64x1xi32>
    %8 = arith.cmpi sge, %6, %7 : vector<64x1xi32>
    %c-8_i32_4 = arith.constant -8 : i32
    %9 = vector.broadcast %c-8_i32_4 : i32 to vector<64x1xi32>
    %10 = arith.addi %3, %9 : vector<64x1xi32>
    %c63_i32 = arith.constant 63 : i32
    %11 = vector.broadcast %c63_i32 : i32 to vector<64x1xi32>
    %12 = arith.cmpi sle, %10, %11 : vector<64x1xi32>
    %13 = arith.andi %8, %12 : vector<64x1xi1>
    %c1_i32 = arith.constant 1 : i32
    %14 = vector.broadcast %c1_i32 : i32 to vector<64x1xi32>
    %15 = arith.cmpi sge, %0, %14 : vector<64x1xi32>
    %16 = arith.andi %13, %15 : vector<64x1xi1>
    %cst = arith.constant 0.000000e+00 : f32
    %17 = vector.shape_cast %16 : vector<64x1xi1> to vector<64x1xi1>
    %18 = vector.broadcast %17 : vector<64x1xi1> to vector<64x16xi1>
    %19 = vector.broadcast %cst : f32 to vector<64x16xf32>
    %20 = arith.select %18, %4, %19 : vector<64x16xi1>, vector<64x16xf32>
    %c8_i32 = arith.constant 8 : i32
    %21 = tpu.dynamic_rotate %2 by %c8_i32 dim 0 : vector<64x16xf32>, i32 -> vector<64x16xf32>
    %c-8_i32_5 = arith.constant -8 : i32
    %22 = vector.broadcast %c-8_i32_5 : i32 to vector<64x1xi32>
    %23 = arith.addi %3, %22 : vector<64x1xi32>
    %c0_i32_6 = arith.constant 0 : i32
    %24 = vector.broadcast %c0_i32_6 : i32 to vector<64x1xi32>
    %25 = arith.cmpi sge, %23, %24 : vector<64x1xi32>
    %c-8_i32_7 = arith.constant -8 : i32
    %26 = vector.broadcast %c-8_i32_7 : i32 to vector<64x1xi32>
    %27 = arith.addi %3, %26 : vector<64x1xi32>
    %c63_i32_8 = arith.constant 63 : i32
    %28 = vector.broadcast %c63_i32_8 : i32 to vector<64x1xi32>
    %29 = arith.cmpi sle, %27, %28 : vector<64x1xi32>
    %30 = arith.andi %25, %29 : vector<64x1xi1>
    %cst_9 = arith.constant 0.000000e+00 : f32
    %31 = vector.shape_cast %30 : vector<64x1xi1> to vector<64x1xi1>
    %32 = vector.broadcast %31 : vector<64x1xi1> to vector<64x16xi1>
    %33 = vector.broadcast %cst_9 : f32 to vector<64x16xf32>
    %34 = arith.select %32, %21, %33 : vector<64x16xi1>, vector<64x16xf32>
    %c7_i32 = arith.constant 7 : i32
    %35 = tpu.dynamic_rotate %2 by %c7_i32 dim 0 : vector<64x16xf32>, i32 -> vector<64x16xf32>
    %c-8_i32_10 = arith.constant -8 : i32
    %36 = vector.broadcast %c-8_i32_10 : i32 to vector<64x1xi32>
    %37 = arith.addi %3, %36 : vector<64x1xi32>
    %c0_i32_11 = arith.constant 0 : i32
    %38 = vector.broadcast %c0_i32_11 : i32 to vector<64x1xi32>
    %39 = arith.cmpi sge, %37, %38 : vector<64x1xi32>
    %c-8_i32_12 = arith.constant -8 : i32
    %40 = vector.broadcast %c-8_i32_12 : i32 to vector<64x1xi32>
    %41 = arith.addi %3, %40 : vector<64x1xi32>
    %c63_i32_13 = arith.constant 63 : i32
    %42 = vector.broadcast %c63_i32_13 : i32 to vector<64x1xi32>
    %43 = arith.cmpi sle, %41, %42 : vector<64x1xi32>
    %44 = arith.andi %39, %43 : vector<64x1xi1>
    %c6_i32 = arith.constant 6 : i32
    %45 = vector.broadcast %c6_i32 : i32 to vector<64x1xi32>
    %46 = arith.cmpi sle, %0, %45 : vector<64x1xi32>
    %47 = arith.andi %44, %46 : vector<64x1xi1>
    %cst_14 = arith.constant 0.000000e+00 : f32
    %48 = vector.shape_cast %47 : vector<64x1xi1> to vector<64x1xi1>
    %49 = vector.broadcast %48 : vector<64x1xi1> to vector<64x16xi1>
    %50 = vector.broadcast %cst_14 : f32 to vector<64x16xf32>
    %51 = arith.select %49, %35, %50 : vector<64x16xi1>, vector<64x16xf32>
    %c1_i32_15 = arith.constant 1 : i32
    %52 = tpu.dynamic_rotate %2 by %c1_i32_15 dim 0 : vector<64x16xf32>, i32 -> vector<64x16xf32>
    %c0_i32_16 = arith.constant 0 : i32
    %53 = vector.broadcast %c0_i32_16 : i32 to vector<64x1xi32>
    %54 = arith.addi %3, %53 : vector<64x1xi32>
    %c0_i32_17 = arith.constant 0 : i32
    %55 = vector.broadcast %c0_i32_17 : i32 to vector<64x1xi32>
    %56 = arith.cmpi sge, %54, %55 : vector<64x1xi32>
    %c0_i32_18 = arith.constant 0 : i32
    %57 = vector.broadcast %c0_i32_18 : i32 to vector<64x1xi32>
    %58 = arith.addi %3, %57 : vector<64x1xi32>
    %c63_i32_19 = arith.constant 63 : i32
    %59 = vector.broadcast %c63_i32_19 : i32 to vector<64x1xi32>
    %60 = arith.cmpi sle, %58, %59 : vector<64x1xi32>
    %61 = arith.andi %56, %60 : vector<64x1xi1>
    %c1_i32_20 = arith.constant 1 : i32
    %62 = vector.broadcast %c1_i32_20 : i32 to vector<64x1xi32>
    %63 = arith.cmpi sge, %0, %62 : vector<64x1xi32>
    %64 = arith.andi %61, %63 : vector<64x1xi1>
    %cst_21 = arith.constant 0.000000e+00 : f32
    %65 = vector.shape_cast %64 : vector<64x1xi1> to vector<64x1xi1>
    %66 = vector.broadcast %65 : vector<64x1xi1> to vector<64x16xi1>
    %67 = vector.broadcast %cst_21 : f32 to vector<64x16xf32>
    %68 = arith.select %66, %52, %67 : vector<64x16xi1>, vector<64x16xf32>
    %c63_i32_22 = arith.constant 63 : i32
    %69 = tpu.dynamic_rotate %2 by %c63_i32_22 dim 0 : vector<64x16xf32>, i32 -> vector<64x16xf32>
    %c0_i32_23 = arith.constant 0 : i32
    %70 = vector.broadcast %c0_i32_23 : i32 to vector<64x1xi32>
    %71 = arith.addi %3, %70 : vector<64x1xi32>
    %c0_i32_24 = arith.constant 0 : i32
    %72 = vector.broadcast %c0_i32_24 : i32 to vector<64x1xi32>
    %73 = arith.cmpi sge, %71, %72 : vector<64x1xi32>
    %c0_i32_25 = arith.constant 0 : i32
    %74 = vector.broadcast %c0_i32_25 : i32 to vector<64x1xi32>
    %75 = arith.addi %3, %74 : vector<64x1xi32>
    %c63_i32_26 = arith.constant 63 : i32
    %76 = vector.broadcast %c63_i32_26 : i32 to vector<64x1xi32>
    %77 = arith.cmpi sle, %75, %76 : vector<64x1xi32>
    %78 = arith.andi %73, %77 : vector<64x1xi1>
    %c6_i32_27 = arith.constant 6 : i32
    %79 = vector.broadcast %c6_i32_27 : i32 to vector<64x1xi32>
    %80 = arith.cmpi sle, %0, %79 : vector<64x1xi32>
    %81 = arith.andi %78, %80 : vector<64x1xi1>
    %cst_28 = arith.constant 0.000000e+00 : f32
    %82 = vector.shape_cast %81 : vector<64x1xi1> to vector<64x1xi1>
    %83 = vector.broadcast %82 : vector<64x1xi1> to vector<64x16xi1>
    %84 = vector.broadcast %cst_28 : f32 to vector<64x16xf32>
    %85 = arith.select %83, %69, %84 : vector<64x16xi1>, vector<64x16xf32>
    %c57_i32 = arith.constant 57 : i32
    %86 = tpu.dynamic_rotate %2 by %c57_i32 dim 0 : vector<64x16xf32>, i32 -> vector<64x16xf32>
    %c8_i32_29 = arith.constant 8 : i32
    %87 = vector.broadcast %c8_i32_29 : i32 to vector<64x1xi32>
    %88 = arith.addi %3, %87 : vector<64x1xi32>
    %c0_i32_30 = arith.constant 0 : i32
    %89 = vector.broadcast %c0_i32_30 : i32 to vector<64x1xi32>
    %90 = arith.cmpi sge, %88, %89 : vector<64x1xi32>
    %c8_i32_31 = arith.constant 8 : i32
    %91 = vector.broadcast %c8_i32_31 : i32 to vector<64x1xi32>
    %92 = arith.addi %3, %91 : vector<64x1xi32>
    %c63_i32_32 = arith.constant 63 : i32
    %93 = vector.broadcast %c63_i32_32 : i32 to vector<64x1xi32>
    %94 = arith.cmpi sle, %92, %93 : vector<64x1xi32>
    %95 = arith.andi %90, %94 : vector<64x1xi1>
    %c1_i32_33 = arith.constant 1 : i32
    %96 = vector.broadcast %c1_i32_33 : i32 to vector<64x1xi32>
    %97 = arith.cmpi sge, %0, %96 : vector<64x1xi32>
    %98 = arith.andi %95, %97 : vector<64x1xi1>
    %cst_34 = arith.constant 0.000000e+00 : f32
    %99 = vector.shape_cast %98 : vector<64x1xi1> to vector<64x1xi1>
    %100 = vector.broadcast %99 : vector<64x1xi1> to vector<64x16xi1>
    %101 = vector.broadcast %cst_34 : f32 to vector<64x16xf32>
    %102 = arith.select %100, %86, %101 : vector<64x16xi1>, vector<64x16xf32>
    %c56_i32 = arith.constant 56 : i32
    %103 = tpu.dynamic_rotate %2 by %c56_i32 dim 0 : vector<64x16xf32>, i32 -> vector<64x16xf32>
    %c8_i32_35 = arith.constant 8 : i32
    %104 = vector.broadcast %c8_i32_35 : i32 to vector<64x1xi32>
    %105 = arith.addi %3, %104 : vector<64x1xi32>
    %c0_i32_36 = arith.constant 0 : i32
    %106 = vector.broadcast %c0_i32_36 : i32 to vector<64x1xi32>
    %107 = arith.cmpi sge, %105, %106 : vector<64x1xi32>
    %c8_i32_37 = arith.constant 8 : i32
    %108 = vector.broadcast %c8_i32_37 : i32 to vector<64x1xi32>
    %109 = arith.addi %3, %108 : vector<64x1xi32>
    %c63_i32_38 = arith.constant 63 : i32
    %110 = vector.broadcast %c63_i32_38 : i32 to vector<64x1xi32>
    %111 = arith.cmpi sle, %109, %110 : vector<64x1xi32>
    %112 = arith.andi %107, %111 : vector<64x1xi1>
    %cst_39 = arith.constant 0.000000e+00 : f32
    %113 = vector.shape_cast %112 : vector<64x1xi1> to vector<64x1xi1>
    %114 = vector.broadcast %113 : vector<64x1xi1> to vector<64x16xi1>
    %115 = vector.broadcast %cst_39 : f32 to vector<64x16xf32>
    %116 = arith.select %114, %103, %115 : vector<64x16xi1>, vector<64x16xf32>
    %c55_i32 = arith.constant 55 : i32
    %117 = tpu.dynamic_rotate %2 by %c55_i32 dim 0 : vector<64x16xf32>, i32 -> vector<64x16xf32>
    %c8_i32_40 = arith.constant 8 : i32
    %118 = vector.broadcast %c8_i32_40 : i32 to vector<64x1xi32>
    %119 = arith.addi %3, %118 : vector<64x1xi32>
    %c0_i32_41 = arith.constant 0 : i32
    %120 = vector.broadcast %c0_i32_41 : i32 to vector<64x1xi32>
    %121 = arith.cmpi sge, %119, %120 : vector<64x1xi32>
    %c8_i32_42 = arith.constant 8 : i32
    %122 = vector.broadcast %c8_i32_42 : i32 to vector<64x1xi32>
    %123 = arith.addi %3, %122 : vector<64x1xi32>
    %c63_i32_43 = arith.constant 63 : i32
    %124 = vector.broadcast %c63_i32_43 : i32 to vector<64x1xi32>
    %125 = arith.cmpi sle, %123, %124 : vector<64x1xi32>
    %126 = arith.andi %121, %125 : vector<64x1xi1>
    %c6_i32_44 = arith.constant 6 : i32
    %127 = vector.broadcast %c6_i32_44 : i32 to vector<64x1xi32>
    %128 = arith.cmpi sle, %0, %127 : vector<64x1xi32>
    %129 = arith.andi %126, %128 : vector<64x1xi1>
    %cst_45 = arith.constant 0.000000e+00 : f32
    %130 = vector.shape_cast %129 : vector<64x1xi1> to vector<64x1xi1>
    %131 = vector.broadcast %130 : vector<64x1xi1> to vector<64x16xi1>
    %132 = vector.broadcast %cst_45 : f32 to vector<64x16xf32>
    %133 = arith.select %131, %117, %132 : vector<64x16xi1>, vector<64x16xf32>
    %134 = tpu.concatenate %20, %34, %51, %68, %2, %85, %102, %116, %133 in 1 : vector<64x16xf32>, vector<64x16xf32>, vector<64x16xf32>, vector<64x16xf32>, vector<64x16xf32>, vector<64x16xf32>, vector<64x16xf32>, vector<64x16xf32>, vector<64x16xf32> -> vector<64x144xf32>
    %135 = arith.truncf %134 : vector<64x144xf32> to vector<64x144xbf16>
    %c0_46 = arith.constant 0 : index
    %c0_47 = arith.constant 0 : index
    %136 = vector.load %arg3[%c0_46, %c0_47] : memref<144x32xbf16, #tpu.memory_space<vmem>>, vector<144x32xbf16>
    %cst_48 = arith.constant dense<0.000000e+00> : vector<64x32xf32>
    %137 = tpu.matmul %135, %136, %cst_48 {dimension_numbers = #tpu.dot_dimension_numbers<[1], [0], [0], [1], [0, 0, 1, 1], [], []>} : vector<64x144xbf16>, vector<144x32xbf16>, vector<64x32xf32> -> vector<64x32xf32>
    %cst_49 = arith.constant dense<0.000000e+00> : vector<32xf32>
    %138 = vector.multi_reduction <add>, %137, %cst_49 [0] : vector<64x32xf32> to vector<32xf32>
    %139 = vector.shape_cast %138 : vector<32xf32> to vector<1x32xf32>
    %cst_50 = arith.constant 6.400000e+01 : f32
    %140 = vector.broadcast %cst_50 : f32 to vector<1x32xf32>
    %141 = arith.divf %139, %140 : vector<1x32xf32>
    %142 = vector.broadcast %141 : vector<1x32xf32> to vector<64x32xf32>
    %143 = arith.subf %137, %142 : vector<64x32xf32>
    %144 = arith.mulf %143, %143 : vector<64x32xf32>
    %cst_51 = arith.constant dense<0.000000e+00> : vector<32xf32>
    %145 = vector.multi_reduction <add>, %144, %cst_51 [0] : vector<64x32xf32> to vector<32xf32>
    %146 = vector.shape_cast %145 : vector<32xf32> to vector<1x32xf32>
    %cst_52 = arith.constant 6.400000e+01 : f32
    %147 = vector.broadcast %cst_52 : f32 to vector<1x32xf32>
    %148 = arith.divf %146, %147 : vector<1x32xf32>
    %149 = vector.broadcast %141 : vector<1x32xf32> to vector<64x32xf32>
    %150 = arith.subf %137, %149 : vector<64x32xf32>
    %cst_53 = arith.constant 9.99999974E-6 : f32
    %151 = vector.broadcast %cst_53 : f32 to vector<1x32xf32>
    %152 = arith.addf %148, %151 : vector<1x32xf32>
    %153 = math.rsqrt %152 : vector<1x32xf32>
    %154 = vector.broadcast %153 : vector<1x32xf32> to vector<64x32xf32>
    %155 = arith.mulf %150, %154 : vector<64x32xf32>
    %cst_54 = arith.constant 0.000000e+00 : f32
    %156 = vector.broadcast %cst_54 : f32 to vector<64x32xf32>
    %157 = arith.cmpf oge, %155, %156 : vector<64x32xf32>
    %cst_55 = arith.constant 0.00999999977 : f32
    %158 = vector.broadcast %cst_55 : f32 to vector<64x32xf32>
    %159 = arith.mulf %158, %155 : vector<64x32xf32>
    %160 = arith.select %157, %155, %159 : vector<64x32xi1>, vector<64x32xf32>
    %161 = tpu.iota {dimensions = array<i32: 0>} : vector<64x1xi32>
    %c9_i32_56 = arith.constant 9 : i32
    %162 = tpu.dynamic_rotate %160 by %c9_i32_56 dim 0 : vector<64x32xf32>, i32 -> vector<64x32xf32>
    %c-8_i32_57 = arith.constant -8 : i32
    %163 = vector.broadcast %c-8_i32_57 : i32 to vector<64x1xi32>
    %164 = arith.addi %161, %163 : vector<64x1xi32>
    %c0_i32_58 = arith.constant 0 : i32
    %165 = vector.broadcast %c0_i32_58 : i32 to vector<64x1xi32>
    %166 = arith.cmpi sge, %164, %165 : vector<64x1xi32>
    %c-8_i32_59 = arith.constant -8 : i32
    %167 = vector.broadcast %c-8_i32_59 : i32 to vector<64x1xi32>
    %168 = arith.addi %161, %167 : vector<64x1xi32>
    %c63_i32_60 = arith.constant 63 : i32
    %169 = vector.broadcast %c63_i32_60 : i32 to vector<64x1xi32>
    %170 = arith.cmpi sle, %168, %169 : vector<64x1xi32>
    %171 = arith.andi %166, %170 : vector<64x1xi1>
    %c1_i32_61 = arith.constant 1 : i32
    %172 = vector.broadcast %c1_i32_61 : i32 to vector<64x1xi32>
    %173 = arith.cmpi sge, %0, %172 : vector<64x1xi32>
    %174 = arith.andi %171, %173 : vector<64x1xi1>
    %cst_62 = arith.constant 0.000000e+00 : f32
    %175 = vector.shape_cast %174 : vector<64x1xi1> to vector<64x1xi1>
    %176 = vector.broadcast %175 : vector<64x1xi1> to vector<64x32xi1>
    %177 = vector.broadcast %cst_62 : f32 to vector<64x32xf32>
    %178 = arith.select %176, %162, %177 : vector<64x32xi1>, vector<64x32xf32>
    %c8_i32_63 = arith.constant 8 : i32
    %179 = tpu.dynamic_rotate %160 by %c8_i32_63 dim 0 : vector<64x32xf32>, i32 -> vector<64x32xf32>
    %c-8_i32_64 = arith.constant -8 : i32
    %180 = vector.broadcast %c-8_i32_64 : i32 to vector<64x1xi32>
    %181 = arith.addi %161, %180 : vector<64x1xi32>
    %c0_i32_65 = arith.constant 0 : i32
    %182 = vector.broadcast %c0_i32_65 : i32 to vector<64x1xi32>
    %183 = arith.cmpi sge, %181, %182 : vector<64x1xi32>
    %c-8_i32_66 = arith.constant -8 : i32
    %184 = vector.broadcast %c-8_i32_66 : i32 to vector<64x1xi32>
    %185 = arith.addi %161, %184 : vector<64x1xi32>
    %c63_i32_67 = arith.constant 63 : i32
    %186 = vector.broadcast %c63_i32_67 : i32 to vector<64x1xi32>
    %187 = arith.cmpi sle, %185, %186 : vector<64x1xi32>
    %188 = arith.andi %183, %187 : vector<64x1xi1>
    %cst_68 = arith.constant 0.000000e+00 : f32
    %189 = vector.shape_cast %188 : vector<64x1xi1> to vector<64x1xi1>
    %190 = vector.broadcast %189 : vector<64x1xi1> to vector<64x32xi1>
    %191 = vector.broadcast %cst_68 : f32 to vector<64x32xf32>
    %192 = arith.select %190, %179, %191 : vector<64x32xi1>, vector<64x32xf32>
    %c7_i32_69 = arith.constant 7 : i32
    %193 = tpu.dynamic_rotate %160 by %c7_i32_69 dim 0 : vector<64x32xf32>, i32 -> vector<64x32xf32>
    %c-8_i32_70 = arith.constant -8 : i32
    %194 = vector.broadcast %c-8_i32_70 : i32 to vector<64x1xi32>
    %195 = arith.addi %161, %194 : vector<64x1xi32>
    %c0_i32_71 = arith.constant 0 : i32
    %196 = vector.broadcast %c0_i32_71 : i32 to vector<64x1xi32>
    %197 = arith.cmpi sge, %195, %196 : vector<64x1xi32>
    %c-8_i32_72 = arith.constant -8 : i32
    %198 = vector.broadcast %c-8_i32_72 : i32 to vector<64x1xi32>
    %199 = arith.addi %161, %198 : vector<64x1xi32>
    %c63_i32_73 = arith.constant 63 : i32
    %200 = vector.broadcast %c63_i32_73 : i32 to vector<64x1xi32>
    %201 = arith.cmpi sle, %199, %200 : vector<64x1xi32>
    %202 = arith.andi %197, %201 : vector<64x1xi1>
    %c6_i32_74 = arith.constant 6 : i32
    %203 = vector.broadcast %c6_i32_74 : i32 to vector<64x1xi32>
    %204 = arith.cmpi sle, %0, %203 : vector<64x1xi32>
    %205 = arith.andi %202, %204 : vector<64x1xi1>
    %cst_75 = arith.constant 0.000000e+00 : f32
    %206 = vector.shape_cast %205 : vector<64x1xi1> to vector<64x1xi1>
    %207 = vector.broadcast %206 : vector<64x1xi1> to vector<64x32xi1>
    %208 = vector.broadcast %cst_75 : f32 to vector<64x32xf32>
    %209 = arith.select %207, %193, %208 : vector<64x32xi1>, vector<64x32xf32>
    %c1_i32_76 = arith.constant 1 : i32
    %210 = tpu.dynamic_rotate %160 by %c1_i32_76 dim 0 : vector<64x32xf32>, i32 -> vector<64x32xf32>
    %c0_i32_77 = arith.constant 0 : i32
    %211 = vector.broadcast %c0_i32_77 : i32 to vector<64x1xi32>
    %212 = arith.addi %161, %211 : vector<64x1xi32>
    %c0_i32_78 = arith.constant 0 : i32
    %213 = vector.broadcast %c0_i32_78 : i32 to vector<64x1xi32>
    %214 = arith.cmpi sge, %212, %213 : vector<64x1xi32>
    %c0_i32_79 = arith.constant 0 : i32
    %215 = vector.broadcast %c0_i32_79 : i32 to vector<64x1xi32>
    %216 = arith.addi %161, %215 : vector<64x1xi32>
    %c63_i32_80 = arith.constant 63 : i32
    %217 = vector.broadcast %c63_i32_80 : i32 to vector<64x1xi32>
    %218 = arith.cmpi sle, %216, %217 : vector<64x1xi32>
    %219 = arith.andi %214, %218 : vector<64x1xi1>
    %c1_i32_81 = arith.constant 1 : i32
    %220 = vector.broadcast %c1_i32_81 : i32 to vector<64x1xi32>
    %221 = arith.cmpi sge, %0, %220 : vector<64x1xi32>
    %222 = arith.andi %219, %221 : vector<64x1xi1>
    %cst_82 = arith.constant 0.000000e+00 : f32
    %223 = vector.shape_cast %222 : vector<64x1xi1> to vector<64x1xi1>
    %224 = vector.broadcast %223 : vector<64x1xi1> to vector<64x32xi1>
    %225 = vector.broadcast %cst_82 : f32 to vector<64x32xf32>
    %226 = arith.select %224, %210, %225 : vector<64x32xi1>, vector<64x32xf32>
    %c63_i32_83 = arith.constant 63 : i32
    %227 = tpu.dynamic_rotate %160 by %c63_i32_83 dim 0 : vector<64x32xf32>, i32 -> vector<64x32xf32>
    %c0_i32_84 = arith.constant 0 : i32
    %228 = vector.broadcast %c0_i32_84 : i32 to vector<64x1xi32>
    %229 = arith.addi %161, %228 : vector<64x1xi32>
    %c0_i32_85 = arith.constant 0 : i32
    %230 = vector.broadcast %c0_i32_85 : i32 to vector<64x1xi32>
    %231 = arith.cmpi sge, %229, %230 : vector<64x1xi32>
    %c0_i32_86 = arith.constant 0 : i32
    %232 = vector.broadcast %c0_i32_86 : i32 to vector<64x1xi32>
    %233 = arith.addi %161, %232 : vector<64x1xi32>
    %c63_i32_87 = arith.constant 63 : i32
    %234 = vector.broadcast %c63_i32_87 : i32 to vector<64x1xi32>
    %235 = arith.cmpi sle, %233, %234 : vector<64x1xi32>
    %236 = arith.andi %231, %235 : vector<64x1xi1>
    %c6_i32_88 = arith.constant 6 : i32
    %237 = vector.broadcast %c6_i32_88 : i32 to vector<64x1xi32>
    %238 = arith.cmpi sle, %0, %237 : vector<64x1xi32>
    %239 = arith.andi %236, %238 : vector<64x1xi1>
    %cst_89 = arith.constant 0.000000e+00 : f32
    %240 = vector.shape_cast %239 : vector<64x1xi1> to vector<64x1xi1>
    %241 = vector.broadcast %240 : vector<64x1xi1> to vector<64x32xi1>
    %242 = vector.broadcast %cst_89 : f32 to vector<64x32xf32>
    %243 = arith.select %241, %227, %242 : vector<64x32xi1>, vector<64x32xf32>
    %c57_i32_90 = arith.constant 57 : i32
    %244 = tpu.dynamic_rotate %160 by %c57_i32_90 dim 0 : vector<64x32xf32>, i32 -> vector<64x32xf32>
    %c8_i32_91 = arith.constant 8 : i32
    %245 = vector.broadcast %c8_i32_91 : i32 to vector<64x1xi32>
    %246 = arith.addi %161, %245 : vector<64x1xi32>
    %c0_i32_92 = arith.constant 0 : i32
    %247 = vector.broadcast %c0_i32_92 : i32 to vector<64x1xi32>
    %248 = arith.cmpi sge, %246, %247 : vector<64x1xi32>
    %c8_i32_93 = arith.constant 8 : i32
    %249 = vector.broadcast %c8_i32_93 : i32 to vector<64x1xi32>
    %250 = arith.addi %161, %249 : vector<64x1xi32>
    %c63_i32_94 = arith.constant 63 : i32
    %251 = vector.broadcast %c63_i32_94 : i32 to vector<64x1xi32>
    %252 = arith.cmpi sle, %250, %251 : vector<64x1xi32>
    %253 = arith.andi %248, %252 : vector<64x1xi1>
    %c1_i32_95 = arith.constant 1 : i32
    %254 = vector.broadcast %c1_i32_95 : i32 to vector<64x1xi32>
    %255 = arith.cmpi sge, %0, %254 : vector<64x1xi32>
    %256 = arith.andi %253, %255 : vector<64x1xi1>
    %cst_96 = arith.constant 0.000000e+00 : f32
    %257 = vector.shape_cast %256 : vector<64x1xi1> to vector<64x1xi1>
    %258 = vector.broadcast %257 : vector<64x1xi1> to vector<64x32xi1>
    %259 = vector.broadcast %cst_96 : f32 to vector<64x32xf32>
    %260 = arith.select %258, %244, %259 : vector<64x32xi1>, vector<64x32xf32>
    %c56_i32_97 = arith.constant 56 : i32
    %261 = tpu.dynamic_rotate %160 by %c56_i32_97 dim 0 : vector<64x32xf32>, i32 -> vector<64x32xf32>
    %c8_i32_98 = arith.constant 8 : i32
    %262 = vector.broadcast %c8_i32_98 : i32 to vector<64x1xi32>
    %263 = arith.addi %161, %262 : vector<64x1xi32>
    %c0_i32_99 = arith.constant 0 : i32
    %264 = vector.broadcast %c0_i32_99 : i32 to vector<64x1xi32>
    %265 = arith.cmpi sge, %263, %264 : vector<64x1xi32>
    %c8_i32_100 = arith.constant 8 : i32
    %266 = vector.broadcast %c8_i32_100 : i32 to vector<64x1xi32>
    %267 = arith.addi %161, %266 : vector<64x1xi32>
    %c63_i32_101 = arith.constant 63 : i32
    %268 = vector.broadcast %c63_i32_101 : i32 to vector<64x1xi32>
    %269 = arith.cmpi sle, %267, %268 : vector<64x1xi32>
    %270 = arith.andi %265, %269 : vector<64x1xi1>
    %cst_102 = arith.constant 0.000000e+00 : f32
    %271 = vector.shape_cast %270 : vector<64x1xi1> to vector<64x1xi1>
    %272 = vector.broadcast %271 : vector<64x1xi1> to vector<64x32xi1>
    %273 = vector.broadcast %cst_102 : f32 to vector<64x32xf32>
    %274 = arith.select %272, %261, %273 : vector<64x32xi1>, vector<64x32xf32>
    %c55_i32_103 = arith.constant 55 : i32
    %275 = tpu.dynamic_rotate %160 by %c55_i32_103 dim 0 : vector<64x32xf32>, i32 -> vector<64x32xf32>
    %c8_i32_104 = arith.constant 8 : i32
    %276 = vector.broadcast %c8_i32_104 : i32 to vector<64x1xi32>
    %277 = arith.addi %161, %276 : vector<64x1xi32>
    %c0_i32_105 = arith.constant 0 : i32
    %278 = vector.broadcast %c0_i32_105 : i32 to vector<64x1xi32>
    %279 = arith.cmpi sge, %277, %278 : vector<64x1xi32>
    %c8_i32_106 = arith.constant 8 : i32
    %280 = vector.broadcast %c8_i32_106 : i32 to vector<64x1xi32>
    %281 = arith.addi %161, %280 : vector<64x1xi32>
    %c63_i32_107 = arith.constant 63 : i32
    %282 = vector.broadcast %c63_i32_107 : i32 to vector<64x1xi32>
    %283 = arith.cmpi sle, %281, %282 : vector<64x1xi32>
    %284 = arith.andi %279, %283 : vector<64x1xi1>
    %c6_i32_108 = arith.constant 6 : i32
    %285 = vector.broadcast %c6_i32_108 : i32 to vector<64x1xi32>
    %286 = arith.cmpi sle, %0, %285 : vector<64x1xi32>
    %287 = arith.andi %284, %286 : vector<64x1xi1>
    %cst_109 = arith.constant 0.000000e+00 : f32
    %288 = vector.shape_cast %287 : vector<64x1xi1> to vector<64x1xi1>
    %289 = vector.broadcast %288 : vector<64x1xi1> to vector<64x32xi1>
    %290 = vector.broadcast %cst_109 : f32 to vector<64x32xf32>
    %291 = arith.select %289, %275, %290 : vector<64x32xi1>, vector<64x32xf32>
    %292 = tpu.concatenate %178, %192, %209, %226, %160, %243, %260, %274, %291 in 1 : vector<64x32xf32>, vector<64x32xf32>, vector<64x32xf32>, vector<64x32xf32>, vector<64x32xf32>, vector<64x32xf32>, vector<64x32xf32>, vector<64x32xf32>, vector<64x32xf32> -> vector<64x288xf32>
    %293 = arith.truncf %292 : vector<64x288xf32> to vector<64x288xbf16>
    %c0_110 = arith.constant 0 : index
    %c0_111 = arith.constant 0 : index
    %294 = vector.load %arg4[%c0_110, %c0_111] : memref<288x32xbf16, #tpu.memory_space<vmem>>, vector<288x32xbf16>
    %cst_112 = arith.constant dense<0.000000e+00> : vector<64x32xf32>
    %295 = tpu.matmul %293, %294, %cst_112 {dimension_numbers = #tpu.dot_dimension_numbers<[1], [0], [0], [1], [0, 0, 1, 1], [], []>} : vector<64x288xbf16>, vector<288x32xbf16>, vector<64x32xf32> -> vector<64x32xf32>
    %cst_113 = arith.constant dense<0.000000e+00> : vector<32xf32>
    %296 = vector.multi_reduction <add>, %295, %cst_113 [0] : vector<64x32xf32> to vector<32xf32>
    %297 = vector.shape_cast %296 : vector<32xf32> to vector<1x32xf32>
    %cst_114 = arith.constant 6.400000e+01 : f32
    %298 = vector.broadcast %cst_114 : f32 to vector<1x32xf32>
    %299 = arith.divf %297, %298 : vector<1x32xf32>
    %300 = vector.broadcast %299 : vector<1x32xf32> to vector<64x32xf32>
    %301 = arith.subf %295, %300 : vector<64x32xf32>
    %302 = arith.mulf %301, %301 : vector<64x32xf32>
    %cst_115 = arith.constant dense<0.000000e+00> : vector<32xf32>
    %303 = vector.multi_reduction <add>, %302, %cst_115 [0] : vector<64x32xf32> to vector<32xf32>
    %304 = vector.shape_cast %303 : vector<32xf32> to vector<1x32xf32>
    %cst_116 = arith.constant 6.400000e+01 : f32
    %305 = vector.broadcast %cst_116 : f32 to vector<1x32xf32>
    %306 = arith.divf %304, %305 : vector<1x32xf32>
    %307 = vector.broadcast %299 : vector<1x32xf32> to vector<64x32xf32>
    %308 = arith.subf %295, %307 : vector<64x32xf32>
    %cst_117 = arith.constant 9.99999974E-6 : f32
    %309 = vector.broadcast %cst_117 : f32 to vector<1x32xf32>
    %310 = arith.addf %306, %309 : vector<1x32xf32>
    %311 = math.rsqrt %310 : vector<1x32xf32>
    %312 = vector.broadcast %311 : vector<1x32xf32> to vector<64x32xf32>
    %313 = arith.mulf %308, %312 : vector<64x32xf32>
    %cst_118 = arith.constant dense<0.000000e+00> : vector<32xf32>
    %314 = vector.multi_reduction <add>, %313, %cst_118 [0] : vector<64x32xf32> to vector<32xf32>
    %315 = vector.shape_cast %314 : vector<32xf32> to vector<1x32xf32>
    %cst_119 = arith.constant 6.400000e+01 : f32
    %316 = vector.broadcast %cst_119 : f32 to vector<1x32xf32>
    %317 = arith.divf %315, %316 : vector<1x32xf32>
    %318 = arith.truncf %317 : vector<1x32xf32> to vector<1x32xbf16>
    %c0_120 = arith.constant 0 : index
    %c0_121 = arith.constant 0 : index
    %319 = vector.load %arg5[%c0_120, %c0_121] : memref<32x2xbf16, #tpu.memory_space<vmem>>, vector<32x2xbf16>
    %cst_122 = arith.constant dense<0.000000e+00> : vector<1x2xf32>
    %320 = tpu.matmul %318, %319, %cst_122 {dimension_numbers = #tpu.dot_dimension_numbers<[1], [0], [0], [1], [0, 0, 1, 1], [], []>} : vector<1x32xbf16>, vector<32x2xbf16>, vector<1x2xf32> -> vector<1x2xf32>
    %cst_123 = arith.constant 0.000000e+00 : f32
    %321 = vector.broadcast %cst_123 : f32 to vector<1x2xf32>
    %322 = arith.maximumf %320, %321 : vector<1x2xf32>
    %323 = arith.truncf %322 : vector<1x2xf32> to vector<1x2xbf16>
    %c0_124 = arith.constant 0 : index
    %c0_125 = arith.constant 0 : index
    %324 = vector.load %arg6[%c0_124, %c0_125] : memref<2x32xbf16, #tpu.memory_space<vmem>>, vector<2x32xbf16>
    %cst_126 = arith.constant dense<0.000000e+00> : vector<1x32xf32>
    %325 = tpu.matmul %323, %324, %cst_126 {dimension_numbers = #tpu.dot_dimension_numbers<[1], [0], [0], [1], [0, 0, 1, 1], [], []>} : vector<1x2xbf16>, vector<2x32xbf16>, vector<1x32xf32> -> vector<1x32xf32>
    %cst_127 = arith.constant 0.000000e+00 : f32
    %326 = vector.broadcast %cst_127 : f32 to vector<1x32xf32>
    %327 = arith.subf %326, %325 : vector<1x32xf32>
    %328 = math.exp %327 : vector<1x32xf32>
    %cst_128 = arith.constant 1.000000e+00 : f32
    %329 = vector.broadcast %cst_128 : f32 to vector<1x32xf32>
    %330 = arith.addf %329, %328 : vector<1x32xf32>
    %cst_129 = arith.constant 1.000000e+00 : f32
    %331 = vector.broadcast %cst_129 : f32 to vector<1x32xf32>
    %332 = arith.divf %331, %330 : vector<1x32xf32>
    %333 = vector.broadcast %332 : vector<1x32xf32> to vector<64x32xf32>
    %334 = arith.mulf %313, %333 : vector<64x32xf32>
    %335 = arith.truncf %2 : vector<64x16xf32> to vector<64x16xbf16>
    %c0_130 = arith.constant 0 : index
    %c0_131 = arith.constant 0 : index
    %336 = vector.load %arg7[%c0_130, %c0_131] : memref<16x32xbf16, #tpu.memory_space<vmem>>, vector<16x32xbf16>
    %cst_132 = arith.constant dense<0.000000e+00> : vector<64x32xf32>
    %337 = tpu.matmul %335, %336, %cst_132 {dimension_numbers = #tpu.dot_dimension_numbers<[1], [0], [0], [1], [0, 0, 1, 1], [], []>} : vector<64x16xbf16>, vector<16x32xbf16>, vector<64x32xf32> -> vector<64x32xf32>
    %cst_133 = arith.constant dense<0.000000e+00> : vector<32xf32>
    %338 = vector.multi_reduction <add>, %337, %cst_133 [0] : vector<64x32xf32> to vector<32xf32>
    %339 = vector.shape_cast %338 : vector<32xf32> to vector<1x32xf32>
    %cst_134 = arith.constant 6.400000e+01 : f32
    %340 = vector.broadcast %cst_134 : f32 to vector<1x32xf32>
    %341 = arith.divf %339, %340 : vector<1x32xf32>
    %342 = vector.broadcast %341 : vector<1x32xf32> to vector<64x32xf32>
    %343 = arith.subf %337, %342 : vector<64x32xf32>
    %344 = arith.mulf %343, %343 : vector<64x32xf32>
    %cst_135 = arith.constant dense<0.000000e+00> : vector<32xf32>
    %345 = vector.multi_reduction <add>, %344, %cst_135 [0] : vector<64x32xf32> to vector<32xf32>
    %346 = vector.shape_cast %345 : vector<32xf32> to vector<1x32xf32>
    %cst_136 = arith.constant 6.400000e+01 : f32
    %347 = vector.broadcast %cst_136 : f32 to vector<1x32xf32>
    %348 = arith.divf %346, %347 : vector<1x32xf32>
    %349 = vector.broadcast %341 : vector<1x32xf32> to vector<64x32xf32>
    %350 = arith.subf %337, %349 : vector<64x32xf32>
    %cst_137 = arith.constant 9.99999974E-6 : f32
    %351 = vector.broadcast %cst_137 : f32 to vector<1x32xf32>
    %352 = arith.addf %348, %351 : vector<1x32xf32>
    %353 = math.rsqrt %352 : vector<1x32xf32>
    %354 = vector.broadcast %353 : vector<1x32xf32> to vector<64x32xf32>
    %355 = arith.mulf %350, %354 : vector<64x32xf32>
    %356 = arith.addf %334, %355 : vector<64x32xf32>
    %cst_138 = arith.constant 0.000000e+00 : f32
    %357 = vector.broadcast %cst_138 : f32 to vector<64x32xf32>
    %358 = arith.cmpf oge, %356, %357 : vector<64x32xf32>
    %cst_139 = arith.constant 0.00999999977 : f32
    %359 = vector.broadcast %cst_139 : f32 to vector<64x32xf32>
    %360 = arith.mulf %359, %356 : vector<64x32xf32>
    %361 = arith.select %358, %356, %360 : vector<64x32xi1>, vector<64x32xf32>
    %c0_140 = arith.constant 0 : index
    %c0_141 = arith.constant 0 : index
    %c0_142 = arith.constant 0 : index
    %362 = vector.load %arg8[%c0_140, %c0_141, %c0_142] : memref<1x64x32xf32, #tpu.memory_space<vmem>>, vector<1x64x32xf32>
    %363 = vector.shape_cast %362 : vector<1x64x32xf32> to vector<64x32xf32>
    %364 = vector.shape_cast %361 : vector<64x32xf32> to vector<1x64x32xf32>
    tpu.vector_store %arg8[%c0_140, %c0_141, %c0_142], %364 {strides = array<i32>} : memref<1x64x32xf32, #tpu.memory_space<vmem>>, vector<1x64x32xf32>,
    return
  }
  func.func @transform_0(%arg0: i32) -> (i32, i32, i32) {
    %c0_i32 = arith.constant 0 : i32
    %c0_i32_0 = arith.constant 0 : i32
    %c0_i32_1 = arith.constant 0 : i32
    return %arg0, %c0_i32, %c0_i32_0 : i32, i32, i32
  }
  func.func @transform_1(%arg0: i32) -> (i32, i32) {
    %c0_i32 = arith.constant 0 : i32
    %c0_i32_0 = arith.constant 0 : i32
    %c0_i32_1 = arith.constant 0 : i32
    return %c0_i32, %c0_i32_0 : i32, i32
  }
  func.func @transform_2(%arg0: i32) -> (i32, i32) {
    %c0_i32 = arith.constant 0 : i32
    %c0_i32_0 = arith.constant 0 : i32
    %c0_i32_1 = arith.constant 0 : i32
    return %c0_i32, %c0_i32_0 : i32, i32
  }
  func.func @transform_3(%arg0: i32) -> (i32, i32) {
    %c0_i32 = arith.constant 0 : i32
    %c0_i32_0 = arith.constant 0 : i32
    %c0_i32_1 = arith.constant 0 : i32
    return %c0_i32, %c0_i32_0 : i32, i32
  }
  func.func @transform_4(%arg0: i32) -> (i32, i32) {
    %c0_i32 = arith.constant 0 : i32
    %c0_i32_0 = arith.constant 0 : i32
    %c0_i32_1 = arith.constant 0 : i32
    return %c0_i32, %c0_i32_0 : i32, i32
  }
  func.func @transform_5(%arg0: i32) -> (i32, i32) {
    %c0_i32 = arith.constant 0 : i32
    %c0_i32_0 = arith.constant 0 : i32
    %c0_i32_1 = arith.constant 0 : i32
    return %c0_i32, %c0_i32_0 : i32, i32
  }
  func.func @transform_6(%arg0: i32) -> (i32, i32) {
    %c0_i32 = arith.constant 0 : i32
    %c0_i32_0 = arith.constant 0 : i32
    %c0_i32_1 = arith.constant 0 : i32
    return %c0_i32, %c0_i32_0 : i32, i32
  }
  func.func @transform_7(%arg0: i32) -> (i32, i32, i32) {
    %c0_i32 = arith.constant 0 : i32
    %c0_i32_0 = arith.constant 0 : i32
    %c0_i32_1 = arith.constant 0 : i32
    return %arg0, %c0_i32, %c0_i32_0 : i32, i32, i32
  }
}

module attributes {stable_mosaic.version = 11 : i64} {
  func.func @_res_se_kernel(%arg0: i32, %arg1: memref<1x256x32xf32, #tpu.memory_space<vmem>>, %arg2: memref<256x1xi32, #tpu.memory_space<vmem>>, %arg3: memref<288x32xbf16, #tpu.memory_space<vmem>>, %arg4: memref<288x32xbf16, #tpu.memory_space<vmem>>, %arg5: memref<32x2xbf16, #tpu.memory_space<vmem>>, %arg6: memref<2x32xbf16, #tpu.memory_space<vmem>>, %arg7: memref<1x256x32xf32, #tpu.memory_space<vmem>>) attributes {dimension_semantics = [#tpu.dimension_semantics<parallel>], iteration_bounds = array<i64: 2>, scalar_prefetch = 0 : i64, scratch_operands = 0 : i64, tpu.core_type = #tpu.core_type<tc>, window_params = [{transform_indices = @transform_0, window_bounds = array<i64: 1, 256, 32>}, {pipeline_mode = #tpu.pipeline_mode<synchronous>, transform_indices = @transform_1, window_bounds = array<i64: 256, 1>}, {pipeline_mode = #tpu.pipeline_mode<synchronous>, transform_indices = @transform_2, window_bounds = array<i64: 288, 32>}, {pipeline_mode = #tpu.pipeline_mode<synchronous>, transform_indices = @transform_3, window_bounds = array<i64: 288, 32>}, {pipeline_mode = #tpu.pipeline_mode<synchronous>, transform_indices = @transform_4, window_bounds = array<i64: 32, 2>}, {pipeline_mode = #tpu.pipeline_mode<synchronous>, transform_indices = @transform_5, window_bounds = array<i64: 2, 32>}, {transform_indices = @transform_6, window_bounds = array<i64: 1, 256, 32>}]} {
    %c0 = arith.constant 0 : index
    %c0_0 = arith.constant 0 : index
    %0 = vector.load %arg2[%c0, %c0_0] : memref<256x1xi32, #tpu.memory_space<vmem>>, vector<256x1xi32>
    %c0_1 = arith.constant 0 : index
    %c0_2 = arith.constant 0 : index
    %c0_3 = arith.constant 0 : index
    %1 = vector.load %arg1[%c0_1, %c0_2, %c0_3] : memref<1x256x32xf32, #tpu.memory_space<vmem>>, vector<1x256x32xf32>
    %2 = vector.shape_cast %1 : vector<1x256x32xf32> to vector<256x32xf32>
    %3 = tpu.iota {dimensions = array<i32: 0>} : vector<256x1xi32>
    %c17_i32 = arith.constant 17 : i32
    %4 = tpu.dynamic_rotate %2 by %c17_i32 dim 0 : vector<256x32xf32>, i32 -> vector<256x32xf32>
    %c-16_i32 = arith.constant -16 : i32
    %5 = vector.broadcast %c-16_i32 : i32 to vector<256x1xi32>
    %6 = arith.addi %3, %5 : vector<256x1xi32>
    %c0_i32 = arith.constant 0 : i32
    %7 = vector.broadcast %c0_i32 : i32 to vector<256x1xi32>
    %8 = arith.cmpi sge, %6, %7 : vector<256x1xi32>
    %c-16_i32_4 = arith.constant -16 : i32
    %9 = vector.broadcast %c-16_i32_4 : i32 to vector<256x1xi32>
    %10 = arith.addi %3, %9 : vector<256x1xi32>
    %c255_i32 = arith.constant 255 : i32
    %11 = vector.broadcast %c255_i32 : i32 to vector<256x1xi32>
    %12 = arith.cmpi sle, %10, %11 : vector<256x1xi32>
    %13 = arith.andi %8, %12 : vector<256x1xi1>
    %c1_i32 = arith.constant 1 : i32
    %14 = vector.broadcast %c1_i32 : i32 to vector<256x1xi32>
    %15 = arith.cmpi sge, %0, %14 : vector<256x1xi32>
    %16 = arith.andi %13, %15 : vector<256x1xi1>
    %cst = arith.constant 0.000000e+00 : f32
    %17 = vector.shape_cast %16 : vector<256x1xi1> to vector<256x1xi1>
    %18 = vector.broadcast %17 : vector<256x1xi1> to vector<256x32xi1>
    %19 = vector.broadcast %cst : f32 to vector<256x32xf32>
    %20 = arith.select %18, %4, %19 : vector<256x32xi1>, vector<256x32xf32>
    %c16_i32 = arith.constant 16 : i32
    %21 = tpu.dynamic_rotate %2 by %c16_i32 dim 0 : vector<256x32xf32>, i32 -> vector<256x32xf32>
    %c-16_i32_5 = arith.constant -16 : i32
    %22 = vector.broadcast %c-16_i32_5 : i32 to vector<256x1xi32>
    %23 = arith.addi %3, %22 : vector<256x1xi32>
    %c0_i32_6 = arith.constant 0 : i32
    %24 = vector.broadcast %c0_i32_6 : i32 to vector<256x1xi32>
    %25 = arith.cmpi sge, %23, %24 : vector<256x1xi32>
    %c-16_i32_7 = arith.constant -16 : i32
    %26 = vector.broadcast %c-16_i32_7 : i32 to vector<256x1xi32>
    %27 = arith.addi %3, %26 : vector<256x1xi32>
    %c255_i32_8 = arith.constant 255 : i32
    %28 = vector.broadcast %c255_i32_8 : i32 to vector<256x1xi32>
    %29 = arith.cmpi sle, %27, %28 : vector<256x1xi32>
    %30 = arith.andi %25, %29 : vector<256x1xi1>
    %cst_9 = arith.constant 0.000000e+00 : f32
    %31 = vector.shape_cast %30 : vector<256x1xi1> to vector<256x1xi1>
    %32 = vector.broadcast %31 : vector<256x1xi1> to vector<256x32xi1>
    %33 = vector.broadcast %cst_9 : f32 to vector<256x32xf32>
    %34 = arith.select %32, %21, %33 : vector<256x32xi1>, vector<256x32xf32>
    %c15_i32 = arith.constant 15 : i32
    %35 = tpu.dynamic_rotate %2 by %c15_i32 dim 0 : vector<256x32xf32>, i32 -> vector<256x32xf32>
    %c-16_i32_10 = arith.constant -16 : i32
    %36 = vector.broadcast %c-16_i32_10 : i32 to vector<256x1xi32>
    %37 = arith.addi %3, %36 : vector<256x1xi32>
    %c0_i32_11 = arith.constant 0 : i32
    %38 = vector.broadcast %c0_i32_11 : i32 to vector<256x1xi32>
    %39 = arith.cmpi sge, %37, %38 : vector<256x1xi32>
    %c-16_i32_12 = arith.constant -16 : i32
    %40 = vector.broadcast %c-16_i32_12 : i32 to vector<256x1xi32>
    %41 = arith.addi %3, %40 : vector<256x1xi32>
    %c255_i32_13 = arith.constant 255 : i32
    %42 = vector.broadcast %c255_i32_13 : i32 to vector<256x1xi32>
    %43 = arith.cmpi sle, %41, %42 : vector<256x1xi32>
    %44 = arith.andi %39, %43 : vector<256x1xi1>
    %c14_i32 = arith.constant 14 : i32
    %45 = vector.broadcast %c14_i32 : i32 to vector<256x1xi32>
    %46 = arith.cmpi sle, %0, %45 : vector<256x1xi32>
    %47 = arith.andi %44, %46 : vector<256x1xi1>
    %cst_14 = arith.constant 0.000000e+00 : f32
    %48 = vector.shape_cast %47 : vector<256x1xi1> to vector<256x1xi1>
    %49 = vector.broadcast %48 : vector<256x1xi1> to vector<256x32xi1>
    %50 = vector.broadcast %cst_14 : f32 to vector<256x32xf32>
    %51 = arith.select %49, %35, %50 : vector<256x32xi1>, vector<256x32xf32>
    %c1_i32_15 = arith.constant 1 : i32
    %52 = tpu.dynamic_rotate %2 by %c1_i32_15 dim 0 : vector<256x32xf32>, i32 -> vector<256x32xf32>
    %c0_i32_16 = arith.constant 0 : i32
    %53 = vector.broadcast %c0_i32_16 : i32 to vector<256x1xi32>
    %54 = arith.addi %3, %53 : vector<256x1xi32>
    %c0_i32_17 = arith.constant 0 : i32
    %55 = vector.broadcast %c0_i32_17 : i32 to vector<256x1xi32>
    %56 = arith.cmpi sge, %54, %55 : vector<256x1xi32>
    %c0_i32_18 = arith.constant 0 : i32
    %57 = vector.broadcast %c0_i32_18 : i32 to vector<256x1xi32>
    %58 = arith.addi %3, %57 : vector<256x1xi32>
    %c255_i32_19 = arith.constant 255 : i32
    %59 = vector.broadcast %c255_i32_19 : i32 to vector<256x1xi32>
    %60 = arith.cmpi sle, %58, %59 : vector<256x1xi32>
    %61 = arith.andi %56, %60 : vector<256x1xi1>
    %c1_i32_20 = arith.constant 1 : i32
    %62 = vector.broadcast %c1_i32_20 : i32 to vector<256x1xi32>
    %63 = arith.cmpi sge, %0, %62 : vector<256x1xi32>
    %64 = arith.andi %61, %63 : vector<256x1xi1>
    %cst_21 = arith.constant 0.000000e+00 : f32
    %65 = vector.shape_cast %64 : vector<256x1xi1> to vector<256x1xi1>
    %66 = vector.broadcast %65 : vector<256x1xi1> to vector<256x32xi1>
    %67 = vector.broadcast %cst_21 : f32 to vector<256x32xf32>
    %68 = arith.select %66, %52, %67 : vector<256x32xi1>, vector<256x32xf32>
    %c255_i32_22 = arith.constant 255 : i32
    %69 = tpu.dynamic_rotate %2 by %c255_i32_22 dim 0 : vector<256x32xf32>, i32 -> vector<256x32xf32>
    %c0_i32_23 = arith.constant 0 : i32
    %70 = vector.broadcast %c0_i32_23 : i32 to vector<256x1xi32>
    %71 = arith.addi %3, %70 : vector<256x1xi32>
    %c0_i32_24 = arith.constant 0 : i32
    %72 = vector.broadcast %c0_i32_24 : i32 to vector<256x1xi32>
    %73 = arith.cmpi sge, %71, %72 : vector<256x1xi32>
    %c0_i32_25 = arith.constant 0 : i32
    %74 = vector.broadcast %c0_i32_25 : i32 to vector<256x1xi32>
    %75 = arith.addi %3, %74 : vector<256x1xi32>
    %c255_i32_26 = arith.constant 255 : i32
    %76 = vector.broadcast %c255_i32_26 : i32 to vector<256x1xi32>
    %77 = arith.cmpi sle, %75, %76 : vector<256x1xi32>
    %78 = arith.andi %73, %77 : vector<256x1xi1>
    %c14_i32_27 = arith.constant 14 : i32
    %79 = vector.broadcast %c14_i32_27 : i32 to vector<256x1xi32>
    %80 = arith.cmpi sle, %0, %79 : vector<256x1xi32>
    %81 = arith.andi %78, %80 : vector<256x1xi1>
    %cst_28 = arith.constant 0.000000e+00 : f32
    %82 = vector.shape_cast %81 : vector<256x1xi1> to vector<256x1xi1>
    %83 = vector.broadcast %82 : vector<256x1xi1> to vector<256x32xi1>
    %84 = vector.broadcast %cst_28 : f32 to vector<256x32xf32>
    %85 = arith.select %83, %69, %84 : vector<256x32xi1>, vector<256x32xf32>
    %c241_i32 = arith.constant 241 : i32
    %86 = tpu.dynamic_rotate %2 by %c241_i32 dim 0 : vector<256x32xf32>, i32 -> vector<256x32xf32>
    %c16_i32_29 = arith.constant 16 : i32
    %87 = vector.broadcast %c16_i32_29 : i32 to vector<256x1xi32>
    %88 = arith.addi %3, %87 : vector<256x1xi32>
    %c0_i32_30 = arith.constant 0 : i32
    %89 = vector.broadcast %c0_i32_30 : i32 to vector<256x1xi32>
    %90 = arith.cmpi sge, %88, %89 : vector<256x1xi32>
    %c16_i32_31 = arith.constant 16 : i32
    %91 = vector.broadcast %c16_i32_31 : i32 to vector<256x1xi32>
    %92 = arith.addi %3, %91 : vector<256x1xi32>
    %c255_i32_32 = arith.constant 255 : i32
    %93 = vector.broadcast %c255_i32_32 : i32 to vector<256x1xi32>
    %94 = arith.cmpi sle, %92, %93 : vector<256x1xi32>
    %95 = arith.andi %90, %94 : vector<256x1xi1>
    %c1_i32_33 = arith.constant 1 : i32
    %96 = vector.broadcast %c1_i32_33 : i32 to vector<256x1xi32>
    %97 = arith.cmpi sge, %0, %96 : vector<256x1xi32>
    %98 = arith.andi %95, %97 : vector<256x1xi1>
    %cst_34 = arith.constant 0.000000e+00 : f32
    %99 = vector.shape_cast %98 : vector<256x1xi1> to vector<256x1xi1>
    %100 = vector.broadcast %99 : vector<256x1xi1> to vector<256x32xi1>
    %101 = vector.broadcast %cst_34 : f32 to vector<256x32xf32>
    %102 = arith.select %100, %86, %101 : vector<256x32xi1>, vector<256x32xf32>
    %c240_i32 = arith.constant 240 : i32
    %103 = tpu.dynamic_rotate %2 by %c240_i32 dim 0 : vector<256x32xf32>, i32 -> vector<256x32xf32>
    %c16_i32_35 = arith.constant 16 : i32
    %104 = vector.broadcast %c16_i32_35 : i32 to vector<256x1xi32>
    %105 = arith.addi %3, %104 : vector<256x1xi32>
    %c0_i32_36 = arith.constant 0 : i32
    %106 = vector.broadcast %c0_i32_36 : i32 to vector<256x1xi32>
    %107 = arith.cmpi sge, %105, %106 : vector<256x1xi32>
    %c16_i32_37 = arith.constant 16 : i32
    %108 = vector.broadcast %c16_i32_37 : i32 to vector<256x1xi32>
    %109 = arith.addi %3, %108 : vector<256x1xi32>
    %c255_i32_38 = arith.constant 255 : i32
    %110 = vector.broadcast %c255_i32_38 : i32 to vector<256x1xi32>
    %111 = arith.cmpi sle, %109, %110 : vector<256x1xi32>
    %112 = arith.andi %107, %111 : vector<256x1xi1>
    %cst_39 = arith.constant 0.000000e+00 : f32
    %113 = vector.shape_cast %112 : vector<256x1xi1> to vector<256x1xi1>
    %114 = vector.broadcast %113 : vector<256x1xi1> to vector<256x32xi1>
    %115 = vector.broadcast %cst_39 : f32 to vector<256x32xf32>
    %116 = arith.select %114, %103, %115 : vector<256x32xi1>, vector<256x32xf32>
    %c239_i32 = arith.constant 239 : i32
    %117 = tpu.dynamic_rotate %2 by %c239_i32 dim 0 : vector<256x32xf32>, i32 -> vector<256x32xf32>
    %c16_i32_40 = arith.constant 16 : i32
    %118 = vector.broadcast %c16_i32_40 : i32 to vector<256x1xi32>
    %119 = arith.addi %3, %118 : vector<256x1xi32>
    %c0_i32_41 = arith.constant 0 : i32
    %120 = vector.broadcast %c0_i32_41 : i32 to vector<256x1xi32>
    %121 = arith.cmpi sge, %119, %120 : vector<256x1xi32>
    %c16_i32_42 = arith.constant 16 : i32
    %122 = vector.broadcast %c16_i32_42 : i32 to vector<256x1xi32>
    %123 = arith.addi %3, %122 : vector<256x1xi32>
    %c255_i32_43 = arith.constant 255 : i32
    %124 = vector.broadcast %c255_i32_43 : i32 to vector<256x1xi32>
    %125 = arith.cmpi sle, %123, %124 : vector<256x1xi32>
    %126 = arith.andi %121, %125 : vector<256x1xi1>
    %c14_i32_44 = arith.constant 14 : i32
    %127 = vector.broadcast %c14_i32_44 : i32 to vector<256x1xi32>
    %128 = arith.cmpi sle, %0, %127 : vector<256x1xi32>
    %129 = arith.andi %126, %128 : vector<256x1xi1>
    %cst_45 = arith.constant 0.000000e+00 : f32
    %130 = vector.shape_cast %129 : vector<256x1xi1> to vector<256x1xi1>
    %131 = vector.broadcast %130 : vector<256x1xi1> to vector<256x32xi1>
    %132 = vector.broadcast %cst_45 : f32 to vector<256x32xf32>
    %133 = arith.select %131, %117, %132 : vector<256x32xi1>, vector<256x32xf32>
    %134 = tpu.concatenate %20, %34, %51, %68, %2, %85, %102, %116, %133 in 1 : vector<256x32xf32>, vector<256x32xf32>, vector<256x32xf32>, vector<256x32xf32>, vector<256x32xf32>, vector<256x32xf32>, vector<256x32xf32>, vector<256x32xf32>, vector<256x32xf32> -> vector<256x288xf32>
    %135 = arith.truncf %134 : vector<256x288xf32> to vector<256x288xbf16>
    %c0_46 = arith.constant 0 : index
    %c0_47 = arith.constant 0 : index
    %136 = vector.load %arg3[%c0_46, %c0_47] : memref<288x32xbf16, #tpu.memory_space<vmem>>, vector<288x32xbf16>
    %cst_48 = arith.constant dense<0.000000e+00> : vector<256x32xf32>
    %137 = tpu.matmul %135, %136, %cst_48 {dimension_numbers = #tpu.dot_dimension_numbers<[1], [0], [0], [1], [0, 0, 1, 1], [], []>} : vector<256x288xbf16>, vector<288x32xbf16>, vector<256x32xf32> -> vector<256x32xf32>
    %cst_49 = arith.constant dense<0.000000e+00> : vector<32xf32>
    %138 = vector.multi_reduction <add>, %137, %cst_49 [0] : vector<256x32xf32> to vector<32xf32>
    %139 = vector.shape_cast %138 : vector<32xf32> to vector<1x32xf32>
    %cst_50 = arith.constant 2.560000e+02 : f32
    %140 = vector.broadcast %cst_50 : f32 to vector<1x32xf32>
    %141 = arith.divf %139, %140 : vector<1x32xf32>
    %142 = vector.broadcast %141 : vector<1x32xf32> to vector<256x32xf32>
    %143 = arith.subf %137, %142 : vector<256x32xf32>
    %144 = arith.mulf %143, %143 : vector<256x32xf32>
    %cst_51 = arith.constant dense<0.000000e+00> : vector<32xf32>
    %145 = vector.multi_reduction <add>, %144, %cst_51 [0] : vector<256x32xf32> to vector<32xf32>
    %146 = vector.shape_cast %145 : vector<32xf32> to vector<1x32xf32>
    %cst_52 = arith.constant 2.560000e+02 : f32
    %147 = vector.broadcast %cst_52 : f32 to vector<1x32xf32>
    %148 = arith.divf %146, %147 : vector<1x32xf32>
    %149 = vector.broadcast %141 : vector<1x32xf32> to vector<256x32xf32>
    %150 = arith.subf %137, %149 : vector<256x32xf32>
    %cst_53 = arith.constant 9.99999974E-6 : f32
    %151 = vector.broadcast %cst_53 : f32 to vector<1x32xf32>
    %152 = arith.addf %148, %151 : vector<1x32xf32>
    %153 = math.rsqrt %152 : vector<1x32xf32>
    %154 = vector.broadcast %153 : vector<1x32xf32> to vector<256x32xf32>
    %155 = arith.mulf %150, %154 : vector<256x32xf32>
    %cst_54 = arith.constant 0.000000e+00 : f32
    %156 = vector.broadcast %cst_54 : f32 to vector<256x32xf32>
    %157 = arith.cmpf oge, %155, %156 : vector<256x32xf32>
    %cst_55 = arith.constant 0.00999999977 : f32
    %158 = vector.broadcast %cst_55 : f32 to vector<256x32xf32>
    %159 = arith.mulf %158, %155 : vector<256x32xf32>
    %160 = arith.select %157, %155, %159 : vector<256x32xi1>, vector<256x32xf32>
    %161 = tpu.iota {dimensions = array<i32: 0>} : vector<256x1xi32>
    %c17_i32_56 = arith.constant 17 : i32
    %162 = tpu.dynamic_rotate %160 by %c17_i32_56 dim 0 : vector<256x32xf32>, i32 -> vector<256x32xf32>
    %c-16_i32_57 = arith.constant -16 : i32
    %163 = vector.broadcast %c-16_i32_57 : i32 to vector<256x1xi32>
    %164 = arith.addi %161, %163 : vector<256x1xi32>
    %c0_i32_58 = arith.constant 0 : i32
    %165 = vector.broadcast %c0_i32_58 : i32 to vector<256x1xi32>
    %166 = arith.cmpi sge, %164, %165 : vector<256x1xi32>
    %c-16_i32_59 = arith.constant -16 : i32
    %167 = vector.broadcast %c-16_i32_59 : i32 to vector<256x1xi32>
    %168 = arith.addi %161, %167 : vector<256x1xi32>
    %c255_i32_60 = arith.constant 255 : i32
    %169 = vector.broadcast %c255_i32_60 : i32 to vector<256x1xi32>
    %170 = arith.cmpi sle, %168, %169 : vector<256x1xi32>
    %171 = arith.andi %166, %170 : vector<256x1xi1>
    %c1_i32_61 = arith.constant 1 : i32
    %172 = vector.broadcast %c1_i32_61 : i32 to vector<256x1xi32>
    %173 = arith.cmpi sge, %0, %172 : vector<256x1xi32>
    %174 = arith.andi %171, %173 : vector<256x1xi1>
    %cst_62 = arith.constant 0.000000e+00 : f32
    %175 = vector.shape_cast %174 : vector<256x1xi1> to vector<256x1xi1>
    %176 = vector.broadcast %175 : vector<256x1xi1> to vector<256x32xi1>
    %177 = vector.broadcast %cst_62 : f32 to vector<256x32xf32>
    %178 = arith.select %176, %162, %177 : vector<256x32xi1>, vector<256x32xf32>
    %c16_i32_63 = arith.constant 16 : i32
    %179 = tpu.dynamic_rotate %160 by %c16_i32_63 dim 0 : vector<256x32xf32>, i32 -> vector<256x32xf32>
    %c-16_i32_64 = arith.constant -16 : i32
    %180 = vector.broadcast %c-16_i32_64 : i32 to vector<256x1xi32>
    %181 = arith.addi %161, %180 : vector<256x1xi32>
    %c0_i32_65 = arith.constant 0 : i32
    %182 = vector.broadcast %c0_i32_65 : i32 to vector<256x1xi32>
    %183 = arith.cmpi sge, %181, %182 : vector<256x1xi32>
    %c-16_i32_66 = arith.constant -16 : i32
    %184 = vector.broadcast %c-16_i32_66 : i32 to vector<256x1xi32>
    %185 = arith.addi %161, %184 : vector<256x1xi32>
    %c255_i32_67 = arith.constant 255 : i32
    %186 = vector.broadcast %c255_i32_67 : i32 to vector<256x1xi32>
    %187 = arith.cmpi sle, %185, %186 : vector<256x1xi32>
    %188 = arith.andi %183, %187 : vector<256x1xi1>
    %cst_68 = arith.constant 0.000000e+00 : f32
    %189 = vector.shape_cast %188 : vector<256x1xi1> to vector<256x1xi1>
    %190 = vector.broadcast %189 : vector<256x1xi1> to vector<256x32xi1>
    %191 = vector.broadcast %cst_68 : f32 to vector<256x32xf32>
    %192 = arith.select %190, %179, %191 : vector<256x32xi1>, vector<256x32xf32>
    %c15_i32_69 = arith.constant 15 : i32
    %193 = tpu.dynamic_rotate %160 by %c15_i32_69 dim 0 : vector<256x32xf32>, i32 -> vector<256x32xf32>
    %c-16_i32_70 = arith.constant -16 : i32
    %194 = vector.broadcast %c-16_i32_70 : i32 to vector<256x1xi32>
    %195 = arith.addi %161, %194 : vector<256x1xi32>
    %c0_i32_71 = arith.constant 0 : i32
    %196 = vector.broadcast %c0_i32_71 : i32 to vector<256x1xi32>
    %197 = arith.cmpi sge, %195, %196 : vector<256x1xi32>
    %c-16_i32_72 = arith.constant -16 : i32
    %198 = vector.broadcast %c-16_i32_72 : i32 to vector<256x1xi32>
    %199 = arith.addi %161, %198 : vector<256x1xi32>
    %c255_i32_73 = arith.constant 255 : i32
    %200 = vector.broadcast %c255_i32_73 : i32 to vector<256x1xi32>
    %201 = arith.cmpi sle, %199, %200 : vector<256x1xi32>
    %202 = arith.andi %197, %201 : vector<256x1xi1>
    %c14_i32_74 = arith.constant 14 : i32
    %203 = vector.broadcast %c14_i32_74 : i32 to vector<256x1xi32>
    %204 = arith.cmpi sle, %0, %203 : vector<256x1xi32>
    %205 = arith.andi %202, %204 : vector<256x1xi1>
    %cst_75 = arith.constant 0.000000e+00 : f32
    %206 = vector.shape_cast %205 : vector<256x1xi1> to vector<256x1xi1>
    %207 = vector.broadcast %206 : vector<256x1xi1> to vector<256x32xi1>
    %208 = vector.broadcast %cst_75 : f32 to vector<256x32xf32>
    %209 = arith.select %207, %193, %208 : vector<256x32xi1>, vector<256x32xf32>
    %c1_i32_76 = arith.constant 1 : i32
    %210 = tpu.dynamic_rotate %160 by %c1_i32_76 dim 0 : vector<256x32xf32>, i32 -> vector<256x32xf32>
    %c0_i32_77 = arith.constant 0 : i32
    %211 = vector.broadcast %c0_i32_77 : i32 to vector<256x1xi32>
    %212 = arith.addi %161, %211 : vector<256x1xi32>
    %c0_i32_78 = arith.constant 0 : i32
    %213 = vector.broadcast %c0_i32_78 : i32 to vector<256x1xi32>
    %214 = arith.cmpi sge, %212, %213 : vector<256x1xi32>
    %c0_i32_79 = arith.constant 0 : i32
    %215 = vector.broadcast %c0_i32_79 : i32 to vector<256x1xi32>
    %216 = arith.addi %161, %215 : vector<256x1xi32>
    %c255_i32_80 = arith.constant 255 : i32
    %217 = vector.broadcast %c255_i32_80 : i32 to vector<256x1xi32>
    %218 = arith.cmpi sle, %216, %217 : vector<256x1xi32>
    %219 = arith.andi %214, %218 : vector<256x1xi1>
    %c1_i32_81 = arith.constant 1 : i32
    %220 = vector.broadcast %c1_i32_81 : i32 to vector<256x1xi32>
    %221 = arith.cmpi sge, %0, %220 : vector<256x1xi32>
    %222 = arith.andi %219, %221 : vector<256x1xi1>
    %cst_82 = arith.constant 0.000000e+00 : f32
    %223 = vector.shape_cast %222 : vector<256x1xi1> to vector<256x1xi1>
    %224 = vector.broadcast %223 : vector<256x1xi1> to vector<256x32xi1>
    %225 = vector.broadcast %cst_82 : f32 to vector<256x32xf32>
    %226 = arith.select %224, %210, %225 : vector<256x32xi1>, vector<256x32xf32>
    %c255_i32_83 = arith.constant 255 : i32
    %227 = tpu.dynamic_rotate %160 by %c255_i32_83 dim 0 : vector<256x32xf32>, i32 -> vector<256x32xf32>
    %c0_i32_84 = arith.constant 0 : i32
    %228 = vector.broadcast %c0_i32_84 : i32 to vector<256x1xi32>
    %229 = arith.addi %161, %228 : vector<256x1xi32>
    %c0_i32_85 = arith.constant 0 : i32
    %230 = vector.broadcast %c0_i32_85 : i32 to vector<256x1xi32>
    %231 = arith.cmpi sge, %229, %230 : vector<256x1xi32>
    %c0_i32_86 = arith.constant 0 : i32
    %232 = vector.broadcast %c0_i32_86 : i32 to vector<256x1xi32>
    %233 = arith.addi %161, %232 : vector<256x1xi32>
    %c255_i32_87 = arith.constant 255 : i32
    %234 = vector.broadcast %c255_i32_87 : i32 to vector<256x1xi32>
    %235 = arith.cmpi sle, %233, %234 : vector<256x1xi32>
    %236 = arith.andi %231, %235 : vector<256x1xi1>
    %c14_i32_88 = arith.constant 14 : i32
    %237 = vector.broadcast %c14_i32_88 : i32 to vector<256x1xi32>
    %238 = arith.cmpi sle, %0, %237 : vector<256x1xi32>
    %239 = arith.andi %236, %238 : vector<256x1xi1>
    %cst_89 = arith.constant 0.000000e+00 : f32
    %240 = vector.shape_cast %239 : vector<256x1xi1> to vector<256x1xi1>
    %241 = vector.broadcast %240 : vector<256x1xi1> to vector<256x32xi1>
    %242 = vector.broadcast %cst_89 : f32 to vector<256x32xf32>
    %243 = arith.select %241, %227, %242 : vector<256x32xi1>, vector<256x32xf32>
    %c241_i32_90 = arith.constant 241 : i32
    %244 = tpu.dynamic_rotate %160 by %c241_i32_90 dim 0 : vector<256x32xf32>, i32 -> vector<256x32xf32>
    %c16_i32_91 = arith.constant 16 : i32
    %245 = vector.broadcast %c16_i32_91 : i32 to vector<256x1xi32>
    %246 = arith.addi %161, %245 : vector<256x1xi32>
    %c0_i32_92 = arith.constant 0 : i32
    %247 = vector.broadcast %c0_i32_92 : i32 to vector<256x1xi32>
    %248 = arith.cmpi sge, %246, %247 : vector<256x1xi32>
    %c16_i32_93 = arith.constant 16 : i32
    %249 = vector.broadcast %c16_i32_93 : i32 to vector<256x1xi32>
    %250 = arith.addi %161, %249 : vector<256x1xi32>
    %c255_i32_94 = arith.constant 255 : i32
    %251 = vector.broadcast %c255_i32_94 : i32 to vector<256x1xi32>
    %252 = arith.cmpi sle, %250, %251 : vector<256x1xi32>
    %253 = arith.andi %248, %252 : vector<256x1xi1>
    %c1_i32_95 = arith.constant 1 : i32
    %254 = vector.broadcast %c1_i32_95 : i32 to vector<256x1xi32>
    %255 = arith.cmpi sge, %0, %254 : vector<256x1xi32>
    %256 = arith.andi %253, %255 : vector<256x1xi1>
    %cst_96 = arith.constant 0.000000e+00 : f32
    %257 = vector.shape_cast %256 : vector<256x1xi1> to vector<256x1xi1>
    %258 = vector.broadcast %257 : vector<256x1xi1> to vector<256x32xi1>
    %259 = vector.broadcast %cst_96 : f32 to vector<256x32xf32>
    %260 = arith.select %258, %244, %259 : vector<256x32xi1>, vector<256x32xf32>
    %c240_i32_97 = arith.constant 240 : i32
    %261 = tpu.dynamic_rotate %160 by %c240_i32_97 dim 0 : vector<256x32xf32>, i32 -> vector<256x32xf32>
    %c16_i32_98 = arith.constant 16 : i32
    %262 = vector.broadcast %c16_i32_98 : i32 to vector<256x1xi32>
    %263 = arith.addi %161, %262 : vector<256x1xi32>
    %c0_i32_99 = arith.constant 0 : i32
    %264 = vector.broadcast %c0_i32_99 : i32 to vector<256x1xi32>
    %265 = arith.cmpi sge, %263, %264 : vector<256x1xi32>
    %c16_i32_100 = arith.constant 16 : i32
    %266 = vector.broadcast %c16_i32_100 : i32 to vector<256x1xi32>
    %267 = arith.addi %161, %266 : vector<256x1xi32>
    %c255_i32_101 = arith.constant 255 : i32
    %268 = vector.broadcast %c255_i32_101 : i32 to vector<256x1xi32>
    %269 = arith.cmpi sle, %267, %268 : vector<256x1xi32>
    %270 = arith.andi %265, %269 : vector<256x1xi1>
    %cst_102 = arith.constant 0.000000e+00 : f32
    %271 = vector.shape_cast %270 : vector<256x1xi1> to vector<256x1xi1>
    %272 = vector.broadcast %271 : vector<256x1xi1> to vector<256x32xi1>
    %273 = vector.broadcast %cst_102 : f32 to vector<256x32xf32>
    %274 = arith.select %272, %261, %273 : vector<256x32xi1>, vector<256x32xf32>
    %c239_i32_103 = arith.constant 239 : i32
    %275 = tpu.dynamic_rotate %160 by %c239_i32_103 dim 0 : vector<256x32xf32>, i32 -> vector<256x32xf32>
    %c16_i32_104 = arith.constant 16 : i32
    %276 = vector.broadcast %c16_i32_104 : i32 to vector<256x1xi32>
    %277 = arith.addi %161, %276 : vector<256x1xi32>
    %c0_i32_105 = arith.constant 0 : i32
    %278 = vector.broadcast %c0_i32_105 : i32 to vector<256x1xi32>
    %279 = arith.cmpi sge, %277, %278 : vector<256x1xi32>
    %c16_i32_106 = arith.constant 16 : i32
    %280 = vector.broadcast %c16_i32_106 : i32 to vector<256x1xi32>
    %281 = arith.addi %161, %280 : vector<256x1xi32>
    %c255_i32_107 = arith.constant 255 : i32
    %282 = vector.broadcast %c255_i32_107 : i32 to vector<256x1xi32>
    %283 = arith.cmpi sle, %281, %282 : vector<256x1xi32>
    %284 = arith.andi %279, %283 : vector<256x1xi1>
    %c14_i32_108 = arith.constant 14 : i32
    %285 = vector.broadcast %c14_i32_108 : i32 to vector<256x1xi32>
    %286 = arith.cmpi sle, %0, %285 : vector<256x1xi32>
    %287 = arith.andi %284, %286 : vector<256x1xi1>
    %cst_109 = arith.constant 0.000000e+00 : f32
    %288 = vector.shape_cast %287 : vector<256x1xi1> to vector<256x1xi1>
    %289 = vector.broadcast %288 : vector<256x1xi1> to vector<256x32xi1>
    %290 = vector.broadcast %cst_109 : f32 to vector<256x32xf32>
    %291 = arith.select %289, %275, %290 : vector<256x32xi1>, vector<256x32xf32>
    %292 = tpu.concatenate %178, %192, %209, %226, %160, %243, %260, %274, %291 in 1 : vector<256x32xf32>, vector<256x32xf32>, vector<256x32xf32>, vector<256x32xf32>, vector<256x32xf32>, vector<256x32xf32>, vector<256x32xf32>, vector<256x32xf32>, vector<256x32xf32> -> vector<256x288xf32>
    %293 = arith.truncf %292 : vector<256x288xf32> to vector<256x288xbf16>
    %c0_110 = arith.constant 0 : index
    %c0_111 = arith.constant 0 : index
    %294 = vector.load %arg4[%c0_110, %c0_111] : memref<288x32xbf16, #tpu.memory_space<vmem>>, vector<288x32xbf16>
    %cst_112 = arith.constant dense<0.000000e+00> : vector<256x32xf32>
    %295 = tpu.matmul %293, %294, %cst_112 {dimension_numbers = #tpu.dot_dimension_numbers<[1], [0], [0], [1], [0, 0, 1, 1], [], []>} : vector<256x288xbf16>, vector<288x32xbf16>, vector<256x32xf32> -> vector<256x32xf32>
    %cst_113 = arith.constant dense<0.000000e+00> : vector<32xf32>
    %296 = vector.multi_reduction <add>, %295, %cst_113 [0] : vector<256x32xf32> to vector<32xf32>
    %297 = vector.shape_cast %296 : vector<32xf32> to vector<1x32xf32>
    %cst_114 = arith.constant 2.560000e+02 : f32
    %298 = vector.broadcast %cst_114 : f32 to vector<1x32xf32>
    %299 = arith.divf %297, %298 : vector<1x32xf32>
    %300 = vector.broadcast %299 : vector<1x32xf32> to vector<256x32xf32>
    %301 = arith.subf %295, %300 : vector<256x32xf32>
    %302 = arith.mulf %301, %301 : vector<256x32xf32>
    %cst_115 = arith.constant dense<0.000000e+00> : vector<32xf32>
    %303 = vector.multi_reduction <add>, %302, %cst_115 [0] : vector<256x32xf32> to vector<32xf32>
    %304 = vector.shape_cast %303 : vector<32xf32> to vector<1x32xf32>
    %cst_116 = arith.constant 2.560000e+02 : f32
    %305 = vector.broadcast %cst_116 : f32 to vector<1x32xf32>
    %306 = arith.divf %304, %305 : vector<1x32xf32>
    %307 = vector.broadcast %299 : vector<1x32xf32> to vector<256x32xf32>
    %308 = arith.subf %295, %307 : vector<256x32xf32>
    %cst_117 = arith.constant 9.99999974E-6 : f32
    %309 = vector.broadcast %cst_117 : f32 to vector<1x32xf32>
    %310 = arith.addf %306, %309 : vector<1x32xf32>
    %311 = math.rsqrt %310 : vector<1x32xf32>
    %312 = vector.broadcast %311 : vector<1x32xf32> to vector<256x32xf32>
    %313 = arith.mulf %308, %312 : vector<256x32xf32>
    %cst_118 = arith.constant dense<0.000000e+00> : vector<32xf32>
    %314 = vector.multi_reduction <add>, %313, %cst_118 [0] : vector<256x32xf32> to vector<32xf32>
    %315 = vector.shape_cast %314 : vector<32xf32> to vector<1x32xf32>
    %cst_119 = arith.constant 2.560000e+02 : f32
    %316 = vector.broadcast %cst_119 : f32 to vector<1x32xf32>
    %317 = arith.divf %315, %316 : vector<1x32xf32>
    %318 = arith.truncf %317 : vector<1x32xf32> to vector<1x32xbf16>
    %c0_120 = arith.constant 0 : index
    %c0_121 = arith.constant 0 : index
    %319 = vector.load %arg5[%c0_120, %c0_121] : memref<32x2xbf16, #tpu.memory_space<vmem>>, vector<32x2xbf16>
    %cst_122 = arith.constant dense<0.000000e+00> : vector<1x2xf32>
    %320 = tpu.matmul %318, %319, %cst_122 {dimension_numbers = #tpu.dot_dimension_numbers<[1], [0], [0], [1], [0, 0, 1, 1], [], []>} : vector<1x32xbf16>, vector<32x2xbf16>, vector<1x2xf32> -> vector<1x2xf32>
    %cst_123 = arith.constant 0.000000e+00 : f32
    %321 = vector.broadcast %cst_123 : f32 to vector<1x2xf32>
    %322 = arith.maximumf %320, %321 : vector<1x2xf32>
    %323 = arith.truncf %322 : vector<1x2xf32> to vector<1x2xbf16>
    %c0_124 = arith.constant 0 : index
    %c0_125 = arith.constant 0 : index
    %324 = vector.load %arg6[%c0_124, %c0_125] : memref<2x32xbf16, #tpu.memory_space<vmem>>, vector<2x32xbf16>
    %cst_126 = arith.constant dense<0.000000e+00> : vector<1x32xf32>
    %325 = tpu.matmul %323, %324, %cst_126 {dimension_numbers = #tpu.dot_dimension_numbers<[1], [0], [0], [1], [0, 0, 1, 1], [], []>} : vector<1x2xbf16>, vector<2x32xbf16>, vector<1x32xf32> -> vector<1x32xf32>
    %cst_127 = arith.constant 0.000000e+00 : f32
    %326 = vector.broadcast %cst_127 : f32 to vector<1x32xf32>
    %327 = arith.subf %326, %325 : vector<1x32xf32>
    %328 = math.exp %327 : vector<1x32xf32>
    %cst_128 = arith.constant 1.000000e+00 : f32
    %329 = vector.broadcast %cst_128 : f32 to vector<1x32xf32>
    %330 = arith.addf %329, %328 : vector<1x32xf32>
    %cst_129 = arith.constant 1.000000e+00 : f32
    %331 = vector.broadcast %cst_129 : f32 to vector<1x32xf32>
    %332 = arith.divf %331, %330 : vector<1x32xf32>
    %333 = vector.broadcast %332 : vector<1x32xf32> to vector<256x32xf32>
    %334 = arith.mulf %313, %333 : vector<256x32xf32>
    %335 = arith.addf %334, %2 : vector<256x32xf32>
    %cst_130 = arith.constant 0.000000e+00 : f32
    %336 = vector.broadcast %cst_130 : f32 to vector<256x32xf32>
    %337 = arith.cmpf oge, %335, %336 : vector<256x32xf32>
    %cst_131 = arith.constant 0.00999999977 : f32
    %338 = vector.broadcast %cst_131 : f32 to vector<256x32xf32>
    %339 = arith.mulf %338, %335 : vector<256x32xf32>
    %340 = arith.select %337, %335, %339 : vector<256x32xi1>, vector<256x32xf32>
    %c0_132 = arith.constant 0 : index
    %c0_133 = arith.constant 0 : index
    %c0_134 = arith.constant 0 : index
    %341 = vector.load %arg7[%c0_132, %c0_133, %c0_134] : memref<1x256x32xf32, #tpu.memory_space<vmem>>, vector<1x256x32xf32>
    %342 = vector.shape_cast %341 : vector<1x256x32xf32> to vector<256x32xf32>
    %343 = vector.shape_cast %340 : vector<256x32xf32> to vector<1x256x32xf32>
    tpu.vector_store %arg7[%c0_132, %c0_133, %c0_134], %343 {strides = array<i32>} : memref<1x256x32xf32, #tpu.memory_space<vmem>>, vector<1x256x32xf32>,
    return
  }
  func.func @transform_0(%arg0: i32) -> (i32, i32, i32) {
    %c0_i32 = arith.constant 0 : i32
    %c0_i32_0 = arith.constant 0 : i32
    %c0_i32_1 = arith.constant 0 : i32
    return %arg0, %c0_i32, %c0_i32_0 : i32, i32, i32
  }
  func.func @transform_1(%arg0: i32) -> (i32, i32) {
    %c0_i32 = arith.constant 0 : i32
    %c0_i32_0 = arith.constant 0 : i32
    %c0_i32_1 = arith.constant 0 : i32
    return %c0_i32, %c0_i32_0 : i32, i32
  }
  func.func @transform_2(%arg0: i32) -> (i32, i32) {
    %c0_i32 = arith.constant 0 : i32
    %c0_i32_0 = arith.constant 0 : i32
    %c0_i32_1 = arith.constant 0 : i32
    return %c0_i32, %c0_i32_0 : i32, i32
  }
  func.func @transform_3(%arg0: i32) -> (i32, i32) {
    %c0_i32 = arith.constant 0 : i32
    %c0_i32_0 = arith.constant 0 : i32
    %c0_i32_1 = arith.constant 0 : i32
    return %c0_i32, %c0_i32_0 : i32, i32
  }
  func.func @transform_4(%arg0: i32) -> (i32, i32) {
    %c0_i32 = arith.constant 0 : i32
    %c0_i32_0 = arith.constant 0 : i32
    %c0_i32_1 = arith.constant 0 : i32
    return %c0_i32, %c0_i32_0 : i32, i32
  }
  func.func @transform_5(%arg0: i32) -> (i32, i32) {
    %c0_i32 = arith.constant 0 : i32
    %c0_i32_0 = arith.constant 0 : i32
    %c0_i32_1 = arith.constant 0 : i32
    return %c0_i32, %c0_i32_0 : i32, i32
  }
  func.func @transform_6(%arg0: i32) -> (i32, i32, i32) {
    %c0_i32 = arith.constant 0 : i32
    %c0_i32_0 = arith.constant 0 : i32
    %c0_i32_1 = arith.constant 0 : i32
    return %arg0, %c0_i32, %c0_i32_0 : i32, i32, i32
  }
}

</mosaic_0001>

<llo_original>
// kernel: pre_up_block.4
$region0: #{pre_up_block.4}
  #allocation0 [shape = 'u32[]', space=smem, size = 0x4, offset = 0x4, fixed_abs, tag = 'smem constant byte address 0x4 - core index']
  #allocation1 [shape = 'u32[144,128]{1,0:T(1,128)}', space=vmem, size = 0x12000, scoped, tag = 'internal scratch']
  %s0 = inlined_call_operand.vmem [shape: f32[2,8,8,32], index: 0, kind: input, shape index: {}]
  %s1 = inlined_call_operand.vmem [shape: bf16[32,128], index: 1, kind: input, shape index: {}]
  %s2 = inlined_call_operand.vmem [shape: f32[2,16,8,64], index: 2, kind: output, shape index: {}]
  %s3 = sld [smem:[#allocation0]]
  $region41: #{pre_up_block.4} parent=0
    _
  %s5 = ssub.s32 1, %s3
  %s6 = scalar_select 0, %s5, %s3
  loop: start=0, step=1, limit=4
  $region2: #{pre_up_block.4} parent=0 // loop_pre_header
    _
  $region3: #{pre_up_block.4} parent=0 // loop_header
    %s8 = sphi 0, %s12
    %p9 = scmp.ge.s32.totalorder %s8, 4
    %s15 = sphi 0, %s27
    %s16 = sphi 0, %s23
    %s17 = sphi 0, %s15
    %s18 = sphi 0, %s16
    %s19 = sphi 0, %s17
    %s20 = sphi 0, %s18
    %s32 = sphi 0, %s34
    %s35 = sphi 0, %s32
    %s36 = sphi 0, %s35
    %s52 = sphi 0, %s36
    %s56 = sphi 0, %s56
    %s58 = sphi 0, %s56
    %s59 = sphi 0, %s58
    %s73 = sphi 0, %s59
    %s81 = sphi 0, %s83
    %s84 = sphi 0, %s81
    %s85 = sphi 0, %s84
    %s101 = sphi 0, %s85
  $region4: #{pre_up_block.4} parent=0 // loop_header_branch
    %11 = sbr.rel (%p9) target = $region8
  $region5: #{pre_up_block.4} parent=0 // loop_body
    %s13 = ssub.s32 %s8, 1
    %s14 = ssub.s32 %s8, 2
    %s21 = sadd.s32 1, %s16
    %p22 = scmp.ge.s32.totalorder %s21, 1
    %s23 = scalar_select %p22, 0, %s21
    %s24 = sadd.s32 1, %s15
    %s25 = scalar_select %p22, %s24, %s15
    %p26 = scmp.ge.s32.totalorder %s25, 2
    %s27 = scalar_select %p26, 0, %s25
    %s28 = ssub.s32 %s15, %s27
    %s29 = ssub.s32 %s16, %s23
    %s30 = sor.u32 %s28, %s29
    %p31 = scmp.eq.s32.totalorder %s30, 0
    %s33 = sadd.s32 %s32, 1
    %s34 = scalar_select %p31, %s32, %s33
    %p37 = pneg %p31
    %p38 = scmp.eq.s32.totalorder %s8, 1
    %p39 = por %p37, %p38
    %p40 = scmp.ne.s32.totalorder %s32, %s35
    %p41 = scmp.eq.s32.totalorder %s8, 0
    %p42 = por %p40, %p41
    %p43 = scmp.ne.s32.totalorder %s32, %s35
    %p44 = scmp.eq.s32.totalorder %s13, 1
    %p45 = por %p43, %p44
    %p46 = scmp.ne.s32.totalorder %s35, %s36
    %p47 = scmp.eq.s32.totalorder %s13, 0
    %p48 = por %p46, %p47
    %p49 = scmp.ne.s32.totalorder %s35, %s36
    %p50 = scmp.eq.s32.totalorder %s14, 1
    %p51 = por %p49, %p50
    %p53 = scmp.ne.s32.totalorder %s36, %s52
    %p54 = scmp.eq.s32.totalorder %s14, 0
    %p55 = por %p53, %p54
    %s57 = sadd.s32 %s56, 1
    %p60 = scmp.eq.s32.totalorder %s8, 1
    %p61 = scmp.ne.s32.totalorder %s56, %s58
    %p62 = scmp.eq.s32.totalorder %s8, 0
    %p63 = por %p61, %p62
    %p64 = scmp.ne.s32.totalorder %s56, %s58
    %p65 = scmp.eq.s32.totalorder %s13, 1
    %p66 = por %p64, %p65
    %p67 = scmp.ne.s32.totalorder %s58, %s59
    %p68 = scmp.eq.s32.totalorder %s13, 0
    %p69 = por %p67, %p68
    %p70 = scmp.ne.s32.totalorder %s58, %s59
    %p71 = scmp.eq.s32.totalorder %s14, 1
    %p72 = por %p70, %p71
    %p74 = scmp.ne.s32.totalorder %s59, %s73
    %p75 = scmp.eq.s32.totalorder %s14, 0
    %p76 = por %p74, %p75
    %s77 = ssub.s32 %s15, %s27
    %s78 = ssub.s32 %s16, %s23
    %s79 = sor.u32 %s77, %s78
    %p80 = scmp.eq.s32.totalorder %s79, 0
    %s82 = sadd.s32 %s81, 1
    %s83 = scalar_select %p80, %s81, %s82
    %p86 = pneg %p80
    %p87 = scmp.eq.s32.totalorder %s8, 1
    %p88 = por %p86, %p87
    %p89 = scmp.ne.s32.totalorder %s81, %s84
    %p90 = scmp.eq.s32.totalorder %s8, 0
    %p91 = por %p89, %p90
    %p92 = scmp.ne.s32.totalorder %s81, %s84
    %p93 = scmp.eq.s32.totalorder %s13, 1
    %p94 = por %p92, %p93
    %p95 = scmp.ne.s32.totalorder %s84, %s85
    %p96 = scmp.eq.s32.totalorder %s13, 0
    %p97 = por %p95, %p96
    %p98 = scmp.ne.s32.totalorder %s84, %s85
    %p99 = scmp.eq.s32.totalorder %s14, 1
    %p100 = por %p98, %p99
    %p102 = scmp.ne.s32.totalorder %s85, %s101
    %p103 = scmp.eq.s32.totalorder %s14, 0
    %p104 = por %p102, %p103
    %p105 = scmp.le.s32.totalorder 1, %s8
    %p106 = scmp.lt.s32.totalorder %s8, 3
    %p107 = pnand %p105, %p106
    %p108 = pneg %p107
    // Predicated region
    $region9: #{pre_up_block.4} parent=5 // pred_check
      _
    $region10: #{pre_up_block.4} parent=5 // pred_check_branch
      %110 = sbr.rel (%p107) target = $region12
    $region11: #{pre_up_block.4} parent=5 // pred_region
      %s111 = ssub.s32 %s8, 1
      // Predicated region
      $region13: #{pre_up_block.4} parent=11 // pred_check
        %p112 = pneg %p69
      $region14: #{pre_up_block.4} parent=11 // pred_check_branch
        %114 = sbr.rel (%p112) target = $region16
      $region15: #{pre_up_block.4} parent=11 // pred_region
        _
      $region16: #{pre_up_block.4} parent=11 // pred_fallthru
        _
    $region12: #{pre_up_block.4} parent=5 // pred_fallthru
      _
    %p115 = scmp.lt.s32.totalorder %s8, 2
    // Predicated region
    $region17: #{pre_up_block.4} parent=5 // pred_check
      %p116 = pneg %p115
    $region18: #{pre_up_block.4} parent=5 // pred_check_branch
      %118 = sbr.rel (%p116) target = $region20
    $region19: #{pre_up_block.4} parent=5 // pred_region
      // Predicated region
      $region21: #{pre_up_block.4} parent=19 // pred_check
        %p119 = pneg %p42
      $region22: #{pre_up_block.4} parent=19 // pred_check_branch
        %121 = sbr.rel (%p119) target = $region24
      $region23: #{pre_up_block.4} parent=19 // pred_region
        %s122 = smul.u32 8, %s16
        %p123 = scmp.lt.s32.totalorder %s15, 1
        %s124 = scalar_select %p123, %s15, 1
        %p125 = scmp.lt.s32.totalorder %s122, 7
        %s126 = scalar_select %p125, %s122, 7
        %s127 = smul.addr %s124, 8
        %s128 = sadd.s32 %s126, %s127
        %s129 = smul.addr %s128, 8
        %s130 = scalar_lea.vmem %s0, %s129
        %s131 = smul.u32 8, %s16
      $region24: #{pre_up_block.4} parent=19 // pred_fallthru
        _
    $region20: #{pre_up_block.4} parent=5 // pred_fallthru
      _
    %p132 = scmp.le.s32.totalorder 1, %s8
    %p133 = scmp.lt.s32.totalorder %s8, 3
    %p134 = pnand %p132, %p133
    %p135 = pneg %p134
    // Predicated region
    $region25: #{pre_up_block.4} parent=5 // pred_check
      _
    $region26: #{pre_up_block.4} parent=5 // pred_check_branch
      %137 = sbr.rel (%p134) target = $region28
    $region27: #{pre_up_block.4} parent=5 // pred_region
      %s138 = ssub.s32 %s8, 1
      %s139 = smul.u32 8, %s18
      %p140 = scmp.lt.s32.totalorder %s17, 1
      %s141 = scalar_select %p140, %s17, 1
      %p142 = scmp.lt.s32.totalorder %s139, 7
      %s143 = scalar_select %p142, %s139, 7
      %s144 = smul.addr %s141, 8
      %s145 = sadd.s32 %s143, %s144
      %s146 = smul.addr %s145, 8
      %s147 = scalar_lea.vmem %s0, %s146
      %p148 = pneg %p48
      %p149 = pneg %p45
      %p150 = pneg %p69
      %p151 = pneg %p66
      %p152 = pneg %p97
      %p153 = pneg %p94
      %s154 = smul.u32 16, %s18
      %p155 = scmp.lt.s32.totalorder %s17, 1
      %s156 = scalar_select %p155, %s17, 1
      %p157 = scmp.lt.s32.totalorder %s154, 15
      %s158 = scalar_select %p157, %s154, 15
      %s159 = smul.addr %s156, 16
      %s160 = sadd.s32 %s158, %s159
      %s161 = smul.addr %s160, 8
      %s162 = scalar_lea.vmem %s2, %s161
      %s163 = smul.u32 8, %s18
      %p164 = scmp.lt.s32.totalorder %s17, 1
      %s165 = scalar_select %p164, %s17, 1
      %p166 = scmp.lt.s32.totalorder %s163, 7
      %s167 = scalar_select %p166, %s163, 7
      %s168 = smul.addr %s165, 8
      %s169 = sadd.s32 %s167, %s168
      %s170 = smul.addr %s169, 8
      %s171 = scalar_lea.vmem %s0, %s170
      %s172 = smul.u32 8, %s18
      %s173 = smul.u32 16, %s18
      %p174 = scmp.lt.s32.totalorder %s17, 1
      %s175 = scalar_select %p174, %s17, 1
      %p176 = scmp.lt.s32.totalorder %s173, 15
      %s177 = scalar_select %p176, %s173, 15
      %s178 = smul.addr %s175, 16
      %s179 = sadd.s32 %s177, %s178
      %s180 = smul.addr %s179, 8
      %s181 = scalar_lea.vmem %s2, %s180
      %s182 = smul.u32 16, %s18
      %v184 = vld [vmem:[%s171] sm:$0xff]
      %v185 = vld [vmem:[%s171 + $0x8] sm:$0xff]
      %v186 = vld [vmem:[%s171 + $0x10] sm:$0xff]
      %v187 = vld [vmem:[%s171 + $0x18] sm:$0xff]
      %v188 = vld [vmem:[%s171 + $0x20] sm:$0xff]
      %v189 = vld [vmem:[%s171 + $0x28] sm:$0xff]
      %v190 = vld [vmem:[%s171 + $0x30] sm:$0xff]
      %v191 = vld [vmem:[%s171 + $0x38] sm:$0xff]
      %v192 = vpack.c.bf16 %v185, %v184
      %v193 = vpack.c.bf16 %v187, %v186
      %v194 = vpack.c.bf16 %v189, %v188
      %v195 = vpack.c.bf16 %v191, %v190
      %v196 = vld [vmem:[%s1] sm:$0xf]
      %v197 = vld [vmem:[%s1 + $0x4] sm:$0xf]
      %v198 = vld [vmem:[%s1 + $0x8] sm:$0xf]
      %v199 = vld [vmem:[%s1 + $0xc] sm:$0xf]
      %v204 = vunpack.c.l.b16 %v196
      %v205 = vunpack.c.l.b16 %v197
      %v206 = vunpack.c.l.b16 %v198
      %v207 = vunpack.c.l.b16 %v199
      %v208 = vpack.c.b16 %v205, %v204
      %v209 = vpack.c.b16 %v207, %v206
      %vm212 = vcmask 261120
      %v214 = vsel %vm212, %v192, 0
      %v217 = vsel %vm212, %v193, 0
      %v220 = vsel %vm212, %v194, 0
      %v223 = vsel %vm212, %v195, 0
      %225 = vmatprep.subr.bf16.mxu0 0
      %226 = vmatpush1.bf16.msra.mxu0 %v208
      %227 = vmatprep.subr.bf16.mxu0 0
      %228 = vmatpush1.bf16.msra.mxu0 %v209
      %229 = vmatprep.subr.bf16.mxu0 0
      %230 = vmatpush1.bf16.msra.mxu0 0
      %231 = vmatprep.subr.bf16.mxu0 0
      %232 = vmatpush1.bf16.msra.mxu0 0
      %233 = vmatprep.subr.bf16.mxu0 0
      %234 = vmatpush1.bf16.msra.mxu0 0
      %235 = vmatprep.subr.bf16.mxu0 0
      %236 = vmatpush1.bf16.msra.mxu0 0
      %237 = vmatprep.subr.bf16.mxu0 0
      %238 = vmatpush1.bf16.msra.mxu0 0
      %239 = vmatprep.subr.bf16.mxu0 0
      %240 = vmatpush1.bf16.msra.mxu0 0
      %241 = vmatprep.subr.bf16.mxu0 0
      %242 = vmatpush1.bf16.msra.mxu0 0
      %243 = vmatprep.subr.bf16.mxu0 0
      %244 = vmatpush1.bf16.msra.mxu0 0
      %245 = vmatprep.subr.bf16.mxu0 0
      %246 = vmatpush1.bf16.msra.mxu0 0
      %247 = vmatprep.subr.bf16.mxu0 0
      %248 = vmatpush1.bf16.msra.mxu0 0
      %249 = vmatprep.subr.bf16.mxu0 0
      %250 = vmatpush1.bf16.msra.mxu0 0
      %251 = vmatprep.subr.bf16.mxu0 0
      %252 = vmatpush1.bf16.msra.mxu0 0
      %253 = vmatprep.subr.bf16.mxu0 0
      %254 = vmatpush1.bf16.msra.mxu0 0
      %255 = vmatprep.subr.bf16.mxu0 0
      %256 = vmatpush1.bf16.msra.mxu0 0
      %257 = vmatprep.mubr.bf16.mxu0 0
      %258 = vmatmul.mubr.bf16.gmra.mrb[0].mxu0 %v214
      %v259 = vpop.f32.mrb[0].mxu0
      %v260 = vadd.f32 0.0, %v259
      %v261 = vpop.f32.mrb[0].mxu0
      %v262 = vpop.f32.mrb[0].mxu0
      %v263 = vadd.f32 0.0, %v262
      %v264 = vpop.f32.mrb[0].mxu0
      %265 = vmatprep.mubr.bf16.mxu0 0
      %266 = vmatmul.mubr.bf16.gmra.mrb[0].mxu0 %v217
      %v267 = vpop.f32.mrb[0].mxu0
      %v268 = vadd.f32 0.0, %v267
      %v269 = vpop.f32.mrb[0].mxu0
      %v270 = vpop.f32.mrb[0].mxu0
      %v271 = vadd.f32 0.0, %v270
      %v272 = vpop.f32.mrb[0].mxu0
      %273 = vmatprep.mubr.bf16.mxu0 0
      %274 = vmatmul.mubr.bf16.gmra.mrb[0].mxu0 %v220
      %v275 = vpop.f32.mrb[0].mxu0
      %v276 = vadd.f32 0.0, %v275
      %v277 = vpop.f32.mrb[0].mxu0
      %v278 = vpop.f32.mrb[0].mxu0
      %v279 = vadd.f32 0.0, %v278
      %v280 = vpop.f32.mrb[0].mxu0
      %281 = vmatprep.mubr.bf16.mxu0 0
      %282 = vmatmul.mubr.bf16.gmra.mrb[0].mxu0 %v223
      %v283 = vpop.f32.mrb[0].mxu0
      %v284 = vadd.f32 0.0, %v283
      %v285 = vpop.f32.mrb[0].mxu0
      %v286 = vpop.f32.mrb[0].mxu0
      %v287 = vadd.f32 0.0, %v286
      %v288 = vpop.f32.mrb[0].mxu0
      %289 = vdwg.mxu0
      %vm290 = vcmask 523264
      %291 = vst.msk [vmem:[%s181] sm:$0xff] %vm290, %v260
      %293 = vrot.lane.b32.xlu0 %v260, 64
      %v294 = vpop.permute.xlu0 %293
      %s296 = scalar_lea.vmem %s181, 8
      %297 = vst.msk [vmem:[%s296] sm:$0xff] %vm290, %v294
      %s298 = scalar_lea.vmem %s181, 16
      %299 = vst.msk [vmem:[%s298] sm:$0xff] %vm290, %v263
      %301 = vrot.lane.b32.xlu0 %v263, 64
      %v302 = vpop.permute.xlu0 %301
      %s304 = scalar_lea.vmem %s181, 24
      %305 = vst.msk [vmem:[%s304] sm:$0xff] %vm290, %v302
      %s306 = scalar_lea.vmem %s181, 32
      %307 = vst.msk [vmem:[%s306] sm:$0xff] %vm290, %v268
      %309 = vrot.lane.b32.xlu0 %v268, 64
      %v310 = vpop.permute.xlu0 %309
      %s312 = scalar_lea.vmem %s181, 40
      %313 = vst.msk [vmem:[%s312] sm:$0xff] %vm290, %v310
      %s314 = scalar_lea.vmem %s181, 48
      %315 = vst.msk [vmem:[%s314] sm:$0xff] %vm290, %v271
      %317 = vrot.lane.b32.xlu0 %v271, 64
      %v318 = vpop.permute.xlu0 %317
      %s320 = scalar_lea.vmem %s181, 56
      %321 = vst.msk [vmem:[%s320] sm:$0xff] %vm290, %v318
      %s322 = scalar_lea.vmem %s181, 64
      %323 = vst.msk [vmem:[%s322] sm:$0xff] %vm290, %v276
      %325 = vrot.lane.b32.xlu0 %v276, 64
      %v326 = vpop.permute.xlu0 %325
      %s328 = scalar_lea.vmem %s181, 72
      %329 = vst.msk [vmem:[%s328] sm:$0xff] %vm290, %v326
      %s330 = scalar_lea.vmem %s181, 80
      %331 = vst.msk [vmem:[%s330] sm:$0xff] %vm290, %v279
      %333 = vrot.lane.b32.xlu0 %v279, 64
      %v334 = vpop.permute.xlu0 %333
      %s336 = scalar_lea.vmem %s181, 88
      %337 = vst.msk [vmem:[%s336] sm:$0xff] %vm290, %v334
      %s338 = scalar_lea.vmem %s181, 96
      %339 = vst.msk [vmem:[%s338] sm:$0xff] %vm290, %v284
      %341 = vrot.lane.b32.xlu0 %v284, 64
      %v342 = vpop.permute.xlu0 %341
      %s344 = scalar_lea.vmem %s181, 104
      %345 = vst.msk [vmem:[%s344] sm:$0xff] %vm290, %v342
      %s346 = scalar_lea.vmem %s181, 112
      %347 = vst.msk [vmem:[%s346] sm:$0xff] %vm290, %v287
      %349 = vrot.lane.b32.xlu0 %v287, 64
      %v350 = vpop.permute.xlu0 %349
      %s352 = scalar_lea.vmem %s181, 120
      %353 = vst.msk [vmem:[%s352] sm:$0xff] %vm290, %v350
      %s354 = smul.u32 16, %s18
      %p355 = scmp.lt.s32.totalorder %s17, 1
      %s356 = scalar_select %p355, %s17, 1
      %p357 = scmp.lt.s32.totalorder %s354, 15
      %s358 = scalar_select %p357, %s354, 15
      %s359 = smul.addr %s356, 16
      %s360 = sadd.s32 %s358, %s359
      %s361 = smul.addr %s360, 8
      %s362 = scalar_lea.vmem %s2, %s361
      // Predicated region
      $region29: #{pre_up_block.4} parent=27 // pred_check
        %p363 = pneg %p94
      $region30: #{pre_up_block.4} parent=27 // pred_check_branch
        %365 = sbr.rel (%p363) target = $region32
      $region31: #{pre_up_block.4} parent=27 // pred_region
        %s366 = smul.u32 16, %s18
      $region32: #{pre_up_block.4} parent=27 // pred_fallthru
        _
    $region28: #{pre_up_block.4} parent=5 // pred_fallthru
      _
    %p367 = scmp.le.s32.totalorder 2, %s8
    // Predicated region
    $region33: #{pre_up_block.4} parent=5 // pred_check
      %p368 = pneg %p367
    $region34: #{pre_up_block.4} parent=5 // pred_check_branch
      %370 = sbr.rel (%p368) target = $region36
    $region35: #{pre_up_block.4} parent=5 // pred_region
      %s371 = ssub.s32 %s8, 2
      // Predicated region
      $region37: #{pre_up_block.4} parent=35 // pred_check
        %p372 = pneg %p100
      $region38: #{pre_up_block.4} parent=35 // pred_check_branch
        %374 = sbr.rel (%p372) target = $region40
      $region39: #{pre_up_block.4} parent=35 // pred_region
        %s375 = smul.u32 16, %s20
        %p376 = scmp.lt.s32.totalorder %s19, 1
        %s377 = scalar_select %p376, %s19, 1
        %p378 = scmp.lt.s32.totalorder %s375, 15
        %s379 = scalar_select %p378, %s375, 15
        %s380 = smul.addr %s377, 16
        %s381 = sadd.s32 %s379, %s380
        %s382 = smul.addr %s381, 8
        %s383 = scalar_lea.vmem %s2, %s382
      $region40: #{pre_up_block.4} parent=35 // pred_fallthru
        _
    $region36: #{pre_up_block.4} parent=5 // pred_fallthru
      _
  $region6: #{pre_up_block.4} parent=0 // loop_footer
    %s12 = sadd.s32 1, %s8
  $region7: #{pre_up_block.4} parent=0 // loop_footer_branch
    %7 = sbr.rel target = $region3
  $region8: #{pre_up_block.4} parent=0 // loop_exit
    _

// kernel: pre_up_block.3
$region0: #{pre_up_block.3}
  #allocation0 [shape = 'u32[]', space=smem, size = 0x4, offset = 0x4, fixed_abs, tag = 'smem constant byte address 0x4 - core index']
  #allocation1 [shape = 'u32[144,128]{1,0:T(1,128)}', space=vmem, size = 0x12000, scoped, tag = 'internal scratch']
  %s0 = inlined_call_operand.vmem [shape: f32[2,64,16], index: 0, kind: input, shape index: {}]
  %s1 = inlined_call_operand.vmem [shape: s32[64,1], index: 1, kind: input, shape index: {}]
  %s2 = inlined_call_operand.vmem [shape: bf16[144,32], index: 2, kind: input, shape index: {}]
  %s3 = inlined_call_operand.vmem [shape: bf16[288,32], index: 3, kind: input, shape index: {}]
  %s4 = inlined_call_operand.vmem [shape: bf16[32,2], index: 4, kind: input, shape index: {}]
  %s5 = inlined_call_operand.vmem [shape: bf16[2,32], index: 5, kind: input, shape index: {}]
  %s6 = inlined_call_operand.vmem [shape: bf16[16,32], index: 6, kind: input, shape index: {}]
  %s7 = inlined_call_operand.vmem [shape: f32[2,64,32], index: 7, kind: output, shape index: {}]
  %s8 = sld [smem:[#allocation0]]
  $region61: #{pre_up_block.3} parent=0
    _
  %s10 = ssub.s32 1, %s8
  %s11 = scalar_select 0, %s10, %s8
  loop: start=0, step=1, limit=4
  $region2: #{pre_up_block.3} parent=0 // loop_pre_header
    _
  $region3: #{pre_up_block.3} parent=0 // loop_header
    %s13 = sphi 0, %s17
    %p14 = scmp.ge.s32.totalorder %s13, 4
    %s23 = sphi 0, %s25
    %s26 = sphi 0, %s23
    %s27 = sphi 0, %s26
    %s43 = sphi 0, %s27
    %s47 = sphi 0, %s47
    %s49 = sphi 0, %s47
    %s50 = sphi 0, %s49
    %s64 = sphi 0, %s50
    %s68 = sphi 0, %s68
    %s70 = sphi 0, %s68
    %s71 = sphi 0, %s70
    %s85 = sphi 0, %s71
    %s89 = sphi 0, %s89
    %s91 = sphi 0, %s89
    %s92 = sphi 0, %s91
    %s106 = sphi 0, %s92
    %s110 = sphi 0, %s110
    %s112 = sphi 0, %s110
    %s113 = sphi 0, %s112
    %s127 = sphi 0, %s113
    %s131 = sphi 0, %s131
    %s133 = sphi 0, %s131
    %s134 = sphi 0, %s133
    %s148 = sphi 0, %s134
    %s152 = sphi 0, %s152
    %s154 = sphi 0, %s152
    %s155 = sphi 0, %s154
    %s169 = sphi 0, %s155
    %s175 = sphi 0, %s177
    %s178 = sphi 0, %s175
    %s179 = sphi 0, %s178
    %s195 = sphi 0, %s179
  $region4: #{pre_up_block.3} parent=0 // loop_header_branch
    %16 = sbr.rel (%p14) target = $region8
  $region5: #{pre_up_block.3} parent=0 // loop_body
    %s18 = ssub.s32 %s13, 1
    %s19 = ssub.s32 %s13, 2
    %s20 = sadd.s32 %s13, 1
    %s21 = ssub.s32 %s13, %s20
    %p22 = scmp.eq.s32.totalorder %s21, 0
    %s24 = sadd.s32 %s23, 1
    %s25 = scalar_select %p22, %s23, %s24
    %p28 = pneg %p22
    %p29 = scmp.eq.s32.totalorder %s13, 1
    %p30 = por %p28, %p29
    %p31 = scmp.ne.s32.totalorder %s23, %s26
    %p32 = scmp.eq.s32.totalorder %s13, 0
    %p33 = por %p31, %p32
    %p34 = scmp.ne.s32.totalorder %s23, %s26
    %p35 = scmp.eq.s32.totalorder %s18, 1
    %p36 = por %p34, %p35
    %p37 = scmp.ne.s32.totalorder %s26, %s27
    %p38 = scmp.eq.s32.totalorder %s18, 0
    %p39 = por %p37, %p38
    %p40 = scmp.ne.s32.totalorder %s26, %s27
    %p41 = scmp.eq.s32.totalorder %s19, 1
    %p42 = por %p40, %p41
    %p44 = scmp.ne.s32.totalorder %s27, %s43
    %p45 = scmp.eq.s32.totalorder %s19, 0
    %p46 = por %p44, %p45
    %s48 = sadd.s32 %s47, 1
    %p51 = scmp.eq.s32.totalorder %s13, 1
    %p52 = scmp.ne.s32.totalorder %s47, %s49
    %p53 = scmp.eq.s32.totalorder %s13, 0
    %p54 = por %p52, %p53
    %p55 = scmp.ne.s32.totalorder %s47, %s49
    %p56 = scmp.eq.s32.totalorder %s18, 1
    %p57 = por %p55, %p56
    %p58 = scmp.ne.s32.totalorder %s49, %s50
    %p59 = scmp.eq.s32.totalorder %s18, 0
    %p60 = por %p58, %p59
    %p61 = scmp.ne.s32.totalorder %s49, %s50
    %p62 = scmp.eq.s32.totalorder %s19, 1
    %p63 = por %p61, %p62
    %p65 = scmp.ne.s32.totalorder %s50, %s64
    %p66 = scmp.eq.s32.totalorder %s19, 0
    %p67 = por %p65, %p66
    %s69 = sadd.s32 %s68, 1
    %p72 = scmp.eq.s32.totalorder %s13, 1
    %p73 = scmp.ne.s32.totalorder %s68, %s70
    %p74 = scmp.eq.s32.totalorder %s13, 0
    %p75 = por %p73, %p74
    %p76 = scmp.ne.s32.totalorder %s68, %s70
    %p77 = scmp.eq.s32.totalorder %s18, 1
    %p78 = por %p76, %p77
    %p79 = scmp.ne.s32.totalorder %s70, %s71
    %p80 = scmp.eq.s32.totalorder %s18, 0
    %p81 = por %p79, %p80
    %p82 = scmp.ne.s32.totalorder %s70, %s71
    %p83 = scmp.eq.s32.totalorder %s19, 1
    %p84 = por %p82, %p83
    %p86 = scmp.ne.s32.totalorder %s71, %s85
    %p87 = scmp.eq.s32.totalorder %s19, 0
    %p88 = por %p86, %p87
    %s90 = sadd.s32 %s89, 1
    %p93 = scmp.eq.s32.totalorder %s13, 1
    %p94 = scmp.ne.s32.totalorder %s89, %s91
    %p95 = scmp.eq.s32.totalorder %s13, 0
    %p96 = por %p94, %p95
    %p97 = scmp.ne.s32.totalorder %s89, %s91
    %p98 = scmp.eq.s32.totalorder %s18, 1
    %p99 = por %p97, %p98
    %p100 = scmp.ne.s32.totalorder %s91, %s92
    %p101 = scmp.eq.s32.totalorder %s18, 0
    %p102 = por %p100, %p101
    %p103 = scmp.ne.s32.totalorder %s91, %s92
    %p104 = scmp.eq.s32.totalorder %s19, 1
    %p105 = por %p103, %p104
    %p107 = scmp.ne.s32.totalorder %s92, %s106
    %p108 = scmp.eq.s32.totalorder %s19, 0
    %p109 = por %p107, %p108
    %s111 = sadd.s32 %s110, 1
    %p114 = scmp.eq.s32.totalorder %s13, 1
    %p115 = scmp.ne.s32.totalorder %s110, %s112
    %p116 = scmp.eq.s32.totalorder %s13, 0
    %p117 = por %p115, %p116
    %p118 = scmp.ne.s32.totalorder %s110, %s112
    %p119 = scmp.eq.s32.totalorder %s18, 1
    %p120 = por %p118, %p119
    %p121 = scmp.ne.s32.totalorder %s112, %s113
    %p122 = scmp.eq.s32.totalorder %s18, 0
    %p123 = por %p121, %p122
    %p124 = scmp.ne.s32.totalorder %s112, %s113
    %p125 = scmp.eq.s32.totalorder %s19, 1
    %p126 = por %p124, %p125
    %p128 = scmp.ne.s32.totalorder %s113, %s127
    %p129 = scmp.eq.s32.totalorder %s19, 0
    %p130 = por %p128, %p129
    %s132 = sadd.s32 %s131, 1
    %p135 = scmp.eq.s32.totalorder %s13, 1
    %p136 = scmp.ne.s32.totalorder %s131, %s133
    %p137 = scmp.eq.s32.totalorder %s13, 0
    %p138 = por %p136, %p137
    %p139 = scmp.ne.s32.totalorder %s131, %s133
    %p140 = scmp.eq.s32.totalorder %s18, 1
    %p141 = por %p139, %p140
    %p142 = scmp.ne.s32.totalorder %s133, %s134
    %p143 = scmp.eq.s32.totalorder %s18, 0
    %p144 = por %p142, %p143
    %p145 = scmp.ne.s32.totalorder %s133, %s134
    %p146 = scmp.eq.s32.totalorder %s19, 1
    %p147 = por %p145, %p146
    %p149 = scmp.ne.s32.totalorder %s134, %s148
    %p150 = scmp.eq.s32.totalorder %s19, 0
    %p151 = por %p149, %p150
    %s153 = sadd.s32 %s152, 1
    %p156 = scmp.eq.s32.totalorder %s13, 1
    %p157 = scmp.ne.s32.totalorder %s152, %s154
    %p158 = scmp.eq.s32.totalorder %s13, 0
    %p159 = por %p157, %p158
    %p160 = scmp.ne.s32.totalorder %s152, %s154
    %p161 = scmp.eq.s32.totalorder %s18, 1
    %p162 = por %p160, %p161
    %p163 = scmp.ne.s32.totalorder %s154, %s155
    %p164 = scmp.eq.s32.totalorder %s18, 0
    %p165 = por %p163, %p164
    %p166 = scmp.ne.s32.totalorder %s154, %s155
    %p167 = scmp.eq.s32.totalorder %s19, 1
    %p168 = por %p166, %p167
    %p170 = scmp.ne.s32.totalorder %s155, %s169
    %p171 = scmp.eq.s32.totalorder %s19, 0
    %p172 = por %p170, %p171
    %s173 = ssub.s32 %s13, %s20
    %p174 = scmp.eq.s32.totalorder %s173, 0
    %s176 = sadd.s32 %s175, 1
    %s177 = scalar_select %p174, %s175, %s176
    %p180 = pneg %p174
    %p181 = scmp.eq.s32.totalorder %s13, 1
    %p182 = por %p180, %p181
    %p183 = scmp.ne.s32.totalorder %s175, %s178
    %p184 = scmp.eq.s32.totalorder %s13, 0
    %p185 = por %p183, %p184
    %p186 = scmp.ne.s32.totalorder %s175, %s178
    %p187 = scmp.eq.s32.totalorder %s18, 1
    %p188 = por %p186, %p187
    %p189 = scmp.ne.s32.totalorder %s178, %s179
    %p190 = scmp.eq.s32.totalorder %s18, 0
    %p191 = por %p189, %p190
    %p192 = scmp.ne.s32.totalorder %s178, %s179
    %p193 = scmp.eq.s32.totalorder %s19, 1
    %p194 = por %p192, %p193
    %p196 = scmp.ne.s32.totalorder %s179, %s195
    %p197 = scmp.eq.s32.totalorder %s19, 0
    %p198 = por %p196, %p197
    %p199 = scmp.le.s32.totalorder 1, %s13
    %p200 = scmp.lt.s32.totalorder %s13, 3
    %p201 = pnand %p199, %p200
    %p202 = pneg %p201
    // Predicated region
    $region9: #{pre_up_block.3} parent=5 // pred_check
      _
    $region10: #{pre_up_block.3} parent=5 // pred_check_branch
      %204 = sbr.rel (%p201) target = $region12
    $region11: #{pre_up_block.3} parent=5 // pred_region
      %s205 = ssub.s32 %s13, 1
      // Predicated region
      $region13: #{pre_up_block.3} parent=11 // pred_check
        %p206 = pneg %p60
      $region14: #{pre_up_block.3} parent=11 // pred_check_branch
        %208 = sbr.rel (%p206) target = $region16
      $region15: #{pre_up_block.3} parent=11 // pred_region
        _
      $region16: #{pre_up_block.3} parent=11 // pred_fallthru
        _
      // Predicated region
      $region17: #{pre_up_block.3} parent=11 // pred_check
        %p209 = pneg %p81
      $region18: #{pre_up_block.3} parent=11 // pred_check_branch
        %211 = sbr.rel (%p209) target = $region20
      $region19: #{pre_up_block.3} parent=11 // pred_region
        _
      $region20: #{pre_up_block.3} parent=11 // pred_fallthru
        _
      // Predicated region
      $region21: #{pre_up_block.3} parent=11 // pred_check
        %p212 = pneg %p102
      $region22: #{pre_up_block.3} parent=11 // pred_check_branch
        %214 = sbr.rel (%p212) target = $region24
      $region23: #{pre_up_block.3} parent=11 // pred_region
        _
      $region24: #{pre_up_block.3} parent=11 // pred_fallthru
        _
      // Predicated region
      $region25: #{pre_up_block.3} parent=11 // pred_check
        %p215 = pneg %p123
      $region26: #{pre_up_block.3} parent=11 // pred_check_branch
        %217 = sbr.rel (%p215) target = $region28
      $region27: #{pre_up_block.3} parent=11 // pred_region
        _
      $region28: #{pre_up_block.3} parent=11 // pred_fallthru
        _
      // Predicated region
      $region29: #{pre_up_block.3} parent=11 // pred_check
        %p218 = pneg %p144
      $region30: #{pre_up_block.3} parent=11 // pred_check_branch
        %220 = sbr.rel (%p218) target = $region32
      $region31: #{pre_up_block.3} parent=11 // pred_region
        _
      $region32: #{pre_up_block.3} parent=11 // pred_fallthru
        _
      // Predicated region
      $region33: #{pre_up_block.3} parent=11 // pred_check
        %p221 = pneg %p165
      $region34: #{pre_up_block.3} parent=11 // pred_check_branch
        %223 = sbr.rel (%p221) target = $region36
      $region35: #{pre_up_block.3} parent=11 // pred_region
        _
      $region36: #{pre_up_block.3} parent=11 // pred_fallthru
        _
    $region12: #{pre_up_block.3} parent=5 // pred_fallthru
      _
    %p224 = scmp.lt.s32.totalorder %s13, 2
    // Predicated region
    $region37: #{pre_up_block.3} parent=5 // pred_check
      %p225 = pneg %p224
    $region38: #{pre_up_block.3} parent=5 // pred_check_branch
      %227 = sbr.rel (%p225) target = $region40
    $region39: #{pre_up_block.3} parent=5 // pred_region
      // Predicated region
      $region41: #{pre_up_block.3} parent=39 // pred_check
        %p228 = pneg %p33
      $region42: #{pre_up_block.3} parent=39 // pred_check_branch
        %230 = sbr.rel (%p228) target = $region44
      $region43: #{pre_up_block.3} parent=39 // pred_region
        %p231 = scmp.lt.s32.totalorder %s13, 1
        %s232 = scalar_select %p231, %s13, 1
        %s233 = smul.addr %s232, 8
        %s234 = smul.addr %s233, 8
        %s235 = scalar_lea.vmem %s0, %s234
      $region44: #{pre_up_block.3} parent=39 // pred_fallthru
        _
    $region40: #{pre_up_block.3} parent=5 // pred_fallthru
      _
    %p236 = scmp.le.s32.totalorder 1, %s13
    %p237 = scmp.lt.s32.totalorder %s13, 3
    %p238 = pnand %p236, %p237
    %p239 = pneg %p238
    // Predicated region
    $region45: #{pre_up_block.3} parent=5 // pred_check
      _
    $region46: #{pre_up_block.3} parent=5 // pred_check_branch
      %241 = sbr.rel (%p238) target = $region48
    $region47: #{pre_up_block.3} parent=5 // pred_region
      %s242 = ssub.s32 %s13, 1
      %p243 = scmp.lt.s32.totalorder %s18, 1
      %s244 = scalar_select %p243, %s18, 1
      %s245 = smul.addr %s244, 8
      %s246 = smul.addr %s245, 8
      %s247 = scalar_lea.vmem %s0, %s246
      %p248 = pneg %p39
      %p249 = pneg %p36
      %p250 = pneg %p60
      %p251 = pneg %p57
      %p252 = pneg %p81
      %p253 = pneg %p78
      %p254 = pneg %p102
      %p255 = pneg %p99
      %p256 = pneg %p123
      %p257 = pneg %p120
      %p258 = pneg %p144
      %p259 = pneg %p141
      %p260 = pneg %p165
      %p261 = pneg %p162
      %p262 = pneg %p191
      %p263 = pneg %p188
      %p264 = scmp.lt.s32.totalorder %s18, 1
      %s265 = scalar_select %p264, %s18, 1
      %s266 = smul.addr %s265, 8
      %s267 = smul.addr %s266, 8
      %s268 = scalar_lea.vmem %s7, %s267
      %p269 = scmp.lt.s32.totalorder %s18, 1
      %s270 = scalar_select %p269, %s18, 1
      %s271 = smul.addr %s270, 8
      %s272 = smul.addr %s271, 8
      %s273 = scalar_lea.vmem %s0, %s272
      %p274 = scmp.lt.s32.totalorder %s18, 1
      %s275 = scalar_select %p274, %s18, 1
      %s276 = smul.addr %s275, 8
      %s277 = smul.addr %s276, 8
      %s278 = scalar_lea.vmem %s7, %s277
      %v280 = vld [vmem:[%s1] sm:$0xff]
      %v281 = vld [vmem:[%s1 + $0x8] sm:$0xff]
      %v282 = vld [vmem:[%s1 + $0x10] sm:$0xff]
      %v283 = vld [vmem:[%s1 + $0x18] sm:$0xff]
      %v284 = vld [vmem:[%s1 + $0x20] sm:$0xff]
      %v285 = vld [vmem:[%s1 + $0x28] sm:$0xff]
      %v286 = vld [vmem:[%s1 + $0x30] sm:$0xff]
      %v287 = vld [vmem:[%s1 + $0x38] sm:$0xff]
      %v288 = vld [vmem:[%s273] sm:$0xff]
      %v289 = vld [vmem:[%s273 + $0x8] sm:$0xff]
      %v290 = vld [vmem:[%s273 + $0x10] sm:$0xff]
      %v291 = vld [vmem:[%s273 + $0x18] sm:$0xff]
      %v292 = vld [vmem:[%s273 + $0x20] sm:$0xff]
      %v293 = vld [vmem:[%s273 + $0x28] sm:$0xff]
      %v294 = vld [vmem:[%s273 + $0x30] sm:$0xff]
      %v295 = vld [vmem:[%s273 + $0x38] sm:$0xff]
      %v296 = vlaneseq
      %v297 = vshrl.u32 %v296, 7
      %v298 = vadd.s32 %v297, 8
      %v299 = vadd.s32 %v297, 16
      %v300 = vadd.s32 %v297, 24
      %v301 = vadd.s32 %v297, 32
      %v302 = vadd.s32 %v297, 40
      %v303 = vadd.s32 %v297, 48
      %v304 = vadd.s32 %v297, 56
      %v305 = vrot.slane %v288, 7
      %v306 = vrot.slane %v289, 7
      %v307 = vrot.slane %v290, 7
      %v308 = vrot.slane %v291, 7
      %v309 = vrot.slane %v292, 7
      %v310 = vrot.slane %v293, 7
      %v311 = vrot.slane %v294, 7
      %v312 = vrot.slane %v295, 7
      %vm313 = vcmp.lt.s32.totalorder %v297, 1
      %v314 = vsel %vm313, %v311, %v312
      %v315 = vsel %vm313, %v310, %v311
      %v316 = vsel %vm313, %v309, %v310
      %v317 = vsel %vm313, %v308, %v309
      %v318 = vsel %vm313, %v307, %v308
      %v319 = vsel %vm313, %v306, %v307
      %v320 = vsel %vm313, %v305, %v306
      %v321 = vsel %vm313, %v312, %v305
      %v322 = vadd.s32 %v297, 4294967288
      %v323 = vadd.s32 %v298, 4294967288
      %v324 = vadd.s32 %v299, 4294967288
      %v325 = vadd.s32 %v300, 4294967288
      %v326 = vadd.s32 %v301, 4294967288
      %v327 = vadd.s32 %v302, 4294967288
      %v328 = vadd.s32 %v303, 4294967288
      %v329 = vadd.s32 %v304, 4294967288
      %vm330 = vcmp.ge.s32.totalorder %v322, 0
      %vm331 = vcmp.ge.s32.totalorder %v323, 0
      %vm332 = vcmp.ge.s32.totalorder %v324, 0
      %vm333 = vcmp.ge.s32.totalorder %v325, 0
      %vm334 = vcmp.ge.s32.totalorder %v326, 0
      %vm335 = vcmp.ge.s32.totalorder %v327, 0
      %vm336 = vcmp.ge.s32.totalorder %v328, 0
      %vm337 = vcmp.ge.s32.totalorder %v329, 0
      %vm338 = vcmp.le.s32.totalorder %v322, 63
      %vm339 = vcmp.le.s32.totalorder %v323, 63
      %vm340 = vcmp.le.s32.totalorder %v324, 63
      %vm341 = vcmp.le.s32.totalorder %v325, 63
      %vm342 = vcmp.le.s32.totalorder %v326, 63
      %vm343 = vcmp.le.s32.totalorder %v327, 63
      %vm344 = vcmp.le.s32.totalorder %v328, 63
      %vm345 = vcmp.le.s32.totalorder %v329, 63
      %vm346 = vmand %vm330, %vm338
      %vm347 = vmand %vm331, %vm339
      %vm348 = vmand %vm332, %vm340
      %vm349 = vmand %vm333, %vm341
      %vm350 = vmand %vm334, %vm342
      %vm351 = vmand %vm335, %vm343
      %vm352 = vmand %vm336, %vm344
      %vm353 = vmand %vm337, %vm345
      %vm354 = vcmp.ge.s32.totalorder %v280, 1
      %vm355 = vcmp.ge.s32.totalorder %v281, 1
      %vm356 = vcmp.ge.s32.totalorder %v282, 1
      %vm357 = vcmp.ge.s32.totalorder %v283, 1
      %vm358 = vcmp.ge.s32.totalorder %v284, 1
      %vm359 = vcmp.ge.s32.totalorder %v285, 1
      %vm360 = vcmp.ge.s32.totalorder %v286, 1
      %vm361 = vcmp.ge.s32.totalorder %v287, 1
      %vm362 = vmand %vm346, %vm354
      %vm363 = vmand %vm347, %vm355
      %vm364 = vmand %vm348, %vm356
      %vm365 = vmand %vm349, %vm357
      %vm366 = vmand %vm350, %vm358
      %vm367 = vmand %vm351, %vm359
      %vm368 = vmand %vm352, %vm360
      %vm369 = vmand %vm353, %vm361
      %v370 = vsel %vm362, 1, 0
      %v371 = vsel %vm363, 1, 0
      %v372 = vsel %vm364, 1, 0
      %v373 = vsel %vm365, 1, 0
      %v374 = vsel %vm366, 1, 0
      %v375 = vsel %vm367, 1, 0
      %v376 = vsel %vm368, 1, 0
      %v377 = vsel %vm369, 1, 0
      %378 = vset.pattern.permute.xlu0 0
      %379 = vperm.xlu0 %378, %v370
      %v380 = vpop.permute.xlu0 %379
      %381 = vset.pattern.permute.xlu0 0
      %382 = vperm.xlu0 %381, %v371
      %v383 = vpop.permute.xlu0 %382
      %384 = vset.pattern.permute.xlu0 0
      %385 = vperm.xlu0 %384, %v372
      %v386 = vpop.permute.xlu0 %385
      %387 = vset.pattern.permute.xlu0 0
      %388 = vperm.xlu0 %387, %v373
      %v389 = vpop.permute.xlu0 %388
      %390 = vset.pattern.permute.xlu0 0
      %391 = vperm.xlu0 %390, %v374
      %v392 = vpop.permute.xlu0 %391
      %393 = vset.pattern.permute.xlu0 0
      %394 = vperm.xlu0 %393, %v375
      %v395 = vpop.permute.xlu0 %394
      %396 = vset.pattern.permute.xlu0 0
      %397 = vperm.xlu0 %396, %v376
      %v398 = vpop.permute.xlu0 %397
      %399 = vset.pattern.permute.xlu0 0
      %400 = vperm.xlu0 %399, %v377
      %v401 = vpop.permute.xlu0 %400
      %vm402 = vcmp.eq.s32.totalorder %v380, 1
      %vm403 = vcmp.eq.s32.totalorder %v383, 1
      %vm404 = vcmp.eq.s32.totalorder %v386, 1
      %vm405 = vcmp.eq.s32.totalorder %v389, 1
      %vm406 = vcmp.eq.s32.totalorder %v392, 1
      %vm407 = vcmp.eq.s32.totalorder %v395, 1
      %vm408 = vcmp.eq.s32.totalorder %v398, 1
      %vm409 = vcmp.eq.s32.totalorder %v401, 1
      %v410 = vsel %vm402, %v314, 0.0
      %v411 = vsel %vm403, %v321, 0.0
      %v412 = vsel %vm404, %v320, 0.0
      %v413 = vsel %vm405, %v319, 0.0
      %v414 = vsel %vm406, %v318, 0.0
      %v415 = vsel %vm407, %v317, 0.0
      %v416 = vsel %vm408, %v316, 0.0
      %v417 = vsel %vm409, %v315, 0.0
      %v418 = vsel %vm346, 1, 0
      %v419 = vsel %vm347, 1, 0
      %v420 = vsel %vm348, 1, 0
      %v421 = vsel %vm349, 1, 0
      %v422 = vsel %vm350, 1, 0
      %v423 = vsel %vm351, 1, 0
      %v424 = vsel %vm352, 1, 0
      %v425 = vsel %vm353, 1, 0
      %vm426 = vcmp.eq.s32.totalorder %v418, 1
      %vm427 = vcmp.eq.s32.totalorder %v419, 1
      %vm428 = vcmp.eq.s32.totalorder %v420, 1
      %vm429 = vcmp.eq.s32.totalorder %v421, 1
      %vm430 = vcmp.eq.s32.totalorder %v422, 1
      %vm431 = vcmp.eq.s32.totalorder %v423, 1
      %vm432 = vcmp.eq.s32.totalorder %v424, 1
      %vm433 = vcmp.eq.s32.totalorder %v425, 1
      %v434 = vsel %vm426, %v295, 0.0
      %v435 = vsel %vm427, %v288, 0.0
      %v436 = vsel %vm428, %v289, 0.0
      %v437 = vsel %vm429, %v290, 0.0
      %v438 = vsel %vm430, %v291, 0.0
      %v439 = vsel %vm431, %v292, 0.0
      %v440 = vsel %vm432, %v293, 0.0
      %v441 = vsel %vm433, %v294, 0.0
      %v442 = vrot.slane %v288, 1
      %v443 = vrot.slane %v289, 1
      %v444 = vrot.slane %v290, 1
      %v445 = vrot.slane %v291, 1
      %v446 = vrot.slane %v292, 1
      %v447 = vrot.slane %v293, 1
      %v448 = vrot.slane %v294, 1
      %v449 = vrot.slane %v295, 1
      %vm450 = vcmp.lt.s32.totalorder %v297, 7
      %v451 = vsel %vm450, %v448, %v449
      %v452 = vsel %vm450, %v447, %v448
      %v453 = vsel %vm450, %v446, %v447
      %v454 = vsel %vm450, %v445, %v446
      %v455 = vsel %vm450, %v444, %v445
      %v456 = vsel %vm450, %v443, %v444
      %v457 = vsel %vm450, %v442, %v443
      %v458 = vsel %vm450, %v449, %v442
      %vm459 = vcmp.le.s32.totalorder %v280, 6
      %vm460 = vcmp.le.s32.totalorder %v281, 6
      %vm461 = vcmp.le.s32.totalorder %v282, 6
      %vm462 = vcmp.le.s32.totalorder %v283, 6
      %vm463 = vcmp.le.s32.totalorder %v284, 6
      %vm464 = vcmp.le.s32.totalorder %v285, 6
      %vm465 = vcmp.le.s32.totalorder %v286, 6
      %vm466 = vcmp.le.s32.totalorder %v287, 6
      %vm467 = vmand %vm346, %vm459
      %vm468 = vmand %vm347, %vm460
      %vm469 = vmand %vm348, %vm461
      %vm470 = vmand %vm349, %vm462
      %vm471 = vmand %vm350, %vm463
      %vm472 = vmand %vm351, %vm464
      %vm473 = vmand %vm352, %vm465
      %vm474 = vmand %vm353, %vm466
      %v475 = vsel %vm467, 1, 0
      %v476 = vsel %vm468, 1, 0
      %v477 = vsel %vm469, 1, 0
      %v478 = vsel %vm470, 1, 0
      %v479 = vsel %vm471, 1, 0
      %v480 = vsel %vm472, 1, 0
      %v481 = vsel %vm473, 1, 0
      %v482 = vsel %vm474, 1, 0
      %483 = vset.pattern.permute.xlu0 0
      %484 = vperm.xlu0 %483, %v475
      %v485 = vpop.permute.xlu0 %484
      %486 = vset.pattern.permute.xlu0 0
      %487 = vperm.xlu0 %486, %v476
      %v488 = vpop.permute.xlu0 %487
      %489 = vset.pattern.permute.xlu0 0
      %490 = vperm.xlu0 %489, %v477
      %v491 = vpop.permute.xlu0 %490
      %492 = vset.pattern.permute.xlu0 0
      %493 = vperm.xlu0 %492, %v478
      %v494 = vpop.permute.xlu0 %493
      %495 = vset.pattern.permute.xlu0 0
      %496 = vperm.xlu0 %495, %v479
      %v497 = vpop.permute.xlu0 %496
      %498 = vset.pattern.permute.xlu0 0
      %499 = vperm.xlu0 %498, %v480
      %v500 = vpop.permute.xlu0 %499
      %501 = vset.pattern.permute.xlu0 0
      %502 = vperm.xlu0 %501, %v481
      %v503 = vpop.permute.xlu0 %502
      %504 = vset.pattern.permute.xlu0 0
      %505 = vperm.xlu0 %504, %v482
      %v506 = vpop.permute.xlu0 %505
      %vm507 = vcmp.eq.s32.totalorder %v485, 1
      %vm508 = vcmp.eq.s32.totalorder %v488, 1
      %vm509 = vcmp.eq.s32.totalorder %v491, 1
      %vm510 = vcmp.eq.s32.totalorder %v494, 1
      %vm511 = vcmp.eq.s32.totalorder %v497, 1
      %vm512 = vcmp.eq.s32.totalorder %v500, 1
      %vm513 = vcmp.eq.s32.totalorder %v503, 1
      %vm514 = vcmp.eq.s32.totalorder %v506, 1
      %v515 = vsel %vm507, %v458, 0.0
      %v516 = vsel %vm508, %v457, 0.0
      %v517 = vsel %vm509, %v456, 0.0
      %v518 = vsel %vm510, %v455, 0.0
      %v519 = vsel %vm511, %v454, 0.0
      %v520 = vsel %vm512, %v453, 0.0
      %v521 = vsel %vm513, %v452, 0.0
      %v522 = vsel %vm514, %v451, 0.0
      %vm523 = vcmp.ge.s32.totalorder %v297, 0
      %vm524 = vcmp.ge.s32.totalorder %v298, 0
      %vm525 = vcmp.ge.s32.totalorder %v299, 0
      %vm526 = vcmp.ge.s32.totalorder %v300, 0
      %vm527 = vcmp.ge.s32.totalorder %v301, 0
      %vm528 = vcmp.ge.s32.totalorder %v302, 0
      %vm529 = vcmp.ge.s32.totalorder %v303, 0
      %vm530 = vcmp.ge.s32.totalorder %v304, 0
      %vm531 = vcmp.le.s32.totalorder %v297, 63
      %vm532 = vcmp.le.s32.totalorder %v298, 63
      %vm533 = vcmp.le.s32.totalorder %v299, 63
      %vm534 = vcmp.le.s32.totalorder %v300, 63
      %vm535 = vcmp.le.s32.totalorder %v301, 63
      %vm536 = vcmp.le.s32.totalorder %v302, 63
      %vm537 = vcmp.le.s32.totalorder %v303, 63
      %vm538 = vcmp.le.s32.totalorder %v304, 63
      %vm539 = vmand %vm523, %vm531
      %vm540 = vmand %vm524, %vm532
      %vm541 = vmand %vm525, %vm533
      %vm542 = vmand %vm526, %vm534
      %vm543 = vmand %vm527, %vm535
      %vm544 = vmand %vm528, %vm536
      %vm545 = vmand %vm529, %vm537
      %vm546 = vmand %vm530, %vm538
      %vm547 = vmand %vm539, %vm354
      %vm548 = vmand %vm540, %vm355
      %vm549 = vmand %vm541, %vm356
      %vm550 = vmand %vm542, %vm357
      %vm551 = vmand %vm543, %vm358
      %vm552 = vmand %vm544, %vm359
      %vm553 = vmand %vm545, %vm360
      %vm554 = vmand %vm546, %vm361
      %v555 = vsel %vm547, 1, 0
      %v556 = vsel %vm548, 1, 0
      %v557 = vsel %vm549, 1, 0
      %v558 = vsel %vm550, 1, 0
      %v559 = vsel %vm551, 1, 0
      %v560 = vsel %vm552, 1, 0
      %v561 = vsel %vm553, 1, 0
      %v562 = vsel %vm554, 1, 0
      %563 = vset.pattern.permute.xlu0 0
      %564 = vperm.xlu0 %563, %v555
      %v565 = vpop.permute.xlu0 %564
      %566 = vset.pattern.permute.xlu0 0
      %567 = vperm.xlu0 %566, %v556
      %v568 = vpop.permute.xlu0 %567
      %569 = vset.pattern.permute.xlu0 0
      %570 = vperm.xlu0 %569, %v557
      %v571 = vpop.permute.xlu0 %570
      %572 = vset.pattern.permute.xlu0 0
      %573 = vperm.xlu0 %572, %v558
      %v574 = vpop.permute.xlu0 %573
      %575 = vset.pattern.permute.xlu0 0
      %576 = vperm.xlu0 %575, %v559
      %v577 = vpop.permute.xlu0 %576
      %578 = vset.pattern.permute.xlu0 0
      %579 = vperm.xlu0 %578, %v560
      %v580 = vpop.permute.xlu0 %579
      %581 = vset.pattern.permute.xlu0 0
      %582 = vperm.xlu0 %581, %v561
      %v583 = vpop.permute.xlu0 %582
      %584 = vset.pattern.permute.xlu0 0
      %585 = vperm.xlu0 %584, %v562
      %v586 = vpop.permute.xlu0 %585
      %vm587 = vcmp.eq.s32.totalorder %v565, 1
      %vm588 = vcmp.eq.s32.totalorder %v568, 1
      %vm589 = vcmp.eq.s32.totalorder %v571, 1
      %vm590 = vcmp.eq.s32.totalorder %v574, 1
      %vm591 = vcmp.eq.s32.totalorder %v577, 1
      %vm592 = vcmp.eq.s32.totalorder %v580, 1
      %vm593 = vcmp.eq.s32.totalorder %v583, 1
      %vm594 = vcmp.eq.s32.totalorder %v586, 1
      %v595 = vsel %vm587, %v321, 0.0
      %v596 = vsel %vm588, %v320, 0.0
      %v597 = vsel %vm589, %v319, 0.0
      %v598 = vsel %vm590, %v318, 0.0
      %v599 = vsel %vm591, %v317, 0.0
      %v600 = vsel %vm592, %v316, 0.0
      %v601 = vsel %vm593, %v315, 0.0
      %v602 = vsel %vm594, %v314, 0.0
      %vm603 = vmand %vm539, %vm459
      %vm604 = vmand %vm540, %vm460
      %vm605 = vmand %vm541, %vm461
      %vm606 = vmand %vm542, %vm462
      %vm607 = vmand %vm543, %vm463
      %vm608 = vmand %vm544, %vm464
      %vm609 = vmand %vm545, %vm465
      %vm610 = vmand %vm546, %vm466
      %v611 = vsel %vm603, 1, 0
      %v612 = vsel %vm604, 1, 0
      %v613 = vsel %vm605, 1, 0
      %v614 = vsel %vm606, 1, 0
      %v615 = vsel %vm607, 1, 0
      %v616 = vsel %vm608, 1, 0
      %v617 = vsel %vm609, 1, 0
      %v618 = vsel %vm610, 1, 0
      %619 = vset.pattern.permute.xlu0 0
      %620 = vperm.xlu0 %619, %v611
      %v621 = vpop.permute.xlu0 %620
      %622 = vset.pattern.permute.xlu0 0
      %623 = vperm.xlu0 %622, %v612
      %v624 = vpop.permute.xlu0 %623
      %625 = vset.pattern.permute.xlu0 0
      %626 = vperm.xlu0 %625, %v613
      %v627 = vpop.permute.xlu0 %626
      %628 = vset.pattern.permute.xlu0 0
      %629 = vperm.xlu0 %628, %v614
      %v630 = vpop.permute.xlu0 %629
      %631 = vset.pattern.permute.xlu0 0
      %632 = vperm.xlu0 %631, %v615
      %v633 = vpop.permute.xlu0 %632
      %634 = vset.pattern.permute.xlu0 0
      %635 = vperm.xlu0 %634, %v616
      %v636 = vpop.permute.xlu0 %635
      %637 = vset.pattern.permute.xlu0 0
      %638 = vperm.xlu0 %637, %v617
      %v639 = vpop.permute.xlu0 %638
      %640 = vset.pattern.permute.xlu0 0
      %641 = vperm.xlu0 %640, %v618
      %v642 = vpop.permute.xlu0 %641
      %vm643 = vcmp.eq.s32.totalorder %v621, 1
      %vm644 = vcmp.eq.s32.totalorder %v624, 1
      %vm645 = vcmp.eq.s32.totalorder %v627, 1
      %vm646 = vcmp.eq.s32.totalorder %v630, 1
      %vm647 = vcmp.eq.s32.totalorder %v633, 1
      %vm648 = vcmp.eq.s32.totalorder %v636, 1
      %vm649 = vcmp.eq.s32.totalorder %v639, 1
      %vm650 = vcmp.eq.s32.totalorder %v642, 1
      %v651 = vsel %vm643, %v457, 0.0
      %v652 = vsel %vm644, %v456, 0.0
      %v653 = vsel %vm645, %v455, 0.0
      %v654 = vsel %vm646, %v454, 0.0
      %v655 = vsel %vm647, %v453, 0.0
      %v656 = vsel %vm648, %v452, 0.0
      %v657 = vsel %vm649, %v451, 0.0
      %v658 = vsel %vm650, %v458, 0.0
      %v659 = vadd.s32 %v298, 8
      %v660 = vadd.s32 %v299, 8
      %v661 = vadd.s32 %v300, 8
      %v662 = vadd.s32 %v301, 8
      %v663 = vadd.s32 %v302, 8
      %v664 = vadd.s32 %v303, 8
      %v665 = vadd.s32 %v304, 8
      %vm666 = vcmp.ge.s32.totalorder %v659, 0
      %vm667 = vcmp.ge.s32.totalorder %v660, 0
      %vm668 = vcmp.ge.s32.totalorder %v661, 0
      %vm669 = vcmp.ge.s32.totalorder %v662, 0
      %vm670 = vcmp.ge.s32.totalorder %v663, 0
      %vm671 = vcmp.ge.s32.totalorder %v664, 0
      %vm672 = vcmp.ge.s32.totalorder %v665, 0
      %vm673 = vcmp.le.s32.totalorder %v659, 63
      %vm674 = vcmp.le.s32.totalorder %v660, 63
      %vm675 = vcmp.le.s32.totalorder %v661, 63
      %vm676 = vcmp.le.s32.totalorder %v662, 63
      %vm677 = vcmp.le.s32.totalorder %v663, 63
      %vm678 = vcmp.le.s32.totalorder %v664, 63
      %vm679 = vcmp.le.s32.totalorder %v665, 63
      %vm680 = vmand %vm666, %vm673
      %vm681 = vmand %vm667, %vm674
      %vm682 = vmand %vm668, %vm675
      %vm683 = vmand %vm669, %vm676
      %vm684 = vmand %vm670, %vm677
      %vm685 = vmand %vm671, %vm678
      %vm686 = vmand %vm672, %vm679
      %vm687 = vmand %vm540, %vm354
      %vm688 = vmand %vm680, %vm355
      %vm689 = vmand %vm681, %vm356
      %vm690 = vmand %vm682, %vm357
      %vm691 = vmand %vm683, %vm358
      %vm692 = vmand %vm684, %vm359
      %vm693 = vmand %vm685, %vm360
      %vm694 = vmand %vm686, %vm361
      %v695 = vsel %vm687, 1, 0
      %v696 = vsel %vm688, 1, 0
      %v697 = vsel %vm689, 1, 0
      %v698 = vsel %vm690, 1, 0
      %v699 = vsel %vm691, 1, 0
      %v700 = vsel %vm692, 1, 0
      %v701 = vsel %vm693, 1, 0
      %v702 = vsel %vm694, 1, 0
      %703 = vset.pattern.permute.xlu0 0
      %704 = vperm.xlu0 %703, %v695
      %v705 = vpop.permute.xlu0 %704
      %706 = vset.pattern.permute.xlu0 0
      %707 = vperm.xlu0 %706, %v696
      %v708 = vpop.permute.xlu0 %707
      %709 = vset.pattern.permute.xlu0 0
      %710 = vperm.xlu0 %709, %v697
      %v711 = vpop.permute.xlu0 %710
      %712 = vset.pattern.permute.xlu0 0
      %713 = vperm.xlu0 %712, %v698
      %v714 = vpop.permute.xlu0 %713
      %715 = vset.pattern.permute.xlu0 0
      %716 = vperm.xlu0 %715, %v699
      %v717 = vpop.permute.xlu0 %716
      %718 = vset.pattern.permute.xlu0 0
      %719 = vperm.xlu0 %718, %v700
      %v720 = vpop.permute.xlu0 %719
      %721 = vset.pattern.permute.xlu0 0
      %722 = vperm.xlu0 %721, %v701
      %v723 = vpop.permute.xlu0 %722
      %724 = vset.pattern.permute.xlu0 0
      %725 = vperm.xlu0 %724, %v702
      %v726 = vpop.permute.xlu0 %725
      %vm727 = vcmp.eq.s32.totalorder %v705, 1
      %vm728 = vcmp.eq.s32.totalorder %v708, 1
      %vm729 = vcmp.eq.s32.totalorder %v711, 1
      %vm730 = vcmp.eq.s32.totalorder %v714, 1
      %vm731 = vcmp.eq.s32.totalorder %v717, 1
      %vm732 = vcmp.eq.s32.totalorder %v720, 1
      %vm733 = vcmp.eq.s32.totalorder %v723, 1
      %vm734 = vcmp.eq.s32.totalorder %v726, 1
      %v735 = vsel %vm727, %v320, 0.0
      %v736 = vsel %vm728, %v319, 0.0
      %v737 = vsel %vm729, %v318, 0.0
      %v738 = vsel %vm730, %v317, 0.0
      %v739 = vsel %vm731, %v316, 0.0
      %v740 = vsel %vm732, %v315, 0.0
      %v741 = vsel %vm733, %v314, 0.0
      %v742 = vsel %vm734, %v321, 0.0
      %v743 = vsel %vm540, 1, 0
      %v744 = vsel %vm680, 1, 0
      %v745 = vsel %vm681, 1, 0
      %v746 = vsel %vm682, 1, 0
      %v747 = vsel %vm683, 1, 0
      %v748 = vsel %vm684, 1, 0
      %v749 = vsel %vm685, 1, 0
      %v750 = vsel %vm686, 1, 0
      %vm751 = vcmp.eq.s32.totalorder %v743, 1
      %vm752 = vcmp.eq.s32.totalorder %v744, 1
      %vm753 = vcmp.eq.s32.totalorder %v745, 1
      %vm754 = vcmp.eq.s32.totalorder %v746, 1
      %vm755 = vcmp.eq.s32.totalorder %v747, 1
      %vm756 = vcmp.eq.s32.totalorder %v748, 1
      %vm757 = vcmp.eq.s32.totalorder %v749, 1
      %vm758 = vcmp.eq.s32.totalorder %v750, 1
      %v759 = vsel %vm751, %v289, 0.0
      %v760 = vsel %vm752, %v290, 0.0
      %v761 = vsel %vm753, %v291, 0.0
      %v762 = vsel %vm754, %v292, 0.0
      %v763 = vsel %vm755, %v293, 0.0
      %v764 = vsel %vm756, %v294, 0.0
      %v765 = vsel %vm757, %v295, 0.0
      %v766 = vsel %vm758, %v288, 0.0
      %vm767 = vmand %vm540, %vm459
      %vm768 = vmand %vm680, %vm460
      %vm769 = vmand %vm681, %vm461
      %vm770 = vmand %vm682, %vm462
      %vm771 = vmand %vm683, %vm463
      %vm772 = vmand %vm684, %vm464
      %vm773 = vmand %vm685, %vm465
      %vm774 = vmand %vm686, %vm466
      %v775 = vsel %vm767, 1, 0
      %v776 = vsel %vm768, 1, 0
      %v777 = vsel %vm769, 1, 0
      %v778 = vsel %vm770, 1, 0
      %v779 = vsel %vm771, 1, 0
      %v780 = vsel %vm772, 1, 0
      %v781 = vsel %vm773, 1, 0
      %v782 = vsel %vm774, 1, 0
      %783 = vset.pattern.permute.xlu0 0
      %784 = vperm.xlu0 %783, %v775
      %v785 = vpop.permute.xlu0 %784
      %786 = vset.pattern.permute.xlu0 0
      %787 = vperm.xlu0 %786, %v776
      %v788 = vpop.permute.xlu0 %787
      %789 = vset.pattern.permute.xlu0 0
      %790 = vperm.xlu0 %789, %v777
      %v791 = vpop.permute.xlu0 %790
      %792 = vset.pattern.permute.xlu0 0
      %793 = vperm.xlu0 %792, %v778
      %v794 = vpop.permute.xlu0 %793
      %795 = vset.pattern.permute.xlu0 0
      %796 = vperm.xlu0 %795, %v779
      %v797 = vpop.permute.xlu0 %796
      %798 = vset.pattern.permute.xlu0 0
      %799 = vperm.xlu0 %798, %v780
      %v800 = vpop.permute.xlu0 %799
      %801 = vset.pattern.permute.xlu0 0
      %802 = vperm.xlu0 %801, %v781
      %v803 = vpop.permute.xlu0 %802
      %804 = vset.pattern.permute.xlu0 0
      %805 = vperm.xlu0 %804, %v782
      %v806 = vpop.permute.xlu0 %805
      %vm807 = vcmp.eq.s32.totalorder %v785, 1
      %vm808 = vcmp.eq.s32.totalorder %v788, 1
      %vm809 = vcmp.eq.s32.totalorder %v791, 1
      %vm810 = vcmp.eq.s32.totalorder %v794, 1
      %vm811 = vcmp.eq.s32.totalorder %v797, 1
      %vm812 = vcmp.eq.s32.totalorder %v800, 1
      %vm813 = vcmp.eq.s32.totalorder %v803, 1
      %vm814 = vcmp.eq.s32.totalorder %v806, 1
      %v815 = vsel %vm807, %v456, 0.0
      %v816 = vsel %vm808, %v455, 0.0
      %v817 = vsel %vm809, %v454, 0.0
      %v818 = vsel %vm810, %v453, 0.0
      %v819 = vsel %vm811, %v452, 0.0
      %v820 = vsel %vm812, %v451, 0.0
      %v821 = vsel %vm813, %v458, 0.0
      %v822 = vsel %vm814, %v457, 0.0
      %831 = vrot.lane.b32.xlu0 %v434, 16
      %v832 = vpop.permute.xlu0 %831
      %833 = vrot.lane.b32.xlu0 %v435, 16
      %v834 = vpop.permute.xlu0 %833
      %835 = vrot.lane.b32.xlu0 %v436, 16
      %v836 = vpop.permute.xlu0 %835
      %837 = vrot.lane.b32.xlu0 %v437, 16
      %v838 = vpop.permute.xlu0 %837
      %839 = vrot.lane.b32.xlu0 %v438, 16
      %v840 = vpop.permute.xlu0 %839
      %841 = vrot.lane.b32.xlu0 %v439, 16
      %v842 = vpop.permute.xlu0 %841
      %843 = vrot.lane.b32.xlu0 %v440, 16
      %v844 = vpop.permute.xlu0 %843
      %845 = vrot.lane.b32.xlu0 %v441, 16
      %v846 = vpop.permute.xlu0 %845
      %863 = vrot.lane.b32.xlu0 %v515, 32
      %v864 = vpop.permute.xlu0 %863
      %865 = vrot.lane.b32.xlu0 %v516, 32
      %v866 = vpop.permute.xlu0 %865
      %867 = vrot.lane.b32.xlu0 %v517, 32
      %v868 = vpop.permute.xlu0 %867
      %869 = vrot.lane.b32.xlu0 %v518, 32
      %v870 = vpop.permute.xlu0 %869
      %871 = vrot.lane.b32.xlu0 %v519, 32
      %v872 = vpop.permute.xlu0 %871
      %873 = vrot.lane.b32.xlu0 %v520, 32
      %v874 = vpop.permute.xlu0 %873
      %875 = vrot.lane.b32.xlu0 %v521, 32
      %v876 = vpop.permute.xlu0 %875
      %877 = vrot.lane.b32.xlu0 %v522, 32
      %v878 = vpop.permute.xlu0 %877
      %895 = vrot.lane.b32.xlu0 %v595, 48
      %v896 = vpop.permute.xlu0 %895
      %897 = vrot.lane.b32.xlu0 %v596, 48
      %v898 = vpop.permute.xlu0 %897
      %899 = vrot.lane.b32.xlu0 %v597, 48
      %v900 = vpop.permute.xlu0 %899
      %901 = vrot.lane.b32.xlu0 %v598, 48
      %v902 = vpop.permute.xlu0 %901
      %903 = vrot.lane.b32.xlu0 %v599, 48
      %v904 = vpop.permute.xlu0 %903
      %905 = vrot.lane.b32.xlu0 %v600, 48
      %v906 = vpop.permute.xlu0 %905
      %907 = vrot.lane.b32.xlu0 %v601, 48
      %v908 = vpop.permute.xlu0 %907
      %909 = vrot.lane.b32.xlu0 %v602, 48
      %v910 = vpop.permute.xlu0 %909
      %927 = vrot.lane.b32.xlu0 %v288, 64
      %v928 = vpop.permute.xlu0 %927
      %929 = vrot.lane.b32.xlu0 %v289, 64
      %v930 = vpop.permute.xlu0 %929
      %931 = vrot.lane.b32.xlu0 %v290, 64
      %v932 = vpop.permute.xlu0 %931
      %933 = vrot.lane.b32.xlu0 %v291, 64
      %v934 = vpop.permute.xlu0 %933
      %935 = vrot.lane.b32.xlu0 %v292, 64
      %v936 = vpop.permute.xlu0 %935
      %937 = vrot.lane.b32.xlu0 %v293, 64
      %v938 = vpop.permute.xlu0 %937
      %939 = vrot.lane.b32.xlu0 %v294, 64
      %v940 = vpop.permute.xlu0 %939
      %941 = vrot.lane.b32.xlu0 %v295, 64
      %v942 = vpop.permute.xlu0 %941
      %959 = vrot.lane.b32.xlu0 %v651, 80
      %v960 = vpop.permute.xlu0 %959
      %961 = vrot.lane.b32.xlu0 %v652, 80
      %v962 = vpop.permute.xlu0 %961
      %963 = vrot.lane.b32.xlu0 %v653, 80
      %v964 = vpop.permute.xlu0 %963
      %965 = vrot.lane.b32.xlu0 %v654, 80
      %v966 = vpop.permute.xlu0 %965
      %967 = vrot.lane.b32.xlu0 %v655, 80
      %v968 = vpop.permute.xlu0 %967
      %969 = vrot.lane.b32.xlu0 %v656, 80
      %v970 = vpop.permute.xlu0 %969
      %971 = vrot.lane.b32.xlu0 %v657, 80
      %v972 = vpop.permute.xlu0 %971
      %973 = vrot.lane.b32.xlu0 %v658, 80
      %v974 = vpop.permute.xlu0 %973
      %991 = vrot.lane.b32.xlu0 %v735, 96
      %v992 = vpop.permute.xlu0 %991
      %993 = vrot.lane.b32.xlu0 %v736, 96
      %v994 = vpop.permute.xlu0 %993
      %995 = vrot.lane.b32.xlu0 %v737, 96
      %v996 = vpop.permute.xlu0 %995
      %997 = vrot.lane.b32.xlu0 %v738, 96
      %v998 = vpop.permute.xlu0 %997
      %999 = vrot.lane.b32.xlu0 %v739, 96
      %v1000 = vpop.permute.xlu0 %999
      %1001 = vrot.lane.b32.xlu0 %v740, 96
      %v1002 = vpop.permute.xlu0 %1001
      %1003 = vrot.lane.b32.xlu0 %v741, 96
      %v1004 = vpop.permute.xlu0 %1003
      %1005 = vrot.lane.b32.xlu0 %v742, 96
      %v1006 = vpop.permute.xlu0 %1005
      %1023 = vrot.lane.b32.xlu0 %v759, 112
      %v1024 = vpop.permute.xlu0 %1023
      %1025 = vrot.lane.b32.xlu0 %v760, 112
      %v1026 = vpop.permute.xlu0 %1025
      %1027 = vrot.lane.b32.xlu0 %v761, 112
      %v1028 = vpop.permute.xlu0 %1027
      %1029 = vrot.lane.b32.xlu0 %v762, 112
      %v1030 = vpop.permute.xlu0 %1029
      %1031 = vrot.lane.b32.xlu0 %v763, 112
      %v1032 = vpop.permute.xlu0 %1031
      %1033 = vrot.lane.b32.xlu0 %v764, 112
      %v1034 = vpop.permute.xlu0 %1033
      %1035 = vrot.lane.b32.xlu0 %v765, 112
      %v1036 = vpop.permute.xlu0 %1035
      %1037 = vrot.lane.b32.xlu0 %v766, 112
      %v1038 = vpop.permute.xlu0 %1037
      %vm1047 = vcmask 130048
      %v1048 = vsel %vm1047, %v410, %v832
      %v1049 = vsel %vm1047, %v411, %v834
      %v1050 = vsel %vm1047, %v412, %v836
      %v1051 = vsel %vm1047, %v413, %v838
      %v1052 = vsel %vm1047, %v414, %v840
      %v1053 = vsel %vm1047, %v415, %v842
      %v1054 = vsel %vm1047, %v416, %v844
      %v1055 = vsel %vm1047, %v417, %v846
      %vm1056 = vcmask 261120
      %v1057 = vsel %vm1056, %v1048, %v864
      %v1058 = vsel %vm1056, %v1049, %v866
      %v1059 = vsel %vm1056, %v1050, %v868
      %v1060 = vsel %vm1056, %v1051, %v870
      %v1061 = vsel %vm1056, %v1052, %v872
      %v1062 = vsel %vm1056, %v1053, %v874
      %v1063 = vsel %vm1056, %v1054, %v876
      %v1064 = vsel %vm1056, %v1055, %v878
      %vm1065 = vcmask 392192
      %v1066 = vsel %vm1065, %v1057, %v896
      %v1067 = vsel %vm1065, %v1058, %v898
      %v1068 = vsel %vm1065, %v1059, %v900
      %v1069 = vsel %vm1065, %v1060, %v902
      %v1070 = vsel %vm1065, %v1061, %v904
      %v1071 = vsel %vm1065, %v1062, %v906
      %v1072 = vsel %vm1065, %v1063, %v908
      %v1073 = vsel %vm1065, %v1064, %v910
      %vm1074 = vcmask 523264
      %v1075 = vsel %vm1074, %v1066, %v928
      %v1076 = vsel %vm1074, %v1067, %v930
      %v1077 = vsel %vm1074, %v1068, %v932
      %v1078 = vsel %vm1074, %v1069, %v934
      %v1079 = vsel %vm1074, %v1070, %v936
      %v1080 = vsel %vm1074, %v1071, %v938
      %v1081 = vsel %vm1074, %v1072, %v940
      %v1082 = vsel %vm1074, %v1073, %v942
      %vm1083 = vcmask 654336
      %v1084 = vsel %vm1083, %v1075, %v960
      %v1085 = vsel %vm1083, %v1076, %v962
      %v1086 = vsel %vm1083, %v1077, %v964
      %v1087 = vsel %vm1083, %v1078, %v966
      %v1088 = vsel %vm1083, %v1079, %v968
      %v1089 = vsel %vm1083, %v1080, %v970
      %v1090 = vsel %vm1083, %v1081, %v972
      %v1091 = vsel %vm1083, %v1082, %v974
      %vm1092 = vcmask 785408
      %v1093 = vsel %vm1092, %v1084, %v992
      %v1094 = vsel %vm1092, %v1085, %v994
      %v1095 = vsel %vm1092, %v1086, %v996
      %v1096 = vsel %vm1092, %v1087, %v998
      %v1097 = vsel %vm1092, %v1088, %v1000
      %v1098 = vsel %vm1092, %v1089, %v1002
      %v1099 = vsel %vm1092, %v1090, %v1004
      %v1100 = vsel %vm1092, %v1091, %v1006
      %vm1101 = vcmask 916480
      %v1102 = vsel %vm1101, %v1093, %v1024
      %v1103 = vsel %vm1101, %v1094, %v1026
      %v1104 = vsel %vm1101, %v1095, %v1028
      %v1105 = vsel %vm1101, %v1096, %v1030
      %v1106 = vsel %vm1101, %v1097, %v1032
      %v1107 = vsel %vm1101, %v1098, %v1034
      %v1108 = vsel %vm1101, %v1099, %v1036
      %v1109 = vsel %vm1101, %v1100, %v1038
      %v1110 = vpack.c.bf16 %v1103, %v1102
      %v1111 = vpack.c.bf16 %v816, %v815
      %v1112 = vpack.c.bf16 %v1105, %v1104
      %v1113 = vpack.c.bf16 %v818, %v817
      %v1114 = vpack.c.bf16 %v1107, %v1106
      %v1115 = vpack.c.bf16 %v820, %v819
      %v1116 = vpack.c.bf16 %v1109, %v1108
      %v1117 = vpack.c.bf16 %v822, %v821
      %v1118 = vld [vmem:[%s2] sm:$0xf]
      %v1119 = vld [vmem:[%s2 + $0x4] sm:$0xf]
      %v1120 = vld [vmem:[%s2 + $0x8] sm:$0xf]
      %v1121 = vld [vmem:[%s2 + $0xc] sm:$0xf]
      %v1122 = vld [vmem:[%s2 + $0x10] sm:$0xf]
      %v1123 = vld [vmem:[%s2 + $0x14] sm:$0xf]
      %v1124 = vld [vmem:[%s2 + $0x18] sm:$0xf]
      %v1125 = vld [vmem:[%s2 + $0x1c] sm:$0xf]
      %v1126 = vld [vmem:[%s2 + $0x20] sm:$0xf]
      %v1127 = vld [vmem:[%s2 + $0x24] sm:$0xf]
      %v1128 = vld [vmem:[%s2 + $0x28] sm:$0xf]
      %v1129 = vld [vmem:[%s2 + $0x2c] sm:$0xf]
      %v1130 = vld [vmem:[%s2 + $0x30] sm:$0xf]
      %v1131 = vld [vmem:[%s2 + $0x34] sm:$0xf]
      %v1132 = vld [vmem:[%s2 + $0x38] sm:$0xf]
      %v1133 = vld [vmem:[%s2 + $0x3c] sm:$0xf]
      %v1134 = vld [vmem:[%s2 + $0x40] sm:$0xf]
      %v1135 = vld [vmem:[%s2 + $0x44] sm:$0xf]
      %v1154 = vunpack.c.l.b16 %v1118
      %v1155 = vunpack.c.l.b16 %v1119
      %v1156 = vunpack.c.l.b16 %v1120
      %v1157 = vunpack.c.l.b16 %v1121
      %v1158 = vunpack.c.l.b16 %v1122
      %v1159 = vunpack.c.l.b16 %v1123
      %v1160 = vunpack.c.l.b16 %v1124
      %v1161 = vunpack.c.l.b16 %v1125
      %v1162 = vunpack.c.l.b16 %v1126
      %v1163 = vunpack.c.l.b16 %v1127
      %v1164 = vunpack.c.l.b16 %v1128
      %v1165 = vunpack.c.l.b16 %v1129
      %v1166 = vunpack.c.l.b16 %v1130
      %v1167 = vunpack.c.l.b16 %v1131
      %v1168 = vunpack.c.l.b16 %v1132
      %v1169 = vunpack.c.l.b16 %v1133
      %v1170 = vunpack.c.l.b16 %v1134
      %v1171 = vunpack.c.l.b16 %v1135
      %v1172 = vpack.c.b16 %v1155, %v1154
      %v1173 = vpack.c.b16 %v1157, %v1156
      %v1174 = vpack.c.b16 %v1159, %v1158
      %v1175 = vpack.c.b16 %v1161, %v1160
      %v1176 = vpack.c.b16 %v1163, %v1162
      %v1177 = vpack.c.b16 %v1165, %v1164
      %v1178 = vpack.c.b16 %v1167, %v1166
      %v1179 = vpack.c.b16 %v1169, %v1168
      %v1180 = vpack.c.b16 %v1171, %v1170
      %v1191 = vsel %vm1047, %v1111, 0
      %v1194 = vsel %vm1047, %v1113, 0
      %v1197 = vsel %vm1047, %v1115, 0
      %v1200 = vsel %vm1047, %v1117, 0
      %1202 = vmatprep.subr.bf16.mxu0 0
      %1203 = vmatpush1.bf16.msra.mxu0 %v1172
      %1204 = vmatprep.subr.bf16.mxu0 0
      %1205 = vmatpush1.bf16.msra.mxu0 %v1173
      %1206 = vmatprep.subr.bf16.mxu0 0
      %1207 = vmatpush1.bf16.msra.mxu0 %v1174
      %1208 = vmatprep.subr.bf16.mxu0 0
      %1209 = vmatpush1.bf16.msra.mxu0 %v1175
      %1210 = vmatprep.subr.bf16.mxu0 0
      %1211 = vmatpush1.bf16.msra.mxu0 %v1176
      %1212 = vmatprep.subr.bf16.mxu0 0
      %1213 = vmatpush1.bf16.msra.mxu0 %v1177
      %1214 = vmatprep.subr.bf16.mxu0 0
      %1215 = vmatpush1.bf16.msra.mxu0 %v1178
      %1216 = vmatprep.subr.bf16.mxu0 0
      %1217 = vmatpush1.bf16.msra.mxu0 %v1179
      %1218 = vmatprep.subr.bf16.mxu0 0
      %1219 = vmatpush1.bf16.msra.mxu0 %v1180
      %1220 = vmatprep.subr.bf16.mxu0 0
      %1221 = vmatpush1.bf16.msra.mxu0 0
      %1222 = vmatprep.subr.bf16.mxu0 0
      %1223 = vmatpush1.bf16.msra.mxu0 0
      %1224 = vmatprep.subr.bf16.mxu0 0
      %1225 = vmatpush1.bf16.msra.mxu0 0
      %1226 = vmatprep.subr.bf16.mxu0 0
      %1227 = vmatpush1.bf16.msra.mxu0 0
      %1228 = vmatprep.subr.bf16.mxu0 0
      %1229 = vmatpush1.bf16.msra.mxu0 0
      %1230 = vmatprep.subr.bf16.mxu0 0
      %1231 = vmatpush1.bf16.msra.mxu0 0
      %1232 = vmatprep.subr.bf16.mxu0 0
      %1233 = vmatpush1.bf16.msra.mxu0 0
      %1234 = vmatprep.mubr.bf16.mxu0 %v1191
      %1235 = vmatmul.mubr.bf16.gmra.mrb[0].mxu0 %v1110
      %v1236 = vpop.f32.mrb[0].mxu0
      %v1237 = vadd.f32 0.0, %v1236
      %v1238 = vpop.f32.mrb[0].mxu0
      %v1239 = vpop.f32.mrb[0].mxu0
      %v1240 = vadd.f32 0.0, %v1239
      %v1241 = vpop.f32.mrb[0].mxu0
      %1242 = vmatprep.mubr.bf16.mxu0 %v1194
      %1243 = vmatmul.mubr.bf16.gmra.mrb[0].mxu0 %v1112
      %v1244 = vpop.f32.mrb[0].mxu0
      %v1245 = vadd.f32 0.0, %v1244
      %v1246 = vpop.f32.mrb[0].mxu0
      %v1247 = vpop.f32.mrb[0].mxu0
      %v1248 = vadd.f32 0.0, %v1247
      %v1249 = vpop.f32.mrb[0].mxu0
      %1250 = vmatprep.mubr.bf16.mxu0 %v1197
      %1251 = vmatmul.mubr.bf16.gmra.mrb[0].mxu0 %v1114
      %v1252 = vpop.f32.mrb[0].mxu0
      %v1253 = vadd.f32 0.0, %v1252
      %v1254 = vpop.f32.mrb[0].mxu0
      %v1255 = vpop.f32.mrb[0].mxu0
      %v1256 = vadd.f32 0.0, %v1255
      %v1257 = vpop.f32.mrb[0].mxu0
      %1258 = vmatprep.mubr.bf16.mxu0 %v1200
      %1259 = vmatmul.mubr.bf16.gmra.mrb[0].mxu0 %v1116
      %v1260 = vpop.f32.mrb[0].mxu0
      %v1261 = vadd.f32 0.0, %v1260
      %v1262 = vpop.f32.mrb[0].mxu0
      %v1263 = vpop.f32.mrb[0].mxu0
      %v1264 = vadd.f32 0.0, %v1263
      %v1265 = vpop.f32.mrb[0].mxu0
      %1266 = vdwg.mxu0
      %v1267 = vsel %vm1056, %v1237, 0.0
      %v1268 = vsel %vm1056, %v1240, 0.0
      %v1269 = vadd.f32 %v1267, %v1268
      %v1270 = vsel %vm1056, %v1245, 0.0
      %v1271 = vadd.f32 %v1269, %v1270
      %v1272 = vsel %vm1056, %v1248, 0.0
      %v1273 = vadd.f32 %v1271, %v1272
      %v1274 = vsel %vm1056, %v1253, 0.0
      %v1275 = vadd.f32 %v1273, %v1274
      %v1276 = vsel %vm1056, %v1256, 0.0
      %v1277 = vadd.f32 %v1275, %v1276
      %v1278 = vsel %vm1056, %v1261, 0.0
      %v1279 = vadd.f32 %v1277, %v1278
      %v1280 = vsel %vm1056, %v1264, 0.0
      %v1281 = vadd.f32 %v1279, %v1280
      %v1282 = vrot.slane %v1281, 4
      %v1283 = vadd.f32 %v1281, %v1282
      %v1284 = vrot.slane %v1283, 2
      %v1285 = vadd.f32 %v1283, %v1284
      %v1286 = vrot.slane %v1285, 1
      %v1287 = vadd.f32 %v1285, %v1286
      %v1288 = vrcp.pop 64.0
      %v1289 = vmul.f32 %v1287, %v1288
      %v1290 = vsub.f32 %v1237, %v1289
      %v1291 = vsub.f32 %v1240, %v1289
      %v1292 = vsub.f32 %v1245, %v1289
      %v1293 = vsub.f32 %v1248, %v1289
      %v1294 = vsub.f32 %v1253, %v1289
      %v1295 = vsub.f32 %v1256, %v1289
      %v1296 = vsub.f32 %v1261, %v1289
      %v1297 = vsub.f32 %v1264, %v1289
      %v1298 = vmul.f32 %v1290, %v1290
      %v1299 = vmul.f32 %v1291, %v1291
      %v1300 = vmul.f32 %v1292, %v1292
      %v1301 = vmul.f32 %v1293, %v1293
      %v1302 = vmul.f32 %v1294, %v1294
      %v1303 = vmul.f32 %v1295, %v1295
      %v1304 = vmul.f32 %v1296, %v1296
      %v1305 = vmul.f32 %v1297, %v1297
      %v1306 = vsel %vm1056, %v1298, 0.0
      %v1307 = vsel %vm1056, %v1299, 0.0
      %v1308 = vadd.f32 %v1306, %v1307
      %v1309 = vsel %vm1056, %v1300, 0.0
      %v1310 = vadd.f32 %v1308, %v1309
      %v1311 = vsel %vm1056, %v1301, 0.0
      %v1312 = vadd.f32 %v1310, %v1311
      %v1313 = vsel %vm1056, %v1302, 0.0
      %v1314 = vadd.f32 %v1312, %v1313
      %v1315 = vsel %vm1056, %v1303, 0.0
      %v1316 = vadd.f32 %v1314, %v1315
      %v1317 = vsel %vm1056, %v1304, 0.0
      %v1318 = vadd.f32 %v1316, %v1317
      %v1319 = vsel %vm1056, %v1305, 0.0
      %v1320 = vadd.f32 %v1318, %v1319
      %v1321 = vrot.slane %v1320, 4
      %v1322 = vadd.f32 %v1320, %v1321
      %v1323 = vrot.slane %v1322, 2
      %v1324 = vadd.f32 %v1322, %v1323
      %v1325 = vrot.slane %v1324, 1
      %v1326 = vadd.f32 %v1324, %v1325
      %v1327 = vmul.f32 %v1326, %v1288
      %v1328 = vadd.f32 %v1327, 1e-05
      %v1329 = vrsqrt.pop %v1328
      %v1330 = vmul.f32 %v1290, %v1329
      %v1331 = vmul.f32 %v1291, %v1329
      %v1332 = vmul.f32 %v1292, %v1329
      %v1333 = vmul.f32 %v1293, %v1329
      %v1334 = vmul.f32 %v1294, %v1329
      %v1335 = vmul.f32 %v1295, %v1329
      %v1336 = vmul.f32 %v1296, %v1329
      %v1337 = vmul.f32 %v1297, %v1329
      %vm1338 = vcmp.ge.f32.partialorder %v1330, 0.0
      %vm1339 = vcmp.ge.f32.partialorder %v1331, 0.0
      %vm1340 = vcmp.ge.f32.partialorder %v1332, 0.0
      %vm1341 = vcmp.ge.f32.partialorder %v1333, 0.0
      %vm1342 = vcmp.ge.f32.partialorder %v1334, 0.0
      %vm1343 = vcmp.ge.f32.partialorder %v1335, 0.0
      %vm1344 = vcmp.ge.f32.partialorder %v1336, 0.0
      %vm1345 = vcmp.ge.f32.partialorder %v1337, 0.0
      %v1346 = vmul.f32 %v1330, 0.01
      %v1347 = vmul.f32 %v1331, 0.01
      %v1348 = vmul.f32 %v1332, 0.01
      %v1349 = vmul.f32 %v1333, 0.01
      %v1350 = vmul.f32 %v1334, 0.01
      %v1351 = vmul.f32 %v1335, 0.01
      %v1352 = vmul.f32 %v1336, 0.01
      %v1353 = vmul.f32 %v1337, 0.01
      %v1354 = vsel %vm1338, %v1330, %v1346
      %v1355 = vsel %vm1339, %v1331, %v1347
      %v1356 = vsel %vm1340, %v1332, %v1348
      %v1357 = vsel %vm1341, %v1333, %v1349
      %v1358 = vsel %vm1342, %v1334, %v1350
      %v1359 = vsel %vm1343, %v1335, %v1351
      %v1360 = vsel %vm1344, %v1336, %v1352
      %v1361 = vsel %vm1345, %v1337, %v1353
      %v1362 = vrot.slane %v1354, 7
      %v1363 = vrot.slane %v1355, 7
      %v1364 = vrot.slane %v1356, 7
      %v1365 = vrot.slane %v1357, 7
      %v1366 = vrot.slane %v1358, 7
      %v1367 = vrot.slane %v1359, 7
      %v1368 = vrot.slane %v1360, 7
      %v1369 = vrot.slane %v1361, 7
      %v1370 = vsel %vm313, %v1368, %v1369
      %v1371 = vsel %vm313, %v1367, %v1368
      %v1372 = vsel %vm313, %v1366, %v1367
      %v1373 = vsel %vm313, %v1365, %v1366
      %v1374 = vsel %vm313, %v1364, %v1365
      %v1375 = vsel %vm313, %v1363, %v1364
      %v1376 = vsel %vm313, %v1362, %v1363
      %v1377 = vsel %vm313, %v1369, %v1362
      %v1378 = vsel %vm402, %v1370, 0.0
      %v1379 = vsel %vm403, %v1377, 0.0
      %v1380 = vsel %vm404, %v1376, 0.0
      %v1381 = vsel %vm405, %v1375, 0.0
      %v1382 = vsel %vm406, %v1374, 0.0
      %v1383 = vsel %vm407, %v1373, 0.0
      %v1384 = vsel %vm408, %v1372, 0.0
      %v1385 = vsel %vm409, %v1371, 0.0
      %v1386 = vsel %vm426, %v1361, 0.0
      %v1387 = vsel %vm427, %v1354, 0.0
      %v1388 = vsel %vm428, %v1355, 0.0
      %v1389 = vsel %vm429, %v1356, 0.0
      %v1390 = vsel %vm430, %v1357, 0.0
      %v1391 = vsel %vm431, %v1358, 0.0
      %v1392 = vsel %vm432, %v1359, 0.0
      %v1393 = vsel %vm433, %v1360, 0.0
      %v1394 = vrot.slane %v1354, 1
      %v1395 = vrot.slane %v1355, 1
      %v1396 = vrot.slane %v1356, 1
      %v1397 = vrot.slane %v1357, 1
      %v1398 = vrot.slane %v1358, 1
      %v1399 = vrot.slane %v1359, 1
      %v1400 = vrot.slane %v1360, 1
      %v1401 = vrot.slane %v1361, 1
      %v1402 = vsel %vm450, %v1400, %v1401
      %v1403 = vsel %vm450, %v1399, %v1400
      %v1404 = vsel %vm450, %v1398, %v1399
      %v1405 = vsel %vm450, %v1397, %v1398
      %v1406 = vsel %vm450, %v1396, %v1397
      %v1407 = vsel %vm450, %v1395, %v1396
      %v1408 = vsel %vm450, %v1394, %v1395
      %v1409 = vsel %vm450, %v1401, %v1394
      %v1410 = vsel %vm507, %v1409, 0.0
      %v1411 = vsel %vm508, %v1408, 0.0
      %v1412 = vsel %vm509, %v1407, 0.0
      %v1413 = vsel %vm510, %v1406, 0.0
      %v1414 = vsel %vm511, %v1405, 0.0
      %v1415 = vsel %vm512, %v1404, 0.0
      %v1416 = vsel %vm513, %v1403, 0.0
      %v1417 = vsel %vm514, %v1402, 0.0
      %v1418 = vsel %vm587, %v1377, 0.0
      %v1419 = vsel %vm588, %v1376, 0.0
      %v1420 = vsel %vm589, %v1375, 0.0
      %v1421 = vsel %vm590, %v1374, 0.0
      %v1422 = vsel %vm591, %v1373, 0.0
      %v1423 = vsel %vm592, %v1372, 0.0
      %v1424 = vsel %vm593, %v1371, 0.0
      %v1425 = vsel %vm594, %v1370, 0.0
      %v1426 = vsel %vm643, %v1408, 0.0
      %v1427 = vsel %vm644, %v1407, 0.0
      %v1428 = vsel %vm645, %v1406, 0.0
      %v1429 = vsel %vm646, %v1405, 0.0
      %v1430 = vsel %vm647, %v1404, 0.0
      %v1431 = vsel %vm648, %v1403, 0.0
      %v1432 = vsel %vm649, %v1402, 0.0
      %v1433 = vsel %vm650, %v1409, 0.0
      %v1434 = vsel %vm727, %v1376, 0.0
      %v1435 = vsel %vm728, %v1375, 0.0
      %v1436 = vsel %vm729, %v1374, 0.0
      %v1437 = vsel %vm730, %v1373, 0.0
      %v1438 = vsel %vm731, %v1372, 0.0
      %v1439 = vsel %vm732, %v1371, 0.0
      %v1440 = vsel %vm733, %v1370, 0.0
      %v1441 = vsel %vm734, %v1377, 0.0
      %v1442 = vsel %vm751, %v1355, 0.0
      %v1443 = vsel %vm752, %v1356, 0.0
      %v1444 = vsel %vm753, %v1357, 0.0
      %v1445 = vsel %vm754, %v1358, 0.0
      %v1446 = vsel %vm755, %v1359, 0.0
      %v1447 = vsel %vm756, %v1360, 0.0
      %v1448 = vsel %vm757, %v1361, 0.0
      %v1449 = vsel %vm758, %v1354, 0.0
      %v1450 = vsel %vm807, %v1407, 0.0
      %v1451 = vsel %vm808, %v1406, 0.0
      %v1452 = vsel %vm809, %v1405, 0.0
      %v1453 = vsel %vm810, %v1404, 0.0
      %v1454 = vsel %vm811, %v1403, 0.0
      %v1455 = vsel %vm812, %v1402, 0.0
      %v1456 = vsel %vm813, %v1409, 0.0
      %v1457 = vsel %vm814, %v1408, 0.0
      %1466 = vrot.lane.b32.xlu0 %v1386, 32
      %v1467 = vpop.permute.xlu0 %1466
      %1468 = vrot.lane.b32.xlu0 %v1387, 32
      %v1469 = vpop.permute.xlu0 %1468
      %1470 = vrot.lane.b32.xlu0 %v1388, 32
      %v1471 = vpop.permute.xlu0 %1470
      %1472 = vrot.lane.b32.xlu0 %v1389, 32
      %v1473 = vpop.permute.xlu0 %1472
      %1474 = vrot.lane.b32.xlu0 %v1390, 32
      %v1475 = vpop.permute.xlu0 %1474
      %1476 = vrot.lane.b32.xlu0 %v1391, 32
      %v1477 = vpop.permute.xlu0 %1476
      %1478 = vrot.lane.b32.xlu0 %v1392, 32
      %v1479 = vpop.permute.xlu0 %1478
      %1480 = vrot.lane.b32.xlu0 %v1393, 32
      %v1481 = vpop.permute.xlu0 %1480
      %1498 = vrot.lane.b32.xlu0 %v1410, 64
      %v1499 = vpop.permute.xlu0 %1498
      %1500 = vrot.lane.b32.xlu0 %v1411, 64
      %v1501 = vpop.permute.xlu0 %1500
      %1502 = vrot.lane.b32.xlu0 %v1412, 64
      %v1503 = vpop.permute.xlu0 %1502
      %1504 = vrot.lane.b32.xlu0 %v1413, 64
      %v1505 = vpop.permute.xlu0 %1504
      %1506 = vrot.lane.b32.xlu0 %v1414, 64
      %v1507 = vpop.permute.xlu0 %1506
      %1508 = vrot.lane.b32.xlu0 %v1415, 64
      %v1509 = vpop.permute.xlu0 %1508
      %1510 = vrot.lane.b32.xlu0 %v1416, 64
      %v1511 = vpop.permute.xlu0 %1510
      %1512 = vrot.lane.b32.xlu0 %v1417, 64
      %v1513 = vpop.permute.xlu0 %1512
      %1530 = vrot.lane.b32.xlu0 %v1418, 96
      %v1531 = vpop.permute.xlu0 %1530
      %1532 = vrot.lane.b32.xlu0 %v1419, 96
      %v1533 = vpop.permute.xlu0 %1532
      %1534 = vrot.lane.b32.xlu0 %v1420, 96
      %v1535 = vpop.permute.xlu0 %1534
      %1536 = vrot.lane.b32.xlu0 %v1421, 96
      %v1537 = vpop.permute.xlu0 %1536
      %1538 = vrot.lane.b32.xlu0 %v1422, 96
      %v1539 = vpop.permute.xlu0 %1538
      %1540 = vrot.lane.b32.xlu0 %v1423, 96
      %v1541 = vpop.permute.xlu0 %1540
      %1542 = vrot.lane.b32.xlu0 %v1424, 96
      %v1543 = vpop.permute.xlu0 %1542
      %1544 = vrot.lane.b32.xlu0 %v1425, 96
      %v1545 = vpop.permute.xlu0 %1544
      %1562 = vrot.lane.b32.xlu0 %v1426, 32
      %v1563 = vpop.permute.xlu0 %1562
      %1564 = vrot.lane.b32.xlu0 %v1427, 32
      %v1565 = vpop.permute.xlu0 %1564
      %1566 = vrot.lane.b32.xlu0 %v1428, 32
      %v1567 = vpop.permute.xlu0 %1566
      %1568 = vrot.lane.b32.xlu0 %v1429, 32
      %v1569 = vpop.permute.xlu0 %1568
      %1570 = vrot.lane.b32.xlu0 %v1430, 32
      %v1571 = vpop.permute.xlu0 %1570
      %1572 = vrot.lane.b32.xlu0 %v1431, 32
      %v1573 = vpop.permute.xlu0 %1572
      %1574 = vrot.lane.b32.xlu0 %v1432, 32
      %v1575 = vpop.permute.xlu0 %1574
      %1576 = vrot.lane.b32.xlu0 %v1433, 32
      %v1577 = vpop.permute.xlu0 %1576
      %1594 = vrot.lane.b32.xlu0 %v1434, 64
      %v1595 = vpop.permute.xlu0 %1594
      %1596 = vrot.lane.b32.xlu0 %v1435, 64
      %v1597 = vpop.permute.xlu0 %1596
      %1598 = vrot.lane.b32.xlu0 %v1436, 64
      %v1599 = vpop.permute.xlu0 %1598
      %1600 = vrot.lane.b32.xlu0 %v1437, 64
      %v1601 = vpop.permute.xlu0 %1600
      %1602 = vrot.lane.b32.xlu0 %v1438, 64
      %v1603 = vpop.permute.xlu0 %1602
      %1604 = vrot.lane.b32.xlu0 %v1439, 64
      %v1605 = vpop.permute.xlu0 %1604
      %1606 = vrot.lane.b32.xlu0 %v1440, 64
      %v1607 = vpop.permute.xlu0 %1606
      %1608 = vrot.lane.b32.xlu0 %v1441, 64
      %v1609 = vpop.permute.xlu0 %1608
      %1626 = vrot.lane.b32.xlu0 %v1442, 96
      %v1627 = vpop.permute.xlu0 %1626
      %1628 = vrot.lane.b32.xlu0 %v1443, 96
      %v1629 = vpop.permute.xlu0 %1628
      %1630 = vrot.lane.b32.xlu0 %v1444, 96
      %v1631 = vpop.permute.xlu0 %1630
      %1632 = vrot.lane.b32.xlu0 %v1445, 96
      %v1633 = vpop.permute.xlu0 %1632
      %1634 = vrot.lane.b32.xlu0 %v1446, 96
      %v1635 = vpop.permute.xlu0 %1634
      %1636 = vrot.lane.b32.xlu0 %v1447, 96
      %v1637 = vpop.permute.xlu0 %1636
      %1638 = vrot.lane.b32.xlu0 %v1448, 96
      %v1639 = vpop.permute.xlu0 %1638
      %1640 = vrot.lane.b32.xlu0 %v1449, 96
      %v1641 = vpop.permute.xlu0 %1640
      %v1650 = vsel %vm1056, %v1378, %v1467
      %v1651 = vsel %vm1056, %v1379, %v1469
      %v1652 = vsel %vm1056, %v1380, %v1471
      %v1653 = vsel %vm1056, %v1381, %v1473
      %v1654 = vsel %vm1056, %v1382, %v1475
      %v1655 = vsel %vm1056, %v1383, %v1477
      %v1656 = vsel %vm1056, %v1384, %v1479
      %v1657 = vsel %vm1056, %v1385, %v1481
      %v1658 = vsel %vm1074, %v1650, %v1499
      %v1659 = vsel %vm1074, %v1651, %v1501
      %v1660 = vsel %vm1074, %v1652, %v1503
      %v1661 = vsel %vm1074, %v1653, %v1505
      %v1662 = vsel %vm1074, %v1654, %v1507
      %v1663 = vsel %vm1074, %v1655, %v1509
      %v1664 = vsel %vm1074, %v1656, %v1511
      %v1665 = vsel %vm1074, %v1657, %v1513
      %v1666 = vsel %vm1092, %v1658, %v1531
      %v1667 = vsel %vm1092, %v1659, %v1533
      %v1668 = vsel %vm1092, %v1660, %v1535
      %v1669 = vsel %vm1092, %v1661, %v1537
      %v1670 = vsel %vm1092, %v1662, %v1539
      %v1671 = vsel %vm1092, %v1663, %v1541
      %v1672 = vsel %vm1092, %v1664, %v1543
      %v1673 = vsel %vm1092, %v1665, %v1545
      %v1674 = vsel %vm1056, %v1354, %v1563
      %v1675 = vsel %vm1056, %v1355, %v1565
      %v1676 = vsel %vm1056, %v1356, %v1567
      %v1677 = vsel %vm1056, %v1357, %v1569
      %v1678 = vsel %vm1056, %v1358, %v1571
      %v1679 = vsel %vm1056, %v1359, %v1573
      %v1680 = vsel %vm1056, %v1360, %v1575
      %v1681 = vsel %vm1056, %v1361, %v1577
      %v1682 = vsel %vm1074, %v1674, %v1595
      %v1683 = vsel %vm1074, %v1675, %v1597
      %v1684 = vsel %vm1074, %v1676, %v1599
      %v1685 = vsel %vm1074, %v1677, %v1601
      %v1686 = vsel %vm1074, %v1678, %v1603
      %v1687 = vsel %vm1074, %v1679, %v1605
      %v1688 = vsel %vm1074, %v1680, %v1607
      %v1689 = vsel %vm1074, %v1681, %v1609
      %v1690 = vsel %vm1092, %v1682, %v1627
      %v1691 = vsel %vm1092, %v1683, %v1629
      %v1692 = vsel %vm1092, %v1684, %v1631
      %v1693 = vsel %vm1092, %v1685, %v1633
      %v1694 = vsel %vm1092, %v1686, %v1635
      %v1695 = vsel %vm1092, %v1687, %v1637
      %v1696 = vsel %vm1092, %v1688, %v1639
      %v1697 = vsel %vm1092, %v1689, %v1641
      %v1698 = vpack.c.bf16 %v1667, %v1666
      %v1699 = vpack.c.bf16 %v1691, %v1690
      %v1700 = vpack.c.bf16 %v1451, %v1450
      %v1701 = vpack.c.bf16 %v1669, %v1668
      %v1702 = vpack.c.bf16 %v1693, %v1692
      %v1703 = vpack.c.bf16 %v1453, %v1452
      %v1704 = vpack.c.bf16 %v1671, %v1670
      %v1705 = vpack.c.bf16 %v1695, %v1694
      %v1706 = vpack.c.bf16 %v1455, %v1454
      %v1707 = vpack.c.bf16 %v1673, %v1672
      %v1708 = vpack.c.bf16 %v1697, %v1696
      %v1709 = vpack.c.bf16 %v1457, %v1456
      %v1710 = vld [vmem:[%s3] sm:$0xf]
      %v1711 = vld [vmem:[%s3 + $0x4] sm:$0xf]
      %v1712 = vld [vmem:[%s3 + $0x8] sm:$0xf]
      %v1713 = vld [vmem:[%s3 + $0xc] sm:$0xf]
      %v1714 = vld [vmem:[%s3 + $0x10] sm:$0xf]
      %v1715 = vld [vmem:[%s3 + $0x14] sm:$0xf]
      %v1716 = vld [vmem:[%s3 + $0x18] sm:$0xf]
      %v1717 = vld [vmem:[%s3 + $0x1c] sm:$0xf]
      %v1718 = vld [vmem:[%s3 + $0x20] sm:$0xf]
      %v1719 = vld [vmem:[%s3 + $0x24] sm:$0xf]
      %v1720 = vld [vmem:[%s3 + $0x28] sm:$0xf]
      %v1721 = vld [vmem:[%s3 + $0x2c] sm:$0xf]
      %v1722 = vld [vmem:[%s3 + $0x30] sm:$0xf]
      %v1723 = vld [vmem:[%s3 + $0x34] sm:$0xf]
      %v1724 = vld [vmem:[%s3 + $0x38] sm:$0xf]
      %v1725 = vld [vmem:[%s3 + $0x3c] sm:$0xf]
      %v1726 = vld [vmem:[%s3 + $0x40] sm:$0xf]
      %v1727 = vld [vmem:[%s3 + $0x44] sm:$0xf]
      %v1728 = vld [vmem:[%s3 + $0x48] sm:$0xf]
      %v1729 = vld [vmem:[%s3 + $0x4c] sm:$0xf]
      %v1730 = vld [vmem:[%s3 + $0x50] sm:$0xf]
      %v1731 = vld [vmem:[%s3 + $0x54] sm:$0xf]
      %v1732 = vld [vmem:[%s3 + $0x58] sm:$0xf]
      %v1733 = vld [vmem:[%s3 + $0x5c] sm:$0xf]
      %v1734 = vld [vmem:[%s3 + $0x60] sm:$0xf]
      %v1735 = vld [vmem:[%s3 + $0x64] sm:$0xf]
      %v1736 = vld [vmem:[%s3 + $0x68] sm:$0xf]
      %v1737 = vld [vmem:[%s3 + $0x6c] sm:$0xf]
      %v1738 = vld [vmem:[%s3 + $0x70] sm:$0xf]
      %v1739 = vld [vmem:[%s3 + $0x74] sm:$0xf]
      %v1740 = vld [vmem:[%s3 + $0x78] sm:$0xf]
      %v1741 = vld [vmem:[%s3 + $0x7c] sm:$0xf]
      %v1742 = vld [vmem:[%s3 + $0x80] sm:$0xf]
      %v1743 = vld [vmem:[%s3 + $0x84] sm:$0xf]
      %v1744 = vld [vmem:[%s3 + $0x88] sm:$0xf]
      %v1745 = vld [vmem:[%s3 + $0x8c] sm:$0xf]
      %v1782 = vunpack.c.l.b16 %v1710
      %v1783 = vunpack.c.l.b16 %v1711
      %v1784 = vunpack.c.l.b16 %v1712
      %v1785 = vunpack.c.l.b16 %v1713
      %v1786 = vunpack.c.l.b16 %v1714
      %v1787 = vunpack.c.l.b16 %v1715
      %v1788 = vunpack.c.l.b16 %v1716
      %v1789 = vunpack.c.l.b16 %v1717
      %v1790 = vunpack.c.l.b16 %v1718
      %v1791 = vunpack.c.l.b16 %v1719
      %v1792 = vunpack.c.l.b16 %v1720
      %v1793 = vunpack.c.l.b16 %v1721
      %v1794 = vunpack.c.l.b16 %v1722
      %v1795 = vunpack.c.l.b16 %v1723
      %v1796 = vunpack.c.l.b16 %v1724
      %v1797 = vunpack.c.l.b16 %v1725
      %v1798 = vunpack.c.l.b16 %v1726
      %v1799 = vunpack.c.l.b16 %v1727
      %v1800 = vunpack.c.l.b16 %v1728
      %v1801 = vunpack.c.l.b16 %v1729
      %v1802 = vunpack.c.l.b16 %v1730
      %v1803 = vunpack.c.l.b16 %v1731
      %v1804 = vunpack.c.l.b16 %v1732
      %v1805 = vunpack.c.l.b16 %v1733
      %v1806 = vunpack.c.l.b16 %v1734
      %v1807 = vunpack.c.l.b16 %v1735
      %v1808 = vunpack.c.l.b16 %v1736
      %v1809 = vunpack.c.l.b16 %v1737
      %v1810 = vunpack.c.l.b16 %v1738
      %v1811 = vunpack.c.l.b16 %v1739
      %v1812 = vunpack.c.l.b16 %v1740
      %v1813 = vunpack.c.l.b16 %v1741
      %v1814 = vunpack.c.l.b16 %v1742
      %v1815 = vunpack.c.l.b16 %v1743
      %v1816 = vunpack.c.l.b16 %v1744
      %v1817 = vunpack.c.l.b16 %v1745
      %v1818 = vpack.c.b16 %v1783, %v1782
      %v1819 = vpack.c.b16 %v1785, %v1784
      %v1820 = vpack.c.b16 %v1787, %v1786
      %v1821 = vpack.c.b16 %v1789, %v1788
      %v1822 = vpack.c.b16 %v1791, %v1790
      %v1823 = vpack.c.b16 %v1793, %v1792
      %v1824 = vpack.c.b16 %v1795, %v1794
      %v1825 = vpack.c.b16 %v1797, %v1796
      %v1826 = vpack.c.b16 %v1799, %v1798
      %v1827 = vpack.c.b16 %v1801, %v1800
      %v1828 = vpack.c.b16 %v1803, %v1802
      %v1829 = vpack.c.b16 %v1805, %v1804
      %v1830 = vpack.c.b16 %v1807, %v1806
      %v1831 = vpack.c.b16 %v1809, %v1808
      %v1832 = vpack.c.b16 %v1811, %v1810
      %v1833 = vpack.c.b16 %v1813, %v1812
      %v1834 = vpack.c.b16 %v1815, %v1814
      %v1835 = vpack.c.b16 %v1817, %v1816
      %v1855 = vsel %vm1056, %v1700, 0
      %v1858 = vsel %vm1056, %v1703, 0
      %v1861 = vsel %vm1056, %v1706, 0
      %v1864 = vsel %vm1056, %v1709, 0
      %1866 = vmatprep.subr.bf16.mxu0 0
      %1867 = vmatpush1.bf16.msra.mxu0 %v1818
      %1868 = vmatprep.subr.bf16.mxu0 0
      %1869 = vmatpush1.bf16.msra.mxu0 %v1819
      %1870 = vmatprep.subr.bf16.mxu0 0
      %1871 = vmatpush1.bf16.msra.mxu0 %v1820
      %1872 = vmatprep.subr.bf16.mxu0 0
      %1873 = vmatpush1.bf16.msra.mxu0 %v1821
      %1874 = vmatprep.subr.bf16.mxu0 0
      %1875 = vmatpush1.bf16.msra.mxu0 %v1822
      %1876 = vmatprep.subr.bf16.mxu0 0
      %1877 = vmatpush1.bf16.msra.mxu0 %v1823
      %1878 = vmatprep.subr.bf16.mxu0 0
      %1879 = vmatpush1.bf16.msra.mxu0 %v1824
      %1880 = vmatprep.subr.bf16.mxu0 0
      %1881 = vmatpush1.bf16.msra.mxu0 %v1825
      %1882 = vmatprep.subr.bf16.mxu0 0
      %1883 = vmatpush1.bf16.msra.mxu0 %v1826
      %1884 = vmatprep.subr.bf16.mxu0 0
      %1885 = vmatpush1.bf16.msra.mxu0 %v1827
      %1886 = vmatprep.subr.bf16.mxu0 0
      %1887 = vmatpush1.bf16.msra.mxu0 %v1828
      %1888 = vmatprep.subr.bf16.mxu0 0
      %1889 = vmatpush1.bf16.msra.mxu0 %v1829
      %1890 = vmatprep.subr.bf16.mxu0 0
      %1891 = vmatpush1.bf16.msra.mxu0 %v1830
      %1892 = vmatprep.subr.bf16.mxu0 0
      %1893 = vmatpush1.bf16.msra.mxu0 %v1831
      %1894 = vmatprep.subr.bf16.mxu0 0
      %1895 = vmatpush1.bf16.msra.mxu0 %v1832
      %1896 = vmatprep.subr.bf16.mxu0 0
      %1897 = vmatpush1.bf16.msra.mxu0 %v1833
      %1898 = vmatprep.mubr.bf16.mxu0 %v1699
      %1899 = vmatmul.mubr.bf16.gmra.mrb[0].mxu0 %v1698
      %v1900 = vpop.f32.mrb[0].mxu0
      %v1901 = vadd.f32 0.0, %v1900
      %v1902 = vpop.f32.mrb[0].mxu0
      %v1903 = vpop.f32.mrb[0].mxu0
      %v1904 = vadd.f32 0.0, %v1903
      %v1905 = vpop.f32.mrb[0].mxu0
      %1906 = vmatprep.mubr.bf16.mxu0 %v1702
      %1907 = vmatmul.mubr.bf16.gmra.mrb[0].mxu0 %v1701
      %v1908 = vpop.f32.mrb[0].mxu0
      %v1909 = vadd.f32 0.0, %v1908
      %v1910 = vpop.f32.mrb[0].mxu0
      %v1911 = vpop.f32.mrb[0].mxu0
      %v1912 = vadd.f32 0.0, %v1911
      %v1913 = vpop.f32.mrb[0].mxu0
      %1914 = vmatprep.mubr.bf16.mxu0 %v1705
      %1915 = vmatmul.mubr.bf16.gmra.mrb[0].mxu0 %v1704
      %v1916 = vpop.f32.mrb[0].mxu0
      %v1917 = vadd.f32 0.0, %v1916
      %v1918 = vpop.f32.mrb[0].mxu0
      %v1919 = vpop.f32.mrb[0].mxu0
      %v1920 = vadd.f32 0.0, %v1919
      %v1921 = vpop.f32.mrb[0].mxu0
      %1922 = vmatprep.mubr.bf16.mxu0 %v1708
      %1923 = vmatmul.mubr.bf16.gmra.mrb[0].mxu0 %v1707
      %v1924 = vpop.f32.mrb[0].mxu0
      %v1925 = vadd.f32 0.0, %v1924
      %v1926 = vpop.f32.mrb[0].mxu0
      %v1927 = vpop.f32.mrb[0].mxu0
      %v1928 = vadd.f32 0.0, %v1927
      %v1929 = vpop.f32.mrb[0].mxu0
      %1930 = vdwg.mxu0
      %1931 = vmatprep.subr.bf16.mxu0 0
      %1932 = vmatpush1.bf16.msra.mxu0 %v1834
      %1933 = vmatprep.subr.bf16.mxu0 0
      %1934 = vmatpush1.bf16.msra.mxu0 %v1835
      %1935 = vmatprep.subr.bf16.mxu0 0
      %1936 = vmatpush1.bf16.msra.mxu0 0
      %1937 = vmatprep.subr.bf16.mxu0 0
      %1938 = vmatpush1.bf16.msra.mxu0 0
      %1939 = vmatprep.subr.bf16.mxu0 0
      %1940 = vmatpush1.bf16.msra.mxu0 0
      %1941 = vmatprep.subr.bf16.mxu0 0
      %1942 = vmatpush1.bf16.msra.mxu0 0
      %1943 = vmatprep.subr.bf16.mxu0 0
      %1944 = vmatpush1.bf16.msra.mxu0 0
      %1945 = vmatprep.subr.bf16.mxu0 0
      %1946 = vmatpush1.bf16.msra.mxu0 0
      %1947 = vmatprep.subr.bf16.mxu0 0
      %1948 = vmatpush1.bf16.msra.mxu0 0
      %1949 = vmatprep.subr.bf16.mxu0 0
      %1950 = vmatpush1.bf16.msra.mxu0 0
      %1951 = vmatprep.subr.bf16.mxu0 0
      %1952 = vmatpush1.bf16.msra.mxu0 0
      %1953 = vmatprep.subr.bf16.mxu0 0
      %1954 = vmatpush1.bf16.msra.mxu0 0
      %1955 = vmatprep.subr.bf16.mxu0 0
      %1956 = vmatpush1.bf16.msra.mxu0 0
      %1957 = vmatprep.subr.bf16.mxu0 0
      %1958 = vmatpush1.bf16.msra.mxu0 0
      %1959 = vmatprep.subr.bf16.mxu0 0
      %1960 = vmatpush1.bf16.msra.mxu0 0
      %1961 = vmatprep.subr.bf16.mxu0 0
      %1962 = vmatpush1.bf16.msra.mxu0 0
      %1963 = vmatprep.mubr.bf16.mxu0 0
      %1964 = vmatmul.mubr.bf16.gmra.mrb[0].mxu0 %v1855
      %v1965 = vpop.f32.mrb[0].mxu0
      %v1966 = vadd.f32 %v1901, %v1965
      %v1967 = vpop.f32.mrb[0].mxu0
      %v1968 = vpop.f32.mrb[0].mxu0
      %v1969 = vadd.f32 %v1904, %v1968
      %v1970 = vpop.f32.mrb[0].mxu0
      %1971 = vmatprep.mubr.bf16.mxu0 0
      %1972 = vmatmul.mubr.bf16.gmra.mrb[0].mxu0 %v1858
      %v1973 = vpop.f32.mrb[0].mxu0
      %v1974 = vadd.f32 %v1909, %v1973
      %v1975 = vpop.f32.mrb[0].mxu0
      %v1976 = vpop.f32.mrb[0].mxu0
      %v1977 = vadd.f32 %v1912, %v1976
      %v1978 = vpop.f32.mrb[0].mxu0
      %1979 = vmatprep.mubr.bf16.mxu0 0
      %1980 = vmatmul.mubr.bf16.gmra.mrb[0].mxu0 %v1861
      %v1981 = vpop.f32.mrb[0].mxu0
      %v1982 = vadd.f32 %v1917, %v1981
      %v1983 = vpop.f32.mrb[0].mxu0
      %v1984 = vpop.f32.mrb[0].mxu0
      %v1985 = vadd.f32 %v1920, %v1984
      %v1986 = vpop.f32.mrb[0].mxu0
      %1987 = vmatprep.mubr.bf16.mxu0 0
      %1988 = vmatmul.mubr.bf16.gmra.mrb[0].mxu0 %v1864
      %v1989 = vpop.f32.mrb[0].mxu0
      %v1990 = vadd.f32 %v1925, %v1989
      %v1991 = vpop.f32.mrb[0].mxu0
      %v1992 = vpop.f32.mrb[0].mxu0
      %v1993 = vadd.f32 %v1928, %v1992
      %v1994 = vpop.f32.mrb[0].mxu0
      %1995 = vdwg.mxu0
      %v1996 = vsel %vm1056, %v1966, 0.0
      %v1997 = vsel %vm1056, %v1969, 0.0
      %v1998 = vadd.f32 %v1996, %v1997
      %v1999 = vsel %vm1056, %v1974, 0.0
      %v2000 = vadd.f32 %v1998, %v1999
      %v2001 = vsel %vm1056, %v1977, 0.0
      %v2002 = vadd.f32 %v2000, %v2001
      %v2003 = vsel %vm1056, %v1982, 0.0
      %v2004 = vadd.f32 %v2002, %v2003
      %v2005 = vsel %vm1056, %v1985, 0.0
      %v2006 = vadd.f32 %v2004, %v2005
      %v2007 = vsel %vm1056, %v1990, 0.0
      %v2008 = vadd.f32 %v2006, %v2007
      %v2009 = vsel %vm1056, %v1993, 0.0
      %v2010 = vadd.f32 %v2008, %v2009
      %v2011 = vrot.slane %v2010, 4
      %v2012 = vadd.f32 %v2010, %v2011
      %v2013 = vrot.slane %v2012, 2
      %v2014 = vadd.f32 %v2012, %v2013
      %v2015 = vrot.slane %v2014, 1
      %v2016 = vadd.f32 %v2014, %v2015
      %v2017 = vmul.f32 %v2016, %v1288
      %v2018 = vsub.f32 %v1966, %v2017
      %v2019 = vsub.f32 %v1969, %v2017
      %v2020 = vsub.f32 %v1974, %v2017
      %v2021 = vsub.f32 %v1977, %v2017
      %v2022 = vsub.f32 %v1982, %v2017
      %v2023 = vsub.f32 %v1985, %v2017
      %v2024 = vsub.f32 %v1990, %v2017
      %v2025 = vsub.f32 %v1993, %v2017
      %v2026 = vmul.f32 %v2018, %v2018
      %v2027 = vmul.f32 %v2019, %v2019
      %v2028 = vmul.f32 %v2020, %v2020
      %v2029 = vmul.f32 %v2021, %v2021
      %v2030 = vmul.f32 %v2022, %v2022
      %v2031 = vmul.f32 %v2023, %v2023
      %v2032 = vmul.f32 %v2024, %v2024
      %v2033 = vmul.f32 %v2025, %v2025
      %v2034 = vsel %vm1056, %v2026, 0.0
      %v2035 = vsel %vm1056, %v2027, 0.0
      %v2036 = vadd.f32 %v2034, %v2035
      %v2037 = vsel %vm1056, %v2028, 0.0
      %v2038 = vadd.f32 %v2036, %v2037
      %v2039 = vsel %vm1056, %v2029, 0.0
      %v2040 = vadd.f32 %v2038, %v2039
      %v2041 = vsel %vm1056, %v2030, 0.0
      %v2042 = vadd.f32 %v2040, %v2041
      %v2043 = vsel %vm1056, %v2031, 0.0
      %v2044 = vadd.f32 %v2042, %v2043
      %v2045 = vsel %vm1056, %v2032, 0.0
      %v2046 = vadd.f32 %v2044, %v2045
      %v2047 = vsel %vm1056, %v2033, 0.0
      %v2048 = vadd.f32 %v2046, %v2047
      %v2049 = vrot.slane %v2048, 4
      %v2050 = vadd.f32 %v2048, %v2049
      %v2051 = vrot.slane %v2050, 2
      %v2052 = vadd.f32 %v2050, %v2051
      %v2053 = vrot.slane %v2052, 1
      %v2054 = vadd.f32 %v2052, %v2053
      %v2055 = vmul.f32 %v2054, %v1288
      %v2056 = vadd.f32 %v2055, 1e-05
      %v2057 = vrsqrt.pop %v2056
      %v2058 = vmul.f32 %v2018, %v2057
      %v2059 = vmul.f32 %v2019, %v2057
      %v2060 = vmul.f32 %v2020, %v2057
      %v2061 = vmul.f32 %v2021, %v2057
      %v2062 = vmul.f32 %v2022, %v2057
      %v2063 = vmul.f32 %v2023, %v2057
      %v2064 = vmul.f32 %v2024, %v2057
      %v2065 = vmul.f32 %v2025, %v2057
      %v2066 = vsel %vm1056, %v2058, 0.0
      %v2067 = vsel %vm1056, %v2059, 0.0
      %v2068 = vadd.f32 %v2066, %v2067
      %v2069 = vsel %vm1056, %v2060, 0.0
      %v2070 = vadd.f32 %v2068, %v2069
      %v2071 = vsel %vm1056, %v2061, 0.0
      %v2072 = vadd.f32 %v2070, %v2071
      %v2073 = vsel %vm1056, %v2062, 0.0
      %v2074 = vadd.f32 %v2072, %v2073
      %v2075 = vsel %vm1056, %v2063, 0.0
      %v2076 = vadd.f32 %v2074, %v2075
      %v2077 = vsel %vm1056, %v2064, 0.0
      %v2078 = vadd.f32 %v2076, %v2077
      %v2079 = vsel %vm1056, %v2065, 0.0
      %v2080 = vadd.f32 %v2078, %v2079
      %v2081 = vrot.slane %v2080, 4
      %v2082 = vadd.f32 %v2080, %v2081
      %v2083 = vrot.slane %v2082, 2
      %v2084 = vadd.f32 %v2082, %v2083
      %v2085 = vrot.slane %v2084, 1
      %v2086 = vadd.f32 %v2084, %v2085
      %v2087 = vmul.f32 %v2086, %v1288
      %v2088 = vpack.c.bf16 %v2087, %v2087
      %v2089 = vld [vmem:[%s4] sm:$0xf]
      %v2090 = vld [vmem:[%s4 + $0x4] sm:$0xf]
      %v2091 = vld [vmem:[%s4 + $0x8] sm:$0xf]
      %v2092 = vld [vmem:[%s4 + $0xc] sm:$0xf]
      %v2097 = vunpack.c.l.b16 %v2089
      %v2098 = vunpack.c.l.b16 %v2090
      %v2099 = vunpack.c.l.b16 %v2091
      %v2100 = vunpack.c.l.b16 %v2092
      %v2101 = vpack.c.b16 %v2098, %v2097
      %v2102 = vpack.c.b16 %v2100, %v2099
      %v2106 = vsel %vm1056, %v2088, 0
      %2108 = vmatprep.subr.bf16.mxu0 0
      %2109 = vmatpush1.bf16.msra.mxu0 %v2101
      %2110 = vmatprep.subr.bf16.mxu0 0
      %2111 = vmatpush1.bf16.msra.mxu0 %v2102
      %2112 = vmatprep.subr.bf16.mxu0 0
      %2113 = vmatpush1.bf16.msra.mxu0 0
      %2114 = vmatprep.subr.bf16.mxu0 0
      %2115 = vmatpush1.bf16.msra.mxu0 0
      %2116 = vmatprep.subr.bf16.mxu0 0
      %2117 = vmatpush1.bf16.msra.mxu0 0
      %2118 = vmatprep.subr.bf16.mxu0 0
      %2119 = vmatpush1.bf16.msra.mxu0 0
      %2120 = vmatprep.subr.bf16.mxu0 0
      %2121 = vmatpush1.bf16.msra.mxu0 0
      %2122 = vmatprep.subr.bf16.mxu0 0
      %2123 = vmatpush1.bf16.msra.mxu0 0
      %2124 = vmatprep.subr.bf16.mxu0 0
      %2125 = vmatpush1.bf16.msra.mxu0 0
      %2126 = vmatprep.subr.bf16.mxu0 0
      %2127 = vmatpush1.bf16.msra.mxu0 0
      %2128 = vmatprep.subr.bf16.mxu0 0
      %2129 = vmatpush1.bf16.msra.mxu0 0
      %2130 = vmatprep.subr.bf16.mxu0 0
      %2131 = vmatpush1.bf16.msra.mxu0 0
      %2132 = vmatprep.subr.bf16.mxu0 0
      %2133 = vmatpush1.bf16.msra.mxu0 0
      %2134 = vmatprep.subr.bf16.mxu0 0
      %2135 = vmatpush1.bf16.msra.mxu0 0
      %2136 = vmatprep.subr.bf16.mxu0 0
      %2137 = vmatpush1.bf16.msra.mxu0 0
      %2138 = vmatprep.subr.bf16.mxu0 0
      %2139 = vmatpush1.bf16.msra.mxu0 0
      %2140 = vmatprep.mubr.bf16.mxu0 0
      %2141 = vmatmul.mubr.bf16.gmra.mrb[0].mxu0 %v2106
      %v2142 = vpop.f32.mrb[0].mxu0
      %v2143 = vadd.f32 0.0, %v2142
      %v2144 = vpop.f32.mrb[0].mxu0
      %v2145 = vpop.f32.mrb[0].mxu0
      %v2146 = vpop.f32.mrb[0].mxu0
      %2147 = vdwg.mxu0
      %v2148 = vmax.f32 %v2143, 0.0
      %v2149 = vpack.c.bf16 %v2148, %v2148
      %v2150 = vld [vmem:[%s5] sm:$0x1]
      %vm2151 = vcmask 15360
      %v2153 = vsel %vm2151, %v2149, 0
      %vm2155 = vcmask 1040384
      %v2157 = vsel %vm2155, %v2150, 0
      %2159 = vmatprep.subr.bf16.mxu0 0
      %2160 = vmatpush1.bf16.msra.mxu0 %v2157
      %2161 = vmatprep.subr.bf16.mxu0 0
      %2162 = vmatpush1.bf16.msra.mxu0 0
      %2163 = vmatprep.subr.bf16.mxu0 0
      %2164 = vmatpush1.bf16.msra.mxu0 0
      %2165 = vmatprep.subr.bf16.mxu0 0
      %2166 = vmatpush1.bf16.msra.mxu0 0
      %2167 = vmatprep.subr.bf16.mxu0 0
      %2168 = vmatpush1.bf16.msra.mxu0 0
      %2169 = vmatprep.subr.bf16.mxu0 0
      %2170 = vmatpush1.bf16.msra.mxu0 0
      %2171 = vmatprep.subr.bf16.mxu0 0
      %2172 = vmatpush1.bf16.msra.mxu0 0
      %2173 = vmatprep.subr.bf16.mxu0 0
      %2174 = vmatpush1.bf16.msra.mxu0 0
      %2175 = vmatprep.subr.bf16.mxu0 0
      %2176 = vmatpush1.bf16.msra.mxu0 0
      %2177 = vmatprep.subr.bf16.mxu0 0
      %2178 = vmatpush1.bf16.msra.mxu0 0
      %2179 = vmatprep.subr.bf16.mxu0 0
      %2180 = vmatpush1.bf16.msra.mxu0 0
      %2181 = vmatprep.subr.bf16.mxu0 0
      %2182 = vmatpush1.bf16.msra.mxu0 0
      %2183 = vmatprep.subr.bf16.mxu0 0
      %2184 = vmatpush1.bf16.msra.mxu0 0
      %2185 = vmatprep.subr.bf16.mxu0 0
      %2186 = vmatpush1.bf16.msra.mxu0 0
      %2187 = vmatprep.subr.bf16.mxu0 0
      %2188 = vmatpush1.bf16.msra.mxu0 0
      %2189 = vmatprep.subr.bf16.mxu0 0
      %2190 = vmatpush1.bf16.msra.mxu0 0
      %2191 = vmatprep.mubr.bf16.mxu0 0
      %2192 = vmatmul.mubr.bf16.gmra.mrb[0].mxu0 %v2153
      %v2193 = vpop.f32.mrb[0].mxu0
      %v2194 = vadd.f32 0.0, %v2193
      %v2195 = vpop.f32.mrb[0].mxu0
      %v2196 = vpop.f32.mrb[0].mxu0
      %v2197 = vpop.f32.mrb[0].mxu0
      %2198 = vdwg.mxu0
      %v2199 = vsub.f32 0.0, %v2194
      %v2200 = vmul.f32 %v2199, 1.442695
      %v2201 = vpow.pop %v2200
      %v2202 = vadd.f32 %v2201, 1.0
      %v2203 = vrcp.pop %v2202
      %v2204 = vmul.f32 1.0, %v2203
      %v2205 = vlaneseq
      %v2206 = vshrl.u32 %v2205, 7
      %v2207 = vsub.s32 0, %v2206
      %v2208 = vrot.slane %v2204, %v2207
      %v2209 = vmul.f32 %v2058, %v2208
      %v2210 = vmul.f32 %v2059, %v2208
      %v2211 = vmul.f32 %v2060, %v2208
      %v2212 = vmul.f32 %v2061, %v2208
      %v2213 = vmul.f32 %v2062, %v2208
      %v2214 = vmul.f32 %v2063, %v2208
      %v2215 = vmul.f32 %v2064, %v2208
      %v2216 = vmul.f32 %v2065, %v2208
      %v2217 = vpack.c.bf16 %v289, %v288
      %v2218 = vpack.c.bf16 %v291, %v290
      %v2219 = vpack.c.bf16 %v293, %v292
      %v2220 = vpack.c.bf16 %v295, %v294
      %v2221 = vld [vmem:[%s6] sm:$0xf]
      %v2222 = vld [vmem:[%s6 + $0x4] sm:$0xf]
      %v2225 = vunpack.c.l.b16 %v2221
      %v2226 = vunpack.c.l.b16 %v2222
      %v2227 = vpack.c.b16 %v2226, %v2225
      %v2230 = vsel %vm1047, %v2217, 0
      %v2233 = vsel %vm1047, %v2218, 0
      %v2236 = vsel %vm1047, %v2219, 0
      %v2239 = vsel %vm1047, %v2220, 0
      %2241 = vmatprep.subr.bf16.mxu0 0
      %2242 = vmatpush1.bf16.msra.mxu0 %v2227
      %2243 = vmatprep.subr.bf16.mxu0 0
      %2244 = vmatpush1.bf16.msra.mxu0 0
      %2245 = vmatprep.subr.bf16.mxu0 0
      %2246 = vmatpush1.bf16.msra.mxu0 0
      %2247 = vmatprep.subr.bf16.mxu0 0
      %2248 = vmatpush1.bf16.msra.mxu0 0
      %2249 = vmatprep.subr.bf16.mxu0 0
      %2250 = vmatpush1.bf16.msra.mxu0 0
      %2251 = vmatprep.subr.bf16.mxu0 0
      %2252 = vmatpush1.bf16.msra.mxu0 0
      %2253 = vmatprep.subr.bf16.mxu0 0
      %2254 = vmatpush1.bf16.msra.mxu0 0
      %2255 = vmatprep.subr.bf16.mxu0 0
      %2256 = vmatpush1.bf16.msra.mxu0 0
      %2257 = vmatprep.subr.bf16.mxu0 0
      %2258 = vmatpush1.bf16.msra.mxu0 0
      %2259 = vmatprep.subr.bf16.mxu0 0
      %2260 = vmatpush1.bf16.msra.mxu0 0
      %2261 = vmatprep.subr.bf16.mxu0 0
      %2262 = vmatpush1.bf16.msra.mxu0 0
      %2263 = vmatprep.subr.bf16.mxu0 0
      %2264 = vmatpush1.bf16.msra.mxu0 0
      %2265 = vmatprep.subr.bf16.mxu0 0
      %2266 = vmatpush1.bf16.msra.mxu0 0
      %2267 = vmatprep.subr.bf16.mxu0 0
      %2268 = vmatpush1.bf16.msra.mxu0 0
      %2269 = vmatprep.subr.bf16.mxu0 0
      %2270 = vmatpush1.bf16.msra.mxu0 0
      %2271 = vmatprep.subr.bf16.mxu0 0
      %2272 = vmatpush1.bf16.msra.mxu0 0
      %2273 = vmatprep.mubr.bf16.mxu0 0
      %2274 = vmatmul.mubr.bf16.gmra.mrb[0].mxu0 %v2230
      %v2275 = vpop.f32.mrb[0].mxu0
      %v2276 = vadd.f32 0.0, %v2275
      %v2277 = vpop.f32.mrb[0].mxu0
      %v2278 = vpop.f32.mrb[0].mxu0
      %v2279 = vadd.f32 0.0, %v2278
      %v2280 = vpop.f32.mrb[0].mxu0
      %2281 = vmatprep.mubr.bf16.mxu0 0
      %2282 = vmatmul.mubr.bf16.gmra.mrb[0].mxu0 %v2233
      %v2283 = vpop.f32.mrb[0].mxu0
      %v2284 = vadd.f32 0.0, %v2283
      %v2285 = vpop.f32.mrb[0].mxu0
      %v2286 = vpop.f32.mrb[0].mxu0
      %v2287 = vadd.f32 0.0, %v2286
      %v2288 = vpop.f32.mrb[0].mxu0
      %2289 = vmatprep.mubr.bf16.mxu0 0
      %2290 = vmatmul.mubr.bf16.gmra.mrb[0].mxu0 %v2236
      %v2291 = vpop.f32.mrb[0].mxu0
      %v2292 = vadd.f32 0.0, %v2291
      %v2293 = vpop.f32.mrb[0].mxu0
      %v2294 = vpop.f32.mrb[0].mxu0
      %v2295 = vadd.f32 0.0, %v2294
      %v2296 = vpop.f32.mrb[0].mxu0
      %2297 = vmatprep.mubr.bf16.mxu0 0
      %2298 = vmatmul.mubr.bf16.gmra.mrb[0].mxu0 %v2239
      %v2299 = vpop.f32.mrb[0].mxu0
      %v2300 = vadd.f32 0.0, %v2299
      %v2301 = vpop.f32.mrb[0].mxu0
      %v2302 = vpop.f32.mrb[0].mxu0
      %v2303 = vadd.f32 0.0, %v2302
      %v2304 = vpop.f32.mrb[0].mxu0
      %2305 = vdwg.mxu0
      %v2306 = vsel %vm1056, %v2276, 0.0
      %v2307 = vsel %vm1056, %v2279, 0.0
      %v2308 = vadd.f32 %v2306, %v2307
      %v2309 = vsel %vm1056, %v2284, 0.0
      %v2310 = vadd.f32 %v2308, %v2309
      %v2311 = vsel %vm1056, %v2287, 0.0
      %v2312 = vadd.f32 %v2310, %v2311
      %v2313 = vsel %vm1056, %v2292, 0.0
      %v2314 = vadd.f32 %v2312, %v2313
      %v2315 = vsel %vm1056, %v2295, 0.0
      %v2316 = vadd.f32 %v2314, %v2315
      %v2317 = vsel %vm1056, %v2300, 0.0
      %v2318 = vadd.f32 %v2316, %v2317
      %v2319 = vsel %vm1056, %v2303, 0.0
      %v2320 = vadd.f32 %v2318, %v2319
      %v2321 = vrot.slane %v2320, 4
      %v2322 = vadd.f32 %v2320, %v2321
      %v2323 = vrot.slane %v2322, 2
      %v2324 = vadd.f32 %v2322, %v2323
      %v2325 = vrot.slane %v2324, 1
      %v2326 = vadd.f32 %v2324, %v2325
      %v2327 = vmul.f32 %v2326, %v1288
      %v2328 = vsub.f32 %v2276, %v2327
      %v2329 = vsub.f32 %v2279, %v2327
      %v2330 = vsub.f32 %v2284, %v2327
      %v2331 = vsub.f32 %v2287, %v2327
      %v2332 = vsub.f32 %v2292, %v2327
      %v2333 = vsub.f32 %v2295, %v2327
      %v2334 = vsub.f32 %v2300, %v2327
      %v2335 = vsub.f32 %v2303, %v2327
      %v2336 = vmul.f32 %v2328, %v2328
      %v2337 = vmul.f32 %v2329, %v2329
      %v2338 = vmul.f32 %v2330, %v2330
      %v2339 = vmul.f32 %v2331, %v2331
      %v2340 = vmul.f32 %v2332, %v2332
      %v2341 = vmul.f32 %v2333, %v2333
      %v2342 = vmul.f32 %v2334, %v2334
      %v2343 = vmul.f32 %v2335, %v2335
      %v2344 = vsel %vm1056, %v2336, 0.0
      %v2345 = vsel %vm1056, %v2337, 0.0
      %v2346 = vadd.f32 %v2344, %v2345
      %v2347 = vsel %vm1056, %v2338, 0.0
      %v2348 = vadd.f32 %v2346, %v2347
      %v2349 = vsel %vm1056, %v2339, 0.0
      %v2350 = vadd.f32 %v2348, %v2349
      %v2351 = vsel %vm1056, %v2340, 0.0
      %v2352 = vadd.f32 %v2350, %v2351
      %v2353 = vsel %vm1056, %v2341, 0.0
      %v2354 = vadd.f32 %v2352, %v2353
      %v2355 = vsel %vm1056, %v2342, 0.0
      %v2356 = vadd.f32 %v2354, %v2355
      %v2357 = vsel %vm1056, %v2343, 0.0
      %v2358 = vadd.f32 %v2356, %v2357
      %v2359 = vrot.slane %v2358, 4
      %v2360 = vadd.f32 %v2358, %v2359
      %v2361 = vrot.slane %v2360, 2
      %v2362 = vadd.f32 %v2360, %v2361
      %v2363 = vrot.slane %v2362, 1
      %v2364 = vadd.f32 %v2362, %v2363
      %v2365 = vmul.f32 %v2364, %v1288
      %v2366 = vadd.f32 %v2365, 1e-05
      %v2367 = vrsqrt.pop %v2366
      %v2368 = vmul.f32 %v2328, %v2367
      %v2369 = vmul.f32 %v2329, %v2367
      %v2370 = vmul.f32 %v2330, %v2367
      %v2371 = vmul.f32 %v2331, %v2367
      %v2372 = vmul.f32 %v2332, %v2367
      %v2373 = vmul.f32 %v2333, %v2367
      %v2374 = vmul.f32 %v2334, %v2367
      %v2375 = vmul.f32 %v2335, %v2367
      %v2376 = vadd.f32 %v2209, %v2368
      %v2377 = vadd.f32 %v2210, %v2369
      %v2378 = vadd.f32 %v2211, %v2370
      %v2379 = vadd.f32 %v2212, %v2371
      %v2380 = vadd.f32 %v2213, %v2372
      %v2381 = vadd.f32 %v2214, %v2373
      %v2382 = vadd.f32 %v2215, %v2374
      %v2383 = vadd.f32 %v2216, %v2375
      %vm2384 = vcmp.ge.f32.partialorder %v2376, 0.0
      %vm2385 = vcmp.ge.f32.partialorder %v2377, 0.0
      %vm2386 = vcmp.ge.f32.partialorder %v2378, 0.0
      %vm2387 = vcmp.ge.f32.partialorder %v2379, 0.0
      %vm2388 = vcmp.ge.f32.partialorder %v2380, 0.0
      %vm2389 = vcmp.ge.f32.partialorder %v2381, 0.0
      %vm2390 = vcmp.ge.f32.partialorder %v2382, 0.0
      %vm2391 = vcmp.ge.f32.partialorder %v2383, 0.0
      %v2392 = vmul.f32 %v2376, 0.01
      %v2393 = vmul.f32 %v2377, 0.01
      %v2394 = vmul.f32 %v2378, 0.01
      %v2395 = vmul.f32 %v2379, 0.01
      %v2396 = vmul.f32 %v2380, 0.01
      %v2397 = vmul.f32 %v2381, 0.01
      %v2398 = vmul.f32 %v2382, 0.01
      %v2399 = vmul.f32 %v2383, 0.01
      %v2400 = vsel %vm2384, %v2376, %v2392
      %v2401 = vsel %vm2385, %v2377, %v2393
      %v2402 = vsel %vm2386, %v2378, %v2394
      %v2403 = vsel %vm2387, %v2379, %v2395
      %v2404 = vsel %vm2388, %v2380, %v2396
      %v2405 = vsel %vm2389, %v2381, %v2397
      %v2406 = vsel %vm2390, %v2382, %v2398
      %v2407 = vsel %vm2391, %v2383, %v2399
      %2408 = vst.msk [vmem:[%s278] sm:$0xff] %vm1056, %v2400
      %2409 = vst.msk [vmem:[%s278 + $0x8] sm:$0xff] %vm1056, %v2401
      %2410 = vst.msk [vmem:[%s278 + $0x10] sm:$0xff] %vm1056, %v2402
      %2411 = vst.msk [vmem:[%s278 + $0x18] sm:$0xff] %vm1056, %v2403
      %2412 = vst.msk [vmem:[%s278 + $0x20] sm:$0xff] %vm1056, %v2404
      %2413 = vst.msk [vmem:[%s278 + $0x28] sm:$0xff] %vm1056, %v2405
      %2414 = vst.msk [vmem:[%s278 + $0x30] sm:$0xff] %vm1056, %v2406
      %2415 = vst.msk [vmem:[%s278 + $0x38] sm:$0xff] %vm1056, %v2407
      %p2416 = scmp.lt.s32.totalorder %s18, 1
      %s2417 = scalar_select %p2416, %s18, 1
      %s2418 = smul.addr %s2417, 8
      %s2419 = smul.addr %s2418, 8
      %s2420 = scalar_lea.vmem %s7, %s2419
      // Predicated region
      $region49: #{pre_up_block.3} parent=47 // pred_check
        %p2421 = pneg %p188
      $region50: #{pre_up_block.3} parent=47 // pred_check_branch
        %2423 = sbr.rel (%p2421) target = $region52
      $region51: #{pre_up_block.3} parent=47 // pred_region
        _
      $region52: #{pre_up_block.3} parent=47 // pred_fallthru
        _
    $region48: #{pre_up_block.3} parent=5 // pred_fallthru
      _
    %p2424 = scmp.le.s32.totalorder 2, %s13
    // Predicated region
    $region53: #{pre_up_block.3} parent=5 // pred_check
      %p2425 = pneg %p2424
    $region54: #{pre_up_block.3} parent=5 // pred_check_branch
      %2427 = sbr.rel (%p2425) target = $region56
    $region55: #{pre_up_block.3} parent=5 // pred_region
      %s2428 = ssub.s32 %s13, 2
      // Predicated region
      $region57: #{pre_up_block.3} parent=55 // pred_check
        %p2429 = pneg %p194
      $region58: #{pre_up_block.3} parent=55 // pred_check_branch
        %2431 = sbr.rel (%p2429) target = $region60
      $region59: #{pre_up_block.3} parent=55 // pred_region
        %p2432 = scmp.lt.s32.totalorder %s19, 1
        %s2433 = scalar_select %p2432, %s19, 1
        %s2434 = smul.addr %s2433, 8
        %s2435 = smul.addr %s2434, 8
        %s2436 = scalar_lea.vmem %s7, %s2435
      $region60: #{pre_up_block.3} parent=55 // pred_fallthru
        _
    $region56: #{pre_up_block.3} parent=5 // pred_fallthru
      _
  $region6: #{pre_up_block.3} parent=0 // loop_footer
    %s17 = sadd.s32 1, %s13
  $region7: #{pre_up_block.3} parent=0 // loop_footer_branch
    %12 = sbr.rel target = $region3
  $region8: #{pre_up_block.3} parent=0 // loop_exit
    _

// kernel: pre_up_block.5
$region0: #{pre_up_block.5}
  #allocation0 [shape = 'u32[]', space=smem, size = 0x4, offset = 0x4, fixed_abs, tag = 'smem constant byte address 0x4 - core index']
  #allocation1 [shape = 'u32[144,128]{1,0:T(1,128)}', space=vmem, size = 0x12000, scoped, tag = 'internal scratch']
  %s0 = inlined_call_operand.vmem [shape: f32[2,256,32], index: 0, kind: input, shape index: {}]
  %s1 = inlined_call_operand.vmem [shape: s32[256,1], index: 1, kind: input, shape index: {}]
  %s2 = inlined_call_operand.vmem [shape: bf16[288,32], index: 2, kind: input, shape index: {}]
  %s3 = inlined_call_operand.vmem [shape: bf16[288,32], index: 3, kind: input, shape index: {}]
  %s4 = inlined_call_operand.vmem [shape: bf16[32,2], index: 4, kind: input, shape index: {}]
  %s5 = inlined_call_operand.vmem [shape: bf16[2,32], index: 5, kind: input, shape index: {}]
  %s6 = inlined_call_operand.hbm [shape: f32[2,256,32], index: 6, kind: output, shape index: {}]
  %s7 = sld [smem:[#allocation0]]
  $region57: #{pre_up_block.5} parent=0
    _
  %s9 = ssub.s32 1, %s7
  %s10 = scalar_select 0, %s9, %s7
  $region1: #{pre_up_block.5} parent=0
    #allocation2 [shape = 'u8[262144]{0}', space=vmem, size = 0x40000, scoped, tag = 'output window, operand 0']
    #allocation3 [shape = 's32[2]{0}', space=sflag, size = 0x8, scoped, tag = 'scoped memory for pre_up_block.5']
    %11 = vsyncpa [#allocation3], 0
    %s12 = scalar_lea.sflag [#allocation3], 1
    %13 = vsyncpa %s12, 0
    loop: start=0, step=1, limit=4
    $region2: #{pre_up_block.5} parent=1 // loop_pre_header
      _
    $region3: #{pre_up_block.5} parent=1 // loop_header
      %s15 = sphi 0, %s19
      %p16 = scmp.ge.s32.totalorder %s15, 4
      %s25 = sphi 0, %s27
      %s28 = sphi 0, %s25
      %s29 = sphi 0, %s28
      %s45 = sphi 0, %s29
      %s49 = sphi 0, %s49
      %s51 = sphi 0, %s49
      %s52 = sphi 0, %s51
      %s66 = sphi 0, %s52
      %s70 = sphi 0, %s70
      %s72 = sphi 0, %s70
      %s73 = sphi 0, %s72
      %s87 = sphi 0, %s73
      %s91 = sphi 0, %s91
      %s93 = sphi 0, %s91
      %s94 = sphi 0, %s93
      %s108 = sphi 0, %s94
      %s112 = sphi 0, %s112
      %s114 = sphi 0, %s112
      %s115 = sphi 0, %s114
      %s129 = sphi 0, %s115
      %s133 = sphi 0, %s133
      %s135 = sphi 0, %s133
      %s136 = sphi 0, %s135
      %s150 = sphi 0, %s136
      %s156 = sphi 0, %s158
      %s159 = sphi 0, %s156
      %s160 = sphi 0, %s159
      %s176 = sphi 0, %s160
    $region4: #{pre_up_block.5} parent=1 // loop_header_branch
      %18 = sbr.rel (%p16) target = $region8
    $region5: #{pre_up_block.5} parent=1 // loop_body
      %s20 = ssub.s32 %s15, 1
      %s21 = ssub.s32 %s15, 2
      %s22 = sadd.s32 %s15, 1
      %s23 = ssub.s32 %s15, %s22
      %p24 = scmp.eq.s32.totalorder %s23, 0
      %s26 = sadd.s32 %s25, 1
      %s27 = scalar_select %p24, %s25, %s26
      %p30 = pneg %p24
      %p31 = scmp.eq.s32.totalorder %s15, 1
      %p32 = por %p30, %p31
      %p33 = scmp.ne.s32.totalorder %s25, %s28
      %p34 = scmp.eq.s32.totalorder %s15, 0
      %p35 = por %p33, %p34
      %p36 = scmp.ne.s32.totalorder %s25, %s28
      %p37 = scmp.eq.s32.totalorder %s20, 1
      %p38 = por %p36, %p37
      %p39 = scmp.ne.s32.totalorder %s28, %s29
      %p40 = scmp.eq.s32.totalorder %s20, 0
      %p41 = por %p39, %p40
      %p42 = scmp.ne.s32.totalorder %s28, %s29
      %p43 = scmp.eq.s32.totalorder %s21, 1
      %p44 = por %p42, %p43
      %p46 = scmp.ne.s32.totalorder %s29, %s45
      %p47 = scmp.eq.s32.totalorder %s21, 0
      %p48 = por %p46, %p47
      %s50 = sadd.s32 %s49, 1
      %p53 = scmp.eq.s32.totalorder %s15, 1
      %p54 = scmp.ne.s32.totalorder %s49, %s51
      %p55 = scmp.eq.s32.totalorder %s15, 0
      %p56 = por %p54, %p55
      %p57 = scmp.ne.s32.totalorder %s49, %s51
      %p58 = scmp.eq.s32.totalorder %s20, 1
      %p59 = por %p57, %p58
      %p60 = scmp.ne.s32.totalorder %s51, %s52
      %p61 = scmp.eq.s32.totalorder %s20, 0
      %p62 = por %p60, %p61
      %p63 = scmp.ne.s32.totalorder %s51, %s52
      %p64 = scmp.eq.s32.totalorder %s21, 1
      %p65 = por %p63, %p64
      %p67 = scmp.ne.s32.totalorder %s52, %s66
      %p68 = scmp.eq.s32.totalorder %s21, 0
      %p69 = por %p67, %p68
      %s71 = sadd.s32 %s70, 1
      %p74 = scmp.eq.s32.totalorder %s15, 1
      %p75 = scmp.ne.s32.totalorder %s70, %s72
      %p76 = scmp.eq.s32.totalorder %s15, 0
      %p77 = por %p75, %p76
      %p78 = scmp.ne.s32.totalorder %s70, %s72
      %p79 = scmp.eq.s32.totalorder %s20, 1
      %p80 = por %p78, %p79
      %p81 = scmp.ne.s32.totalorder %s72, %s73
      %p82 = scmp.eq.s32.totalorder %s20, 0
      %p83 = por %p81, %p82
      %p84 = scmp.ne.s32.totalorder %s72, %s73
      %p85 = scmp.eq.s32.totalorder %s21, 1
      %p86 = por %p84, %p85
      %p88 = scmp.ne.s32.totalorder %s73, %s87
      %p89 = scmp.eq.s32.totalorder %s21, 0
      %p90 = por %p88, %p89
      %s92 = sadd.s32 %s91, 1
      %p95 = scmp.eq.s32.totalorder %s15, 1
      %p96 = scmp.ne.s32.totalorder %s91, %s93
      %p97 = scmp.eq.s32.totalorder %s15, 0
      %p98 = por %p96, %p97
      %p99 = scmp.ne.s32.totalorder %s91, %s93
      %p100 = scmp.eq.s32.totalorder %s20, 1
      %p101 = por %p99, %p100
      %p102 = scmp.ne.s32.totalorder %s93, %s94
      %p103 = scmp.eq.s32.totalorder %s20, 0
      %p104 = por %p102, %p103
      %p105 = scmp.ne.s32.totalorder %s93, %s94
      %p106 = scmp.eq.s32.totalorder %s21, 1
      %p107 = por %p105, %p106
      %p109 = scmp.ne.s32.totalorder %s94, %s108
      %p110 = scmp.eq.s32.totalorder %s21, 0
      %p111 = por %p109, %p110
      %s113 = sadd.s32 %s112, 1
      %p116 = scmp.eq.s32.totalorder %s15, 1
      %p117 = scmp.ne.s32.totalorder %s112, %s114
      %p118 = scmp.eq.s32.totalorder %s15, 0
      %p119 = por %p117, %p118
      %p120 = scmp.ne.s32.totalorder %s112, %s114
      %p121 = scmp.eq.s32.totalorder %s20, 1
      %p122 = por %p120, %p121
      %p123 = scmp.ne.s32.totalorder %s114, %s115
      %p124 = scmp.eq.s32.totalorder %s20, 0
      %p125 = por %p123, %p124
      %p126 = scmp.ne.s32.totalorder %s114, %s115
      %p127 = scmp.eq.s32.totalorder %s21, 1
      %p128 = por %p126, %p127
      %p130 = scmp.ne.s32.totalorder %s115, %s129
      %p131 = scmp.eq.s32.totalorder %s21, 0
      %p132 = por %p130, %p131
      %s134 = sadd.s32 %s133, 1
      %p137 = scmp.eq.s32.totalorder %s15, 1
      %p138 = scmp.ne.s32.totalorder %s133, %s135
      %p139 = scmp.eq.s32.totalorder %s15, 0
      %p140 = por %p138, %p139
      %p141 = scmp.ne.s32.totalorder %s133, %s135
      %p142 = scmp.eq.s32.totalorder %s20, 1
      %p143 = por %p141, %p142
      %p144 = scmp.ne.s32.totalorder %s135, %s136
      %p145 = scmp.eq.s32.totalorder %s20, 0
      %p146 = por %p144, %p145
      %p147 = scmp.ne.s32.totalorder %s135, %s136
      %p148 = scmp.eq.s32.totalorder %s21, 1
      %p149 = por %p147, %p148
      %p151 = scmp.ne.s32.totalorder %s136, %s150
      %p152 = scmp.eq.s32.totalorder %s21, 0
      %p153 = por %p151, %p152
      %s154 = ssub.s32 %s15, %s22
      %p155 = scmp.eq.s32.totalorder %s154, 0
      %s157 = sadd.s32 %s156, 1
      %s158 = scalar_select %p155, %s156, %s157
      %p161 = pneg %p155
      %p162 = scmp.eq.s32.totalorder %s15, 1
      %p163 = por %p161, %p162
      %p164 = scmp.ne.s32.totalorder %s156, %s159
      %p165 = scmp.eq.s32.totalorder %s15, 0
      %p166 = por %p164, %p165
      %p167 = scmp.ne.s32.totalorder %s156, %s159
      %p168 = scmp.eq.s32.totalorder %s20, 1
      %p169 = por %p167, %p168
      %p170 = scmp.ne.s32.totalorder %s159, %s160
      %p171 = scmp.eq.s32.totalorder %s20, 0
      %p172 = por %p170, %p171
      %p173 = scmp.ne.s32.totalorder %s159, %s160
      %p174 = scmp.eq.s32.totalorder %s21, 1
      %p175 = por %p173, %p174
      %p177 = scmp.ne.s32.totalorder %s160, %s176
      %p178 = scmp.eq.s32.totalorder %s21, 0
      %p179 = por %p177, %p178
      %p180 = scmp.le.s32.totalorder 1, %s15
      %p181 = scmp.lt.s32.totalorder %s15, 3
      %p182 = pnand %p180, %p181
      %p183 = pneg %p182
      // Predicated region
      $region9: #{pre_up_block.5} parent=5 // pred_check
        _
      $region10: #{pre_up_block.5} parent=5 // pred_check_branch
        %185 = sbr.rel (%p182) target = $region12
      $region11: #{pre_up_block.5} parent=5 // pred_region
        %s186 = ssub.s32 %s15, 1
        // Predicated region
        $region13: #{pre_up_block.5} parent=11 // pred_check
          %p187 = pneg %p62
        $region14: #{pre_up_block.5} parent=11 // pred_check_branch
          %189 = sbr.rel (%p187) target = $region16
        $region15: #{pre_up_block.5} parent=11 // pred_region
          _
        $region16: #{pre_up_block.5} parent=11 // pred_fallthru
          _
        // Predicated region
        $region17: #{pre_up_block.5} parent=11 // pred_check
          %p190 = pneg %p83
        $region18: #{pre_up_block.5} parent=11 // pred_check_branch
          %192 = sbr.rel (%p190) target = $region20
        $region19: #{pre_up_block.5} parent=11 // pred_region
          _
        $region20: #{pre_up_block.5} parent=11 // pred_fallthru
          _
        // Predicated region
        $region21: #{pre_up_block.5} parent=11 // pred_check
          %p193 = pneg %p104
        $region22: #{pre_up_block.5} parent=11 // pred_check_branch
          %195 = sbr.rel (%p193) target = $region24
        $region23: #{pre_up_block.5} parent=11 // pred_region
          _
        $region24: #{pre_up_block.5} parent=11 // pred_fallthru
          _
        // Predicated region
        $region25: #{pre_up_block.5} parent=11 // pred_check
          %p196 = pneg %p125
        $region26: #{pre_up_block.5} parent=11 // pred_check_branch
          %198 = sbr.rel (%p196) target = $region28
        $region27: #{pre_up_block.5} parent=11 // pred_region
          _
        $region28: #{pre_up_block.5} parent=11 // pred_fallthru
          _
        // Predicated region
        $region29: #{pre_up_block.5} parent=11 // pred_check
          %p199 = pneg %p146
        $region30: #{pre_up_block.5} parent=11 // pred_check_branch
          %201 = sbr.rel (%p199) target = $region32
        $region31: #{pre_up_block.5} parent=11 // pred_region
          _
        $region32: #{pre_up_block.5} parent=11 // pred_fallthru
          _
      $region12: #{pre_up_block.5} parent=5 // pred_fallthru
        _
      %p202 = scmp.lt.s32.totalorder %s15, 2
      // Predicated region
      $region33: #{pre_up_block.5} parent=5 // pred_check
        %p203 = pneg %p202
      $region34: #{pre_up_block.5} parent=5 // pred_check_branch
        %205 = sbr.rel (%p203) target = $region36
      $region35: #{pre_up_block.5} parent=5 // pred_region
        // Predicated region
        $region37: #{pre_up_block.5} parent=35 // pred_check
          %p206 = pneg %p35
        $region38: #{pre_up_block.5} parent=35 // pred_check_branch
          %208 = sbr.rel (%p206) target = $region40
        $region39: #{pre_up_block.5} parent=35 // pred_region
          %p209 = scmp.lt.s32.totalorder %s15, 1
          %s210 = scalar_select %p209, %s15, 1
          %s211 = smul.addr %s210, 32
          %s212 = smul.addr %s211, 8
          %s213 = scalar_lea.vmem %s0, %s212
        $region40: #{pre_up_block.5} parent=35 // pred_fallthru
          _
      $region36: #{pre_up_block.5} parent=5 // pred_fallthru
        _
      %p214 = scmp.le.s32.totalorder 1, %s15
      %p215 = scmp.lt.s32.totalorder %s15, 3
      %p216 = pnand %p214, %p215
      %p217 = pneg %p216
      // Predicated region
      $region41: #{pre_up_block.5} parent=5 // pred_check
        _
      $region42: #{pre_up_block.5} parent=5 // pred_check_branch
        %219 = sbr.rel (%p216) target = $region44
      $region43: #{pre_up_block.5} parent=5 // pred_region
        %s220 = ssub.s32 %s15, 1
        %p221 = scmp.lt.s32.totalorder %s20, 1
        %s222 = scalar_select %p221, %s20, 1
        %s223 = smul.addr %s222, 32
        %s224 = smul.addr %s223, 8
        %s225 = scalar_lea.vmem %s0, %s224
        %p226 = pneg %p41
        %p227 = pneg %p38
        %p228 = pneg %p62
        %p229 = pneg %p59
        %p230 = pneg %p83
        %p231 = pneg %p80
        %p232 = pneg %p104
        %p233 = pneg %p101
        %p234 = pneg %p125
        %p235 = pneg %p122
        %p236 = pneg %p146
        %p237 = pneg %p143
        %p238 = pneg %p172
        %p239 = pneg %p169
        %s240 = sand.u32 %s159, 1
        %s241 = scalar_lea.sflag [#allocation3], %s240
        %s242 = sand.u32 %s159, 1
        %s243 = smul.addr %s242, 256
        %s244 = scalar_lea.vmem [#allocation2], %s243
        %p245 = scmp.lt.s32.totalorder %s20, 1
        %s246 = scalar_select %p245, %s20, 1
        %s247 = smul.addr %s246, 32
        %s248 = smul.addr %s247, 8
        %s249 = scalar_lea.vmem %s0, %s248
        %v251 = vld [vmem:[%s1] sm:$0xff]
        %v252 = vld [vmem:[%s1 + $0x8] sm:$0xff]
        %v253 = vld [vmem:[%s1 + $0x10] sm:$0xff]
        %v254 = vld [vmem:[%s1 + $0x18] sm:$0xff]
        %v255 = vld [vmem:[%s1 + $0x20] sm:$0xff]
        %v256 = vld [vmem:[%s1 + $0x28] sm:$0xff]
        %v257 = vld [vmem:[%s1 + $0x30] sm:$0xff]
        %v258 = vld [vmem:[%s1 + $0x38] sm:$0xff]
        %v259 = vld [vmem:[%s1 + $0x40] sm:$0xff]
        %v260 = vld [vmem:[%s1 + $0x48] sm:$0xff]
        %v261 = vld [vmem:[%s1 + $0x50] sm:$0xff]
        %v262 = vld [vmem:[%s1 + $0x58] sm:$0xff]
        %v263 = vld [vmem:[%s1 + $0x60] sm:$0xff]
        %v264 = vld [vmem:[%s1 + $0x68] sm:$0xff]
        %v265 = vld [vmem:[%s1 + $0x70] sm:$0xff]
        %v266 = vld [vmem:[%s1 + $0x78] sm:$0xff]
        %v267 = vld [vmem:[%s1 + $0x80] sm:$0xff]
        %v268 = vld [vmem:[%s1 + $0x88] sm:$0xff]
        %v269 = vld [vmem:[%s1 + $0x90] sm:$0xff]
        %v270 = vld [vmem:[%s1 + $0x98] sm:$0xff]
        %v271 = vld [vmem:[%s1 + $0xa0] sm:$0xff]
        %v272 = vld [vmem:[%s1 + $0xa8] sm:$0xff]
        %v273 = vld [vmem:[%s1 + $0xb0] sm:$0xff]
        %v274 = vld [vmem:[%s1 + $0xb8] sm:$0xff]
        %v275 = vld [vmem:[%s1 + $0xc0] sm:$0xff]
        %v276 = vld [vmem:[%s1 + $0xc8] sm:$0xff]
        %v277 = vld [vmem:[%s1 + $0xd0] sm:$0xff]
        %v278 = vld [vmem:[%s1 + $0xd8] sm:$0xff]
        %v279 = vld [vmem:[%s1 + $0xe0] sm:$0xff]
        %v280 = vld [vmem:[%s1 + $0xe8] sm:$0xff]
        %v281 = vld [vmem:[%s1 + $0xf0] sm:$0xff]
        %v282 = vld [vmem:[%s1 + $0xf8] sm:$0xff]
        %v283 = vld [vmem:[%s249] sm:$0xff]
        %v284 = vld [vmem:[%s249 + $0x8] sm:$0xff]
        %v285 = vld [vmem:[%s249 + $0x10] sm:$0xff]
        %v286 = vld [vmem:[%s249 + $0x18] sm:$0xff]
        %v287 = vld [vmem:[%s249 + $0x20] sm:$0xff]
        %v288 = vld [vmem:[%s249 + $0x28] sm:$0xff]
        %v289 = vld [vmem:[%s249 + $0x30] sm:$0xff]
        %v290 = vld [vmem:[%s249 + $0x38] sm:$0xff]
        %v291 = vld [vmem:[%s249 + $0x40] sm:$0xff]
        %v292 = vld [vmem:[%s249 + $0x48] sm:$0xff]
        %v293 = vld [vmem:[%s249 + $0x50] sm:$0xff]
        %v294 = vld [vmem:[%s249 + $0x58] sm:$0xff]
        %v295 = vld [vmem:[%s249 + $0x60] sm:$0xff]
        %v296 = vld [vmem:[%s249 + $0x68] sm:$0xff]
        %v297 = vld [vmem:[%s249 + $0x70] sm:$0xff]
        %v298 = vld [vmem:[%s249 + $0x78] sm:$0xff]
        %v299 = vld [vmem:[%s249 + $0x80] sm:$0xff]
        %v300 = vld [vmem:[%s249 + $0x88] sm:$0xff]
        %v301 = vld [vmem:[%s249 + $0x90] sm:$0xff]
        %v302 = vld [vmem:[%s249 + $0x98] sm:$0xff]
        %v303 = vld [vmem:[%s249 + $0xa0] sm:$0xff]
        %v304 = vld [vmem:[%s249 + $0xa8] sm:$0xff]
        %v305 = vld [vmem:[%s249 + $0xb0] sm:$0xff]
        %v306 = vld [vmem:[%s249 + $0xb8] sm:$0xff]
        %v307 = vld [vmem:[%s249 + $0xc0] sm:$0xff]
        %v308 = vld [vmem:[%s249 + $0xc8] sm:$0xff]
        %v309 = vld [vmem:[%s249 + $0xd0] sm:$0xff]
        %v310 = vld [vmem:[%s249 + $0xd8] sm:$0xff]
        %v311 = vld [vmem:[%s249 + $0xe0] sm:$0xff]
        %v312 = vld [vmem:[%s249 + $0xe8] sm:$0xff]
        %v313 = vld [vmem:[%s249 + $0xf0] sm:$0xff]
        %v314 = vld [vmem:[%s249 + $0xf8] sm:$0xff]
        %v315 = vlaneseq
        %v316 = vshrl.u32 %v315, 7
        %v317 = vadd.s32 %v316, 8
        %v318 = vadd.s32 %v316, 16
        %v319 = vadd.s32 %v316, 24
        %v320 = vadd.s32 %v316, 32
        %v321 = vadd.s32 %v316, 40
        %v322 = vadd.s32 %v316, 48
        %v323 = vadd.s32 %v316, 56
        %v324 = vadd.s32 %v316, 64
        %v325 = vadd.s32 %v316, 72
        %v326 = vadd.s32 %v316, 80
        %v327 = vadd.s32 %v316, 88
        %v328 = vadd.s32 %v316, 96
        %v329 = vadd.s32 %v316, 104
        %v330 = vadd.s32 %v316, 112
        %v331 = vadd.s32 %v316, 120
        %v332 = vadd.s32 %v316, 128
        %v333 = vadd.s32 %v316, 136
        %v334 = vadd.s32 %v316, 144
        %v335 = vadd.s32 %v316, 152
        %v336 = vadd.s32 %v316, 160
        %v337 = vadd.s32 %v316, 168
        %v338 = vadd.s32 %v316, 176
        %v339 = vadd.s32 %v316, 184
        %v340 = vadd.s32 %v316, 192
        %v341 = vadd.s32 %v316, 200
        %v342 = vadd.s32 %v316, 208
        %v343 = vadd.s32 %v316, 216
        %v344 = vadd.s32 %v316, 224
        %v345 = vadd.s32 %v316, 232
        %v346 = vadd.s32 %v316, 240
        %v347 = vadd.s32 %v316, 248
        %v348 = vrot.slane %v283, 7
        %v349 = vrot.slane %v284, 7
        %v350 = vrot.slane %v285, 7
        %v351 = vrot.slane %v286, 7
        %v352 = vrot.slane %v287, 7
        %v353 = vrot.slane %v288, 7
        %v354 = vrot.slane %v289, 7
        %v355 = vrot.slane %v290, 7
        %v356 = vrot.slane %v291, 7
        %v357 = vrot.slane %v292, 7
        %v358 = vrot.slane %v293, 7
        %v359 = vrot.slane %v294, 7
        %v360 = vrot.slane %v295, 7
        %v361 = vrot.slane %v296, 7
        %v362 = vrot.slane %v297, 7
        %v363 = vrot.slane %v298, 7
        %v364 = vrot.slane %v299, 7
        %v365 = vrot.slane %v300, 7
        %v366 = vrot.slane %v301, 7
        %v367 = vrot.slane %v302, 7
        %v368 = vrot.slane %v303, 7
        %v369 = vrot.slane %v304, 7
        %v370 = vrot.slane %v305, 7
        %v371 = vrot.slane %v306, 7
        %v372 = vrot.slane %v307, 7
        %v373 = vrot.slane %v308, 7
        %v374 = vrot.slane %v309, 7
        %v375 = vrot.slane %v310, 7
        %v376 = vrot.slane %v311, 7
        %v377 = vrot.slane %v312, 7
        %v378 = vrot.slane %v313, 7
        %v379 = vrot.slane %v314, 7
        %vm380 = vcmp.lt.s32.totalorder %v316, 1
        %v381 = vsel %vm380, %v378, %v379
        %v382 = vsel %vm380, %v377, %v378
        %v383 = vsel %vm380, %v376, %v377
        %v384 = vsel %vm380, %v375, %v376
        %v385 = vsel %vm380, %v374, %v375
        %v386 = vsel %vm380, %v373, %v374
        %v387 = vsel %vm380, %v372, %v373
        %v388 = vsel %vm380, %v371, %v372
        %v389 = vsel %vm380, %v370, %v371
        %v390 = vsel %vm380, %v369, %v370
        %v391 = vsel %vm380, %v368, %v369
        %v392 = vsel %vm380, %v367, %v368
        %v393 = vsel %vm380, %v366, %v367
        %v394 = vsel %vm380, %v365, %v366
        %v395 = vsel %vm380, %v364, %v365
        %v396 = vsel %vm380, %v363, %v364
        %v397 = vsel %vm380, %v362, %v363
        %v398 = vsel %vm380, %v361, %v362
        %v399 = vsel %vm380, %v360, %v361
        %v400 = vsel %vm380, %v359, %v360
        %v401 = vsel %vm380, %v358, %v359
        %v402 = vsel %vm380, %v357, %v358
        %v403 = vsel %vm380, %v356, %v357
        %v404 = vsel %vm380, %v355, %v356
        %v405 = vsel %vm380, %v354, %v355
        %v406 = vsel %vm380, %v353, %v354
        %v407 = vsel %vm380, %v352, %v353
        %v408 = vsel %vm380, %v351, %v352
        %v409 = vsel %vm380, %v350, %v351
        %v410 = vsel %vm380, %v349, %v350
        %v411 = vsel %vm380, %v348, %v349
        %v412 = vsel %vm380, %v379, %v348
        %v413 = vadd.s32 %v316, 4294967280
        %v414 = vadd.s32 %v317, 4294967280
        %v415 = vadd.s32 %v318, 4294967280
        %v416 = vadd.s32 %v319, 4294967280
        %v417 = vadd.s32 %v320, 4294967280
        %v418 = vadd.s32 %v321, 4294967280
        %v419 = vadd.s32 %v322, 4294967280
        %v420 = vadd.s32 %v323, 4294967280
        %v421 = vadd.s32 %v324, 4294967280
        %v422 = vadd.s32 %v325, 4294967280
        %v423 = vadd.s32 %v326, 4294967280
        %v424 = vadd.s32 %v327, 4294967280
        %v425 = vadd.s32 %v328, 4294967280
        %v426 = vadd.s32 %v329, 4294967280
        %v427 = vadd.s32 %v330, 4294967280
        %v428 = vadd.s32 %v331, 4294967280
        %v429 = vadd.s32 %v332, 4294967280
        %v430 = vadd.s32 %v333, 4294967280
        %v431 = vadd.s32 %v334, 4294967280
        %v432 = vadd.s32 %v335, 4294967280
        %v433 = vadd.s32 %v336, 4294967280
        %v434 = vadd.s32 %v337, 4294967280
        %v435 = vadd.s32 %v338, 4294967280
        %v436 = vadd.s32 %v339, 4294967280
        %v437 = vadd.s32 %v340, 4294967280
        %v438 = vadd.s32 %v341, 4294967280
        %v439 = vadd.s32 %v342, 4294967280
        %v440 = vadd.s32 %v343, 4294967280
        %v441 = vadd.s32 %v344, 4294967280
        %v442 = vadd.s32 %v345, 4294967280
        %v443 = vadd.s32 %v346, 4294967280
        %v444 = vadd.s32 %v347, 4294967280
        %vm445 = vcmp.ge.s32.totalorder %v413, 0
        %vm446 = vcmp.ge.s32.totalorder %v414, 0
        %vm447 = vcmp.ge.s32.totalorder %v415, 0
        %vm448 = vcmp.ge.s32.totalorder %v416, 0
        %vm449 = vcmp.ge.s32.totalorder %v417, 0
        %vm450 = vcmp.ge.s32.totalorder %v418, 0
        %vm451 = vcmp.ge.s32.totalorder %v419, 0
        %vm452 = vcmp.ge.s32.totalorder %v420, 0
        %vm453 = vcmp.ge.s32.totalorder %v421, 0
        %vm454 = vcmp.ge.s32.totalorder %v422, 0
        %vm455 = vcmp.ge.s32.totalorder %v423, 0
        %vm456 = vcmp.ge.s32.totalorder %v424, 0
        %vm457 = vcmp.ge.s32.totalorder %v425, 0
        %vm458 = vcmp.ge.s32.totalorder %v426, 0
        %vm459 = vcmp.ge.s32.totalorder %v427, 0
        %vm460 = vcmp.ge.s32.totalorder %v428, 0
        %vm461 = vcmp.ge.s32.totalorder %v429, 0
        %vm462 = vcmp.ge.s32.totalorder %v430, 0
        %vm463 = vcmp.ge.s32.totalorder %v431, 0
        %vm464 = vcmp.ge.s32.totalorder %v432, 0
        %vm465 = vcmp.ge.s32.totalorder %v433, 0
        %vm466 = vcmp.ge.s32.totalorder %v434, 0
        %vm467 = vcmp.ge.s32.totalorder %v435, 0
        %vm468 = vcmp.ge.s32.totalorder %v436, 0
        %vm469 = vcmp.ge.s32.totalorder %v437, 0
        %vm470 = vcmp.ge.s32.totalorder %v438, 0
        %vm471 = vcmp.ge.s32.totalorder %v439, 0
        %vm472 = vcmp.ge.s32.totalorder %v440, 0
        %vm473 = vcmp.ge.s32.totalorder %v441, 0
        %vm474 = vcmp.ge.s32.totalorder %v442, 0
        %vm475 = vcmp.ge.s32.totalorder %v443, 0
        %vm476 = vcmp.ge.s32.totalorder %v444, 0
        %vm477 = vcmp.le.s32.totalorder %v413, 255
        %vm478 = vcmp.le.s32.totalorder %v414, 255
        %vm479 = vcmp.le.s32.totalorder %v415, 255
        %vm480 = vcmp.le.s32.totalorder %v416, 255
        %vm481 = vcmp.le.s32.totalorder %v417, 255
        %vm482 = vcmp.le.s32.totalorder %v418, 255
        %vm483 = vcmp.le.s32.totalorder %v419, 255
        %vm484 = vcmp.le.s32.totalorder %v420, 255
        %vm485 = vcmp.le.s32.totalorder %v421, 255
        %vm486 = vcmp.le.s32.totalorder %v422, 255
        %vm487 = vcmp.le.s32.totalorder %v423, 255
        %vm488 = vcmp.le.s32.totalorder %v424, 255
        %vm489 = vcmp.le.s32.totalorder %v425, 255
        %vm490 = vcmp.le.s32.totalorder %v426, 255
        %vm491 = vcmp.le.s32.totalorder %v427, 255
        %vm492 = vcmp.le.s32.totalorder %v428, 255
        %vm493 = vcmp.le.s32.totalorder %v429, 255
        %vm494 = vcmp.le.s32.totalorder %v430, 255
        %vm495 = vcmp.le.s32.totalorder %v431, 255
        %vm496 = vcmp.le.s32.totalorder %v432, 255
        %vm497 = vcmp.le.s32.totalorder %v433, 255
        %vm498 = vcmp.le.s32.totalorder %v434, 255
        %vm499 = vcmp.le.s32.totalorder %v435, 255
        %vm500 = vcmp.le.s32.totalorder %v436, 255
        %vm501 = vcmp.le.s32.totalorder %v437, 255
        %vm502 = vcmp.le.s32.totalorder %v438, 255
        %vm503 = vcmp.le.s32.totalorder %v439, 255
        %vm504 = vcmp.le.s32.totalorder %v440, 255
        %vm505 = vcmp.le.s32.totalorder %v441, 255
        %vm506 = vcmp.le.s32.totalorder %v442, 255
        %vm507 = vcmp.le.s32.totalorder %v443, 255
        %vm508 = vcmp.le.s32.totalorder %v444, 255
        %vm509 = vmand %vm445, %vm477
        %vm510 = vmand %vm446, %vm478
        %vm511 = vmand %vm447, %vm479
        %vm512 = vmand %vm448, %vm480
        %vm513 = vmand %vm449, %vm481
        %vm514 = vmand %vm450, %vm482
        %vm515 = vmand %vm451, %vm483
        %vm516 = vmand %vm452, %vm484
        %vm517 = vmand %vm453, %vm485
        %vm518 = vmand %vm454, %vm486
        %vm519 = vmand %vm455, %vm487
        %vm520 = vmand %vm456, %vm488
        %vm521 = vmand %vm457, %vm489
        %vm522 = vmand %vm458, %vm490
        %vm523 = vmand %vm459, %vm491
        %vm524 = vmand %vm460, %vm492
        %vm525 = vmand %vm461, %vm493
        %vm526 = vmand %vm462, %vm494
        %vm527 = vmand %vm463, %vm495
        %vm528 = vmand %vm464, %vm496
        %vm529 = vmand %vm465, %vm497
        %vm530 = vmand %vm466, %vm498
        %vm531 = vmand %vm467, %vm499
        %vm532 = vmand %vm468, %vm500
        %vm533 = vmand %vm469, %vm501
        %vm534 = vmand %vm470, %vm502
        %vm535 = vmand %vm471, %vm503
        %vm536 = vmand %vm472, %vm504
        %vm537 = vmand %vm473, %vm505
        %vm538 = vmand %vm474, %vm506
        %vm539 = vmand %vm475, %vm507
        %vm540 = vmand %vm476, %vm508
        %vm541 = vcmp.ge.s32.totalorder %v251, 1
        %vm542 = vcmp.ge.s32.totalorder %v252, 1
        %vm543 = vcmp.ge.s32.totalorder %v253, 1
        %vm544 = vcmp.ge.s32.totalorder %v254, 1
        %vm545 = vcmp.ge.s32.totalorder %v255, 1
        %vm546 = vcmp.ge.s32.totalorder %v256, 1
        %vm547 = vcmp.ge.s32.totalorder %v257, 1
        %vm548 = vcmp.ge.s32.totalorder %v258, 1
        %vm549 = vcmp.ge.s32.totalorder %v259, 1
        %vm550 = vcmp.ge.s32.totalorder %v260, 1
        %vm551 = vcmp.ge.s32.totalorder %v261, 1
        %vm552 = vcmp.ge.s32.totalorder %v262, 1
        %vm553 = vcmp.ge.s32.totalorder %v263, 1
        %vm554 = vcmp.ge.s32.totalorder %v264, 1
        %vm555 = vcmp.ge.s32.totalorder %v265, 1
        %vm556 = vcmp.ge.s32.totalorder %v266, 1
        %vm557 = vcmp.ge.s32.totalorder %v267, 1
        %vm558 = vcmp.ge.s32.totalorder %v268, 1
        %vm559 = vcmp.ge.s32.totalorder %v269, 1
        %vm560 = vcmp.ge.s32.totalorder %v270, 1
        %vm561 = vcmp.ge.s32.totalorder %v271, 1
        %vm562 = vcmp.ge.s32.totalorder %v272, 1
        %vm563 = vcmp.ge.s32.totalorder %v273, 1
        %vm564 = vcmp.ge.s32.totalorder %v274, 1
        %vm565 = vcmp.ge.s32.totalorder %v275, 1
        %vm566 = vcmp.ge.s32.totalorder %v276, 1
        %vm567 = vcmp.ge.s32.totalorder %v277, 1
        %vm568 = vcmp.ge.s32.totalorder %v278, 1
        %vm569 = vcmp.ge.s32.totalorder %v279, 1
        %vm570 = vcmp.ge.s32.totalorder %v280, 1
        %vm571 = vcmp.ge.s32.totalorder %v281, 1
        %vm572 = vcmp.ge.s32.totalorder %v282, 1
        %vm573 = vmand %vm509, %vm541
        %vm574 = vmand %vm510, %vm542
        %vm575 = vmand %vm511, %vm543
        %vm576 = vmand %vm512, %vm544
        %vm577 = vmand %vm513, %vm545
        %vm578 = vmand %vm514, %vm546
        %vm579 = vmand %vm515, %vm547
        %vm580 = vmand %vm516, %vm548
        %vm581 = vmand %vm517, %vm549
        %vm582 = vmand %vm518, %vm550
        %vm583 = vmand %vm519, %vm551
        %vm584 = vmand %vm520, %vm552
        %vm585 = vmand %vm521, %vm553
        %vm586 = vmand %vm522, %vm554
        %vm587 = vmand %vm523, %vm555
        %vm588 = vmand %vm524, %vm556
        %vm589 = vmand %vm525, %vm557
        %vm590 = vmand %vm526, %vm558
        %vm591 = vmand %vm527, %vm559
        %vm592 = vmand %vm528, %vm560
        %vm593 = vmand %vm529, %vm561
        %vm594 = vmand %vm530, %vm562
        %vm595 = vmand %vm531, %vm563
        %vm596 = vmand %vm532, %vm564
        %vm597 = vmand %vm533, %vm565
        %vm598 = vmand %vm534, %vm566
        %vm599 = vmand %vm535, %vm567
        %vm600 = vmand %vm536, %vm568
        %vm601 = vmand %vm537, %vm569
        %vm602 = vmand %vm538, %vm570
        %vm603 = vmand %vm539, %vm571
        %vm604 = vmand %vm540, %vm572
        %v605 = vsel %vm573, 1, 0
        %v606 = vsel %vm574, 1, 0
        %v607 = vsel %vm575, 1, 0
        %v608 = vsel %vm576, 1, 0
        %v609 = vsel %vm577, 1, 0
        %v610 = vsel %vm578, 1, 0
        %v611 = vsel %vm579, 1, 0
        %v612 = vsel %vm580, 1, 0
        %v613 = vsel %vm581, 1, 0
        %v614 = vsel %vm582, 1, 0
        %v615 = vsel %vm583, 1, 0
        %v616 = vsel %vm584, 1, 0
        %v617 = vsel %vm585, 1, 0
        %v618 = vsel %vm586, 1, 0
        %v619 = vsel %vm587, 1, 0
        %v620 = vsel %vm588, 1, 0
        %v621 = vsel %vm589, 1, 0
        %v622 = vsel %vm590, 1, 0
        %v623 = vsel %vm591, 1, 0
        %v624 = vsel %vm592, 1, 0
        %v625 = vsel %vm593, 1, 0
        %v626 = vsel %vm594, 1, 0
        %v627 = vsel %vm595, 1, 0
        %v628 = vsel %vm596, 1, 0
        %v629 = vsel %vm597, 1, 0
        %v630 = vsel %vm598, 1, 0
        %v631 = vsel %vm599, 1, 0
        %v632 = vsel %vm600, 1, 0
        %v633 = vsel %vm601, 1, 0
        %v634 = vsel %vm602, 1, 0
        %v635 = vsel %vm603, 1, 0
        %v636 = vsel %vm604, 1, 0
        %637 = vset.pattern.permute.xlu0 0
        %638 = vperm.xlu0 %637, %v605
        %v639 = vpop.permute.xlu0 %638
        %640 = vset.pattern.permute.xlu0 0
        %641 = vperm.xlu0 %640, %v606
        %v642 = vpop.permute.xlu0 %641
        %643 = vset.pattern.permute.xlu0 0
        %644 = vperm.xlu0 %643, %v607
        %v645 = vpop.permute.xlu0 %644
        %646 = vset.pattern.permute.xlu0 0
        %647 = vperm.xlu0 %646, %v608
        %v648 = vpop.permute.xlu0 %647
        %649 = vset.pattern.permute.xlu0 0
        %650 = vperm.xlu0 %649, %v609
        %v651 = vpop.permute.xlu0 %650
        %652 = vset.pattern.permute.xlu0 0
        %653 = vperm.xlu0 %652, %v610
        %v654 = vpop.permute.xlu0 %653
        %655 = vset.pattern.permute.xlu0 0
        %656 = vperm.xlu0 %655, %v611
        %v657 = vpop.permute.xlu0 %656
        %658 = vset.pattern.permute.xlu0 0
        %659 = vperm.xlu0 %658, %v612
        %v660 = vpop.permute.xlu0 %659
        %661 = vset.pattern.permute.xlu0 0
        %662 = vperm.xlu0 %661, %v613
        %v663 = vpop.permute.xlu0 %662
        %664 = vset.pattern.permute.xlu0 0
        %665 = vperm.xlu0 %664, %v614
        %v666 = vpop.permute.xlu0 %665
        %667 = vset.pattern.permute.xlu0 0
        %668 = vperm.xlu0 %667, %v615
        %v669 = vpop.permute.xlu0 %668
        %670 = vset.pattern.permute.xlu0 0
        %671 = vperm.xlu0 %670, %v616
        %v672 = vpop.permute.xlu0 %671
        %673 = vset.pattern.permute.xlu0 0
        %674 = vperm.xlu0 %673, %v617
        %v675 = vpop.permute.xlu0 %674
        %676 = vset.pattern.permute.xlu0 0
        %677 = vperm.xlu0 %676, %v618
        %v678 = vpop.permute.xlu0 %677
        %679 = vset.pattern.permute.xlu0 0
        %680 = vperm.xlu0 %679, %v619
        %v681 = vpop.permute.xlu0 %680
        %682 = vset.pattern.permute.xlu0 0
        %683 = vperm.xlu0 %682, %v620
        %v684 = vpop.permute.xlu0 %683
        %685 = vset.pattern.permute.xlu0 0
        %686 = vperm.xlu0 %685, %v621
        %v687 = vpop.permute.xlu0 %686
        %688 = vset.pattern.permute.xlu0 0
        %689 = vperm.xlu0 %688, %v622
        %v690 = vpop.permute.xlu0 %689
        %691 = vset.pattern.permute.xlu0 0
        %692 = vperm.xlu0 %691, %v623
        %v693 = vpop.permute.xlu0 %692
        %694 = vset.pattern.permute.xlu0 0
        %695 = vperm.xlu0 %694, %v624
        %v696 = vpop.permute.xlu0 %695
        %697 = vset.pattern.permute.xlu0 0
        %698 = vperm.xlu0 %697, %v625
        %v699 = vpop.permute.xlu0 %698
        %700 = vset.pattern.permute.xlu0 0
        %701 = vperm.xlu0 %700, %v626
        %v702 = vpop.permute.xlu0 %701
        %703 = vset.pattern.permute.xlu0 0
        %704 = vperm.xlu0 %703, %v627
        %v705 = vpop.permute.xlu0 %704
        %706 = vset.pattern.permute.xlu0 0
        %707 = vperm.xlu0 %706, %v628
        %v708 = vpop.permute.xlu0 %707
        %709 = vset.pattern.permute.xlu0 0
        %710 = vperm.xlu0 %709, %v629
        %v711 = vpop.permute.xlu0 %710
        %712 = vset.pattern.permute.xlu0 0
        %713 = vperm.xlu0 %712, %v630
        %v714 = vpop.permute.xlu0 %713
        %715 = vset.pattern.permute.xlu0 0
        %716 = vperm.xlu0 %715, %v631
        %v717 = vpop.permute.xlu0 %716
        %718 = vset.pattern.permute.xlu0 0
        %719 = vperm.xlu0 %718, %v632
        %v720 = vpop.permute.xlu0 %719
        %721 = vset.pattern.permute.xlu0 0
        %722 = vperm.xlu0 %721, %v633
        %v723 = vpop.permute.xlu0 %722
        %724 = vset.pattern.permute.xlu0 0
        %725 = vperm.xlu0 %724, %v634
        %v726 = vpop.permute.xlu0 %725
        %727 = vset.pattern.permute.xlu0 0
        %728 = vperm.xlu0 %727, %v635
        %v729 = vpop.permute.xlu0 %728
        %730 = vset.pattern.permute.xlu0 0
        %731 = vperm.xlu0 %730, %v636
        %v732 = vpop.permute.xlu0 %731
        %vm733 = vcmp.eq.s32.totalorder %v639, 1
        %vm734 = vcmp.eq.s32.totalorder %v642, 1
        %vm735 = vcmp.eq.s32.totalorder %v645, 1
        %vm736 = vcmp.eq.s32.totalorder %v648, 1
        %vm737 = vcmp.eq.s32.totalorder %v651, 1
        %vm738 = vcmp.eq.s32.totalorder %v654, 1
        %vm739 = vcmp.eq.s32.totalorder %v657, 1
        %vm740 = vcmp.eq.s32.totalorder %v660, 1
        %vm741 = vcmp.eq.s32.totalorder %v663, 1
        %vm742 = vcmp.eq.s32.totalorder %v666, 1
        %vm743 = vcmp.eq.s32.totalorder %v669, 1
        %vm744 = vcmp.eq.s32.totalorder %v672, 1
        %vm745 = vcmp.eq.s32.totalorder %v675, 1
        %vm746 = vcmp.eq.s32.totalorder %v678, 1
        %vm747 = vcmp.eq.s32.totalorder %v681, 1
        %vm748 = vcmp.eq.s32.totalorder %v684, 1
        %vm749 = vcmp.eq.s32.totalorder %v687, 1
        %vm750 = vcmp.eq.s32.totalorder %v690, 1
        %vm751 = vcmp.eq.s32.totalorder %v693, 1
        %vm752 = vcmp.eq.s32.totalorder %v696, 1
        %vm753 = vcmp.eq.s32.totalorder %v699, 1
        %vm754 = vcmp.eq.s32.totalorder %v702, 1
        %vm755 = vcmp.eq.s32.totalorder %v705, 1
        %vm756 = vcmp.eq.s32.totalorder %v708, 1
        %vm757 = vcmp.eq.s32.totalorder %v711, 1
        %vm758 = vcmp.eq.s32.totalorder %v714, 1
        %vm759 = vcmp.eq.s32.totalorder %v717, 1
        %vm760 = vcmp.eq.s32.totalorder %v720, 1
        %vm761 = vcmp.eq.s32.totalorder %v723, 1
        %vm762 = vcmp.eq.s32.totalorder %v726, 1
        %vm763 = vcmp.eq.s32.totalorder %v729, 1
        %vm764 = vcmp.eq.s32.totalorder %v732, 1
        %v765 = vsel %vm733, %v382, 0.0
        %v766 = vsel %vm734, %v381, 0.0
        %v767 = vsel %vm735, %v412, 0.0
        %v768 = vsel %vm736, %v411, 0.0
        %v769 = vsel %vm737, %v410, 0.0
        %v770 = vsel %vm738, %v409, 0.0
        %v771 = vsel %vm739, %v408, 0.0
        %v772 = vsel %vm740, %v407, 0.0
        %v773 = vsel %vm741, %v406, 0.0
        %v774 = vsel %vm742, %v405, 0.0
        %v775 = vsel %vm743, %v404, 0.0
        %v776 = vsel %vm744, %v403, 0.0
        %v777 = vsel %vm745, %v402, 0.0
        %v778 = vsel %vm746, %v401, 0.0
        %v779 = vsel %vm747, %v400, 0.0
        %v780 = vsel %vm748, %v399, 0.0
        %v781 = vsel %vm749, %v398, 0.0
        %v782 = vsel %vm750, %v397, 0.0
        %v783 = vsel %vm751, %v396, 0.0
        %v784 = vsel %vm752, %v395, 0.0
        %v785 = vsel %vm753, %v394, 0.0
        %v786 = vsel %vm754, %v393, 0.0
        %v787 = vsel %vm755, %v392, 0.0
        %v788 = vsel %vm756, %v391, 0.0
        %v789 = vsel %vm757, %v390, 0.0
        %v790 = vsel %vm758, %v389, 0.0
        %v791 = vsel %vm759, %v388, 0.0
        %v792 = vsel %vm760, %v387, 0.0
        %v793 = vsel %vm761, %v386, 0.0
        %v794 = vsel %vm762, %v385, 0.0
        %v795 = vsel %vm763, %v384, 0.0
        %v796 = vsel %vm764, %v383, 0.0
        %v797 = vsel %vm509, 1, 0
        %v798 = vsel %vm510, 1, 0
        %v799 = vsel %vm511, 1, 0
        %v800 = vsel %vm512, 1, 0
        %v801 = vsel %vm513, 1, 0
        %v802 = vsel %vm514, 1, 0
        %v803 = vsel %vm515, 1, 0
        %v804 = vsel %vm516, 1, 0
        %v805 = vsel %vm517, 1, 0
        %v806 = vsel %vm518, 1, 0
        %v807 = vsel %vm519, 1, 0
        %v808 = vsel %vm520, 1, 0
        %v809 = vsel %vm521, 1, 0
        %v810 = vsel %vm522, 1, 0
        %v811 = vsel %vm523, 1, 0
        %v812 = vsel %vm524, 1, 0
        %v813 = vsel %vm525, 1, 0
        %v814 = vsel %vm526, 1, 0
        %v815 = vsel %vm527, 1, 0
        %v816 = vsel %vm528, 1, 0
        %v817 = vsel %vm529, 1, 0
        %v818 = vsel %vm530, 1, 0
        %v819 = vsel %vm531, 1, 0
        %v820 = vsel %vm532, 1, 0
        %v821 = vsel %vm533, 1, 0
        %v822 = vsel %vm534, 1, 0
        %v823 = vsel %vm535, 1, 0
        %v824 = vsel %vm536, 1, 0
        %v825 = vsel %vm537, 1, 0
        %v826 = vsel %vm538, 1, 0
        %v827 = vsel %vm539, 1, 0
        %v828 = vsel %vm540, 1, 0
        %vm829 = vcmp.eq.s32.totalorder %v797, 1
        %vm830 = vcmp.eq.s32.totalorder %v798, 1
        %vm831 = vcmp.eq.s32.totalorder %v799, 1
        %vm832 = vcmp.eq.s32.totalorder %v800, 1
        %vm833 = vcmp.eq.s32.totalorder %v801, 1
        %vm834 = vcmp.eq.s32.totalorder %v802, 1
        %vm835 = vcmp.eq.s32.totalorder %v803, 1
        %vm836 = vcmp.eq.s32.totalorder %v804, 1
        %vm837 = vcmp.eq.s32.totalorder %v805, 1
        %vm838 = vcmp.eq.s32.totalorder %v806, 1
        %vm839 = vcmp.eq.s32.totalorder %v807, 1
        %vm840 = vcmp.eq.s32.totalorder %v808, 1
        %vm841 = vcmp.eq.s32.totalorder %v809, 1
        %vm842 = vcmp.eq.s32.totalorder %v810, 1
        %vm843 = vcmp.eq.s32.totalorder %v811, 1
        %vm844 = vcmp.eq.s32.totalorder %v812, 1
        %vm845 = vcmp.eq.s32.totalorder %v813, 1
        %vm846 = vcmp.eq.s32.totalorder %v814, 1
        %vm847 = vcmp.eq.s32.totalorder %v815, 1
        %vm848 = vcmp.eq.s32.totalorder %v816, 1
        %vm849 = vcmp.eq.s32.totalorder %v817, 1
        %vm850 = vcmp.eq.s32.totalorder %v818, 1
        %vm851 = vcmp.eq.s32.totalorder %v819, 1
        %vm852 = vcmp.eq.s32.totalorder %v820, 1
        %vm853 = vcmp.eq.s32.totalorder %v821, 1
        %vm854 = vcmp.eq.s32.totalorder %v822, 1
        %vm855 = vcmp.eq.s32.totalorder %v823, 1
        %vm856 = vcmp.eq.s32.totalorder %v824, 1
        %vm857 = vcmp.eq.s32.totalorder %v825, 1
        %vm858 = vcmp.eq.s32.totalorder %v826, 1
        %vm859 = vcmp.eq.s32.totalorder %v827, 1
        %vm860 = vcmp.eq.s32.totalorder %v828, 1
        %v861 = vsel %vm829, %v313, 0.0
        %v862 = vsel %vm830, %v314, 0.0
        %v863 = vsel %vm831, %v283, 0.0
        %v864 = vsel %vm832, %v284, 0.0
        %v865 = vsel %vm833, %v285, 0.0
        %v866 = vsel %vm834, %v286, 0.0
        %v867 = vsel %vm835, %v287, 0.0
        %v868 = vsel %vm836, %v288, 0.0
        %v869 = vsel %vm837, %v289, 0.0
        %v870 = vsel %vm838, %v290, 0.0
        %v871 = vsel %vm839, %v291, 0.0
        %v872 = vsel %vm840, %v292, 0.0
        %v873 = vsel %vm841, %v293, 0.0
        %v874 = vsel %vm842, %v294, 0.0
        %v875 = vsel %vm843, %v295, 0.0
        %v876 = vsel %vm844, %v296, 0.0
        %v877 = vsel %vm845, %v297, 0.0
        %v878 = vsel %vm846, %v298, 0.0
        %v879 = vsel %vm847, %v299, 0.0
        %v880 = vsel %vm848, %v300, 0.0
        %v881 = vsel %vm849, %v301, 0.0
        %v882 = vsel %vm850, %v302, 0.0
        %v883 = vsel %vm851, %v303, 0.0
        %v884 = vsel %vm852, %v304, 0.0
        %v885 = vsel %vm853, %v305, 0.0
        %v886 = vsel %vm854, %v306, 0.0
        %v887 = vsel %vm855, %v307, 0.0
        %v888 = vsel %vm856, %v308, 0.0
        %v889 = vsel %vm857, %v309, 0.0
        %v890 = vsel %vm858, %v310, 0.0
        %v891 = vsel %vm859, %v311, 0.0
        %v892 = vsel %vm860, %v312, 0.0
        %v893 = vrot.slane %v283, 1
        %v894 = vrot.slane %v284, 1
        %v895 = vrot.slane %v285, 1
        %v896 = vrot.slane %v286, 1
        %v897 = vrot.slane %v287, 1
        %v898 = vrot.slane %v288, 1
        %v899 = vrot.slane %v289, 1
        %v900 = vrot.slane %v290, 1
        %v901 = vrot.slane %v291, 1
        %v902 = vrot.slane %v292, 1
        %v903 = vrot.slane %v293, 1
        %v904 = vrot.slane %v294, 1
        %v905 = vrot.slane %v295, 1
        %v906 = vrot.slane %v296, 1
        %v907 = vrot.slane %v297, 1
        %v908 = vrot.slane %v298, 1
        %v909 = vrot.slane %v299, 1
        %v910 = vrot.slane %v300, 1
        %v911 = vrot.slane %v301, 1
        %v912 = vrot.slane %v302, 1
        %v913 = vrot.slane %v303, 1
        %v914 = vrot.slane %v304, 1
        %v915 = vrot.slane %v305, 1
        %v916 = vrot.slane %v306, 1
        %v917 = vrot.slane %v307, 1
        %v918 = vrot.slane %v308, 1
        %v919 = vrot.slane %v309, 1
        %v920 = vrot.slane %v310, 1
        %v921 = vrot.slane %v311, 1
        %v922 = vrot.slane %v312, 1
        %v923 = vrot.slane %v313, 1
        %v924 = vrot.slane %v314, 1
        %vm925 = vcmp.lt.s32.totalorder %v316, 7
        %v926 = vsel %vm925, %v923, %v924
        %v927 = vsel %vm925, %v922, %v923
        %v928 = vsel %vm925, %v921, %v922
        %v929 = vsel %vm925, %v920, %v921
        %v930 = vsel %vm925, %v919, %v920
        %v931 = vsel %vm925, %v918, %v919
        %v932 = vsel %vm925, %v917, %v918
        %v933 = vsel %vm925, %v916, %v917
        %v934 = vsel %vm925, %v915, %v916
        %v935 = vsel %vm925, %v914, %v915
        %v936 = vsel %vm925, %v913, %v914
        %v937 = vsel %vm925, %v912, %v913
        %v938 = vsel %vm925, %v911, %v912
        %v939 = vsel %vm925, %v910, %v911
        %v940 = vsel %vm925, %v909, %v910
        %v941 = vsel %vm925, %v908, %v909
        %v942 = vsel %vm925, %v907, %v908
        %v943 = vsel %vm925, %v906, %v907
        %v944 = vsel %vm925, %v905, %v906
        %v945 = vsel %vm925, %v904, %v905
        %v946 = vsel %vm925, %v903, %v904
        %v947 = vsel %vm925, %v902, %v903
        %v948 = vsel %vm925, %v901, %v902
        %v949 = vsel %vm925, %v900, %v901
        %v950 = vsel %vm925, %v899, %v900
        %v951 = vsel %vm925, %v898, %v899
        %v952 = vsel %vm925, %v897, %v898
        %v953 = vsel %vm925, %v896, %v897
        %v954 = vsel %vm925, %v895, %v896
        %v955 = vsel %vm925, %v894, %v895
        %v956 = vsel %vm925, %v893, %v894
        %v957 = vsel %vm925, %v924, %v893
        %vm958 = vcmp.le.s32.totalorder %v251, 14
        %vm959 = vcmp.le.s32.totalorder %v252, 14
        %vm960 = vcmp.le.s32.totalorder %v253, 14
        %vm961 = vcmp.le.s32.totalorder %v254, 14
        %vm962 = vcmp.le.s32.totalorder %v255, 14
        %vm963 = vcmp.le.s32.totalorder %v256, 14
        %vm964 = vcmp.le.s32.totalorder %v257, 14
        %vm965 = vcmp.le.s32.totalorder %v258, 14
        %vm966 = vcmp.le.s32.totalorder %v259, 14
        %vm967 = vcmp.le.s32.totalorder %v260, 14
        %vm968 = vcmp.le.s32.totalorder %v261, 14
        %vm969 = vcmp.le.s32.totalorder %v262, 14
        %vm970 = vcmp.le.s32.totalorder %v263, 14
        %vm971 = vcmp.le.s32.totalorder %v264, 14
        %vm972 = vcmp.le.s32.totalorder %v265, 14
        %vm973 = vcmp.le.s32.totalorder %v266, 14
        %vm974 = vcmp.le.s32.totalorder %v267, 14
        %vm975 = vcmp.le.s32.totalorder %v268, 14
        %vm976 = vcmp.le.s32.totalorder %v269, 14
        %vm977 = vcmp.le.s32.totalorder %v270, 14
        %vm978 = vcmp.le.s32.totalorder %v271, 14
        %vm979 = vcmp.le.s32.totalorder %v272, 14
        %vm980 = vcmp.le.s32.totalorder %v273, 14
        %vm981 = vcmp.le.s32.totalorder %v274, 14
        %vm982 = vcmp.le.s32.totalorder %v275, 14
        %vm983 = vcmp.le.s32.totalorder %v276, 14
        %vm984 = vcmp.le.s32.totalorder %v277, 14
        %vm985 = vcmp.le.s32.totalorder %v278, 14
        %vm986 = vcmp.le.s32.totalorder %v279, 14
        %vm987 = vcmp.le.s32.totalorder %v280, 14
        %vm988 = vcmp.le.s32.totalorder %v281, 14
        %vm989 = vcmp.le.s32.totalorder %v282, 14
        %vm990 = vmand %vm509, %vm958
        %vm991 = vmand %vm510, %vm959
        %vm992 = vmand %vm511, %vm960
        %vm993 = vmand %vm512, %vm961
        %vm994 = vmand %vm513, %vm962
        %vm995 = vmand %vm514, %vm963
        %vm996 = vmand %vm515, %vm964
        %vm997 = vmand %vm516, %vm965
        %vm998 = vmand %vm517, %vm966
        %vm999 = vmand %vm518, %vm967
        %vm1000 = vmand %vm519, %vm968
        %vm1001 = vmand %vm520, %vm969
        %vm1002 = vmand %vm521, %vm970
        %vm1003 = vmand %vm522, %vm971
        %vm1004 = vmand %vm523, %vm972
        %vm1005 = vmand %vm524, %vm973
        %vm1006 = vmand %vm525, %vm974
        %vm1007 = vmand %vm526, %vm975
        %vm1008 = vmand %vm527, %vm976
        %vm1009 = vmand %vm528, %vm977
        %vm1010 = vmand %vm529, %vm978
        %vm1011 = vmand %vm530, %vm979
        %vm1012 = vmand %vm531, %vm980
        %vm1013 = vmand %vm532, %vm981
        %vm1014 = vmand %vm533, %vm982
        %vm1015 = vmand %vm534, %vm983
        %vm1016 = vmand %vm535, %vm984
        %vm1017 = vmand %vm536, %vm985
        %vm1018 = vmand %vm537, %vm986
        %vm1019 = vmand %vm538, %vm987
        %vm1020 = vmand %vm539, %vm988
        %vm1021 = vmand %vm540, %vm989
        %v1022 = vsel %vm990, 1, 0
        %v1023 = vsel %vm991, 1, 0
        %v1024 = vsel %vm992, 1, 0
        %v1025 = vsel %vm993, 1, 0
        %v1026 = vsel %vm994, 1, 0
        %v1027 = vsel %vm995, 1, 0
        %v1028 = vsel %vm996, 1, 0
        %v1029 = vsel %vm997, 1, 0
        %v1030 = vsel %vm998, 1, 0
        %v1031 = vsel %vm999, 1, 0
        %v1032 = vsel %vm1000, 1, 0
        %v1033 = vsel %vm1001, 1, 0
        %v1034 = vsel %vm1002, 1, 0
        %v1035 = vsel %vm1003, 1, 0
        %v1036 = vsel %vm1004, 1, 0
        %v1037 = vsel %vm1005, 1, 0
        %v1038 = vsel %vm1006, 1, 0
        %v1039 = vsel %vm1007, 1, 0
        %v1040 = vsel %vm1008, 1, 0
        %v1041 = vsel %vm1009, 1, 0
        %v1042 = vsel %vm1010, 1, 0
        %v1043 = vsel %vm1011, 1, 0
        %v1044 = vsel %vm1012, 1, 0
        %v1045 = vsel %vm1013, 1, 0
        %v1046 = vsel %vm1014, 1, 0
        %v1047 = vsel %vm1015, 1, 0
        %v1048 = vsel %vm1016, 1, 0
        %v1049 = vsel %vm1017, 1, 0
        %v1050 = vsel %vm1018, 1, 0
        %v1051 = vsel %vm1019, 1, 0
        %v1052 = vsel %vm1020, 1, 0
        %v1053 = vsel %vm1021, 1, 0
        %1054 = vset.pattern.permute.xlu0 0
        %1055 = vperm.xlu0 %1054, %v1022
        %v1056 = vpop.permute.xlu0 %1055
        %1057 = vset.pattern.permute.xlu0 0
        %1058 = vperm.xlu0 %1057, %v1023
        %v1059 = vpop.permute.xlu0 %1058
        %1060 = vset.pattern.permute.xlu0 0
        %1061 = vperm.xlu0 %1060, %v1024
        %v1062 = vpop.permute.xlu0 %1061
        %1063 = vset.pattern.permute.xlu0 0
        %1064 = vperm.xlu0 %1063, %v1025
        %v1065 = vpop.permute.xlu0 %1064
        %1066 = vset.pattern.permute.xlu0 0
        %1067 = vperm.xlu0 %1066, %v1026
        %v1068 = vpop.permute.xlu0 %1067
        %1069 = vset.pattern.permute.xlu0 0
        %1070 = vperm.xlu0 %1069, %v1027
        %v1071 = vpop.permute.xlu0 %1070
        %1072 = vset.pattern.permute.xlu0 0
        %1073 = vperm.xlu0 %1072, %v1028
        %v1074 = vpop.permute.xlu0 %1073
        %1075 = vset.pattern.permute.xlu0 0
        %1076 = vperm.xlu0 %1075, %v1029
        %v1077 = vpop.permute.xlu0 %1076
        %1078 = vset.pattern.permute.xlu0 0
        %1079 = vperm.xlu0 %1078, %v1030
        %v1080 = vpop.permute.xlu0 %1079
        %1081 = vset.pattern.permute.xlu0 0
        %1082 = vperm.xlu0 %1081, %v1031
        %v1083 = vpop.permute.xlu0 %1082
        %1084 = vset.pattern.permute.xlu0 0
        %1085 = vperm.xlu0 %1084, %v1032
        %v1086 = vpop.permute.xlu0 %1085
        %1087 = vset.pattern.permute.xlu0 0
        %1088 = vperm.xlu0 %1087, %v1033
        %v1089 = vpop.permute.xlu0 %1088
        %1090 = vset.pattern.permute.xlu0 0
        %1091 = vperm.xlu0 %1090, %v1034
        %v1092 = vpop.permute.xlu0 %1091
        %1093 = vset.pattern.permute.xlu0 0
        %1094 = vperm.xlu0 %1093, %v1035
        %v1095 = vpop.permute.xlu0 %1094
        %1096 = vset.pattern.permute.xlu0 0
        %1097 = vperm.xlu0 %1096, %v1036
        %v1098 = vpop.permute.xlu0 %1097
        %1099 = vset.pattern.permute.xlu0 0
        %1100 = vperm.xlu0 %1099, %v1037
        %v1101 = vpop.permute.xlu0 %1100
        %1102 = vset.pattern.permute.xlu0 0
        %1103 = vperm.xlu0 %1102, %v1038
        %v1104 = vpop.permute.xlu0 %1103
        %1105 = vset.pattern.permute.xlu0 0
        %1106 = vperm.xlu0 %1105, %v1039
        %v1107 = vpop.permute.xlu0 %1106
        %1108 = vset.pattern.permute.xlu0 0
        %1109 = vperm.xlu0 %1108, %v1040
        %v1110 = vpop.permute.xlu0 %1109
        %1111 = vset.pattern.permute.xlu0 0
        %1112 = vperm.xlu0 %1111, %v1041
        %v1113 = vpop.permute.xlu0 %1112
        %1114 = vset.pattern.permute.xlu0 0
        %1115 = vperm.xlu0 %1114, %v1042
        %v1116 = vpop.permute.xlu0 %1115
        %1117 = vset.pattern.permute.xlu0 0
        %1118 = vperm.xlu0 %1117, %v1043
        %v1119 = vpop.permute.xlu0 %1118
        %1120 = vset.pattern.permute.xlu0 0
        %1121 = vperm.xlu0 %1120, %v1044
        %v1122 = vpop.permute.xlu0 %1121
        %1123 = vset.pattern.permute.xlu0 0
        %1124 = vperm.xlu0 %1123, %v1045
        %v1125 = vpop.permute.xlu0 %1124
        %1126 = vset.pattern.permute.xlu0 0
        %1127 = vperm.xlu0 %1126, %v1046
        %v1128 = vpop.permute.xlu0 %1127
        %1129 = vset.pattern.permute.xlu0 0
        %1130 = vperm.xlu0 %1129, %v1047
        %v1131 = vpop.permute.xlu0 %1130
        %1132 = vset.pattern.permute.xlu0 0
        %1133 = vperm.xlu0 %1132, %v1048
        %v1134 = vpop.permute.xlu0 %1133
        %1135 = vset.pattern.permute.xlu0 0
        %1136 = vperm.xlu0 %1135, %v1049
        %v1137 = vpop.permute.xlu0 %1136
        %1138 = vset.pattern.permute.xlu0 0
        %1139 = vperm.xlu0 %1138, %v1050
        %v1140 = vpop.permute.xlu0 %1139
        %1141 = vset.pattern.permute.xlu0 0
        %1142 = vperm.xlu0 %1141, %v1051
        %v1143 = vpop.permute.xlu0 %1142
        %1144 = vset.pattern.permute.xlu0 0
        %1145 = vperm.xlu0 %1144, %v1052
        %v1146 = vpop.permute.xlu0 %1145
        %1147 = vset.pattern.permute.xlu0 0
        %1148 = vperm.xlu0 %1147, %v1053
        %v1149 = vpop.permute.xlu0 %1148
        %vm1150 = vcmp.eq.s32.totalorder %v1056, 1
        %vm1151 = vcmp.eq.s32.totalorder %v1059, 1
        %vm1152 = vcmp.eq.s32.totalorder %v1062, 1
        %vm1153 = vcmp.eq.s32.totalorder %v1065, 1
        %vm1154 = vcmp.eq.s32.totalorder %v1068, 1
        %vm1155 = vcmp.eq.s32.totalorder %v1071, 1
        %vm1156 = vcmp.eq.s32.totalorder %v1074, 1
        %vm1157 = vcmp.eq.s32.totalorder %v1077, 1
        %vm1158 = vcmp.eq.s32.totalorder %v1080, 1
        %vm1159 = vcmp.eq.s32.totalorder %v1083, 1
        %vm1160 = vcmp.eq.s32.totalorder %v1086, 1
        %vm1161 = vcmp.eq.s32.totalorder %v1089, 1
        %vm1162 = vcmp.eq.s32.totalorder %v1092, 1
        %vm1163 = vcmp.eq.s32.totalorder %v1095, 1
        %vm1164 = vcmp.eq.s32.totalorder %v1098, 1
        %vm1165 = vcmp.eq.s32.totalorder %v1101, 1
        %vm1166 = vcmp.eq.s32.totalorder %v1104, 1
        %vm1167 = vcmp.eq.s32.totalorder %v1107, 1
        %vm1168 = vcmp.eq.s32.totalorder %v1110, 1
        %vm1169 = vcmp.eq.s32.totalorder %v1113, 1
        %vm1170 = vcmp.eq.s32.totalorder %v1116, 1
        %vm1171 = vcmp.eq.s32.totalorder %v1119, 1
        %vm1172 = vcmp.eq.s32.totalorder %v1122, 1
        %vm1173 = vcmp.eq.s32.totalorder %v1125, 1
        %vm1174 = vcmp.eq.s32.totalorder %v1128, 1
        %vm1175 = vcmp.eq.s32.totalorder %v1131, 1
        %vm1176 = vcmp.eq.s32.totalorder %v1134, 1
        %vm1177 = vcmp.eq.s32.totalorder %v1137, 1
        %vm1178 = vcmp.eq.s32.totalorder %v1140, 1
        %vm1179 = vcmp.eq.s32.totalorder %v1143, 1
        %vm1180 = vcmp.eq.s32.totalorder %v1146, 1
        %vm1181 = vcmp.eq.s32.totalorder %v1149, 1
        %v1182 = vsel %vm1150, %v926, 0.0
        %v1183 = vsel %vm1151, %v957, 0.0
        %v1184 = vsel %vm1152, %v956, 0.0
        %v1185 = vsel %vm1153, %v955, 0.0
        %v1186 = vsel %vm1154, %v954, 0.0
        %v1187 = vsel %vm1155, %v953, 0.0
        %v1188 = vsel %vm1156, %v952, 0.0
        %v1189 = vsel %vm1157, %v951, 0.0
        %v1190 = vsel %vm1158, %v950, 0.0
        %v1191 = vsel %vm1159, %v949, 0.0
        %v1192 = vsel %vm1160, %v948, 0.0
        %v1193 = vsel %vm1161, %v947, 0.0
        %v1194 = vsel %vm1162, %v946, 0.0
        %v1195 = vsel %vm1163, %v945, 0.0
        %v1196 = vsel %vm1164, %v944, 0.0
        %v1197 = vsel %vm1165, %v943, 0.0
        %v1198 = vsel %vm1166, %v942, 0.0
        %v1199 = vsel %vm1167, %v941, 0.0
        %v1200 = vsel %vm1168, %v940, 0.0
        %v1201 = vsel %vm1169, %v939, 0.0
        %v1202 = vsel %vm1170, %v938, 0.0
        %v1203 = vsel %vm1171, %v937, 0.0
        %v1204 = vsel %vm1172, %v936, 0.0
        %v1205 = vsel %vm1173, %v935, 0.0
        %v1206 = vsel %vm1174, %v934, 0.0
        %v1207 = vsel %vm1175, %v933, 0.0
        %v1208 = vsel %vm1176, %v932, 0.0
        %v1209 = vsel %vm1177, %v931, 0.0
        %v1210 = vsel %vm1178, %v930, 0.0
        %v1211 = vsel %vm1179, %v929, 0.0
        %v1212 = vsel %vm1180, %v928, 0.0
        %v1213 = vsel %vm1181, %v927, 0.0
        %vm1214 = vcmp.ge.s32.totalorder %v316, 0
        %vm1215 = vcmp.ge.s32.totalorder %v317, 0
        %vm1216 = vcmp.ge.s32.totalorder %v318, 0
        %vm1217 = vcmp.ge.s32.totalorder %v319, 0
        %vm1218 = vcmp.ge.s32.totalorder %v320, 0
        %vm1219 = vcmp.ge.s32.totalorder %v321, 0
        %vm1220 = vcmp.ge.s32.totalorder %v322, 0
        %vm1221 = vcmp.ge.s32.totalorder %v323, 0
        %vm1222 = vcmp.ge.s32.totalorder %v324, 0
        %vm1223 = vcmp.ge.s32.totalorder %v325, 0
        %vm1224 = vcmp.ge.s32.totalorder %v326, 0
        %vm1225 = vcmp.ge.s32.totalorder %v327, 0
        %vm1226 = vcmp.ge.s32.totalorder %v328, 0
        %vm1227 = vcmp.ge.s32.totalorder %v329, 0
        %vm1228 = vcmp.ge.s32.totalorder %v330, 0
        %vm1229 = vcmp.ge.s32.totalorder %v331, 0
        %vm1230 = vcmp.ge.s32.totalorder %v332, 0
        %vm1231 = vcmp.ge.s32.totalorder %v333, 0
        %vm1232 = vcmp.ge.s32.totalorder %v334, 0
        %vm1233 = vcmp.ge.s32.totalorder %v335, 0
        %vm1234 = vcmp.ge.s32.totalorder %v336, 0
        %vm1235 = vcmp.ge.s32.totalorder %v337, 0
        %vm1236 = vcmp.ge.s32.totalorder %v338, 0
        %vm1237 = vcmp.ge.s32.totalorder %v339, 0
        %vm1238 = vcmp.ge.s32.totalorder %v340, 0
        %vm1239 = vcmp.ge.s32.totalorder %v341, 0
        %vm1240 = vcmp.ge.s32.totalorder %v342, 0
        %vm1241 = vcmp.ge.s32.totalorder %v343, 0
        %vm1242 = vcmp.ge.s32.totalorder %v344, 0
        %vm1243 = vcmp.ge.s32.totalorder %v345, 0
        %vm1244 = vcmp.ge.s32.totalorder %v346, 0
        %vm1245 = vcmp.ge.s32.totalorder %v347, 0
        %vm1246 = vcmp.le.s32.totalorder %v316, 255
        %vm1247 = vcmp.le.s32.totalorder %v317, 255
        %vm1248 = vcmp.le.s32.totalorder %v318, 255
        %vm1249 = vcmp.le.s32.totalorder %v319, 255
        %vm1250 = vcmp.le.s32.totalorder %v320, 255
        %vm1251 = vcmp.le.s32.totalorder %v321, 255
        %vm1252 = vcmp.le.s32.totalorder %v322, 255
        %vm1253 = vcmp.le.s32.totalorder %v323, 255
        %vm1254 = vcmp.le.s32.totalorder %v324, 255
        %vm1255 = vcmp.le.s32.totalorder %v325, 255
        %vm1256 = vcmp.le.s32.totalorder %v326, 255
        %vm1257 = vcmp.le.s32.totalorder %v327, 255
        %vm1258 = vcmp.le.s32.totalorder %v328, 255
        %vm1259 = vcmp.le.s32.totalorder %v329, 255
        %vm1260 = vcmp.le.s32.totalorder %v330, 255
        %vm1261 = vcmp.le.s32.totalorder %v331, 255
        %vm1262 = vcmp.le.s32.totalorder %v332, 255
        %vm1263 = vcmp.le.s32.totalorder %v333, 255
        %vm1264 = vcmp.le.s32.totalorder %v334, 255
        %vm1265 = vcmp.le.s32.totalorder %v335, 255
        %vm1266 = vcmp.le.s32.totalorder %v336, 255
        %vm1267 = vcmp.le.s32.totalorder %v337, 255
        %vm1268 = vcmp.le.s32.totalorder %v338, 255
        %vm1269 = vcmp.le.s32.totalorder %v339, 255
        %vm1270 = vcmp.le.s32.totalorder %v340, 255
        %vm1271 = vcmp.le.s32.totalorder %v341, 255
        %vm1272 = vcmp.le.s32.totalorder %v342, 255
        %vm1273 = vcmp.le.s32.totalorder %v343, 255
        %vm1274 = vcmp.le.s32.totalorder %v344, 255
        %vm1275 = vcmp.le.s32.totalorder %v345, 255
        %vm1276 = vcmp.le.s32.totalorder %v346, 255
        %vm1277 = vcmp.le.s32.totalorder %v347, 255
        %vm1278 = vmand %vm1214, %vm1246
        %vm1279 = vmand %vm1215, %vm1247
        %vm1280 = vmand %vm1216, %vm1248
        %vm1281 = vmand %vm1217, %vm1249
        %vm1282 = vmand %vm1218, %vm1250
        %vm1283 = vmand %vm1219, %vm1251
        %vm1284 = vmand %vm1220, %vm1252
        %vm1285 = vmand %vm1221, %vm1253
        %vm1286 = vmand %vm1222, %vm1254
        %vm1287 = vmand %vm1223, %vm1255
        %vm1288 = vmand %vm1224, %vm1256
        %vm1289 = vmand %vm1225, %vm1257
        %vm1290 = vmand %vm1226, %vm1258
        %vm1291 = vmand %vm1227, %vm1259
        %vm1292 = vmand %vm1228, %vm1260
        %vm1293 = vmand %vm1229, %vm1261
        %vm1294 = vmand %vm1230, %vm1262
        %vm1295 = vmand %vm1231, %vm1263
        %vm1296 = vmand %vm1232, %vm1264
        %vm1297 = vmand %vm1233, %vm1265
        %vm1298 = vmand %vm1234, %vm1266
        %vm1299 = vmand %vm1235, %vm1267
        %vm1300 = vmand %vm1236, %vm1268
        %vm1301 = vmand %vm1237, %vm1269
        %vm1302 = vmand %vm1238, %vm1270
        %vm1303 = vmand %vm1239, %vm1271
        %vm1304 = vmand %vm1240, %vm1272
        %vm1305 = vmand %vm1241, %vm1273
        %vm1306 = vmand %vm1242, %vm1274
        %vm1307 = vmand %vm1243, %vm1275
        %vm1308 = vmand %vm1244, %vm1276
        %vm1309 = vmand %vm1245, %vm1277
        %vm1310 = vmand %vm1278, %vm541
        %vm1311 = vmand %vm1279, %vm542
        %vm1312 = vmand %vm1280, %vm543
        %vm1313 = vmand %vm1281, %vm544
        %vm1314 = vmand %vm1282, %vm545
        %vm1315 = vmand %vm1283, %vm546
        %vm1316 = vmand %vm1284, %vm547
        %vm1317 = vmand %vm1285, %vm548
        %vm1318 = vmand %vm1286, %vm549
        %vm1319 = vmand %vm1287, %vm550
        %vm1320 = vmand %vm1288, %vm551
        %vm1321 = vmand %vm1289, %vm552
        %vm1322 = vmand %vm1290, %vm553
        %vm1323 = vmand %vm1291, %vm554
        %vm1324 = vmand %vm1292, %vm555
        %vm1325 = vmand %vm1293, %vm556
        %vm1326 = vmand %vm1294, %vm557
        %vm1327 = vmand %vm1295, %vm558
        %vm1328 = vmand %vm1296, %vm559
        %vm1329 = vmand %vm1297, %vm560
        %vm1330 = vmand %vm1298, %vm561
        %vm1331 = vmand %vm1299, %vm562
        %vm1332 = vmand %vm1300, %vm563
        %vm1333 = vmand %vm1301, %vm564
        %vm1334 = vmand %vm1302, %vm565
        %vm1335 = vmand %vm1303, %vm566
        %vm1336 = vmand %vm1304, %vm567
        %vm1337 = vmand %vm1305, %vm568
        %vm1338 = vmand %vm1306, %vm569
        %vm1339 = vmand %vm1307, %vm570
        %vm1340 = vmand %vm1308, %vm571
        %vm1341 = vmand %vm1309, %vm572
        %v1342 = vsel %vm1310, 1, 0
        %v1343 = vsel %vm1311, 1, 0
        %v1344 = vsel %vm1312, 1, 0
        %v1345 = vsel %vm1313, 1, 0
        %v1346 = vsel %vm1314, 1, 0
        %v1347 = vsel %vm1315, 1, 0
        %v1348 = vsel %vm1316, 1, 0
        %v1349 = vsel %vm1317, 1, 0
        %v1350 = vsel %vm1318, 1, 0
        %v1351 = vsel %vm1319, 1, 0
        %v1352 = vsel %vm1320, 1, 0
        %v1353 = vsel %vm1321, 1, 0
        %v1354 = vsel %vm1322, 1, 0
        %v1355 = vsel %vm1323, 1, 0
        %v1356 = vsel %vm1324, 1, 0
        %v1357 = vsel %vm1325, 1, 0
        %v1358 = vsel %vm1326, 1, 0
        %v1359 = vsel %vm1327, 1, 0
        %v1360 = vsel %vm1328, 1, 0
        %v1361 = vsel %vm1329, 1, 0
        %v1362 = vsel %vm1330, 1, 0
        %v1363 = vsel %vm1331, 1, 0
        %v1364 = vsel %vm1332, 1, 0
        %v1365 = vsel %vm1333, 1, 0
        %v1366 = vsel %vm1334, 1, 0
        %v1367 = vsel %vm1335, 1, 0
        %v1368 = vsel %vm1336, 1, 0
        %v1369 = vsel %vm1337, 1, 0
        %v1370 = vsel %vm1338, 1, 0
        %v1371 = vsel %vm1339, 1, 0
        %v1372 = vsel %vm1340, 1, 0
        %v1373 = vsel %vm1341, 1, 0
        %1374 = vset.pattern.permute.xlu0 0
        %1375 = vperm.xlu0 %1374, %v1342
        %v1376 = vpop.permute.xlu0 %1375
        %1377 = vset.pattern.permute.xlu0 0
        %1378 = vperm.xlu0 %1377, %v1343
        %v1379 = vpop.permute.xlu0 %1378
        %1380 = vset.pattern.permute.xlu0 0
        %1381 = vperm.xlu0 %1380, %v1344
        %v1382 = vpop.permute.xlu0 %1381
        %1383 = vset.pattern.permute.xlu0 0
        %1384 = vperm.xlu0 %1383, %v1345
        %v1385 = vpop.permute.xlu0 %1384
        %1386 = vset.pattern.permute.xlu0 0
        %1387 = vperm.xlu0 %1386, %v1346
        %v1388 = vpop.permute.xlu0 %1387
        %1389 = vset.pattern.permute.xlu0 0
        %1390 = vperm.xlu0 %1389, %v1347
        %v1391 = vpop.permute.xlu0 %1390
        %1392 = vset.pattern.permute.xlu0 0
        %1393 = vperm.xlu0 %1392, %v1348
        %v1394 = vpop.permute.xlu0 %1393
        %1395 = vset.pattern.permute.xlu0 0
        %1396 = vperm.xlu0 %1395, %v1349
        %v1397 = vpop.permute.xlu0 %1396
        %1398 = vset.pattern.permute.xlu0 0
        %1399 = vperm.xlu0 %1398, %v1350
        %v1400 = vpop.permute.xlu0 %1399
        %1401 = vset.pattern.permute.xlu0 0
        %1402 = vperm.xlu0 %1401, %v1351
        %v1403 = vpop.permute.xlu0 %1402
        %1404 = vset.pattern.permute.xlu0 0
        %1405 = vperm.xlu0 %1404, %v1352
        %v1406 = vpop.permute.xlu0 %1405
        %1407 = vset.pattern.permute.xlu0 0
        %1408 = vperm.xlu0 %1407, %v1353
        %v1409 = vpop.permute.xlu0 %1408
        %1410 = vset.pattern.permute.xlu0 0
        %1411 = vperm.xlu0 %1410, %v1354
        %v1412 = vpop.permute.xlu0 %1411
        %1413 = vset.pattern.permute.xlu0 0
        %1414 = vperm.xlu0 %1413, %v1355
        %v1415 = vpop.permute.xlu0 %1414
        %1416 = vset.pattern.permute.xlu0 0
        %1417 = vperm.xlu0 %1416, %v1356
        %v1418 = vpop.permute.xlu0 %1417
        %1419 = vset.pattern.permute.xlu0 0
        %1420 = vperm.xlu0 %1419, %v1357
        %v1421 = vpop.permute.xlu0 %1420
        %1422 = vset.pattern.permute.xlu0 0
        %1423 = vperm.xlu0 %1422, %v1358
        %v1424 = vpop.permute.xlu0 %1423
        %1425 = vset.pattern.permute.xlu0 0
        %1426 = vperm.xlu0 %1425, %v1359
        %v1427 = vpop.permute.xlu0 %1426
        %1428 = vset.pattern.permute.xlu0 0
        %1429 = vperm.xlu0 %1428, %v1360
        %v1430 = vpop.permute.xlu0 %1429
        %1431 = vset.pattern.permute.xlu0 0
        %1432 = vperm.xlu0 %1431, %v1361
        %v1433 = vpop.permute.xlu0 %1432
        %1434 = vset.pattern.permute.xlu0 0
        %1435 = vperm.xlu0 %1434, %v1362
        %v1436 = vpop.permute.xlu0 %1435
        %1437 = vset.pattern.permute.xlu0 0
        %1438 = vperm.xlu0 %1437, %v1363
        %v1439 = vpop.permute.xlu0 %1438
        %1440 = vset.pattern.permute.xlu0 0
        %1441 = vperm.xlu0 %1440, %v1364
        %v1442 = vpop.permute.xlu0 %1441
        %1443 = vset.pattern.permute.xlu0 0
        %1444 = vperm.xlu0 %1443, %v1365
        %v1445 = vpop.permute.xlu0 %1444
        %1446 = vset.pattern.permute.xlu0 0
        %1447 = vperm.xlu0 %1446, %v1366
        %v1448 = vpop.permute.xlu0 %1447
        %1449 = vset.pattern.permute.xlu0 0
        %1450 = vperm.xlu0 %1449, %v1367
        %v1451 = vpop.permute.xlu0 %1450
        %1452 = vset.pattern.permute.xlu0 0
        %1453 = vperm.xlu0 %1452, %v1368
        %v1454 = vpop.permute.xlu0 %1453
        %1455 = vset.pattern.permute.xlu0 0
        %1456 = vperm.xlu0 %1455, %v1369
        %v1457 = vpop.permute.xlu0 %1456
        %1458 = vset.pattern.permute.xlu0 0
        %1459 = vperm.xlu0 %1458, %v1370
        %v1460 = vpop.permute.xlu0 %1459
        %1461 = vset.pattern.permute.xlu0 0
        %1462 = vperm.xlu0 %1461, %v1371
        %v1463 = vpop.permute.xlu0 %1462
        %1464 = vset.pattern.permute.xlu0 0
        %1465 = vperm.xlu0 %1464, %v1372
        %v1466 = vpop.permute.xlu0 %1465
        %1467 = vset.pattern.permute.xlu0 0
        %1468 = vperm.xlu0 %1467, %v1373
        %v1469 = vpop.permute.xlu0 %1468
        %vm1470 = vcmp.eq.s32.totalorder %v1376, 1
        %vm1471 = vcmp.eq.s32.totalorder %v1379, 1
        %vm1472 = vcmp.eq.s32.totalorder %v1382, 1
        %vm1473 = vcmp.eq.s32.totalorder %v1385, 1
        %vm1474 = vcmp.eq.s32.totalorder %v1388, 1
        %vm1475 = vcmp.eq.s32.totalorder %v1391, 1
        %vm1476 = vcmp.eq.s32.totalorder %v1394, 1
        %vm1477 = vcmp.eq.s32.totalorder %v1397, 1
        %vm1478 = vcmp.eq.s32.totalorder %v1400, 1
        %vm1479 = vcmp.eq.s32.totalorder %v1403, 1
        %vm1480 = vcmp.eq.s32.totalorder %v1406, 1
        %vm1481 = vcmp.eq.s32.totalorder %v1409, 1
        %vm1482 = vcmp.eq.s32.totalorder %v1412, 1
        %vm1483 = vcmp.eq.s32.totalorder %v1415, 1
        %vm1484 = vcmp.eq.s32.totalorder %v1418, 1
        %vm1485 = vcmp.eq.s32.totalorder %v1421, 1
        %vm1486 = vcmp.eq.s32.totalorder %v1424, 1
        %vm1487 = vcmp.eq.s32.totalorder %v1427, 1
        %vm1488 = vcmp.eq.s32.totalorder %v1430, 1
        %vm1489 = vcmp.eq.s32.totalorder %v1433, 1
        %vm1490 = vcmp.eq.s32.totalorder %v1436, 1
        %vm1491 = vcmp.eq.s32.totalorder %v1439, 1
        %vm1492 = vcmp.eq.s32.totalorder %v1442, 1
        %vm1493 = vcmp.eq.s32.totalorder %v1445, 1
        %vm1494 = vcmp.eq.s32.totalorder %v1448, 1
        %vm1495 = vcmp.eq.s32.totalorder %v1451, 1
        %vm1496 = vcmp.eq.s32.totalorder %v1454, 1
        %vm1497 = vcmp.eq.s32.totalorder %v1457, 1
        %vm1498 = vcmp.eq.s32.totalorder %v1460, 1
        %vm1499 = vcmp.eq.s32.totalorder %v1463, 1
        %vm1500 = vcmp.eq.s32.totalorder %v1466, 1
        %vm1501 = vcmp.eq.s32.totalorder %v1469, 1
        %v1502 = vsel %vm1470, %v412, 0.0
        %v1503 = vsel %vm1471, %v411, 0.0
        %v1504 = vsel %vm1472, %v410, 0.0
        %v1505 = vsel %vm1473, %v409, 0.0
        %v1506 = vsel %vm1474, %v408, 0.0
        %v1507 = vsel %vm1475, %v407, 0.0
        %v1508 = vsel %vm1476, %v406, 0.0
        %v1509 = vsel %vm1477, %v405, 0.0
        %v1510 = vsel %vm1478, %v404, 0.0
        %v1511 = vsel %vm1479, %v403, 0.0
        %v1512 = vsel %vm1480, %v402, 0.0
        %v1513 = vsel %vm1481, %v401, 0.0
        %v1514 = vsel %vm1482, %v400, 0.0
        %v1515 = vsel %vm1483, %v399, 0.0
        %v1516 = vsel %vm1484, %v398, 0.0
        %v1517 = vsel %vm1485, %v397, 0.0
        %v1518 = vsel %vm1486, %v396, 0.0
        %v1519 = vsel %vm1487, %v395, 0.0
        %v1520 = vsel %vm1488, %v394, 0.0
        %v1521 = vsel %vm1489, %v393, 0.0
        %v1522 = vsel %vm1490, %v392, 0.0
        %v1523 = vsel %vm1491, %v391, 0.0
        %v1524 = vsel %vm1492, %v390, 0.0
        %v1525 = vsel %vm1493, %v389, 0.0
        %v1526 = vsel %vm1494, %v388, 0.0
        %v1527 = vsel %vm1495, %v387, 0.0
        %v1528 = vsel %vm1496, %v386, 0.0
        %v1529 = vsel %vm1497, %v385, 0.0
        %v1530 = vsel %vm1498, %v384, 0.0
        %v1531 = vsel %vm1499, %v383, 0.0
        %v1532 = vsel %vm1500, %v382, 0.0
        %v1533 = vsel %vm1501, %v381, 0.0
        %vm1534 = vmand %vm1278, %vm958
        %vm1535 = vmand %vm1279, %vm959
        %vm1536 = vmand %vm1280, %vm960
        %vm1537 = vmand %vm1281, %vm961
        %vm1538 = vmand %vm1282, %vm962
        %vm1539 = vmand %vm1283, %vm963
        %vm1540 = vmand %vm1284, %vm964
        %vm1541 = vmand %vm1285, %vm965
        %vm1542 = vmand %vm1286, %vm966
        %vm1543 = vmand %vm1287, %vm967
        %vm1544 = vmand %vm1288, %vm968
        %vm1545 = vmand %vm1289, %vm969
        %vm1546 = vmand %vm1290, %vm970
        %vm1547 = vmand %vm1291, %vm971
        %vm1548 = vmand %vm1292, %vm972
        %vm1549 = vmand %vm1293, %vm973
        %vm1550 = vmand %vm1294, %vm974
        %vm1551 = vmand %vm1295, %vm975
        %vm1552 = vmand %vm1296, %vm976
        %vm1553 = vmand %vm1297, %vm977
        %vm1554 = vmand %vm1298, %vm978
        %vm1555 = vmand %vm1299, %vm979
        %vm1556 = vmand %vm1300, %vm980
        %vm1557 = vmand %vm1301, %vm981
        %vm1558 = vmand %vm1302, %vm982
        %vm1559 = vmand %vm1303, %vm983
        %vm1560 = vmand %vm1304, %vm984
        %vm1561 = vmand %vm1305, %vm985
        %vm1562 = vmand %vm1306, %vm986
        %vm1563 = vmand %vm1307, %vm987
        %vm1564 = vmand %vm1308, %vm988
        %vm1565 = vmand %vm1309, %vm989
        %v1566 = vsel %vm1534, 1, 0
        %v1567 = vsel %vm1535, 1, 0
        %v1568 = vsel %vm1536, 1, 0
        %v1569 = vsel %vm1537, 1, 0
        %v1570 = vsel %vm1538, 1, 0
        %v1571 = vsel %vm1539, 1, 0
        %v1572 = vsel %vm1540, 1, 0
        %v1573 = vsel %vm1541, 1, 0
        %v1574 = vsel %vm1542, 1, 0
        %v1575 = vsel %vm1543, 1, 0
        %v1576 = vsel %vm1544, 1, 0
        %v1577 = vsel %vm1545, 1, 0
        %v1578 = vsel %vm1546, 1, 0
        %v1579 = vsel %vm1547, 1, 0
        %v1580 = vsel %vm1548, 1, 0
        %v1581 = vsel %vm1549, 1, 0
        %v1582 = vsel %vm1550, 1, 0
        %v1583 = vsel %vm1551, 1, 0
        %v1584 = vsel %vm1552, 1, 0
        %v1585 = vsel %vm1553, 1, 0
        %v1586 = vsel %vm1554, 1, 0
        %v1587 = vsel %vm1555, 1, 0
        %v1588 = vsel %vm1556, 1, 0
        %v1589 = vsel %vm1557, 1, 0
        %v1590 = vsel %vm1558, 1, 0
        %v1591 = vsel %vm1559, 1, 0
        %v1592 = vsel %vm1560, 1, 0
        %v1593 = vsel %vm1561, 1, 0
        %v1594 = vsel %vm1562, 1, 0
        %v1595 = vsel %vm1563, 1, 0
        %v1596 = vsel %vm1564, 1, 0
        %v1597 = vsel %vm1565, 1, 0
        %1598 = vset.pattern.permute.xlu0 0
        %1599 = vperm.xlu0 %1598, %v1566
        %v1600 = vpop.permute.xlu0 %1599
        %1601 = vset.pattern.permute.xlu0 0
        %1602 = vperm.xlu0 %1601, %v1567
        %v1603 = vpop.permute.xlu0 %1602
        %1604 = vset.pattern.permute.xlu0 0
        %1605 = vperm.xlu0 %1604, %v1568
        %v1606 = vpop.permute.xlu0 %1605
        %1607 = vset.pattern.permute.xlu0 0
        %1608 = vperm.xlu0 %1607, %v1569
        %v1609 = vpop.permute.xlu0 %1608
        %1610 = vset.pattern.permute.xlu0 0
        %1611 = vperm.xlu0 %1610, %v1570
        %v1612 = vpop.permute.xlu0 %1611
        %1613 = vset.pattern.permute.xlu0 0
        %1614 = vperm.xlu0 %1613, %v1571
        %v1615 = vpop.permute.xlu0 %1614
        %1616 = vset.pattern.permute.xlu0 0
        %1617 = vperm.xlu0 %1616, %v1572
        %v1618 = vpop.permute.xlu0 %1617
        %1619 = vset.pattern.permute.xlu0 0
        %1620 = vperm.xlu0 %1619, %v1573
        %v1621 = vpop.permute.xlu0 %1620
        %1622 = vset.pattern.permute.xlu0 0
        %1623 = vperm.xlu0 %1622, %v1574
        %v1624 = vpop.permute.xlu0 %1623
        %1625 = vset.pattern.permute.xlu0 0
        %1626 = vperm.xlu0 %1625, %v1575
        %v1627 = vpop.permute.xlu0 %1626
        %1628 = vset.pattern.permute.xlu0 0
        %1629 = vperm.xlu0 %1628, %v1576
        %v1630 = vpop.permute.xlu0 %1629
        %1631 = vset.pattern.permute.xlu0 0
        %1632 = vperm.xlu0 %1631, %v1577
        %v1633 = vpop.permute.xlu0 %1632
        %1634 = vset.pattern.permute.xlu0 0
        %1635 = vperm.xlu0 %1634, %v1578
        %v1636 = vpop.permute.xlu0 %1635
        %1637 = vset.pattern.permute.xlu0 0
        %1638 = vperm.xlu0 %1637, %v1579
        %v1639 = vpop.permute.xlu0 %1638
        %1640 = vset.pattern.permute.xlu0 0
        %1641 = vperm.xlu0 %1640, %v1580
        %v1642 = vpop.permute.xlu0 %1641
        %1643 = vset.pattern.permute.xlu0 0
        %1644 = vperm.xlu0 %1643, %v1581
        %v1645 = vpop.permute.xlu0 %1644
        %1646 = vset.pattern.permute.xlu0 0
        %1647 = vperm.xlu0 %1646, %v1582
        %v1648 = vpop.permute.xlu0 %1647
        %1649 = vset.pattern.permute.xlu0 0
        %1650 = vperm.xlu0 %1649, %v1583
        %v1651 = vpop.permute.xlu0 %1650
        %1652 = vset.pattern.permute.xlu0 0
        %1653 = vperm.xlu0 %1652, %v1584
        %v1654 = vpop.permute.xlu0 %1653
        %1655 = vset.pattern.permute.xlu0 0
        %1656 = vperm.xlu0 %1655, %v1585
        %v1657 = vpop.permute.xlu0 %1656
        %1658 = vset.pattern.permute.xlu0 0
        %1659 = vperm.xlu0 %1658, %v1586
        %v1660 = vpop.permute.xlu0 %1659
        %1661 = vset.pattern.permute.xlu0 0
        %1662 = vperm.xlu0 %1661, %v1587
        %v1663 = vpop.permute.xlu0 %1662
        %1664 = vset.pattern.permute.xlu0 0
        %1665 = vperm.xlu0 %1664, %v1588
        %v1666 = vpop.permute.xlu0 %1665
        %1667 = vset.pattern.permute.xlu0 0
        %1668 = vperm.xlu0 %1667, %v1589
        %v1669 = vpop.permute.xlu0 %1668
        %1670 = vset.pattern.permute.xlu0 0
        %1671 = vperm.xlu0 %1670, %v1590
        %v1672 = vpop.permute.xlu0 %1671
        %1673 = vset.pattern.permute.xlu0 0
        %1674 = vperm.xlu0 %1673, %v1591
        %v1675 = vpop.permute.xlu0 %1674
        %1676 = vset.pattern.permute.xlu0 0
        %1677 = vperm.xlu0 %1676, %v1592
        %v1678 = vpop.permute.xlu0 %1677
        %1679 = vset.pattern.permute.xlu0 0
        %1680 = vperm.xlu0 %1679, %v1593
        %v1681 = vpop.permute.xlu0 %1680
        %1682 = vset.pattern.permute.xlu0 0
        %1683 = vperm.xlu0 %1682, %v1594
        %v1684 = vpop.permute.xlu0 %1683
        %1685 = vset.pattern.permute.xlu0 0
        %1686 = vperm.xlu0 %1685, %v1595
        %v1687 = vpop.permute.xlu0 %1686
        %1688 = vset.pattern.permute.xlu0 0
        %1689 = vperm.xlu0 %1688, %v1596
        %v1690 = vpop.permute.xlu0 %1689
        %1691 = vset.pattern.permute.xlu0 0
        %1692 = vperm.xlu0 %1691, %v1597
        %v1693 = vpop.permute.xlu0 %1692
        %vm1694 = vcmp.eq.s32.totalorder %v1600, 1
        %vm1695 = vcmp.eq.s32.totalorder %v1603, 1
        %vm1696 = vcmp.eq.s32.totalorder %v1606, 1
        %vm1697 = vcmp.eq.s32.totalorder %v1609, 1
        %vm1698 = vcmp.eq.s32.totalorder %v1612, 1
        %vm1699 = vcmp.eq.s32.totalorder %v1615, 1
        %vm1700 = vcmp.eq.s32.totalorder %v1618, 1
        %vm1701 = vcmp.eq.s32.totalorder %v1621, 1
        %vm1702 = vcmp.eq.s32.totalorder %v1624, 1
        %vm1703 = vcmp.eq.s32.totalorder %v1627, 1
        %vm1704 = vcmp.eq.s32.totalorder %v1630, 1
        %vm1705 = vcmp.eq.s32.totalorder %v1633, 1
        %vm1706 = vcmp.eq.s32.totalorder %v1636, 1
        %vm1707 = vcmp.eq.s32.totalorder %v1639, 1
        %vm1708 = vcmp.eq.s32.totalorder %v1642, 1
        %vm1709 = vcmp.eq.s32.totalorder %v1645, 1
        %vm1710 = vcmp.eq.s32.totalorder %v1648, 1
        %vm1711 = vcmp.eq.s32.totalorder %v1651, 1
        %vm1712 = vcmp.eq.s32.totalorder %v1654, 1
        %vm1713 = vcmp.eq.s32.totalorder %v1657, 1
        %vm1714 = vcmp.eq.s32.totalorder %v1660, 1
        %vm1715 = vcmp.eq.s32.totalorder %v1663, 1
        %vm1716 = vcmp.eq.s32.totalorder %v1666, 1
        %vm1717 = vcmp.eq.s32.totalorder %v1669, 1
        %vm1718 = vcmp.eq.s32.totalorder %v1672, 1
        %vm1719 = vcmp.eq.s32.totalorder %v1675, 1
        %vm1720 = vcmp.eq.s32.totalorder %v1678, 1
        %vm1721 = vcmp.eq.s32.totalorder %v1681, 1
        %vm1722 = vcmp.eq.s32.totalorder %v1684, 1
        %vm1723 = vcmp.eq.s32.totalorder %v1687, 1
        %vm1724 = vcmp.eq.s32.totalorder %v1690, 1
        %vm1725 = vcmp.eq.s32.totalorder %v1693, 1
        %v1726 = vsel %vm1694, %v956, 0.0
        %v1727 = vsel %vm1695, %v955, 0.0
        %v1728 = vsel %vm1696, %v954, 0.0
        %v1729 = vsel %vm1697, %v953, 0.0
        %v1730 = vsel %vm1698, %v952, 0.0
        %v1731 = vsel %vm1699, %v951, 0.0
        %v1732 = vsel %vm1700, %v950, 0.0
        %v1733 = vsel %vm1701, %v949, 0.0
        %v1734 = vsel %vm1702, %v948, 0.0
        %v1735 = vsel %vm1703, %v947, 0.0
        %v1736 = vsel %vm1704, %v946, 0.0
        %v1737 = vsel %vm1705, %v945, 0.0
        %v1738 = vsel %vm1706, %v944, 0.0
        %v1739 = vsel %vm1707, %v943, 0.0
        %v1740 = vsel %vm1708, %v942, 0.0
        %v1741 = vsel %vm1709, %v941, 0.0
        %v1742 = vsel %vm1710, %v940, 0.0
        %v1743 = vsel %vm1711, %v939, 0.0
        %v1744 = vsel %vm1712, %v938, 0.0
        %v1745 = vsel %vm1713, %v937, 0.0
        %v1746 = vsel %vm1714, %v936, 0.0
        %v1747 = vsel %vm1715, %v935, 0.0
        %v1748 = vsel %vm1716, %v934, 0.0
        %v1749 = vsel %vm1717, %v933, 0.0
        %v1750 = vsel %vm1718, %v932, 0.0
        %v1751 = vsel %vm1719, %v931, 0.0
        %v1752 = vsel %vm1720, %v930, 0.0
        %v1753 = vsel %vm1721, %v929, 0.0
        %v1754 = vsel %vm1722, %v928, 0.0
        %v1755 = vsel %vm1723, %v927, 0.0
        %v1756 = vsel %vm1724, %v926, 0.0
        %v1757 = vsel %vm1725, %v957, 0.0
        %v1758 = vadd.s32 %v317, 16
        %v1759 = vadd.s32 %v318, 16
        %v1760 = vadd.s32 %v319, 16
        %v1761 = vadd.s32 %v320, 16
        %v1762 = vadd.s32 %v321, 16
        %v1763 = vadd.s32 %v322, 16
        %v1764 = vadd.s32 %v323, 16
        %v1765 = vadd.s32 %v324, 16
        %v1766 = vadd.s32 %v325, 16
        %v1767 = vadd.s32 %v326, 16
        %v1768 = vadd.s32 %v327, 16
        %v1769 = vadd.s32 %v328, 16
        %v1770 = vadd.s32 %v329, 16
        %v1771 = vadd.s32 %v330, 16
        %v1772 = vadd.s32 %v331, 16
        %v1773 = vadd.s32 %v332, 16
        %v1774 = vadd.s32 %v333, 16
        %v1775 = vadd.s32 %v334, 16
        %v1776 = vadd.s32 %v335, 16
        %v1777 = vadd.s32 %v336, 16
        %v1778 = vadd.s32 %v337, 16
        %v1779 = vadd.s32 %v338, 16
        %v1780 = vadd.s32 %v339, 16
        %v1781 = vadd.s32 %v340, 16
        %v1782 = vadd.s32 %v341, 16
        %v1783 = vadd.s32 %v342, 16
        %v1784 = vadd.s32 %v343, 16
        %v1785 = vadd.s32 %v344, 16
        %v1786 = vadd.s32 %v345, 16
        %v1787 = vadd.s32 %v346, 16
        %v1788 = vadd.s32 %v347, 16
        %vm1789 = vcmp.ge.s32.totalorder %v1758, 0
        %vm1790 = vcmp.ge.s32.totalorder %v1759, 0
        %vm1791 = vcmp.ge.s32.totalorder %v1760, 0
        %vm1792 = vcmp.ge.s32.totalorder %v1761, 0
        %vm1793 = vcmp.ge.s32.totalorder %v1762, 0
        %vm1794 = vcmp.ge.s32.totalorder %v1763, 0
        %vm1795 = vcmp.ge.s32.totalorder %v1764, 0
        %vm1796 = vcmp.ge.s32.totalorder %v1765, 0
        %vm1797 = vcmp.ge.s32.totalorder %v1766, 0
        %vm1798 = vcmp.ge.s32.totalorder %v1767, 0
        %vm1799 = vcmp.ge.s32.totalorder %v1768, 0
        %vm1800 = vcmp.ge.s32.totalorder %v1769, 0
        %vm1801 = vcmp.ge.s32.totalorder %v1770, 0
        %vm1802 = vcmp.ge.s32.totalorder %v1771, 0
        %vm1803 = vcmp.ge.s32.totalorder %v1772, 0
        %vm1804 = vcmp.ge.s32.totalorder %v1773, 0
        %vm1805 = vcmp.ge.s32.totalorder %v1774, 0
        %vm1806 = vcmp.ge.s32.totalorder %v1775, 0
        %vm1807 = vcmp.ge.s32.totalorder %v1776, 0
        %vm1808 = vcmp.ge.s32.totalorder %v1777, 0
        %vm1809 = vcmp.ge.s32.totalorder %v1778, 0
        %vm1810 = vcmp.ge.s32.totalorder %v1779, 0
        %vm1811 = vcmp.ge.s32.totalorder %v1780, 0
        %vm1812 = vcmp.ge.s32.totalorder %v1781, 0
        %vm1813 = vcmp.ge.s32.totalorder %v1782, 0
        %vm1814 = vcmp.ge.s32.totalorder %v1783, 0
        %vm1815 = vcmp.ge.s32.totalorder %v1784, 0
        %vm1816 = vcmp.ge.s32.totalorder %v1785, 0
        %vm1817 = vcmp.ge.s32.totalorder %v1786, 0
        %vm1818 = vcmp.ge.s32.totalorder %v1787, 0
        %vm1819 = vcmp.ge.s32.totalorder %v1788, 0
        %vm1820 = vcmp.le.s32.totalorder %v1758, 255
        %vm1821 = vcmp.le.s32.totalorder %v1759, 255
        %vm1822 = vcmp.le.s32.totalorder %v1760, 255
        %vm1823 = vcmp.le.s32.totalorder %v1761, 255
        %vm1824 = vcmp.le.s32.totalorder %v1762, 255
        %vm1825 = vcmp.le.s32.totalorder %v1763, 255
        %vm1826 = vcmp.le.s32.totalorder %v1764, 255
        %vm1827 = vcmp.le.s32.totalorder %v1765, 255
        %vm1828 = vcmp.le.s32.totalorder %v1766, 255
        %vm1829 = vcmp.le.s32.totalorder %v1767, 255
        %vm1830 = vcmp.le.s32.totalorder %v1768, 255
        %vm1831 = vcmp.le.s32.totalorder %v1769, 255
        %vm1832 = vcmp.le.s32.totalorder %v1770, 255
        %vm1833 = vcmp.le.s32.totalorder %v1771, 255
        %vm1834 = vcmp.le.s32.totalorder %v1772, 255
        %vm1835 = vcmp.le.s32.totalorder %v1773, 255
        %vm1836 = vcmp.le.s32.totalorder %v1774, 255
        %vm1837 = vcmp.le.s32.totalorder %v1775, 255
        %vm1838 = vcmp.le.s32.totalorder %v1776, 255
        %vm1839 = vcmp.le.s32.totalorder %v1777, 255
        %vm1840 = vcmp.le.s32.totalorder %v1778, 255
        %vm1841 = vcmp.le.s32.totalorder %v1779, 255
        %vm1842 = vcmp.le.s32.totalorder %v1780, 255
        %vm1843 = vcmp.le.s32.totalorder %v1781, 255
        %vm1844 = vcmp.le.s32.totalorder %v1782, 255
        %vm1845 = vcmp.le.s32.totalorder %v1783, 255
        %vm1846 = vcmp.le.s32.totalorder %v1784, 255
        %vm1847 = vcmp.le.s32.totalorder %v1785, 255
        %vm1848 = vcmp.le.s32.totalorder %v1786, 255
        %vm1849 = vcmp.le.s32.totalorder %v1787, 255
        %vm1850 = vcmp.le.s32.totalorder %v1788, 255
        %vm1851 = vmand %vm1789, %vm1820
        %vm1852 = vmand %vm1790, %vm1821
        %vm1853 = vmand %vm1791, %vm1822
        %vm1854 = vmand %vm1792, %vm1823
        %vm1855 = vmand %vm1793, %vm1824
        %vm1856 = vmand %vm1794, %vm1825
        %vm1857 = vmand %vm1795, %vm1826
        %vm1858 = vmand %vm1796, %vm1827
        %vm1859 = vmand %vm1797, %vm1828
        %vm1860 = vmand %vm1798, %vm1829
        %vm1861 = vmand %vm1799, %vm1830
        %vm1862 = vmand %vm1800, %vm1831
        %vm1863 = vmand %vm1801, %vm1832
        %vm1864 = vmand %vm1802, %vm1833
        %vm1865 = vmand %vm1803, %vm1834
        %vm1866 = vmand %vm1804, %vm1835
        %vm1867 = vmand %vm1805, %vm1836
        %vm1868 = vmand %vm1806, %vm1837
        %vm1869 = vmand %vm1807, %vm1838
        %vm1870 = vmand %vm1808, %vm1839
        %vm1871 = vmand %vm1809, %vm1840
        %vm1872 = vmand %vm1810, %vm1841
        %vm1873 = vmand %vm1811, %vm1842
        %vm1874 = vmand %vm1812, %vm1843
        %vm1875 = vmand %vm1813, %vm1844
        %vm1876 = vmand %vm1814, %vm1845
        %vm1877 = vmand %vm1815, %vm1846
        %vm1878 = vmand %vm1816, %vm1847
        %vm1879 = vmand %vm1817, %vm1848
        %vm1880 = vmand %vm1818, %vm1849
        %vm1881 = vmand %vm1819, %vm1850
        %vm1882 = vmand %vm1280, %vm541
        %vm1883 = vmand %vm1851, %vm542
        %vm1884 = vmand %vm1852, %vm543
        %vm1885 = vmand %vm1853, %vm544
        %vm1886 = vmand %vm1854, %vm545
        %vm1887 = vmand %vm1855, %vm546
        %vm1888 = vmand %vm1856, %vm547
        %vm1889 = vmand %vm1857, %vm548
        %vm1890 = vmand %vm1858, %vm549
        %vm1891 = vmand %vm1859, %vm550
        %vm1892 = vmand %vm1860, %vm551
        %vm1893 = vmand %vm1861, %vm552
        %vm1894 = vmand %vm1862, %vm553
        %vm1895 = vmand %vm1863, %vm554
        %vm1896 = vmand %vm1864, %vm555
        %vm1897 = vmand %vm1865, %vm556
        %vm1898 = vmand %vm1866, %vm557
        %vm1899 = vmand %vm1867, %vm558
        %vm1900 = vmand %vm1868, %vm559
        %vm1901 = vmand %vm1869, %vm560
        %vm1902 = vmand %vm1870, %vm561
        %vm1903 = vmand %vm1871, %vm562
        %vm1904 = vmand %vm1872, %vm563
        %vm1905 = vmand %vm1873, %vm564
        %vm1906 = vmand %vm1874, %vm565
        %vm1907 = vmand %vm1875, %vm566
        %vm1908 = vmand %vm1876, %vm567
        %vm1909 = vmand %vm1877, %vm568
        %vm1910 = vmand %vm1878, %vm569
        %vm1911 = vmand %vm1879, %vm570
        %vm1912 = vmand %vm1880, %vm571
        %vm1913 = vmand %vm1881, %vm572
        %v1914 = vsel %vm1882, 1, 0
        %v1915 = vsel %vm1883, 1, 0
        %v1916 = vsel %vm1884, 1, 0
        %v1917 = vsel %vm1885, 1, 0
        %v1918 = vsel %vm1886, 1, 0
        %v1919 = vsel %vm1887, 1, 0
        %v1920 = vsel %vm1888, 1, 0
        %v1921 = vsel %vm1889, 1, 0
        %v1922 = vsel %vm1890, 1, 0
        %v1923 = vsel %vm1891, 1, 0
        %v1924 = vsel %vm1892, 1, 0
        %v1925 = vsel %vm1893, 1, 0
        %v1926 = vsel %vm1894, 1, 0
        %v1927 = vsel %vm1895, 1, 0
        %v1928 = vsel %vm1896, 1, 0
        %v1929 = vsel %vm1897, 1, 0
        %v1930 = vsel %vm1898, 1, 0
        %v1931 = vsel %vm1899, 1, 0
        %v1932 = vsel %vm1900, 1, 0
        %v1933 = vsel %vm1901, 1, 0
        %v1934 = vsel %vm1902, 1, 0
        %v1935 = vsel %vm1903, 1, 0
        %v1936 = vsel %vm1904, 1, 0
        %v1937 = vsel %vm1905, 1, 0
        %v1938 = vsel %vm1906, 1, 0
        %v1939 = vsel %vm1907, 1, 0
        %v1940 = vsel %vm1908, 1, 0
        %v1941 = vsel %vm1909, 1, 0
        %v1942 = vsel %vm1910, 1, 0
        %v1943 = vsel %vm1911, 1, 0
        %v1944 = vsel %vm1912, 1, 0
        %v1945 = vsel %vm1913, 1, 0
        %1946 = vset.pattern.permute.xlu0 0
        %1947 = vperm.xlu0 %1946, %v1914
        %v1948 = vpop.permute.xlu0 %1947
        %1949 = vset.pattern.permute.xlu0 0
        %1950 = vperm.xlu0 %1949, %v1915
        %v1951 = vpop.permute.xlu0 %1950
        %1952 = vset.pattern.permute.xlu0 0
        %1953 = vperm.xlu0 %1952, %v1916
        %v1954 = vpop.permute.xlu0 %1953
        %1955 = vset.pattern.permute.xlu0 0
        %1956 = vperm.xlu0 %1955, %v1917
        %v1957 = vpop.permute.xlu0 %1956
        %1958 = vset.pattern.permute.xlu0 0
        %1959 = vperm.xlu0 %1958, %v1918
        %v1960 = vpop.permute.xlu0 %1959
        %1961 = vset.pattern.permute.xlu0 0
        %1962 = vperm.xlu0 %1961, %v1919
        %v1963 = vpop.permute.xlu0 %1962
        %1964 = vset.pattern.permute.xlu0 0
        %1965 = vperm.xlu0 %1964, %v1920
        %v1966 = vpop.permute.xlu0 %1965
        %1967 = vset.pattern.permute.xlu0 0
        %1968 = vperm.xlu0 %1967, %v1921
        %v1969 = vpop.permute.xlu0 %1968
        %1970 = vset.pattern.permute.xlu0 0
        %1971 = vperm.xlu0 %1970, %v1922
        %v1972 = vpop.permute.xlu0 %1971
        %1973 = vset.pattern.permute.xlu0 0
        %1974 = vperm.xlu0 %1973, %v1923
        %v1975 = vpop.permute.xlu0 %1974
        %1976 = vset.pattern.permute.xlu0 0
        %1977 = vperm.xlu0 %1976, %v1924
        %v1978 = vpop.permute.xlu0 %1977
        %1979 = vset.pattern.permute.xlu0 0
        %1980 = vperm.xlu0 %1979, %v1925
        %v1981 = vpop.permute.xlu0 %1980
        %1982 = vset.pattern.permute.xlu0 0
        %1983 = vperm.xlu0 %1982, %v1926
        %v1984 = vpop.permute.xlu0 %1983
        %1985 = vset.pattern.permute.xlu0 0
        %1986 = vperm.xlu0 %1985, %v1927
        %v1987 = vpop.permute.xlu0 %1986
        %1988 = vset.pattern.permute.xlu0 0
        %1989 = vperm.xlu0 %1988, %v1928
        %v1990 = vpop.permute.xlu0 %1989
        %1991 = vset.pattern.permute.xlu0 0
        %1992 = vperm.xlu0 %1991, %v1929
        %v1993 = vpop.permute.xlu0 %1992
        %1994 = vset.pattern.permute.xlu0 0
        %1995 = vperm.xlu0 %1994, %v1930
        %v1996 = vpop.permute.xlu0 %1995
        %1997 = vset.pattern.permute.xlu0 0
        %1998 = vperm.xlu0 %1997, %v1931
        %v1999 = vpop.permute.xlu0 %1998
        %2000 = vset.pattern.permute.xlu0 0
        %2001 = vperm.xlu0 %2000, %v1932
        %v2002 = vpop.permute.xlu0 %2001
        %2003 = vset.pattern.permute.xlu0 0
        %2004 = vperm.xlu0 %2003, %v1933
        %v2005 = vpop.permute.xlu0 %2004
        %2006 = vset.pattern.permute.xlu0 0
        %2007 = vperm.xlu0 %2006, %v1934
        %v2008 = vpop.permute.xlu0 %2007
        %2009 = vset.pattern.permute.xlu0 0
        %2010 = vperm.xlu0 %2009, %v1935
        %v2011 = vpop.permute.xlu0 %2010
        %2012 = vset.pattern.permute.xlu0 0
        %2013 = vperm.xlu0 %2012, %v1936
        %v2014 = vpop.permute.xlu0 %2013
        %2015 = vset.pattern.permute.xlu0 0
        %2016 = vperm.xlu0 %2015, %v1937
        %v2017 = vpop.permute.xlu0 %2016
        %2018 = vset.pattern.permute.xlu0 0
        %2019 = vperm.xlu0 %2018, %v1938
        %v2020 = vpop.permute.xlu0 %2019
        %2021 = vset.pattern.permute.xlu0 0
        %2022 = vperm.xlu0 %2021, %v1939
        %v2023 = vpop.permute.xlu0 %2022
        %2024 = vset.pattern.permute.xlu0 0
        %2025 = vperm.xlu0 %2024, %v1940
        %v2026 = vpop.permute.xlu0 %2025
        %2027 = vset.pattern.permute.xlu0 0
        %2028 = vperm.xlu0 %2027, %v1941
        %v2029 = vpop.permute.xlu0 %2028
        %2030 = vset.pattern.permute.xlu0 0
        %2031 = vperm.xlu0 %2030, %v1942
        %v2032 = vpop.permute.xlu0 %2031
        %2033 = vset.pattern.permute.xlu0 0
        %2034 = vperm.xlu0 %2033, %v1943
        %v2035 = vpop.permute.xlu0 %2034
        %2036 = vset.pattern.permute.xlu0 0
        %2037 = vperm.xlu0 %2036, %v1944
        %v2038 = vpop.permute.xlu0 %2037
        %2039 = vset.pattern.permute.xlu0 0
        %2040 = vperm.xlu0 %2039, %v1945
        %v2041 = vpop.permute.xlu0 %2040
        %vm2042 = vcmp.eq.s32.totalorder %v1948, 1
        %vm2043 = vcmp.eq.s32.totalorder %v1951, 1
        %vm2044 = vcmp.eq.s32.totalorder %v1954, 1
        %vm2045 = vcmp.eq.s32.totalorder %v1957, 1
        %vm2046 = vcmp.eq.s32.totalorder %v1960, 1
        %vm2047 = vcmp.eq.s32.totalorder %v1963, 1
        %vm2048 = vcmp.eq.s32.totalorder %v1966, 1
        %vm2049 = vcmp.eq.s32.totalorder %v1969, 1
        %vm2050 = vcmp.eq.s32.totalorder %v1972, 1
        %vm2051 = vcmp.eq.s32.totalorder %v1975, 1
        %vm2052 = vcmp.eq.s32.totalorder %v1978, 1
        %vm2053 = vcmp.eq.s32.totalorder %v1981, 1
        %vm2054 = vcmp.eq.s32.totalorder %v1984, 1
        %vm2055 = vcmp.eq.s32.totalorder %v1987, 1
        %vm2056 = vcmp.eq.s32.totalorder %v1990, 1
        %vm2057 = vcmp.eq.s32.totalorder %v1993, 1
        %vm2058 = vcmp.eq.s32.totalorder %v1996, 1
        %vm2059 = vcmp.eq.s32.totalorder %v1999, 1
        %vm2060 = vcmp.eq.s32.totalorder %v2002, 1
        %vm2061 = vcmp.eq.s32.totalorder %v2005, 1
        %vm2062 = vcmp.eq.s32.totalorder %v2008, 1
        %vm2063 = vcmp.eq.s32.totalorder %v2011, 1
        %vm2064 = vcmp.eq.s32.totalorder %v2014, 1
        %vm2065 = vcmp.eq.s32.totalorder %v2017, 1
        %vm2066 = vcmp.eq.s32.totalorder %v2020, 1
        %vm2067 = vcmp.eq.s32.totalorder %v2023, 1
        %vm2068 = vcmp.eq.s32.totalorder %v2026, 1
        %vm2069 = vcmp.eq.s32.totalorder %v2029, 1
        %vm2070 = vcmp.eq.s32.totalorder %v2032, 1
        %vm2071 = vcmp.eq.s32.totalorder %v2035, 1
        %vm2072 = vcmp.eq.s32.totalorder %v2038, 1
        %vm2073 = vcmp.eq.s32.totalorder %v2041, 1
        %v2074 = vsel %vm2042, %v410, 0.0
        %v2075 = vsel %vm2043, %v409, 0.0
        %v2076 = vsel %vm2044, %v408, 0.0
        %v2077 = vsel %vm2045, %v407, 0.0
        %v2078 = vsel %vm2046, %v406, 0.0
        %v2079 = vsel %vm2047, %v405, 0.0
        %v2080 = vsel %vm2048, %v404, 0.0
        %v2081 = vsel %vm2049, %v403, 0.0
        %v2082 = vsel %vm2050, %v402, 0.0
        %v2083 = vsel %vm2051, %v401, 0.0
        %v2084 = vsel %vm2052, %v400, 0.0
        %v2085 = vsel %vm2053, %v399, 0.0
        %v2086 = vsel %vm2054, %v398, 0.0
        %v2087 = vsel %vm2055, %v397, 0.0
        %v2088 = vsel %vm2056, %v396, 0.0
        %v2089 = vsel %vm2057, %v395, 0.0
        %v2090 = vsel %vm2058, %v394, 0.0
        %v2091 = vsel %vm2059, %v393, 0.0
        %v2092 = vsel %vm2060, %v392, 0.0
        %v2093 = vsel %vm2061, %v391, 0.0
        %v2094 = vsel %vm2062, %v390, 0.0
        %v2095 = vsel %vm2063, %v389, 0.0
        %v2096 = vsel %vm2064, %v388, 0.0
        %v2097 = vsel %vm2065, %v387, 0.0
        %v2098 = vsel %vm2066, %v386, 0.0
        %v2099 = vsel %vm2067, %v385, 0.0
        %v2100 = vsel %vm2068, %v384, 0.0
        %v2101 = vsel %vm2069, %v383, 0.0
        %v2102 = vsel %vm2070, %v382, 0.0
        %v2103 = vsel %vm2071, %v381, 0.0
        %v2104 = vsel %vm2072, %v412, 0.0
        %v2105 = vsel %vm2073, %v411, 0.0
        %v2106 = vsel %vm1280, 1, 0
        %v2107 = vsel %vm1851, 1, 0
        %v2108 = vsel %vm1852, 1, 0
        %v2109 = vsel %vm1853, 1, 0
        %v2110 = vsel %vm1854, 1, 0
        %v2111 = vsel %vm1855, 1, 0
        %v2112 = vsel %vm1856, 1, 0
        %v2113 = vsel %vm1857, 1, 0
        %v2114 = vsel %vm1858, 1, 0
        %v2115 = vsel %vm1859, 1, 0
        %v2116 = vsel %vm1860, 1, 0
        %v2117 = vsel %vm1861, 1, 0
        %v2118 = vsel %vm1862, 1, 0
        %v2119 = vsel %vm1863, 1, 0
        %v2120 = vsel %vm1864, 1, 0
        %v2121 = vsel %vm1865, 1, 0
        %v2122 = vsel %vm1866, 1, 0
        %v2123 = vsel %vm1867, 1, 0
        %v2124 = vsel %vm1868, 1, 0
        %v2125 = vsel %vm1869, 1, 0
        %v2126 = vsel %vm1870, 1, 0
        %v2127 = vsel %vm1871, 1, 0
        %v2128 = vsel %vm1872, 1, 0
        %v2129 = vsel %vm1873, 1, 0
        %v2130 = vsel %vm1874, 1, 0
        %v2131 = vsel %vm1875, 1, 0
        %v2132 = vsel %vm1876, 1, 0
        %v2133 = vsel %vm1877, 1, 0
        %v2134 = vsel %vm1878, 1, 0
        %v2135 = vsel %vm1879, 1, 0
        %v2136 = vsel %vm1880, 1, 0
        %v2137 = vsel %vm1881, 1, 0
        %vm2138 = vcmp.eq.s32.totalorder %v2106, 1
        %vm2139 = vcmp.eq.s32.totalorder %v2107, 1
        %vm2140 = vcmp.eq.s32.totalorder %v2108, 1
        %vm2141 = vcmp.eq.s32.totalorder %v2109, 1
        %vm2142 = vcmp.eq.s32.totalorder %v2110, 1
        %vm2143 = vcmp.eq.s32.totalorder %v2111, 1
        %vm2144 = vcmp.eq.s32.totalorder %v2112, 1
        %vm2145 = vcmp.eq.s32.totalorder %v2113, 1
        %vm2146 = vcmp.eq.s32.totalorder %v2114, 1
        %vm2147 = vcmp.eq.s32.totalorder %v2115, 1
        %vm2148 = vcmp.eq.s32.totalorder %v2116, 1
        %vm2149 = vcmp.eq.s32.totalorder %v2117, 1
        %vm2150 = vcmp.eq.s32.totalorder %v2118, 1
        %vm2151 = vcmp.eq.s32.totalorder %v2119, 1
        %vm2152 = vcmp.eq.s32.totalorder %v2120, 1
        %vm2153 = vcmp.eq.s32.totalorder %v2121, 1
        %vm2154 = vcmp.eq.s32.totalorder %v2122, 1
        %vm2155 = vcmp.eq.s32.totalorder %v2123, 1
        %vm2156 = vcmp.eq.s32.totalorder %v2124, 1
        %vm2157 = vcmp.eq.s32.totalorder %v2125, 1
        %vm2158 = vcmp.eq.s32.totalorder %v2126, 1
        %vm2159 = vcmp.eq.s32.totalorder %v2127, 1
        %vm2160 = vcmp.eq.s32.totalorder %v2128, 1
        %vm2161 = vcmp.eq.s32.totalorder %v2129, 1
        %vm2162 = vcmp.eq.s32.totalorder %v2130, 1
        %vm2163 = vcmp.eq.s32.totalorder %v2131, 1
        %vm2164 = vcmp.eq.s32.totalorder %v2132, 1
        %vm2165 = vcmp.eq.s32.totalorder %v2133, 1
        %vm2166 = vcmp.eq.s32.totalorder %v2134, 1
        %vm2167 = vcmp.eq.s32.totalorder %v2135, 1
        %vm2168 = vcmp.eq.s32.totalorder %v2136, 1
        %vm2169 = vcmp.eq.s32.totalorder %v2137, 1
        %v2170 = vsel %vm2138, %v285, 0.0
        %v2171 = vsel %vm2139, %v286, 0.0
        %v2172 = vsel %vm2140, %v287, 0.0
        %v2173 = vsel %vm2141, %v288, 0.0
        %v2174 = vsel %vm2142, %v289, 0.0
        %v2175 = vsel %vm2143, %v290, 0.0
        %v2176 = vsel %vm2144, %v291, 0.0
        %v2177 = vsel %vm2145, %v292, 0.0
        %v2178 = vsel %vm2146, %v293, 0.0
        %v2179 = vsel %vm2147, %v294, 0.0
        %v2180 = vsel %vm2148, %v295, 0.0
        %v2181 = vsel %vm2149, %v296, 0.0
        %v2182 = vsel %vm2150, %v297, 0.0
        %v2183 = vsel %vm2151, %v298, 0.0
        %v2184 = vsel %vm2152, %v299, 0.0
        %v2185 = vsel %vm2153, %v300, 0.0
        %v2186 = vsel %vm2154, %v301, 0.0
        %v2187 = vsel %vm2155, %v302, 0.0
        %v2188 = vsel %vm2156, %v303, 0.0
        %v2189 = vsel %vm2157, %v304, 0.0
        %v2190 = vsel %vm2158, %v305, 0.0
        %v2191 = vsel %vm2159, %v306, 0.0
        %v2192 = vsel %vm2160, %v307, 0.0
        %v2193 = vsel %vm2161, %v308, 0.0
        %v2194 = vsel %vm2162, %v309, 0.0
        %v2195 = vsel %vm2163, %v310, 0.0
        %v2196 = vsel %vm2164, %v311, 0.0
        %v2197 = vsel %vm2165, %v312, 0.0
        %v2198 = vsel %vm2166, %v313, 0.0
        %v2199 = vsel %vm2167, %v314, 0.0
        %v2200 = vsel %vm2168, %v283, 0.0
        %v2201 = vsel %vm2169, %v284, 0.0
        %vm2202 = vmand %vm1280, %vm958
        %vm2203 = vmand %vm1851, %vm959
        %vm2204 = vmand %vm1852, %vm960
        %vm2205 = vmand %vm1853, %vm961
        %vm2206 = vmand %vm1854, %vm962
        %vm2207 = vmand %vm1855, %vm963
        %vm2208 = vmand %vm1856, %vm964
        %vm2209 = vmand %vm1857, %vm965
        %vm2210 = vmand %vm1858, %vm966
        %vm2211 = vmand %vm1859, %vm967
        %vm2212 = vmand %vm1860, %vm968
        %vm2213 = vmand %vm1861, %vm969
        %vm2214 = vmand %vm1862, %vm970
        %vm2215 = vmand %vm1863, %vm971
        %vm2216 = vmand %vm1864, %vm972
        %vm2217 = vmand %vm1865, %vm973
        %vm2218 = vmand %vm1866, %vm974
        %vm2219 = vmand %vm1867, %vm975
        %vm2220 = vmand %vm1868, %vm976
        %vm2221 = vmand %vm1869, %vm977
        %vm2222 = vmand %vm1870, %vm978
        %vm2223 = vmand %vm1871, %vm979
        %vm2224 = vmand %vm1872, %vm980
        %vm2225 = vmand %vm1873, %vm981
        %vm2226 = vmand %vm1874, %vm982
        %vm2227 = vmand %vm1875, %vm983
        %vm2228 = vmand %vm1876, %vm984
        %vm2229 = vmand %vm1877, %vm985
        %vm2230 = vmand %vm1878, %vm986
        %vm2231 = vmand %vm1879, %vm987
        %vm2232 = vmand %vm1880, %vm988
        %vm2233 = vmand %vm1881, %vm989
        %v2234 = vsel %vm2202, 1, 0
        %v2235 = vsel %vm2203, 1, 0
        %v2236 = vsel %vm2204, 1, 0
        %v2237 = vsel %vm2205, 1, 0
        %v2238 = vsel %vm2206, 1, 0
        %v2239 = vsel %vm2207, 1, 0
        %v2240 = vsel %vm2208, 1, 0
        %v2241 = vsel %vm2209, 1, 0
        %v2242 = vsel %vm2210, 1, 0
        %v2243 = vsel %vm2211, 1, 0
        %v2244 = vsel %vm2212, 1, 0
        %v2245 = vsel %vm2213, 1, 0
        %v2246 = vsel %vm2214, 1, 0
        %v2247 = vsel %vm2215, 1, 0
        %v2248 = vsel %vm2216, 1, 0
        %v2249 = vsel %vm2217, 1, 0
        %v2250 = vsel %vm2218, 1, 0
        %v2251 = vsel %vm2219, 1, 0
        %v2252 = vsel %vm2220, 1, 0
        %v2253 = vsel %vm2221, 1, 0
        %v2254 = vsel %vm2222, 1, 0
        %v2255 = vsel %vm2223, 1, 0
        %v2256 = vsel %vm2224, 1, 0
        %v2257 = vsel %vm2225, 1, 0
        %v2258 = vsel %vm2226, 1, 0
        %v2259 = vsel %vm2227, 1, 0
        %v2260 = vsel %vm2228, 1, 0
        %v2261 = vsel %vm2229, 1, 0
        %v2262 = vsel %vm2230, 1, 0
        %v2263 = vsel %vm2231, 1, 0
        %v2264 = vsel %vm2232, 1, 0
        %v2265 = vsel %vm2233, 1, 0
        %2266 = vset.pattern.permute.xlu0 0
        %2267 = vperm.xlu0 %2266, %v2234
        %v2268 = vpop.permute.xlu0 %2267
        %2269 = vset.pattern.permute.xlu0 0
        %2270 = vperm.xlu0 %2269, %v2235
        %v2271 = vpop.permute.xlu0 %2270
        %2272 = vset.pattern.permute.xlu0 0
        %2273 = vperm.xlu0 %2272, %v2236
        %v2274 = vpop.permute.xlu0 %2273
        %2275 = vset.pattern.permute.xlu0 0
        %2276 = vperm.xlu0 %2275, %v2237
        %v2277 = vpop.permute.xlu0 %2276
        %2278 = vset.pattern.permute.xlu0 0
        %2279 = vperm.xlu0 %2278, %v2238
        %v2280 = vpop.permute.xlu0 %2279
        %2281 = vset.pattern.permute.xlu0 0
        %2282 = vperm.xlu0 %2281, %v2239
        %v2283 = vpop.permute.xlu0 %2282
        %2284 = vset.pattern.permute.xlu0 0
        %2285 = vperm.xlu0 %2284, %v2240
        %v2286 = vpop.permute.xlu0 %2285
        %2287 = vset.pattern.permute.xlu0 0
        %2288 = vperm.xlu0 %2287, %v2241
        %v2289 = vpop.permute.xlu0 %2288
        %2290 = vset.pattern.permute.xlu0 0
        %2291 = vperm.xlu0 %2290, %v2242
        %v2292 = vpop.permute.xlu0 %2291
        %2293 = vset.pattern.permute.xlu0 0
        %2294 = vperm.xlu0 %2293, %v2243
        %v2295 = vpop.permute.xlu0 %2294
        %2296 = vset.pattern.permute.xlu0 0
        %2297 = vperm.xlu0 %2296, %v2244
        %v2298 = vpop.permute.xlu0 %2297
        %2299 = vset.pattern.permute.xlu0 0
        %2300 = vperm.xlu0 %2299, %v2245
        %v2301 = vpop.permute.xlu0 %2300
        %2302 = vset.pattern.permute.xlu0 0
        %2303 = vperm.xlu0 %2302, %v2246
        %v2304 = vpop.permute.xlu0 %2303
        %2305 = vset.pattern.permute.xlu0 0
        %2306 = vperm.xlu0 %2305, %v2247
        %v2307 = vpop.permute.xlu0 %2306
        %2308 = vset.pattern.permute.xlu0 0
        %2309 = vperm.xlu0 %2308, %v2248
        %v2310 = vpop.permute.xlu0 %2309
        %2311 = vset.pattern.permute.xlu0 0
        %2312 = vperm.xlu0 %2311, %v2249
        %v2313 = vpop.permute.xlu0 %2312
        %2314 = vset.pattern.permute.xlu0 0
        %2315 = vperm.xlu0 %2314, %v2250
        %v2316 = vpop.permute.xlu0 %2315
        %2317 = vset.pattern.permute.xlu0 0
        %2318 = vperm.xlu0 %2317, %v2251
        %v2319 = vpop.permute.xlu0 %2318
        %2320 = vset.pattern.permute.xlu0 0
        %2321 = vperm.xlu0 %2320, %v2252
        %v2322 = vpop.permute.xlu0 %2321
        %2323 = vset.pattern.permute.xlu0 0
        %2324 = vperm.xlu0 %2323, %v2253
        %v2325 = vpop.permute.xlu0 %2324
        %2326 = vset.pattern.permute.xlu0 0
        %2327 = vperm.xlu0 %2326, %v2254
        %v2328 = vpop.permute.xlu0 %2327
        %2329 = vset.pattern.permute.xlu0 0
        %2330 = vperm.xlu0 %2329, %v2255
        %v2331 = vpop.permute.xlu0 %2330
        %2332 = vset.pattern.permute.xlu0 0
        %2333 = vperm.xlu0 %2332, %v2256
        %v2334 = vpop.permute.xlu0 %2333
        %2335 = vset.pattern.permute.xlu0 0
        %2336 = vperm.xlu0 %2335, %v2257
        %v2337 = vpop.permute.xlu0 %2336
        %2338 = vset.pattern.permute.xlu0 0
        %2339 = vperm.xlu0 %2338, %v2258
        %v2340 = vpop.permute.xlu0 %2339
        %2341 = vset.pattern.permute.xlu0 0
        %2342 = vperm.xlu0 %2341, %v2259
        %v2343 = vpop.permute.xlu0 %2342
        %2344 = vset.pattern.permute.xlu0 0
        %2345 = vperm.xlu0 %2344, %v2260
        %v2346 = vpop.permute.xlu0 %2345
        %2347 = vset.pattern.permute.xlu0 0
        %2348 = vperm.xlu0 %2347, %v2261
        %v2349 = vpop.permute.xlu0 %2348
        %2350 = vset.pattern.permute.xlu0 0
        %2351 = vperm.xlu0 %2350, %v2262
        %v2352 = vpop.permute.xlu0 %2351
        %2353 = vset.pattern.permute.xlu0 0
        %2354 = vperm.xlu0 %2353, %v2263
        %v2355 = vpop.permute.xlu0 %2354
        %2356 = vset.pattern.permute.xlu0 0
        %2357 = vperm.xlu0 %2356, %v2264
        %v2358 = vpop.permute.xlu0 %2357
        %2359 = vset.pattern.permute.xlu0 0
        %2360 = vperm.xlu0 %2359, %v2265
        %v2361 = vpop.permute.xlu0 %2360
        %vm2362 = vcmp.eq.s32.totalorder %v2268, 1
        %vm2363 = vcmp.eq.s32.totalorder %v2271, 1
        %vm2364 = vcmp.eq.s32.totalorder %v2274, 1
        %vm2365 = vcmp.eq.s32.totalorder %v2277, 1
        %vm2366 = vcmp.eq.s32.totalorder %v2280, 1
        %vm2367 = vcmp.eq.s32.totalorder %v2283, 1
        %vm2368 = vcmp.eq.s32.totalorder %v2286, 1
        %vm2369 = vcmp.eq.s32.totalorder %v2289, 1
        %vm2370 = vcmp.eq.s32.totalorder %v2292, 1
        %vm2371 = vcmp.eq.s32.totalorder %v2295, 1
        %vm2372 = vcmp.eq.s32.totalorder %v2298, 1
        %vm2373 = vcmp.eq.s32.totalorder %v2301, 1
        %vm2374 = vcmp.eq.s32.totalorder %v2304, 1
        %vm2375 = vcmp.eq.s32.totalorder %v2307, 1
        %vm2376 = vcmp.eq.s32.totalorder %v2310, 1
        %vm2377 = vcmp.eq.s32.totalorder %v2313, 1
        %vm2378 = vcmp.eq.s32.totalorder %v2316, 1
        %vm2379 = vcmp.eq.s32.totalorder %v2319, 1
        %vm2380 = vcmp.eq.s32.totalorder %v2322, 1
        %vm2381 = vcmp.eq.s32.totalorder %v2325, 1
        %vm2382 = vcmp.eq.s32.totalorder %v2328, 1
        %vm2383 = vcmp.eq.s32.totalorder %v2331, 1
        %vm2384 = vcmp.eq.s32.totalorder %v2334, 1
        %vm2385 = vcmp.eq.s32.totalorder %v2337, 1
        %vm2386 = vcmp.eq.s32.totalorder %v2340, 1
        %vm2387 = vcmp.eq.s32.totalorder %v2343, 1
        %vm2388 = vcmp.eq.s32.totalorder %v2346, 1
        %vm2389 = vcmp.eq.s32.totalorder %v2349, 1
        %vm2390 = vcmp.eq.s32.totalorder %v2352, 1
        %vm2391 = vcmp.eq.s32.totalorder %v2355, 1
        %vm2392 = vcmp.eq.s32.totalorder %v2358, 1
        %vm2393 = vcmp.eq.s32.totalorder %v2361, 1
        %v2394 = vsel %vm2362, %v954, 0.0
        %v2395 = vsel %vm2363, %v953, 0.0
        %v2396 = vsel %vm2364, %v952, 0.0
        %v2397 = vsel %vm2365, %v951, 0.0
        %v2398 = vsel %vm2366, %v950, 0.0
        %v2399 = vsel %vm2367, %v949, 0.0
        %v2400 = vsel %vm2368, %v948, 0.0
        %v2401 = vsel %vm2369, %v947, 0.0
        %v2402 = vsel %vm2370, %v946, 0.0
        %v2403 = vsel %vm2371, %v945, 0.0
        %v2404 = vsel %vm2372, %v944, 0.0
        %v2405 = vsel %vm2373, %v943, 0.0
        %v2406 = vsel %vm2374, %v942, 0.0
        %v2407 = vsel %vm2375, %v941, 0.0
        %v2408 = vsel %vm2376, %v940, 0.0
        %v2409 = vsel %vm2377, %v939, 0.0
        %v2410 = vsel %vm2378, %v938, 0.0
        %v2411 = vsel %vm2379, %v937, 0.0
        %v2412 = vsel %vm2380, %v936, 0.0
        %v2413 = vsel %vm2381, %v935, 0.0
        %v2414 = vsel %vm2382, %v934, 0.0
        %v2415 = vsel %vm2383, %v933, 0.0
        %v2416 = vsel %vm2384, %v932, 0.0
        %v2417 = vsel %vm2385, %v931, 0.0
        %v2418 = vsel %vm2386, %v930, 0.0
        %v2419 = vsel %vm2387, %v929, 0.0
        %v2420 = vsel %vm2388, %v928, 0.0
        %v2421 = vsel %vm2389, %v927, 0.0
        %v2422 = vsel %vm2390, %v926, 0.0
        %v2423 = vsel %vm2391, %v957, 0.0
        %v2424 = vsel %vm2392, %v956, 0.0
        %v2425 = vsel %vm2393, %v955, 0.0
        %2458 = vrot.lane.b32.xlu0 %v861, 32
        %v2459 = vpop.permute.xlu0 %2458
        %2460 = vrot.lane.b32.xlu0 %v862, 32
        %v2461 = vpop.permute.xlu0 %2460
        %2462 = vrot.lane.b32.xlu0 %v863, 32
        %v2463 = vpop.permute.xlu0 %2462
        %2464 = vrot.lane.b32.xlu0 %v864, 32
        %v2465 = vpop.permute.xlu0 %2464
        %2466 = vrot.lane.b32.xlu0 %v865, 32
        %v2467 = vpop.permute.xlu0 %2466
        %2468 = vrot.lane.b32.xlu0 %v866, 32
        %v2469 = vpop.permute.xlu0 %2468
        %2470 = vrot.lane.b32.xlu0 %v867, 32
        %v2471 = vpop.permute.xlu0 %2470
        %2472 = vrot.lane.b32.xlu0 %v868, 32
        %v2473 = vpop.permute.xlu0 %2472
        %2474 = vrot.lane.b32.xlu0 %v869, 32
        %v2475 = vpop.permute.xlu0 %2474
        %2476 = vrot.lane.b32.xlu0 %v870, 32
        %v2477 = vpop.permute.xlu0 %2476
        %2478 = vrot.lane.b32.xlu0 %v871, 32
        %v2479 = vpop.permute.xlu0 %2478
        %2480 = vrot.lane.b32.xlu0 %v872, 32
        %v2481 = vpop.permute.xlu0 %2480
        %2482 = vrot.lane.b32.xlu0 %v873, 32
        %v2483 = vpop.permute.xlu0 %2482
        %2484 = vrot.lane.b32.xlu0 %v874, 32
        %v2485 = vpop.permute.xlu0 %2484
        %2486 = vrot.lane.b32.xlu0 %v875, 32
        %v2487 = vpop.permute.xlu0 %2486
        %2488 = vrot.lane.b32.xlu0 %v876, 32
        %v2489 = vpop.permute.xlu0 %2488
        %2490 = vrot.lane.b32.xlu0 %v877, 32
        %v2491 = vpop.permute.xlu0 %2490
        %2492 = vrot.lane.b32.xlu0 %v878, 32
        %v2493 = vpop.permute.xlu0 %2492
        %2494 = vrot.lane.b32.xlu0 %v879, 32
        %v2495 = vpop.permute.xlu0 %2494
        %2496 = vrot.lane.b32.xlu0 %v880, 32
        %v2497 = vpop.permute.xlu0 %2496
        %2498 = vrot.lane.b32.xlu0 %v881, 32
        %v2499 = vpop.permute.xlu0 %2498
        %2500 = vrot.lane.b32.xlu0 %v882, 32
        %v2501 = vpop.permute.xlu0 %2500
        %2502 = vrot.lane.b32.xlu0 %v883, 32
        %v2503 = vpop.permute.xlu0 %2502
        %2504 = vrot.lane.b32.xlu0 %v884, 32
        %v2505 = vpop.permute.xlu0 %2504
        %2506 = vrot.lane.b32.xlu0 %v885, 32
        %v2507 = vpop.permute.xlu0 %2506
        %2508 = vrot.lane.b32.xlu0 %v886, 32
        %v2509 = vpop.permute.xlu0 %2508
        %2510 = vrot.lane.b32.xlu0 %v887, 32
        %v2511 = vpop.permute.xlu0 %2510
        %2512 = vrot.lane.b32.xlu0 %v888, 32
        %v2513 = vpop.permute.xlu0 %2512
        %2514 = vrot.lane.b32.xlu0 %v889, 32
        %v2515 = vpop.permute.xlu0 %2514
        %2516 = vrot.lane.b32.xlu0 %v890, 32
        %v2517 = vpop.permute.xlu0 %2516
        %2518 = vrot.lane.b32.xlu0 %v891, 32
        %v2519 = vpop.permute.xlu0 %2518
        %2520 = vrot.lane.b32.xlu0 %v892, 32
        %v2521 = vpop.permute.xlu0 %2520
        %2586 = vrot.lane.b32.xlu0 %v1182, 64
        %v2587 = vpop.permute.xlu0 %2586
        %2588 = vrot.lane.b32.xlu0 %v1183, 64
        %v2589 = vpop.permute.xlu0 %2588
        %2590 = vrot.lane.b32.xlu0 %v1184, 64
        %v2591 = vpop.permute.xlu0 %2590
        %2592 = vrot.lane.b32.xlu0 %v1185, 64
        %v2593 = vpop.permute.xlu0 %2592
        %2594 = vrot.lane.b32.xlu0 %v1186, 64
        %v2595 = vpop.permute.xlu0 %2594
        %2596 = vrot.lane.b32.xlu0 %v1187, 64
        %v2597 = vpop.permute.xlu0 %2596
        %2598 = vrot.lane.b32.xlu0 %v1188, 64
        %v2599 = vpop.permute.xlu0 %2598
        %2600 = vrot.lane.b32.xlu0 %v1189, 64
        %v2601 = vpop.permute.xlu0 %2600
        %2602 = vrot.lane.b32.xlu0 %v1190, 64
        %v2603 = vpop.permute.xlu0 %2602
        %2604 = vrot.lane.b32.xlu0 %v1191, 64
        %v2605 = vpop.permute.xlu0 %2604
        %2606 = vrot.lane.b32.xlu0 %v1192, 64
        %v2607 = vpop.permute.xlu0 %2606
        %2608 = vrot.lane.b32.xlu0 %v1193, 64
        %v2609 = vpop.permute.xlu0 %2608
        %2610 = vrot.lane.b32.xlu0 %v1194, 64
        %v2611 = vpop.permute.xlu0 %2610
        %2612 = vrot.lane.b32.xlu0 %v1195, 64
        %v2613 = vpop.permute.xlu0 %2612
        %2614 = vrot.lane.b32.xlu0 %v1196, 64
        %v2615 = vpop.permute.xlu0 %2614
        %2616 = vrot.lane.b32.xlu0 %v1197, 64
        %v2617 = vpop.permute.xlu0 %2616
        %2618 = vrot.lane.b32.xlu0 %v1198, 64
        %v2619 = vpop.permute.xlu0 %2618
        %2620 = vrot.lane.b32.xlu0 %v1199, 64
        %v2621 = vpop.permute.xlu0 %2620
        %2622 = vrot.lane.b32.xlu0 %v1200, 64
        %v2623 = vpop.permute.xlu0 %2622
        %2624 = vrot.lane.b32.xlu0 %v1201, 64
        %v2625 = vpop.permute.xlu0 %2624
        %2626 = vrot.lane.b32.xlu0 %v1202, 64
        %v2627 = vpop.permute.xlu0 %2626
        %2628 = vrot.lane.b32.xlu0 %v1203, 64
        %v2629 = vpop.permute.xlu0 %2628
        %2630 = vrot.lane.b32.xlu0 %v1204, 64
        %v2631 = vpop.permute.xlu0 %2630
        %2632 = vrot.lane.b32.xlu0 %v1205, 64
        %v2633 = vpop.permute.xlu0 %2632
        %2634 = vrot.lane.b32.xlu0 %v1206, 64
        %v2635 = vpop.permute.xlu0 %2634
        %2636 = vrot.lane.b32.xlu0 %v1207, 64
        %v2637 = vpop.permute.xlu0 %2636
        %2638 = vrot.lane.b32.xlu0 %v1208, 64
        %v2639 = vpop.permute.xlu0 %2638
        %2640 = vrot.lane.b32.xlu0 %v1209, 64
        %v2641 = vpop.permute.xlu0 %2640
        %2642 = vrot.lane.b32.xlu0 %v1210, 64
        %v2643 = vpop.permute.xlu0 %2642
        %2644 = vrot.lane.b32.xlu0 %v1211, 64
        %v2645 = vpop.permute.xlu0 %2644
        %2646 = vrot.lane.b32.xlu0 %v1212, 64
        %v2647 = vpop.permute.xlu0 %2646
        %2648 = vrot.lane.b32.xlu0 %v1213, 64
        %v2649 = vpop.permute.xlu0 %2648
        %2714 = vrot.lane.b32.xlu0 %v1502, 96
        %v2715 = vpop.permute.xlu0 %2714
        %2716 = vrot.lane.b32.xlu0 %v1503, 96
        %v2717 = vpop.permute.xlu0 %2716
        %2718 = vrot.lane.b32.xlu0 %v1504, 96
        %v2719 = vpop.permute.xlu0 %2718
        %2720 = vrot.lane.b32.xlu0 %v1505, 96
        %v2721 = vpop.permute.xlu0 %2720
        %2722 = vrot.lane.b32.xlu0 %v1506, 96
        %v2723 = vpop.permute.xlu0 %2722
        %2724 = vrot.lane.b32.xlu0 %v1507, 96
        %v2725 = vpop.permute.xlu0 %2724
        %2726 = vrot.lane.b32.xlu0 %v1508, 96
        %v2727 = vpop.permute.xlu0 %2726
        %2728 = vrot.lane.b32.xlu0 %v1509, 96
        %v2729 = vpop.permute.xlu0 %2728
        %2730 = vrot.lane.b32.xlu0 %v1510, 96
        %v2731 = vpop.permute.xlu0 %2730
        %2732 = vrot.lane.b32.xlu0 %v1511, 96
        %v2733 = vpop.permute.xlu0 %2732
        %2734 = vrot.lane.b32.xlu0 %v1512, 96
        %v2735 = vpop.permute.xlu0 %2734
        %2736 = vrot.lane.b32.xlu0 %v1513, 96
        %v2737 = vpop.permute.xlu0 %2736
        %2738 = vrot.lane.b32.xlu0 %v1514, 96
        %v2739 = vpop.permute.xlu0 %2738
        %2740 = vrot.lane.b32.xlu0 %v1515, 96
        %v2741 = vpop.permute.xlu0 %2740
        %2742 = vrot.lane.b32.xlu0 %v1516, 96
        %v2743 = vpop.permute.xlu0 %2742
        %2744 = vrot.lane.b32.xlu0 %v1517, 96
        %v2745 = vpop.permute.xlu0 %2744
        %2746 = vrot.lane.b32.xlu0 %v1518, 96
        %v2747 = vpop.permute.xlu0 %2746
        %2748 = vrot.lane.b32.xlu0 %v1519, 96
        %v2749 = vpop.permute.xlu0 %2748
        %2750 = vrot.lane.b32.xlu0 %v1520, 96
        %v2751 = vpop.permute.xlu0 %2750
        %2752 = vrot.lane.b32.xlu0 %v1521, 96
        %v2753 = vpop.permute.xlu0 %2752
        %2754 = vrot.lane.b32.xlu0 %v1522, 96
        %v2755 = vpop.permute.xlu0 %2754
        %2756 = vrot.lane.b32.xlu0 %v1523, 96
        %v2757 = vpop.permute.xlu0 %2756
        %2758 = vrot.lane.b32.xlu0 %v1524, 96
        %v2759 = vpop.permute.xlu0 %2758
        %2760 = vrot.lane.b32.xlu0 %v1525, 96
        %v2761 = vpop.permute.xlu0 %2760
        %2762 = vrot.lane.b32.xlu0 %v1526, 96
        %v2763 = vpop.permute.xlu0 %2762
        %2764 = vrot.lane.b32.xlu0 %v1527, 96
        %v2765 = vpop.permute.xlu0 %2764
        %2766 = vrot.lane.b32.xlu0 %v1528, 96
        %v2767 = vpop.permute.xlu0 %2766
        %2768 = vrot.lane.b32.xlu0 %v1529, 96
        %v2769 = vpop.permute.xlu0 %2768
        %2770 = vrot.lane.b32.xlu0 %v1530, 96
        %v2771 = vpop.permute.xlu0 %2770
        %2772 = vrot.lane.b32.xlu0 %v1531, 96
        %v2773 = vpop.permute.xlu0 %2772
        %2774 = vrot.lane.b32.xlu0 %v1532, 96
        %v2775 = vpop.permute.xlu0 %2774
        %2776 = vrot.lane.b32.xlu0 %v1533, 96
        %v2777 = vpop.permute.xlu0 %2776
        %2842 = vrot.lane.b32.xlu0 %v1726, 32
        %v2843 = vpop.permute.xlu0 %2842
        %2844 = vrot.lane.b32.xlu0 %v1727, 32
        %v2845 = vpop.permute.xlu0 %2844
        %2846 = vrot.lane.b32.xlu0 %v1728, 32
        %v2847 = vpop.permute.xlu0 %2846
        %2848 = vrot.lane.b32.xlu0 %v1729, 32
        %v2849 = vpop.permute.xlu0 %2848
        %2850 = vrot.lane.b32.xlu0 %v1730, 32
        %v2851 = vpop.permute.xlu0 %2850
        %2852 = vrot.lane.b32.xlu0 %v1731, 32
        %v2853 = vpop.permute.xlu0 %2852
        %2854 = vrot.lane.b32.xlu0 %v1732, 32
        %v2855 = vpop.permute.xlu0 %2854
        %2856 = vrot.lane.b32.xlu0 %v1733, 32
        %v2857 = vpop.permute.xlu0 %2856
        %2858 = vrot.lane.b32.xlu0 %v1734, 32
        %v2859 = vpop.permute.xlu0 %2858
        %2860 = vrot.lane.b32.xlu0 %v1735, 32
        %v2861 = vpop.permute.xlu0 %2860
        %2862 = vrot.lane.b32.xlu0 %v1736, 32
        %v2863 = vpop.permute.xlu0 %2862
        %2864 = vrot.lane.b32.xlu0 %v1737, 32
        %v2865 = vpop.permute.xlu0 %2864
        %2866 = vrot.lane.b32.xlu0 %v1738, 32
        %v2867 = vpop.permute.xlu0 %2866
        %2868 = vrot.lane.b32.xlu0 %v1739, 32
        %v2869 = vpop.permute.xlu0 %2868
        %2870 = vrot.lane.b32.xlu0 %v1740, 32
        %v2871 = vpop.permute.xlu0 %2870
        %2872 = vrot.lane.b32.xlu0 %v1741, 32
        %v2873 = vpop.permute.xlu0 %2872
        %2874 = vrot.lane.b32.xlu0 %v1742, 32
        %v2875 = vpop.permute.xlu0 %2874
        %2876 = vrot.lane.b32.xlu0 %v1743, 32
        %v2877 = vpop.permute.xlu0 %2876
        %2878 = vrot.lane.b32.xlu0 %v1744, 32
        %v2879 = vpop.permute.xlu0 %2878
        %2880 = vrot.lane.b32.xlu0 %v1745, 32
        %v2881 = vpop.permute.xlu0 %2880
        %2882 = vrot.lane.b32.xlu0 %v1746, 32
        %v2883 = vpop.permute.xlu0 %2882
        %2884 = vrot.lane.b32.xlu0 %v1747, 32
        %v2885 = vpop.permute.xlu0 %2884
        %2886 = vrot.lane.b32.xlu0 %v1748, 32
        %v2887 = vpop.permute.xlu0 %2886
        %2888 = vrot.lane.b32.xlu0 %v1749, 32
        %v2889 = vpop.permute.xlu0 %2888
        %2890 = vrot.lane.b32.xlu0 %v1750, 32
        %v2891 = vpop.permute.xlu0 %2890
        %2892 = vrot.lane.b32.xlu0 %v1751, 32
        %v2893 = vpop.permute.xlu0 %2892
        %2894 = vrot.lane.b32.xlu0 %v1752, 32
        %v2895 = vpop.permute.xlu0 %2894
        %2896 = vrot.lane.b32.xlu0 %v1753, 32
        %v2897 = vpop.permute.xlu0 %2896
        %2898 = vrot.lane.b32.xlu0 %v1754, 32
        %v2899 = vpop.permute.xlu0 %2898
        %2900 = vrot.lane.b32.xlu0 %v1755, 32
        %v2901 = vpop.permute.xlu0 %2900
        %2902 = vrot.lane.b32.xlu0 %v1756, 32
        %v2903 = vpop.permute.xlu0 %2902
        %2904 = vrot.lane.b32.xlu0 %v1757, 32
        %v2905 = vpop.permute.xlu0 %2904
        %2970 = vrot.lane.b32.xlu0 %v2074, 64
        %v2971 = vpop.permute.xlu0 %2970
        %2972 = vrot.lane.b32.xlu0 %v2075, 64
        %v2973 = vpop.permute.xlu0 %2972
        %2974 = vrot.lane.b32.xlu0 %v2076, 64
        %v2975 = vpop.permute.xlu0 %2974
        %2976 = vrot.lane.b32.xlu0 %v2077, 64
        %v2977 = vpop.permute.xlu0 %2976
        %2978 = vrot.lane.b32.xlu0 %v2078, 64
        %v2979 = vpop.permute.xlu0 %2978
        %2980 = vrot.lane.b32.xlu0 %v2079, 64
        %v2981 = vpop.permute.xlu0 %2980
        %2982 = vrot.lane.b32.xlu0 %v2080, 64
        %v2983 = vpop.permute.xlu0 %2982
        %2984 = vrot.lane.b32.xlu0 %v2081, 64
        %v2985 = vpop.permute.xlu0 %2984
        %2986 = vrot.lane.b32.xlu0 %v2082, 64
        %v2987 = vpop.permute.xlu0 %2986
        %2988 = vrot.lane.b32.xlu0 %v2083, 64
        %v2989 = vpop.permute.xlu0 %2988
        %2990 = vrot.lane.b32.xlu0 %v2084, 64
        %v2991 = vpop.permute.xlu0 %2990
        %2992 = vrot.lane.b32.xlu0 %v2085, 64
        %v2993 = vpop.permute.xlu0 %2992
        %2994 = vrot.lane.b32.xlu0 %v2086, 64
        %v2995 = vpop.permute.xlu0 %2994
        %2996 = vrot.lane.b32.xlu0 %v2087, 64
        %v2997 = vpop.permute.xlu0 %2996
        %2998 = vrot.lane.b32.xlu0 %v2088, 64
        %v2999 = vpop.permute.xlu0 %2998
        %3000 = vrot.lane.b32.xlu0 %v2089, 64
        %v3001 = vpop.permute.xlu0 %3000
        %3002 = vrot.lane.b32.xlu0 %v2090, 64
        %v3003 = vpop.permute.xlu0 %3002
        %3004 = vrot.lane.b32.xlu0 %v2091, 64
        %v3005 = vpop.permute.xlu0 %3004
        %3006 = vrot.lane.b32.xlu0 %v2092, 64
        %v3007 = vpop.permute.xlu0 %3006
        %3008 = vrot.lane.b32.xlu0 %v2093, 64
        %v3009 = vpop.permute.xlu0 %3008
        %3010 = vrot.lane.b32.xlu0 %v2094, 64
        %v3011 = vpop.permute.xlu0 %3010
        %3012 = vrot.lane.b32.xlu0 %v2095, 64
        %v3013 = vpop.permute.xlu0 %3012
        %3014 = vrot.lane.b32.xlu0 %v2096, 64
        %v3015 = vpop.permute.xlu0 %3014
        %3016 = vrot.lane.b32.xlu0 %v2097, 64
        %v3017 = vpop.permute.xlu0 %3016
        %3018 = vrot.lane.b32.xlu0 %v2098, 64
        %v3019 = vpop.permute.xlu0 %3018
        %3020 = vrot.lane.b32.xlu0 %v2099, 64
        %v3021 = vpop.permute.xlu0 %3020
        %3022 = vrot.lane.b32.xlu0 %v2100, 64
        %v3023 = vpop.permute.xlu0 %3022
        %3024 = vrot.lane.b32.xlu0 %v2101, 64
        %v3025 = vpop.permute.xlu0 %3024
        %3026 = vrot.lane.b32.xlu0 %v2102, 64
        %v3027 = vpop.permute.xlu0 %3026
        %3028 = vrot.lane.b32.xlu0 %v2103, 64
        %v3029 = vpop.permute.xlu0 %3028
        %3030 = vrot.lane.b32.xlu0 %v2104, 64
        %v3031 = vpop.permute.xlu0 %3030
        %3032 = vrot.lane.b32.xlu0 %v2105, 64
        %v3033 = vpop.permute.xlu0 %3032
        %3098 = vrot.lane.b32.xlu0 %v2170, 96
        %v3099 = vpop.permute.xlu0 %3098
        %3100 = vrot.lane.b32.xlu0 %v2171, 96
        %v3101 = vpop.permute.xlu0 %3100
        %3102 = vrot.lane.b32.xlu0 %v2172, 96
        %v3103 = vpop.permute.xlu0 %3102
        %3104 = vrot.lane.b32.xlu0 %v2173, 96
        %v3105 = vpop.permute.xlu0 %3104
        %3106 = vrot.lane.b32.xlu0 %v2174, 96
        %v3107 = vpop.permute.xlu0 %3106
        %3108 = vrot.lane.b32.xlu0 %v2175, 96
        %v3109 = vpop.permute.xlu0 %3108
        %3110 = vrot.lane.b32.xlu0 %v2176, 96
        %v3111 = vpop.permute.xlu0 %3110
        %3112 = vrot.lane.b32.xlu0 %v2177, 96
        %v3113 = vpop.permute.xlu0 %3112
        %3114 = vrot.lane.b32.xlu0 %v2178, 96
        %v3115 = vpop.permute.xlu0 %3114
        %3116 = vrot.lane.b32.xlu0 %v2179, 96
        %v3117 = vpop.permute.xlu0 %3116
        %3118 = vrot.lane.b32.xlu0 %v2180, 96
        %v3119 = vpop.permute.xlu0 %3118
        %3120 = vrot.lane.b32.xlu0 %v2181, 96
        %v3121 = vpop.permute.xlu0 %3120
        %3122 = vrot.lane.b32.xlu0 %v2182, 96
        %v3123 = vpop.permute.xlu0 %3122
        %3124 = vrot.lane.b32.xlu0 %v2183, 96
        %v3125 = vpop.permute.xlu0 %3124
        %3126 = vrot.lane.b32.xlu0 %v2184, 96
        %v3127 = vpop.permute.xlu0 %3126
        %3128 = vrot.lane.b32.xlu0 %v2185, 96
        %v3129 = vpop.permute.xlu0 %3128
        %3130 = vrot.lane.b32.xlu0 %v2186, 96
        %v3131 = vpop.permute.xlu0 %3130
        %3132 = vrot.lane.b32.xlu0 %v2187, 96
        %v3133 = vpop.permute.xlu0 %3132
        %3134 = vrot.lane.b32.xlu0 %v2188, 96
        %v3135 = vpop.permute.xlu0 %3134
        %3136 = vrot.lane.b32.xlu0 %v2189, 96
        %v3137 = vpop.permute.xlu0 %3136
        %3138 = vrot.lane.b32.xlu0 %v2190, 96
        %v3139 = vpop.permute.xlu0 %3138
        %3140 = vrot.lane.b32.xlu0 %v2191, 96
        %v3141 = vpop.permute.xlu0 %3140
        %3142 = vrot.lane.b32.xlu0 %v2192, 96
        %v3143 = vpop.permute.xlu0 %3142
        %3144 = vrot.lane.b32.xlu0 %v2193, 96
        %v3145 = vpop.permute.xlu0 %3144
        %3146 = vrot.lane.b32.xlu0 %v2194, 96
        %v3147 = vpop.permute.xlu0 %3146
        %3148 = vrot.lane.b32.xlu0 %v2195, 96
        %v3149 = vpop.permute.xlu0 %3148
        %3150 = vrot.lane.b32.xlu0 %v2196, 96
        %v3151 = vpop.permute.xlu0 %3150
        %3152 = vrot.lane.b32.xlu0 %v2197, 96
        %v3153 = vpop.permute.xlu0 %3152
        %3154 = vrot.lane.b32.xlu0 %v2198, 96
        %v3155 = vpop.permute.xlu0 %3154
        %3156 = vrot.lane.b32.xlu0 %v2199, 96
        %v3157 = vpop.permute.xlu0 %3156
        %3158 = vrot.lane.b32.xlu0 %v2200, 96
        %v3159 = vpop.permute.xlu0 %3158
        %3160 = vrot.lane.b32.xlu0 %v2201, 96
        %v3161 = vpop.permute.xlu0 %3160
        %vm3194 = vcmask 261120
        %v3195 = vsel %vm3194, %v765, %v2459
        %v3196 = vsel %vm3194, %v766, %v2461
        %v3197 = vsel %vm3194, %v767, %v2463
        %v3198 = vsel %vm3194, %v768, %v2465
        %v3199 = vsel %vm3194, %v769, %v2467
        %v3200 = vsel %vm3194, %v770, %v2469
        %v3201 = vsel %vm3194, %v771, %v2471
        %v3202 = vsel %vm3194, %v772, %v2473
        %v3203 = vsel %vm3194, %v773, %v2475
        %v3204 = vsel %vm3194, %v774, %v2477
        %v3205 = vsel %vm3194, %v775, %v2479
        %v3206 = vsel %vm3194, %v776, %v2481
        %v3207 = vsel %vm3194, %v777, %v2483
        %v3208 = vsel %vm3194, %v778, %v2485
        %v3209 = vsel %vm3194, %v779, %v2487
        %v3210 = vsel %vm3194, %v780, %v2489
        %v3211 = vsel %vm3194, %v781, %v2491
        %v3212 = vsel %vm3194, %v782, %v2493
        %v3213 = vsel %vm3194, %v783, %v2495
        %v3214 = vsel %vm3194, %v784, %v2497
        %v3215 = vsel %vm3194, %v785, %v2499
        %v3216 = vsel %vm3194, %v786, %v2501
        %v3217 = vsel %vm3194, %v787, %v2503
        %v3218 = vsel %vm3194, %v788, %v2505
        %v3219 = vsel %vm3194, %v789, %v2507
        %v3220 = vsel %vm3194, %v790, %v2509
        %v3221 = vsel %vm3194, %v791, %v2511
        %v3222 = vsel %vm3194, %v792, %v2513
        %v3223 = vsel %vm3194, %v793, %v2515
        %v3224 = vsel %vm3194, %v794, %v2517
        %v3225 = vsel %vm3194, %v795, %v2519
        %v3226 = vsel %vm3194, %v796, %v2521
        %vm3227 = vcmask 523264
        %v3228 = vsel %vm3227, %v3195, %v2587
        %v3229 = vsel %vm3227, %v3196, %v2589
        %v3230 = vsel %vm3227, %v3197, %v2591
        %v3231 = vsel %vm3227, %v3198, %v2593
        %v3232 = vsel %vm3227, %v3199, %v2595
        %v3233 = vsel %vm3227, %v3200, %v2597
        %v3234 = vsel %vm3227, %v3201, %v2599
        %v3235 = vsel %vm3227, %v3202, %v2601
        %v3236 = vsel %vm3227, %v3203, %v2603
        %v3237 = vsel %vm3227, %v3204, %v2605
        %v3238 = vsel %vm3227, %v3205, %v2607
        %v3239 = vsel %vm3227, %v3206, %v2609
        %v3240 = vsel %vm3227, %v3207, %v2611
        %v3241 = vsel %vm3227, %v3208, %v2613
        %v3242 = vsel %vm3227, %v3209, %v2615
        %v3243 = vsel %vm3227, %v3210, %v2617
        %v3244 = vsel %vm3227, %v3211, %v2619
        %v3245 = vsel %vm3227, %v3212, %v2621
        %v3246 = vsel %vm3227, %v3213, %v2623
        %v3247 = vsel %vm3227, %v3214, %v2625
        %v3248 = vsel %vm3227, %v3215, %v2627
        %v3249 = vsel %vm3227, %v3216, %v2629
        %v3250 = vsel %vm3227, %v3217, %v2631
        %v3251 = vsel %vm3227, %v3218, %v2633
        %v3252 = vsel %vm3227, %v3219, %v2635
        %v3253 = vsel %vm3227, %v3220, %v2637
        %v3254 = vsel %vm3227, %v3221, %v2639
        %v3255 = vsel %vm3227, %v3222, %v2641
        %v3256 = vsel %vm3227, %v3223, %v2643
        %v3257 = vsel %vm3227, %v3224, %v2645
        %v3258 = vsel %vm3227, %v3225, %v2647
        %v3259 = vsel %vm3227, %v3226, %v2649
        %vm3260 = vcmask 785408
        %v3261 = vsel %vm3260, %v3228, %v2715
        %v3262 = vsel %vm3260, %v3229, %v2717
        %v3263 = vsel %vm3260, %v3230, %v2719
        %v3264 = vsel %vm3260, %v3231, %v2721
        %v3265 = vsel %vm3260, %v3232, %v2723
        %v3266 = vsel %vm3260, %v3233, %v2725
        %v3267 = vsel %vm3260, %v3234, %v2727
        %v3268 = vsel %vm3260, %v3235, %v2729
        %v3269 = vsel %vm3260, %v3236, %v2731
        %v3270 = vsel %vm3260, %v3237, %v2733
        %v3271 = vsel %vm3260, %v3238, %v2735
        %v3272 = vsel %vm3260, %v3239, %v2737
        %v3273 = vsel %vm3260, %v3240, %v2739
        %v3274 = vsel %vm3260, %v3241, %v2741
        %v3275 = vsel %vm3260, %v3242, %v2743
        %v3276 = vsel %vm3260, %v3243, %v2745
        %v3277 = vsel %vm3260, %v3244, %v2747
        %v3278 = vsel %vm3260, %v3245, %v2749
        %v3279 = vsel %vm3260, %v3246, %v2751
        %v3280 = vsel %vm3260, %v3247, %v2753
        %v3281 = vsel %vm3260, %v3248, %v2755
        %v3282 = vsel %vm3260, %v3249, %v2757
        %v3283 = vsel %vm3260, %v3250, %v2759
        %v3284 = vsel %vm3260, %v3251, %v2761
        %v3285 = vsel %vm3260, %v3252, %v2763
        %v3286 = vsel %vm3260, %v3253, %v2765
        %v3287 = vsel %vm3260, %v3254, %v2767
        %v3288 = vsel %vm3260, %v3255, %v2769
        %v3289 = vsel %vm3260, %v3256, %v2771
        %v3290 = vsel %vm3260, %v3257, %v2773
        %v3291 = vsel %vm3260, %v3258, %v2775
        %v3292 = vsel %vm3260, %v3259, %v2777
        %v3293 = vsel %vm3194, %v283, %v2843
        %v3294 = vsel %vm3194, %v284, %v2845
        %v3295 = vsel %vm3194, %v285, %v2847
        %v3296 = vsel %vm3194, %v286, %v2849
        %v3297 = vsel %vm3194, %v287, %v2851
        %v3298 = vsel %vm3194, %v288, %v2853
        %v3299 = vsel %vm3194, %v289, %v2855
        %v3300 = vsel %vm3194, %v290, %v2857
        %v3301 = vsel %vm3194, %v291, %v2859
        %v3302 = vsel %vm3194, %v292, %v2861
        %v3303 = vsel %vm3194, %v293, %v2863
        %v3304 = vsel %vm3194, %v294, %v2865
        %v3305 = vsel %vm3194, %v295, %v2867
        %v3306 = vsel %vm3194, %v296, %v2869
        %v3307 = vsel %vm3194, %v297, %v2871
        %v3308 = vsel %vm3194, %v298, %v2873
        %v3309 = vsel %vm3194, %v299, %v2875
        %v3310 = vsel %vm3194, %v300, %v2877
        %v3311 = vsel %vm3194, %v301, %v2879
        %v3312 = vsel %vm3194, %v302, %v2881
        %v3313 = vsel %vm3194, %v303, %v2883
        %v3314 = vsel %vm3194, %v304, %v2885
        %v3315 = vsel %vm3194, %v305, %v2887
        %v3316 = vsel %vm3194, %v306, %v2889
        %v3317 = vsel %vm3194, %v307, %v2891
        %v3318 = vsel %vm3194, %v308, %v2893
        %v3319 = vsel %vm3194, %v309, %v2895
        %v3320 = vsel %vm3194, %v310, %v2897
        %v3321 = vsel %vm3194, %v311, %v2899
        %v3322 = vsel %vm3194, %v312, %v2901
        %v3323 = vsel %vm3194, %v313, %v2903
        %v3324 = vsel %vm3194, %v314, %v2905
        %v3325 = vsel %vm3227, %v3293, %v2971
        %v3326 = vsel %vm3227, %v3294, %v2973
        %v3327 = vsel %vm3227, %v3295, %v2975
        %v3328 = vsel %vm3227, %v3296, %v2977
        %v3329 = vsel %vm3227, %v3297, %v2979
        %v3330 = vsel %vm3227, %v3298, %v2981
        %v3331 = vsel %vm3227, %v3299, %v2983
        %v3332 = vsel %vm3227, %v3300, %v2985
        %v3333 = vsel %vm3227, %v3301, %v2987
        %v3334 = vsel %vm3227, %v3302, %v2989
        %v3335 = vsel %vm3227, %v3303, %v2991
        %v3336 = vsel %vm3227, %v3304, %v2993
        %v3337 = vsel %vm3227, %v3305, %v2995
        %v3338 = vsel %vm3227, %v3306, %v2997
        %v3339 = vsel %vm3227, %v3307, %v2999
        %v3340 = vsel %vm3227, %v3308, %v3001
        %v3341 = vsel %vm3227, %v3309, %v3003
        %v3342 = vsel %vm3227, %v3310, %v3005
        %v3343 = vsel %vm3227, %v3311, %v3007
        %v3344 = vsel %vm3227, %v3312, %v3009
        %v3345 = vsel %vm3227, %v3313, %v3011
        %v3346 = vsel %vm3227, %v3314, %v3013
        %v3347 = vsel %vm3227, %v3315, %v3015
        %v3348 = vsel %vm3227, %v3316, %v3017
        %v3349 = vsel %vm3227, %v3317, %v3019
        %v3350 = vsel %vm3227, %v3318, %v3021
        %v3351 = vsel %vm3227, %v3319, %v3023
        %v3352 = vsel %vm3227, %v3320, %v3025
        %v3353 = vsel %vm3227, %v3321, %v3027
        %v3354 = vsel %vm3227, %v3322, %v3029
        %v3355 = vsel %vm3227, %v3323, %v3031
        %v3356 = vsel %vm3227, %v3324, %v3033
        %v3357 = vsel %vm3260, %v3325, %v3099
        %v3358 = vsel %vm3260, %v3326, %v3101
        %v3359 = vsel %vm3260, %v3327, %v3103
        %v3360 = vsel %vm3260, %v3328, %v3105
        %v3361 = vsel %vm3260, %v3329, %v3107
        %v3362 = vsel %vm3260, %v3330, %v3109
        %v3363 = vsel %vm3260, %v3331, %v3111
        %v3364 = vsel %vm3260, %v3332, %v3113
        %v3365 = vsel %vm3260, %v3333, %v3115
        %v3366 = vsel %vm3260, %v3334, %v3117
        %v3367 = vsel %vm3260, %v3335, %v3119
        %v3368 = vsel %vm3260, %v3336, %v3121
        %v3369 = vsel %vm3260, %v3337, %v3123
        %v3370 = vsel %vm3260, %v3338, %v3125
        %v3371 = vsel %vm3260, %v3339, %v3127
        %v3372 = vsel %vm3260, %v3340, %v3129
        %v3373 = vsel %vm3260, %v3341, %v3131
        %v3374 = vsel %vm3260, %v3342, %v3133
        %v3375 = vsel %vm3260, %v3343, %v3135
        %v3376 = vsel %vm3260, %v3344, %v3137
        %v3377 = vsel %vm3260, %v3345, %v3139
        %v3378 = vsel %vm3260, %v3346, %v3141
        %v3379 = vsel %vm3260, %v3347, %v3143
        %v3380 = vsel %vm3260, %v3348, %v3145
        %v3381 = vsel %vm3260, %v3349, %v3147
        %v3382 = vsel %vm3260, %v3350, %v3149
        %v3383 = vsel %vm3260, %v3351, %v3151
        %v3384 = vsel %vm3260, %v3352, %v3153
        %v3385 = vsel %vm3260, %v3353, %v3155
        %v3386 = vsel %vm3260, %v3354, %v3157
        %v3387 = vsel %vm3260, %v3355, %v3159
        %v3388 = vsel %vm3260, %v3356, %v3161
        %v3389 = vpack.c.bf16 %v3262, %v3261
        %v3390 = vpack.c.bf16 %v3358, %v3357
        %v3391 = vpack.c.bf16 %v2395, %v2394
        %v3392 = vpack.c.bf16 %v3264, %v3263
        %v3393 = vpack.c.bf16 %v3360, %v3359
        %v3394 = vpack.c.bf16 %v2397, %v2396
        %v3395 = vpack.c.bf16 %v3266, %v3265
        %v3396 = vpack.c.bf16 %v3362, %v3361
        %v3397 = vpack.c.bf16 %v2399, %v2398
        %v3398 = vpack.c.bf16 %v3268, %v3267
        %v3399 = vpack.c.bf16 %v3364, %v3363
        %v3400 = vpack.c.bf16 %v2401, %v2400
        %v3401 = vpack.c.bf16 %v3270, %v3269
        %v3402 = vpack.c.bf16 %v3366, %v3365
        %v3403 = vpack.c.bf16 %v2403, %v2402
        %v3404 = vpack.c.bf16 %v3272, %v3271
        %v3405 = vpack.c.bf16 %v3368, %v3367
        %v3406 = vpack.c.bf16 %v2405, %v2404
        %v3407 = vpack.c.bf16 %v3274, %v3273
        %v3408 = vpack.c.bf16 %v3370, %v3369
        %v3409 = vpack.c.bf16 %v2407, %v2406
        %v3410 = vpack.c.bf16 %v3276, %v3275
        %v3411 = vpack.c.bf16 %v3372, %v3371
        %v3412 = vpack.c.bf16 %v2409, %v2408
        %v3413 = vpack.c.bf16 %v3278, %v3277
        %v3414 = vpack.c.bf16 %v3374, %v3373
        %v3415 = vpack.c.bf16 %v2411, %v2410
        %v3416 = vpack.c.bf16 %v3280, %v3279
        %v3417 = vpack.c.bf16 %v3376, %v3375
        %v3418 = vpack.c.bf16 %v2413, %v2412
        %v3419 = vpack.c.bf16 %v3282, %v3281
        %v3420 = vpack.c.bf16 %v3378, %v3377
        %v3421 = vpack.c.bf16 %v2415, %v2414
        %v3422 = vpack.c.bf16 %v3284, %v3283
        %v3423 = vpack.c.bf16 %v3380, %v3379
        %v3424 = vpack.c.bf16 %v2417, %v2416
        %v3425 = vpack.c.bf16 %v3286, %v3285
        %v3426 = vpack.c.bf16 %v3382, %v3381
        %v3427 = vpack.c.bf16 %v2419, %v2418
        %v3428 = vpack.c.bf16 %v3288, %v3287
        %v3429 = vpack.c.bf16 %v3384, %v3383
        %v3430 = vpack.c.bf16 %v2421, %v2420
        %v3431 = vpack.c.bf16 %v3290, %v3289
        %v3432 = vpack.c.bf16 %v3386, %v3385
        %v3433 = vpack.c.bf16 %v2423, %v2422
        %v3434 = vpack.c.bf16 %v3292, %v3291
        %v3435 = vpack.c.bf16 %v3388, %v3387
        %v3436 = vpack.c.bf16 %v2425, %v2424
        %v3437 = vld [vmem:[%s2] sm:$0xf]
        %v3438 = vld [vmem:[%s2 + $0x4] sm:$0xf]
        %v3439 = vld [vmem:[%s2 + $0x8] sm:$0xf]
        %v3440 = vld [vmem:[%s2 + $0xc] sm:$0xf]
        %v3441 = vld [vmem:[%s2 + $0x10] sm:$0xf]
        %v3442 = vld [vmem:[%s2 + $0x14] sm:$0xf]
        %v3443 = vld [vmem:[%s2 + $0x18] sm:$0xf]
        %v3444 = vld [vmem:[%s2 + $0x1c] sm:$0xf]
        %v3445 = vld [vmem:[%s2 + $0x20] sm:$0xf]
        %v3446 = vld [vmem:[%s2 + $0x24] sm:$0xf]
        %v3447 = vld [vmem:[%s2 + $0x28] sm:$0xf]
        %v3448 = vld [vmem:[%s2 + $0x2c] sm:$0xf]
        %v3449 = vld [vmem:[%s2 + $0x30] sm:$0xf]
        %v3450 = vld [vmem:[%s2 + $0x34] sm:$0xf]
        %v3451 = vld [vmem:[%s2 + $0x38] sm:$0xf]
        %v3452 = vld [vmem:[%s2 + $0x3c] sm:$0xf]
        %v3453 = vld [vmem:[%s2 + $0x40] sm:$0xf]
        %v3454 = vld [vmem:[%s2 + $0x44] sm:$0xf]
        %v3455 = vld [vmem:[%s2 + $0x48] sm:$0xf]
        %v3456 = vld [vmem:[%s2 + $0x4c] sm:$0xf]
        %v3457 = vld [vmem:[%s2 + $0x50] sm:$0xf]
        %v3458 = vld [vmem:[%s2 + $0x54] sm:$0xf]
        %v3459 = vld [vmem:[%s2 + $0x58] sm:$0xf]
        %v3460 = vld [vmem:[%s2 + $0x5c] sm:$0xf]
        %v3461 = vld [vmem:[%s2 + $0x60] sm:$0xf]
        %v3462 = vld [vmem:[%s2 + $0x64] sm:$0xf]
        %v3463 = vld [vmem:[%s2 + $0x68] sm:$0xf]
        %v3464 = vld [vmem:[%s2 + $0x6c] sm:$0xf]
        %v3465 = vld [vmem:[%s2 + $0x70] sm:$0xf]
        %v3466 = vld [vmem:[%s2 + $0x74] sm:$0xf]
        %v3467 = vld [vmem:[%s2 + $0x78] sm:$0xf]
        %v3468 = vld [vmem:[%s2 + $0x7c] sm:$0xf]
        %v3469 = vld [vmem:[%s2 + $0x80] sm:$0xf]
        %v3470 = vld [vmem:[%s2 + $0x84] sm:$0xf]
        %v3471 = vld [vmem:[%s2 + $0x88] sm:$0xf]
        %v3472 = vld [vmem:[%s2 + $0x8c] sm:$0xf]
        %v3509 = vunpack.c.l.b16 %v3437
        %v3510 = vunpack.c.l.b16 %v3438
        %v3511 = vunpack.c.l.b16 %v3439
        %v3512 = vunpack.c.l.b16 %v3440
        %v3513 = vunpack.c.l.b16 %v3441
        %v3514 = vunpack.c.l.b16 %v3442
        %v3515 = vunpack.c.l.b16 %v3443
        %v3516 = vunpack.c.l.b16 %v3444
        %v3517 = vunpack.c.l.b16 %v3445
        %v3518 = vunpack.c.l.b16 %v3446
        %v3519 = vunpack.c.l.b16 %v3447
        %v3520 = vunpack.c.l.b16 %v3448
        %v3521 = vunpack.c.l.b16 %v3449
        %v3522 = vunpack.c.l.b16 %v3450
        %v3523 = vunpack.c.l.b16 %v3451
        %v3524 = vunpack.c.l.b16 %v3452
        %v3525 = vunpack.c.l.b16 %v3453
        %v3526 = vunpack.c.l.b16 %v3454
        %v3527 = vunpack.c.l.b16 %v3455
        %v3528 = vunpack.c.l.b16 %v3456
        %v3529 = vunpack.c.l.b16 %v3457
        %v3530 = vunpack.c.l.b16 %v3458
        %v3531 = vunpack.c.l.b16 %v3459
        %v3532 = vunpack.c.l.b16 %v3460
        %v3533 = vunpack.c.l.b16 %v3461
        %v3534 = vunpack.c.l.b16 %v3462
        %v3535 = vunpack.c.l.b16 %v3463
        %v3536 = vunpack.c.l.b16 %v3464
        %v3537 = vunpack.c.l.b16 %v3465
        %v3538 = vunpack.c.l.b16 %v3466
        %v3539 = vunpack.c.l.b16 %v3467
        %v3540 = vunpack.c.l.b16 %v3468
        %v3541 = vunpack.c.l.b16 %v3469
        %v3542 = vunpack.c.l.b16 %v3470
        %v3543 = vunpack.c.l.b16 %v3471
        %v3544 = vunpack.c.l.b16 %v3472
        %v3545 = vpack.c.b16 %v3510, %v3509
        %v3546 = vpack.c.b16 %v3512, %v3511
        %v3547 = vpack.c.b16 %v3514, %v3513
        %v3548 = vpack.c.b16 %v3516, %v3515
        %v3549 = vpack.c.b16 %v3518, %v3517
        %v3550 = vpack.c.b16 %v3520, %v3519
        %v3551 = vpack.c.b16 %v3522, %v3521
        %v3552 = vpack.c.b16 %v3524, %v3523
        %v3553 = vpack.c.b16 %v3526, %v3525
        %v3554 = vpack.c.b16 %v3528, %v3527
        %v3555 = vpack.c.b16 %v3530, %v3529
        %v3556 = vpack.c.b16 %v3532, %v3531
        %v3557 = vpack.c.b16 %v3534, %v3533
        %v3558 = vpack.c.b16 %v3536, %v3535
        %v3559 = vpack.c.b16 %v3538, %v3537
        %v3560 = vpack.c.b16 %v3540, %v3539
        %v3561 = vpack.c.b16 %v3542, %v3541
        %v3562 = vpack.c.b16 %v3544, %v3543
        %v3582 = vsel %vm3194, %v3391, 0
        %v3585 = vsel %vm3194, %v3394, 0
        %v3588 = vsel %vm3194, %v3397, 0
        %v3591 = vsel %vm3194, %v3400, 0
        %v3594 = vsel %vm3194, %v3403, 0
        %v3597 = vsel %vm3194, %v3406, 0
        %v3600 = vsel %vm3194, %v3409, 0
        %v3603 = vsel %vm3194, %v3412, 0
        %v3606 = vsel %vm3194, %v3415, 0
        %v3609 = vsel %vm3194, %v3418, 0
        %v3612 = vsel %vm3194, %v3421, 0
        %v3615 = vsel %vm3194, %v3424, 0
        %v3618 = vsel %vm3194, %v3427, 0
        %v3621 = vsel %vm3194, %v3430, 0
        %v3624 = vsel %vm3194, %v3433, 0
        %v3627 = vsel %vm3194, %v3436, 0
        %3629 = vmatprep.subr.bf16.mxu0 0
        %3630 = vmatpush1.bf16.msra.mxu0 %v3545
        %3631 = vmatprep.subr.bf16.mxu0 0
        %3632 = vmatpush1.bf16.msra.mxu0 %v3546
        %3633 = vmatprep.subr.bf16.mxu0 0
        %3634 = vmatpush1.bf16.msra.mxu0 %v3547
        %3635 = vmatprep.subr.bf16.mxu0 0
        %3636 = vmatpush1.bf16.msra.mxu0 %v3548
        %3637 = vmatprep.subr.bf16.mxu0 0
        %3638 = vmatpush1.bf16.msra.mxu0 %v3549
        %3639 = vmatprep.subr.bf16.mxu0 0
        %3640 = vmatpush1.bf16.msra.mxu0 %v3550
        %3641 = vmatprep.subr.bf16.mxu0 0
        %3642 = vmatpush1.bf16.msra.mxu0 %v3551
        %3643 = vmatprep.subr.bf16.mxu0 0
        %3644 = vmatpush1.bf16.msra.mxu0 %v3552
        %3645 = vmatprep.subr.bf16.mxu0 0
        %3646 = vmatpush1.bf16.msra.mxu0 %v3553
        %3647 = vmatprep.subr.bf16.mxu0 0
        %3648 = vmatpush1.bf16.msra.mxu0 %v3554
        %3649 = vmatprep.subr.bf16.mxu0 0
        %3650 = vmatpush1.bf16.msra.mxu0 %v3555
        %3651 = vmatprep.subr.bf16.mxu0 0
        %3652 = vmatpush1.bf16.msra.mxu0 %v3556
        %3653 = vmatprep.subr.bf16.mxu0 0
        %3654 = vmatpush1.bf16.msra.mxu0 %v3557
        %3655 = vmatprep.subr.bf16.mxu0 0
        %3656 = vmatpush1.bf16.msra.mxu0 %v3558
        %3657 = vmatprep.subr.bf16.mxu0 0
        %3658 = vmatpush1.bf16.msra.mxu0 %v3559
        %3659 = vmatprep.subr.bf16.mxu0 0
        %3660 = vmatpush1.bf16.msra.mxu0 %v3560
        %3661 = vmatprep.mubr.bf16.mxu0 %v3390
        %3662 = vmatmul.mubr.bf16.gmra.mrb[0].mxu0 %v3389
        %v3663 = vpop.f32.mrb[0].mxu0
        %v3664 = vadd.f32 0.0, %v3663
        %v3665 = vpop.f32.mrb[0].mxu0
        %v3666 = vpop.f32.mrb[0].mxu0
        %v3667 = vadd.f32 0.0, %v3666
        %v3668 = vpop.f32.mrb[0].mxu0
        %3669 = vmatprep.mubr.bf16.mxu0 %v3393
        %3670 = vmatmul.mubr.bf16.gmra.mrb[0].mxu0 %v3392
        %v3671 = vpop.f32.mrb[0].mxu0
        %v3672 = vadd.f32 0.0, %v3671
        %v3673 = vpop.f32.mrb[0].mxu0
        %v3674 = vpop.f32.mrb[0].mxu0
        %v3675 = vadd.f32 0.0, %v3674
        %v3676 = vpop.f32.mrb[0].mxu0
        %3677 = vmatprep.mubr.bf16.mxu0 %v3396
        %3678 = vmatmul.mubr.bf16.gmra.mrb[0].mxu0 %v3395
        %v3679 = vpop.f32.mrb[0].mxu0
        %v3680 = vadd.f32 0.0, %v3679
        %v3681 = vpop.f32.mrb[0].mxu0
        %v3682 = vpop.f32.mrb[0].mxu0
        %v3683 = vadd.f32 0.0, %v3682
        %v3684 = vpop.f32.mrb[0].mxu0
        %3685 = vmatprep.mubr.bf16.mxu0 %v3399
        %3686 = vmatmul.mubr.bf16.gmra.mrb[0].mxu0 %v3398
        %v3687 = vpop.f32.mrb[0].mxu0
        %v3688 = vadd.f32 0.0, %v3687
        %v3689 = vpop.f32.mrb[0].mxu0
        %v3690 = vpop.f32.mrb[0].mxu0
        %v3691 = vadd.f32 0.0, %v3690
        %v3692 = vpop.f32.mrb[0].mxu0
        %3693 = vmatprep.mubr.bf16.mxu0 %v3402
        %3694 = vmatmul.mubr.bf16.gmra.mrb[0].mxu0 %v3401
        %v3695 = vpop.f32.mrb[0].mxu0
        %v3696 = vadd.f32 0.0, %v3695
        %v3697 = vpop.f32.mrb[0].mxu0
        %v3698 = vpop.f32.mrb[0].mxu0
        %v3699 = vadd.f32 0.0, %v3698
        %v3700 = vpop.f32.mrb[0].mxu0
        %3701 = vmatprep.mubr.bf16.mxu0 %v3405
        %3702 = vmatmul.mubr.bf16.gmra.mrb[0].mxu0 %v3404
        %v3703 = vpop.f32.mrb[0].mxu0
        %v3704 = vadd.f32 0.0, %v3703
        %v3705 = vpop.f32.mrb[0].mxu0
        %v3706 = vpop.f32.mrb[0].mxu0
        %v3707 = vadd.f32 0.0, %v3706
        %v3708 = vpop.f32.mrb[0].mxu0
        %3709 = vmatprep.mubr.bf16.mxu0 %v3408
        %3710 = vmatmul.mubr.bf16.gmra.mrb[0].mxu0 %v3407
        %v3711 = vpop.f32.mrb[0].mxu0
        %v3712 = vadd.f32 0.0, %v3711
        %v3713 = vpop.f32.mrb[0].mxu0
        %v3714 = vpop.f32.mrb[0].mxu0
        %v3715 = vadd.f32 0.0, %v3714
        %v3716 = vpop.f32.mrb[0].mxu0
        %3717 = vmatprep.mubr.bf16.mxu0 %v3411
        %3718 = vmatmul.mubr.bf16.gmra.mrb[0].mxu0 %v3410
        %v3719 = vpop.f32.mrb[0].mxu0
        %v3720 = vadd.f32 0.0, %v3719
        %v3721 = vpop.f32.mrb[0].mxu0
        %v3722 = vpop.f32.mrb[0].mxu0
        %v3723 = vadd.f32 0.0, %v3722
        %v3724 = vpop.f32.mrb[0].mxu0
        %3725 = vmatprep.mubr.bf16.mxu0 %v3414
        %3726 = vmatmul.mubr.bf16.gmra.mrb[0].mxu0 %v3413
        %v3727 = vpop.f32.mrb[0].mxu0
        %v3728 = vadd.f32 0.0, %v3727
        %v3729 = vpop.f32.mrb[0].mxu0
        %v3730 = vpop.f32.mrb[0].mxu0
        %v3731 = vadd.f32 0.0, %v3730
        %v3732 = vpop.f32.mrb[0].mxu0
        %3733 = vmatprep.mubr.bf16.mxu0 %v3417
        %3734 = vmatmul.mubr.bf16.gmra.mrb[0].mxu0 %v3416
        %v3735 = vpop.f32.mrb[0].mxu0
        %v3736 = vadd.f32 0.0, %v3735
        %v3737 = vpop.f32.mrb[0].mxu0
        %v3738 = vpop.f32.mrb[0].mxu0
        %v3739 = vadd.f32 0.0, %v3738
        %v3740 = vpop.f32.mrb[0].mxu0
        %3741 = vmatprep.mubr.bf16.mxu0 %v3420
        %3742 = vmatmul.mubr.bf16.gmra.mrb[0].mxu0 %v3419
        %v3743 = vpop.f32.mrb[0].mxu0
        %v3744 = vadd.f32 0.0, %v3743
        %v3745 = vpop.f32.mrb[0].mxu0
        %v3746 = vpop.f32.mrb[0].mxu0
        %v3747 = vadd.f32 0.0, %v3746
        %v3748 = vpop.f32.mrb[0].mxu0
        %3749 = vmatprep.mubr.bf16.mxu0 %v3423
        %3750 = vmatmul.mubr.bf16.gmra.mrb[0].mxu0 %v3422
        %v3751 = vpop.f32.mrb[0].mxu0
        %v3752 = vadd.f32 0.0, %v3751
        %v3753 = vpop.f32.mrb[0].mxu0
        %v3754 = vpop.f32.mrb[0].mxu0
        %v3755 = vadd.f32 0.0, %v3754
        %v3756 = vpop.f32.mrb[0].mxu0
        %3757 = vmatprep.mubr.bf16.mxu0 %v3426
        %3758 = vmatmul.mubr.bf16.gmra.mrb[0].mxu0 %v3425
        %v3759 = vpop.f32.mrb[0].mxu0
        %v3760 = vadd.f32 0.0, %v3759
        %v3761 = vpop.f32.mrb[0].mxu0
        %v3762 = vpop.f32.mrb[0].mxu0
        %v3763 = vadd.f32 0.0, %v3762
        %v3764 = vpop.f32.mrb[0].mxu0
        %3765 = vmatprep.mubr.bf16.mxu0 %v3429
        %3766 = vmatmul.mubr.bf16.gmra.mrb[0].mxu0 %v3428
        %v3767 = vpop.f32.mrb[0].mxu0
        %v3768 = vadd.f32 0.0, %v3767
        %v3769 = vpop.f32.mrb[0].mxu0
        %v3770 = vpop.f32.mrb[0].mxu0
        %v3771 = vadd.f32 0.0, %v3770
        %v3772 = vpop.f32.mrb[0].mxu0
        %3773 = vmatprep.mubr.bf16.mxu0 %v3432
        %3774 = vmatmul.mubr.bf16.gmra.mrb[0].mxu0 %v3431
        %v3775 = vpop.f32.mrb[0].mxu0
        %v3776 = vadd.f32 0.0, %v3775
        %v3777 = vpop.f32.mrb[0].mxu0
        %v3778 = vpop.f32.mrb[0].mxu0
        %v3779 = vadd.f32 0.0, %v3778
        %v3780 = vpop.f32.mrb[0].mxu0
        %3781 = vmatprep.mubr.bf16.mxu0 %v3435
        %3782 = vmatmul.mubr.bf16.gmra.mrb[0].mxu0 %v3434
        %v3783 = vpop.f32.mrb[0].mxu0
        %v3784 = vadd.f32 0.0, %v3783
        %v3785 = vpop.f32.mrb[0].mxu0
        %v3786 = vpop.f32.mrb[0].mxu0
        %v3787 = vadd.f32 0.0, %v3786
        %v3788 = vpop.f32.mrb[0].mxu0
        %3789 = vdwg.mxu0
        %3790 = vmatprep.subr.bf16.mxu0 0
        %3791 = vmatpush1.bf16.msra.mxu0 %v3561
        %3792 = vmatprep.subr.bf16.mxu0 0
        %3793 = vmatpush1.bf16.msra.mxu0 %v3562
        %3794 = vmatprep.subr.bf16.mxu0 0
        %3795 = vmatpush1.bf16.msra.mxu0 0
        %3796 = vmatprep.subr.bf16.mxu0 0
        %3797 = vmatpush1.bf16.msra.mxu0 0
        %3798 = vmatprep.subr.bf16.mxu0 0
        %3799 = vmatpush1.bf16.msra.mxu0 0
        %3800 = vmatprep.subr.bf16.mxu0 0
        %3801 = vmatpush1.bf16.msra.mxu0 0
        %3802 = vmatprep.subr.bf16.mxu0 0
        %3803 = vmatpush1.bf16.msra.mxu0 0
        %3804 = vmatprep.subr.bf16.mxu0 0
        %3805 = vmatpush1.bf16.msra.mxu0 0
        %3806 = vmatprep.subr.bf16.mxu0 0
        %3807 = vmatpush1.bf16.msra.mxu0 0
        %3808 = vmatprep.subr.bf16.mxu0 0
        %3809 = vmatpush1.bf16.msra.mxu0 0
        %3810 = vmatprep.subr.bf16.mxu0 0
        %3811 = vmatpush1.bf16.msra.mxu0 0
        %3812 = vmatprep.subr.bf16.mxu0 0
        %3813 = vmatpush1.bf16.msra.mxu0 0
        %3814 = vmatprep.subr.bf16.mxu0 0
        %3815 = vmatpush1.bf16.msra.mxu0 0
        %3816 = vmatprep.subr.bf16.mxu0 0
        %3817 = vmatpush1.bf16.msra.mxu0 0
        %3818 = vmatprep.subr.bf16.mxu0 0
        %3819 = vmatpush1.bf16.msra.mxu0 0
        %3820 = vmatprep.subr.bf16.mxu0 0
        %3821 = vmatpush1.bf16.msra.mxu0 0
        %3822 = vmatprep.mubr.bf16.mxu0 0
        %3823 = vmatmul.mubr.bf16.gmra.mrb[0].mxu0 %v3582
        %v3824 = vpop.f32.mrb[0].mxu0
        %v3825 = vadd.f32 %v3664, %v3824
        %v3826 = vpop.f32.mrb[0].mxu0
        %v3827 = vpop.f32.mrb[0].mxu0
        %v3828 = vadd.f32 %v3667, %v3827
        %v3829 = vpop.f32.mrb[0].mxu0
        %3830 = vmatprep.mubr.bf16.mxu0 0
        %3831 = vmatmul.mubr.bf16.gmra.mrb[0].mxu0 %v3585
        %v3832 = vpop.f32.mrb[0].mxu0
        %v3833 = vadd.f32 %v3672, %v3832
        %v3834 = vpop.f32.mrb[0].mxu0
        %v3835 = vpop.f32.mrb[0].mxu0
        %v3836 = vadd.f32 %v3675, %v3835
        %v3837 = vpop.f32.mrb[0].mxu0
        %3838 = vmatprep.mubr.bf16.mxu0 0
        %3839 = vmatmul.mubr.bf16.gmra.mrb[0].mxu0 %v3588
        %v3840 = vpop.f32.mrb[0].mxu0
        %v3841 = vadd.f32 %v3680, %v3840
        %v3842 = vpop.f32.mrb[0].mxu0
        %v3843 = vpop.f32.mrb[0].mxu0
        %v3844 = vadd.f32 %v3683, %v3843
        %v3845 = vpop.f32.mrb[0].mxu0
        %3846 = vmatprep.mubr.bf16.mxu0 0
        %3847 = vmatmul.mubr.bf16.gmra.mrb[0].mxu0 %v3591
        %v3848 = vpop.f32.mrb[0].mxu0
        %v3849 = vadd.f32 %v3688, %v3848
        %v3850 = vpop.f32.mrb[0].mxu0
        %v3851 = vpop.f32.mrb[0].mxu0
        %v3852 = vadd.f32 %v3691, %v3851
        %v3853 = vpop.f32.mrb[0].mxu0
        %3854 = vmatprep.mubr.bf16.mxu0 0
        %3855 = vmatmul.mubr.bf16.gmra.mrb[0].mxu0 %v3594
        %v3856 = vpop.f32.mrb[0].mxu0
        %v3857 = vadd.f32 %v3696, %v3856
        %v3858 = vpop.f32.mrb[0].mxu0
        %v3859 = vpop.f32.mrb[0].mxu0
        %v3860 = vadd.f32 %v3699, %v3859
        %v3861 = vpop.f32.mrb[0].mxu0
        %3862 = vmatprep.mubr.bf16.mxu0 0
        %3863 = vmatmul.mubr.bf16.gmra.mrb[0].mxu0 %v3597
        %v3864 = vpop.f32.mrb[0].mxu0
        %v3865 = vadd.f32 %v3704, %v3864
        %v3866 = vpop.f32.mrb[0].mxu0
        %v3867 = vpop.f32.mrb[0].mxu0
        %v3868 = vadd.f32 %v3707, %v3867
        %v3869 = vpop.f32.mrb[0].mxu0
        %3870 = vmatprep.mubr.bf16.mxu0 0
        %3871 = vmatmul.mubr.bf16.gmra.mrb[0].mxu0 %v3600
        %v3872 = vpop.f32.mrb[0].mxu0
        %v3873 = vadd.f32 %v3712, %v3872
        %v3874 = vpop.f32.mrb[0].mxu0
        %v3875 = vpop.f32.mrb[0].mxu0
        %v3876 = vadd.f32 %v3715, %v3875
        %v3877 = vpop.f32.mrb[0].mxu0
        %3878 = vmatprep.mubr.bf16.mxu0 0
        %3879 = vmatmul.mubr.bf16.gmra.mrb[0].mxu0 %v3603
        %v3880 = vpop.f32.mrb[0].mxu0
        %v3881 = vadd.f32 %v3720, %v3880
        %v3882 = vpop.f32.mrb[0].mxu0
        %v3883 = vpop.f32.mrb[0].mxu0
        %v3884 = vadd.f32 %v3723, %v3883
        %v3885 = vpop.f32.mrb[0].mxu0
        %3886 = vmatprep.mubr.bf16.mxu0 0
        %3887 = vmatmul.mubr.bf16.gmra.mrb[0].mxu0 %v3606
        %v3888 = vpop.f32.mrb[0].mxu0
        %v3889 = vadd.f32 %v3728, %v3888
        %v3890 = vpop.f32.mrb[0].mxu0
        %v3891 = vpop.f32.mrb[0].mxu0
        %v3892 = vadd.f32 %v3731, %v3891
        %v3893 = vpop.f32.mrb[0].mxu0
        %3894 = vmatprep.mubr.bf16.mxu0 0
        %3895 = vmatmul.mubr.bf16.gmra.mrb[0].mxu0 %v3609
        %v3896 = vpop.f32.mrb[0].mxu0
        %v3897 = vadd.f32 %v3736, %v3896
        %v3898 = vpop.f32.mrb[0].mxu0
        %v3899 = vpop.f32.mrb[0].mxu0
        %v3900 = vadd.f32 %v3739, %v3899
        %v3901 = vpop.f32.mrb[0].mxu0
        %3902 = vmatprep.mubr.bf16.mxu0 0
        %3903 = vmatmul.mubr.bf16.gmra.mrb[0].mxu0 %v3612
        %v3904 = vpop.f32.mrb[0].mxu0
        %v3905 = vadd.f32 %v3744, %v3904
        %v3906 = vpop.f32.mrb[0].mxu0
        %v3907 = vpop.f32.mrb[0].mxu0
        %v3908 = vadd.f32 %v3747, %v3907
        %v3909 = vpop.f32.mrb[0].mxu0
        %3910 = vmatprep.mubr.bf16.mxu0 0
        %3911 = vmatmul.mubr.bf16.gmra.mrb[0].mxu0 %v3615
        %v3912 = vpop.f32.mrb[0].mxu0
        %v3913 = vadd.f32 %v3752, %v3912
        %v3914 = vpop.f32.mrb[0].mxu0
        %v3915 = vpop.f32.mrb[0].mxu0
        %v3916 = vadd.f32 %v3755, %v3915
        %v3917 = vpop.f32.mrb[0].mxu0
        %3918 = vmatprep.mubr.bf16.mxu0 0
        %3919 = vmatmul.mubr.bf16.gmra.mrb[0].mxu0 %v3618
        %v3920 = vpop.f32.mrb[0].mxu0
        %v3921 = vadd.f32 %v3760, %v3920
        %v3922 = vpop.f32.mrb[0].mxu0
        %v3923 = vpop.f32.mrb[0].mxu0
        %v3924 = vadd.f32 %v3763, %v3923
        %v3925 = vpop.f32.mrb[0].mxu0
        %3926 = vmatprep.mubr.bf16.mxu0 0
        %3927 = vmatmul.mubr.bf16.gmra.mrb[0].mxu0 %v3621
        %v3928 = vpop.f32.mrb[0].mxu0
        %v3929 = vadd.f32 %v3768, %v3928
        %v3930 = vpop.f32.mrb[0].mxu0
        %v3931 = vpop.f32.mrb[0].mxu0
        %v3932 = vadd.f32 %v3771, %v3931
        %v3933 = vpop.f32.mrb[0].mxu0
        %3934 = vmatprep.mubr.bf16.mxu0 0
        %3935 = vmatmul.mubr.bf16.gmra.mrb[0].mxu0 %v3624
        %v3936 = vpop.f32.mrb[0].mxu0
        %v3937 = vadd.f32 %v3776, %v3936
        %v3938 = vpop.f32.mrb[0].mxu0
        %v3939 = vpop.f32.mrb[0].mxu0
        %v3940 = vadd.f32 %v3779, %v3939
        %v3941 = vpop.f32.mrb[0].mxu0
        %3942 = vmatprep.mubr.bf16.mxu0 0
        %3943 = vmatmul.mubr.bf16.gmra.mrb[0].mxu0 %v3627
        %v3944 = vpop.f32.mrb[0].mxu0
        %v3945 = vadd.f32 %v3784, %v3944
        %v3946 = vpop.f32.mrb[0].mxu0
        %v3947 = vpop.f32.mrb[0].mxu0
        %v3948 = vadd.f32 %v3787, %v3947
        %v3949 = vpop.f32.mrb[0].mxu0
        %3950 = vdwg.mxu0
        %v3951 = vsel %vm3194, %v3825, 0.0
        %v3952 = vsel %vm3194, %v3828, 0.0
        %v3953 = vadd.f32 %v3951, %v3952
        %v3954 = vsel %vm3194, %v3833, 0.0
        %v3955 = vadd.f32 %v3953, %v3954
        %v3956 = vsel %vm3194, %v3836, 0.0
        %v3957 = vadd.f32 %v3955, %v3956
        %v3958 = vsel %vm3194, %v3841, 0.0
        %v3959 = vadd.f32 %v3957, %v3958
        %v3960 = vsel %vm3194, %v3844, 0.0
        %v3961 = vadd.f32 %v3959, %v3960
        %v3962 = vsel %vm3194, %v3849, 0.0
        %v3963 = vadd.f32 %v3961, %v3962
        %v3964 = vsel %vm3194, %v3852, 0.0
        %v3965 = vadd.f32 %v3963, %v3964
        %v3966 = vsel %vm3194, %v3857, 0.0
        %v3967 = vadd.f32 %v3965, %v3966
        %v3968 = vsel %vm3194, %v3860, 0.0
        %v3969 = vadd.f32 %v3967, %v3968
        %v3970 = vsel %vm3194, %v3865, 0.0
        %v3971 = vadd.f32 %v3969, %v3970
        %v3972 = vsel %vm3194, %v3868, 0.0
        %v3973 = vadd.f32 %v3971, %v3972
        %v3974 = vsel %vm3194, %v3873, 0.0
        %v3975 = vadd.f32 %v3973, %v3974
        %v3976 = vsel %vm3194, %v3876, 0.0
        %v3977 = vadd.f32 %v3975, %v3976
        %v3978 = vsel %vm3194, %v3881, 0.0
        %v3979 = vadd.f32 %v3977, %v3978
        %v3980 = vsel %vm3194, %v3884, 0.0
        %v3981 = vadd.f32 %v3979, %v3980
        %v3982 = vsel %vm3194, %v3889, 0.0
        %v3983 = vadd.f32 %v3981, %v3982
        %v3984 = vsel %vm3194, %v3892, 0.0
        %v3985 = vadd.f32 %v3983, %v3984
        %v3986 = vsel %vm3194, %v3897, 0.0
        %v3987 = vadd.f32 %v3985, %v3986
        %v3988 = vsel %vm3194, %v3900, 0.0
        %v3989 = vadd.f32 %v3987, %v3988
        %v3990 = vsel %vm3194, %v3905, 0.0
        %v3991 = vadd.f32 %v3989, %v3990
        %v3992 = vsel %vm3194, %v3908, 0.0
        %v3993 = vadd.f32 %v3991, %v3992
        %v3994 = vsel %vm3194, %v3913, 0.0
        %v3995 = vadd.f32 %v3993, %v3994
        %v3996 = vsel %vm3194, %v3916, 0.0
        %v3997 = vadd.f32 %v3995, %v3996
        %v3998 = vsel %vm3194, %v3921, 0.0
        %v3999 = vadd.f32 %v3997, %v3998
        %v4000 = vsel %vm3194, %v3924, 0.0
        %v4001 = vadd.f32 %v3999, %v4000
        %v4002 = vsel %vm3194, %v3929, 0.0
        %v4003 = vadd.f32 %v4001, %v4002
        %v4004 = vsel %vm3194, %v3932, 0.0
        %v4005 = vadd.f32 %v4003, %v4004
        %v4006 = vsel %vm3194, %v3937, 0.0
        %v4007 = vadd.f32 %v4005, %v4006
        %v4008 = vsel %vm3194, %v3940, 0.0
        %v4009 = vadd.f32 %v4007, %v4008
        %v4010 = vsel %vm3194, %v3945, 0.0
        %v4011 = vadd.f32 %v4009, %v4010
        %v4012 = vsel %vm3194, %v3948, 0.0
        %v4013 = vadd.f32 %v4011, %v4012
        %v4014 = vrot.slane %v4013, 4
        %v4015 = vadd.f32 %v4013, %v4014
        %v4016 = vrot.slane %v4015, 2
        %v4017 = vadd.f32 %v4015, %v4016
        %v4018 = vrot.slane %v4017, 1
        %v4019 = vadd.f32 %v4017, %v4018
        %v4020 = vrcp.pop 256.0
        %v4021 = vmul.f32 %v4019, %v4020
        %v4022 = vsub.f32 %v3825, %v4021
        %v4023 = vsub.f32 %v3828, %v4021
        %v4024 = vsub.f32 %v3833, %v4021
        %v4025 = vsub.f32 %v3836, %v4021
        %v4026 = vsub.f32 %v3841, %v4021
        %v4027 = vsub.f32 %v3844, %v4021
        %v4028 = vsub.f32 %v3849, %v4021
        %v4029 = vsub.f32 %v3852, %v4021
        %v4030 = vsub.f32 %v3857, %v4021
        %v4031 = vsub.f32 %v3860, %v4021
        %v4032 = vsub.f32 %v3865, %v4021
        %v4033 = vsub.f32 %v3868, %v4021
        %v4034 = vsub.f32 %v3873, %v4021
        %v4035 = vsub.f32 %v3876, %v4021
        %v4036 = vsub.f32 %v3881, %v4021
        %v4037 = vsub.f32 %v3884, %v4021
        %v4038 = vsub.f32 %v3889, %v4021
        %v4039 = vsub.f32 %v3892, %v4021
        %v4040 = vsub.f32 %v3897, %v4021
        %v4041 = vsub.f32 %v3900, %v4021
        %v4042 = vsub.f32 %v3905, %v4021
        %v4043 = vsub.f32 %v3908, %v4021
        %v4044 = vsub.f32 %v3913, %v4021
        %v4045 = vsub.f32 %v3916, %v4021
        %v4046 = vsub.f32 %v3921, %v4021
        %v4047 = vsub.f32 %v3924, %v4021
        %v4048 = vsub.f32 %v3929, %v4021
        %v4049 = vsub.f32 %v3932, %v4021
        %v4050 = vsub.f32 %v3937, %v4021
        %v4051 = vsub.f32 %v3940, %v4021
        %v4052 = vsub.f32 %v3945, %v4021
        %v4053 = vsub.f32 %v3948, %v4021
        %v4054 = vmul.f32 %v4022, %v4022
        %v4055 = vmul.f32 %v4023, %v4023
        %v4056 = vmul.f32 %v4024, %v4024
        %v4057 = vmul.f32 %v4025, %v4025
        %v4058 = vmul.f32 %v4026, %v4026
        %v4059 = vmul.f32 %v4027, %v4027
        %v4060 = vmul.f32 %v4028, %v4028
        %v4061 = vmul.f32 %v4029, %v4029
        %v4062 = vmul.f32 %v4030, %v4030
        %v4063 = vmul.f32 %v4031, %v4031
        %v4064 = vmul.f32 %v4032, %v4032
        %v4065 = vmul.f32 %v4033, %v4033
        %v4066 = vmul.f32 %v4034, %v4034
        %v4067 = vmul.f32 %v4035, %v4035
        %v4068 = vmul.f32 %v4036, %v4036
        %v4069 = vmul.f32 %v4037, %v4037
        %v4070 = vmul.f32 %v4038, %v4038
        %v4071 = vmul.f32 %v4039, %v4039
        %v4072 = vmul.f32 %v4040, %v4040
        %v4073 = vmul.f32 %v4041, %v4041
        %v4074 = vmul.f32 %v4042, %v4042
        %v4075 = vmul.f32 %v4043, %v4043
        %v4076 = vmul.f32 %v4044, %v4044
        %v4077 = vmul.f32 %v4045, %v4045
        %v4078 = vmul.f32 %v4046, %v4046
        %v4079 = vmul.f32 %v4047, %v4047
        %v4080 = vmul.f32 %v4048, %v4048
        %v4081 = vmul.f32 %v4049, %v4049
        %v4082 = vmul.f32 %v4050, %v4050
        %v4083 = vmul.f32 %v4051, %v4051
        %v4084 = vmul.f32 %v4052, %v4052
        %v4085 = vmul.f32 %v4053, %v4053
        %v4086 = vsel %vm3194, %v4054, 0.0
        %v4087 = vsel %vm3194, %v4055, 0.0
        %v4088 = vadd.f32 %v4086, %v4087
        %v4089 = vsel %vm3194, %v4056, 0.0
        %v4090 = vadd.f32 %v4088, %v4089
        %v4091 = vsel %vm3194, %v4057, 0.0
        %v4092 = vadd.f32 %v4090, %v4091
        %v4093 = vsel %vm3194, %v4058, 0.0
        %v4094 = vadd.f32 %v4092, %v4093
        %v4095 = vsel %vm3194, %v4059, 0.0
        %v4096 = vadd.f32 %v4094, %v4095
        %v4097 = vsel %vm3194, %v4060, 0.0
        %v4098 = vadd.f32 %v4096, %v4097
        %v4099 = vsel %vm3194, %v4061, 0.0
        %v4100 = vadd.f32 %v4098, %v4099
        %v4101 = vsel %vm3194, %v4062, 0.0
        %v4102 = vadd.f32 %v4100, %v4101
        %v4103 = vsel %vm3194, %v4063, 0.0
        %v4104 = vadd.f32 %v4102, %v4103
        %v4105 = vsel %vm3194, %v4064, 0.0
        %v4106 = vadd.f32 %v4104, %v4105
        %v4107 = vsel %vm3194, %v4065, 0.0
        %v4108 = vadd.f32 %v4106, %v4107
        %v4109 = vsel %vm3194, %v4066, 0.0
        %v4110 = vadd.f32 %v4108, %v4109
        %v4111 = vsel %vm3194, %v4067, 0.0
        %v4112 = vadd.f32 %v4110, %v4111
        %v4113 = vsel %vm3194, %v4068, 0.0
        %v4114 = vadd.f32 %v4112, %v4113
        %v4115 = vsel %vm3194, %v4069, 0.0
        %v4116 = vadd.f32 %v4114, %v4115
        %v4117 = vsel %vm3194, %v4070, 0.0
        %v4118 = vadd.f32 %v4116, %v4117
        %v4119 = vsel %vm3194, %v4071, 0.0
        %v4120 = vadd.f32 %v4118, %v4119
        %v4121 = vsel %vm3194, %v4072, 0.0
        %v4122 = vadd.f32 %v4120, %v4121
        %v4123 = vsel %vm3194, %v4073, 0.0
        %v4124 = vadd.f32 %v4122, %v4123
        %v4125 = vsel %vm3194, %v4074, 0.0
        %v4126 = vadd.f32 %v4124, %v4125
        %v4127 = vsel %vm3194, %v4075, 0.0
        %v4128 = vadd.f32 %v4126, %v4127
        %v4129 = vsel %vm3194, %v4076, 0.0
        %v4130 = vadd.f32 %v4128, %v4129
        %v4131 = vsel %vm3194, %v4077, 0.0
        %v4132 = vadd.f32 %v4130, %v4131
        %v4133 = vsel %vm3194, %v4078, 0.0
        %v4134 = vadd.f32 %v4132, %v4133
        %v4135 = vsel %vm3194, %v4079, 0.0
        %v4136 = vadd.f32 %v4134, %v4135
        %v4137 = vsel %vm3194, %v4080, 0.0
        %v4138 = vadd.f32 %v4136, %v4137
        %v4139 = vsel %vm3194, %v4081, 0.0
        %v4140 = vadd.f32 %v4138, %v4139
        %v4141 = vsel %vm3194, %v4082, 0.0
        %v4142 = vadd.f32 %v4140, %v4141
        %v4143 = vsel %vm3194, %v4083, 0.0
        %v4144 = vadd.f32 %v4142, %v4143
        %v4145 = vsel %vm3194, %v4084, 0.0
        %v4146 = vadd.f32 %v4144, %v4145
        %v4147 = vsel %vm3194, %v4085, 0.0
        %v4148 = vadd.f32 %v4146, %v4147
        %v4149 = vrot.slane %v4148, 4
        %v4150 = vadd.f32 %v4148, %v4149
        %v4151 = vrot.slane %v4150, 2
        %v4152 = vadd.f32 %v4150, %v4151
        %v4153 = vrot.slane %v4152, 1
        %v4154 = vadd.f32 %v4152, %v4153
        %v4155 = vmul.f32 %v4154, %v4020
        %v4156 = vadd.f32 %v4155, 1e-05
        %v4157 = vrsqrt.pop %v4156
        %v4158 = vmul.f32 %v4022, %v4157
        %v4159 = vmul.f32 %v4023, %v4157
        %v4160 = vmul.f32 %v4024, %v4157
        %v4161 = vmul.f32 %v4025, %v4157
        %v4162 = vmul.f32 %v4026, %v4157
        %v4163 = vmul.f32 %v4027, %v4157
        %v4164 = vmul.f32 %v4028, %v4157
        %v4165 = vmul.f32 %v4029, %v4157
        %v4166 = vmul.f32 %v4030, %v4157
        %v4167 = vmul.f32 %v4031, %v4157
        %v4168 = vmul.f32 %v4032, %v4157
        %v4169 = vmul.f32 %v4033, %v4157
        %v4170 = vmul.f32 %v4034, %v4157
        %v4171 = vmul.f32 %v4035, %v4157
        %v4172 = vmul.f32 %v4036, %v4157
        %v4173 = vmul.f32 %v4037, %v4157
        %v4174 = vmul.f32 %v4038, %v4157
        %v4175 = vmul.f32 %v4039, %v4157
        %v4176 = vmul.f32 %v4040, %v4157
        %v4177 = vmul.f32 %v4041, %v4157
        %v4178 = vmul.f32 %v4042, %v4157
        %v4179 = vmul.f32 %v4043, %v4157
        %v4180 = vmul.f32 %v4044, %v4157
        %v4181 = vmul.f32 %v4045, %v4157
        %v4182 = vmul.f32 %v4046, %v4157
        %v4183 = vmul.f32 %v4047, %v4157
        %v4184 = vmul.f32 %v4048, %v4157
        %v4185 = vmul.f32 %v4049, %v4157
        %v4186 = vmul.f32 %v4050, %v4157
        %v4187 = vmul.f32 %v4051, %v4157
        %v4188 = vmul.f32 %v4052, %v4157
        %v4189 = vmul.f32 %v4053, %v4157
        %vm4190 = vcmp.ge.f32.partialorder %v4158, 0.0
        %vm4191 = vcmp.ge.f32.partialorder %v4159, 0.0
        %vm4192 = vcmp.ge.f32.partialorder %v4160, 0.0
        %vm4193 = vcmp.ge.f32.partialorder %v4161, 0.0
        %vm4194 = vcmp.ge.f32.partialorder %v4162, 0.0
        %vm4195 = vcmp.ge.f32.partialorder %v4163, 0.0
        %vm4196 = vcmp.ge.f32.partialorder %v4164, 0.0
        %vm4197 = vcmp.ge.f32.partialorder %v4165, 0.0
        %vm4198 = vcmp.ge.f32.partialorder %v4166, 0.0
        %vm4199 = vcmp.ge.f32.partialorder %v4167, 0.0
        %vm4200 = vcmp.ge.f32.partialorder %v4168, 0.0
        %vm4201 = vcmp.ge.f32.partialorder %v4169, 0.0
        %vm4202 = vcmp.ge.f32.partialorder %v4170, 0.0
        %vm4203 = vcmp.ge.f32.partialorder %v4171, 0.0
        %vm4204 = vcmp.ge.f32.partialorder %v4172, 0.0
        %vm4205 = vcmp.ge.f32.partialorder %v4173, 0.0
        %vm4206 = vcmp.ge.f32.partialorder %v4174, 0.0
        %vm4207 = vcmp.ge.f32.partialorder %v4175, 0.0
        %vm4208 = vcmp.ge.f32.partialorder %v4176, 0.0
        %vm4209 = vcmp.ge.f32.partialorder %v4177, 0.0
        %vm4210 = vcmp.ge.f32.partialorder %v4178, 0.0
        %vm4211 = vcmp.ge.f32.partialorder %v4179, 0.0
        %vm4212 = vcmp.ge.f32.partialorder %v4180, 0.0
        %vm4213 = vcmp.ge.f32.partialorder %v4181, 0.0
        %vm4214 = vcmp.ge.f32.partialorder %v4182, 0.0
        %vm4215 = vcmp.ge.f32.partialorder %v4183, 0.0
        %vm4216 = vcmp.ge.f32.partialorder %v4184, 0.0
        %vm4217 = vcmp.ge.f32.partialorder %v4185, 0.0
        %vm4218 = vcmp.ge.f32.partialorder %v4186, 0.0
        %vm4219 = vcmp.ge.f32.partialorder %v4187, 0.0
        %vm4220 = vcmp.ge.f32.partialorder %v4188, 0.0
        %vm4221 = vcmp.ge.f32.partialorder %v4189, 0.0
        %v4222 = vmul.f32 %v4158, 0.01
        %v4223 = vmul.f32 %v4159, 0.01
        %v4224 = vmul.f32 %v4160, 0.01
        %v4225 = vmul.f32 %v4161, 0.01
        %v4226 = vmul.f32 %v4162, 0.01
        %v4227 = vmul.f32 %v4163, 0.01
        %v4228 = vmul.f32 %v4164, 0.01
        %v4229 = vmul.f32 %v4165, 0.01
        %v4230 = vmul.f32 %v4166, 0.01
        %v4231 = vmul.f32 %v4167, 0.01
        %v4232 = vmul.f32 %v4168, 0.01
        %v4233 = vmul.f32 %v4169, 0.01
        %v4234 = vmul.f32 %v4170, 0.01
        %v4235 = vmul.f32 %v4171, 0.01
        %v4236 = vmul.f32 %v4172, 0.01
        %v4237 = vmul.f32 %v4173, 0.01
        %v4238 = vmul.f32 %v4174, 0.01
        %v4239 = vmul.f32 %v4175, 0.01
        %v4240 = vmul.f32 %v4176, 0.01
        %v4241 = vmul.f32 %v4177, 0.01
        %v4242 = vmul.f32 %v4178, 0.01
        %v4243 = vmul.f32 %v4179, 0.01
        %v4244 = vmul.f32 %v4180, 0.01
        %v4245 = vmul.f32 %v4181, 0.01
        %v4246 = vmul.f32 %v4182, 0.01
        %v4247 = vmul.f32 %v4183, 0.01
        %v4248 = vmul.f32 %v4184, 0.01
        %v4249 = vmul.f32 %v4185, 0.01
        %v4250 = vmul.f32 %v4186, 0.01
        %v4251 = vmul.f32 %v4187, 0.01
        %v4252 = vmul.f32 %v4188, 0.01
        %v4253 = vmul.f32 %v4189, 0.01
        %v4254 = vsel %vm4190, %v4158, %v4222
        %v4255 = vsel %vm4191, %v4159, %v4223
        %v4256 = vsel %vm4192, %v4160, %v4224
        %v4257 = vsel %vm4193, %v4161, %v4225
        %v4258 = vsel %vm4194, %v4162, %v4226
        %v4259 = vsel %vm4195, %v4163, %v4227
        %v4260 = vsel %vm4196, %v4164, %v4228
        %v4261 = vsel %vm4197, %v4165, %v4229
        %v4262 = vsel %vm4198, %v4166, %v4230
        %v4263 = vsel %vm4199, %v4167, %v4231
        %v4264 = vsel %vm4200, %v4168, %v4232
        %v4265 = vsel %vm4201, %v4169, %v4233
        %v4266 = vsel %vm4202, %v4170, %v4234
        %v4267 = vsel %vm4203, %v4171, %v4235
        %v4268 = vsel %vm4204, %v4172, %v4236
        %v4269 = vsel %vm4205, %v4173, %v4237
        %v4270 = vsel %vm4206, %v4174, %v4238
        %v4271 = vsel %vm4207, %v4175, %v4239
        %v4272 = vsel %vm4208, %v4176, %v4240
        %v4273 = vsel %vm4209, %v4177, %v4241
        %v4274 = vsel %vm4210, %v4178, %v4242
        %v4275 = vsel %vm4211, %v4179, %v4243
        %v4276 = vsel %vm4212, %v4180, %v4244
        %v4277 = vsel %vm4213, %v4181, %v4245
        %v4278 = vsel %vm4214, %v4182, %v4246
        %v4279 = vsel %vm4215, %v4183, %v4247
        %v4280 = vsel %vm4216, %v4184, %v4248
        %v4281 = vsel %vm4217, %v4185, %v4249
        %v4282 = vsel %vm4218, %v4186, %v4250
        %v4283 = vsel %vm4219, %v4187, %v4251
        %v4284 = vsel %vm4220, %v4188, %v4252
        %v4285 = vsel %vm4221, %v4189, %v4253
        %v4286 = vrot.slane %v4254, 7
        %v4287 = vrot.slane %v4255, 7
        %v4288 = vrot.slane %v4256, 7
        %v4289 = vrot.slane %v4257, 7
        %v4290 = vrot.slane %v4258, 7
        %v4291 = vrot.slane %v4259, 7
        %v4292 = vrot.slane %v4260, 7
        %v4293 = vrot.slane %v4261, 7
        %v4294 = vrot.slane %v4262, 7
        %v4295 = vrot.slane %v4263, 7
        %v4296 = vrot.slane %v4264, 7
        %v4297 = vrot.slane %v4265, 7
        %v4298 = vrot.slane %v4266, 7
        %v4299 = vrot.slane %v4267, 7
        %v4300 = vrot.slane %v4268, 7
        %v4301 = vrot.slane %v4269, 7
        %v4302 = vrot.slane %v4270, 7
        %v4303 = vrot.slane %v4271, 7
        %v4304 = vrot.slane %v4272, 7
        %v4305 = vrot.slane %v4273, 7
        %v4306 = vrot.slane %v4274, 7
        %v4307 = vrot.slane %v4275, 7
        %v4308 = vrot.slane %v4276, 7
        %v4309 = vrot.slane %v4277, 7
        %v4310 = vrot.slane %v4278, 7
        %v4311 = vrot.slane %v4279, 7
        %v4312 = vrot.slane %v4280, 7
        %v4313 = vrot.slane %v4281, 7
        %v4314 = vrot.slane %v4282, 7
        %v4315 = vrot.slane %v4283, 7
        %v4316 = vrot.slane %v4284, 7
        %v4317 = vrot.slane %v4285, 7
        %v4318 = vsel %vm380, %v4316, %v4317
        %v4319 = vsel %vm380, %v4315, %v4316
        %v4320 = vsel %vm380, %v4314, %v4315
        %v4321 = vsel %vm380, %v4313, %v4314
        %v4322 = vsel %vm380, %v4312, %v4313
        %v4323 = vsel %vm380, %v4311, %v4312
        %v4324 = vsel %vm380, %v4310, %v4311
        %v4325 = vsel %vm380, %v4309, %v4310
        %v4326 = vsel %vm380, %v4308, %v4309
        %v4327 = vsel %vm380, %v4307, %v4308
        %v4328 = vsel %vm380, %v4306, %v4307
        %v4329 = vsel %vm380, %v4305, %v4306
        %v4330 = vsel %vm380, %v4304, %v4305
        %v4331 = vsel %vm380, %v4303, %v4304
        %v4332 = vsel %vm380, %v4302, %v4303
        %v4333 = vsel %vm380, %v4301, %v4302
        %v4334 = vsel %vm380, %v4300, %v4301
        %v4335 = vsel %vm380, %v4299, %v4300
        %v4336 = vsel %vm380, %v4298, %v4299
        %v4337 = vsel %vm380, %v4297, %v4298
        %v4338 = vsel %vm380, %v4296, %v4297
        %v4339 = vsel %vm380, %v4295, %v4296
        %v4340 = vsel %vm380, %v4294, %v4295
        %v4341 = vsel %vm380, %v4293, %v4294
        %v4342 = vsel %vm380, %v4292, %v4293
        %v4343 = vsel %vm380, %v4291, %v4292
        %v4344 = vsel %vm380, %v4290, %v4291
        %v4345 = vsel %vm380, %v4289, %v4290
        %v4346 = vsel %vm380, %v4288, %v4289
        %v4347 = vsel %vm380, %v4287, %v4288
        %v4348 = vsel %vm380, %v4286, %v4287
        %v4349 = vsel %vm380, %v4317, %v4286
        %v4350 = vsel %vm733, %v4319, 0.0
        %v4351 = vsel %vm734, %v4318, 0.0
        %v4352 = vsel %vm735, %v4349, 0.0
        %v4353 = vsel %vm736, %v4348, 0.0
        %v4354 = vsel %vm737, %v4347, 0.0
        %v4355 = vsel %vm738, %v4346, 0.0
        %v4356 = vsel %vm739, %v4345, 0.0
        %v4357 = vsel %vm740, %v4344, 0.0
        %v4358 = vsel %vm741, %v4343, 0.0
        %v4359 = vsel %vm742, %v4342, 0.0
        %v4360 = vsel %vm743, %v4341, 0.0
        %v4361 = vsel %vm744, %v4340, 0.0
        %v4362 = vsel %vm745, %v4339, 0.0
        %v4363 = vsel %vm746, %v4338, 0.0
        %v4364 = vsel %vm747, %v4337, 0.0
        %v4365 = vsel %vm748, %v4336, 0.0
        %v4366 = vsel %vm749, %v4335, 0.0
        %v4367 = vsel %vm750, %v4334, 0.0
        %v4368 = vsel %vm751, %v4333, 0.0
        %v4369 = vsel %vm752, %v4332, 0.0
        %v4370 = vsel %vm753, %v4331, 0.0
        %v4371 = vsel %vm754, %v4330, 0.0
        %v4372 = vsel %vm755, %v4329, 0.0
        %v4373 = vsel %vm756, %v4328, 0.0
        %v4374 = vsel %vm757, %v4327, 0.0
        %v4375 = vsel %vm758, %v4326, 0.0
        %v4376 = vsel %vm759, %v4325, 0.0
        %v4377 = vsel %vm760, %v4324, 0.0
        %v4378 = vsel %vm761, %v4323, 0.0
        %v4379 = vsel %vm762, %v4322, 0.0
        %v4380 = vsel %vm763, %v4321, 0.0
        %v4381 = vsel %vm764, %v4320, 0.0
        %v4382 = vsel %vm829, %v4284, 0.0
        %v4383 = vsel %vm830, %v4285, 0.0
        %v4384 = vsel %vm831, %v4254, 0.0
        %v4385 = vsel %vm832, %v4255, 0.0
        %v4386 = vsel %vm833, %v4256, 0.0
        %v4387 = vsel %vm834, %v4257, 0.0
        %v4388 = vsel %vm835, %v4258, 0.0
        %v4389 = vsel %vm836, %v4259, 0.0
        %v4390 = vsel %vm837, %v4260, 0.0
        %v4391 = vsel %vm838, %v4261, 0.0
        %v4392 = vsel %vm839, %v4262, 0.0
        %v4393 = vsel %vm840, %v4263, 0.0
        %v4394 = vsel %vm841, %v4264, 0.0
        %v4395 = vsel %vm842, %v4265, 0.0
        %v4396 = vsel %vm843, %v4266, 0.0
        %v4397 = vsel %vm844, %v4267, 0.0
        %v4398 = vsel %vm845, %v4268, 0.0
        %v4399 = vsel %vm846, %v4269, 0.0
        %v4400 = vsel %vm847, %v4270, 0.0
        %v4401 = vsel %vm848, %v4271, 0.0
        %v4402 = vsel %vm849, %v4272, 0.0
        %v4403 = vsel %vm850, %v4273, 0.0
        %v4404 = vsel %vm851, %v4274, 0.0
        %v4405 = vsel %vm852, %v4275, 0.0
        %v4406 = vsel %vm853, %v4276, 0.0
        %v4407 = vsel %vm854, %v4277, 0.0
        %v4408 = vsel %vm855, %v4278, 0.0
        %v4409 = vsel %vm856, %v4279, 0.0
        %v4410 = vsel %vm857, %v4280, 0.0
        %v4411 = vsel %vm858, %v4281, 0.0
        %v4412 = vsel %vm859, %v4282, 0.0
        %v4413 = vsel %vm860, %v4283, 0.0
        %v4414 = vrot.slane %v4254, 1
        %v4415 = vrot.slane %v4255, 1
        %v4416 = vrot.slane %v4256, 1
        %v4417 = vrot.slane %v4257, 1
        %v4418 = vrot.slane %v4258, 1
        %v4419 = vrot.slane %v4259, 1
        %v4420 = vrot.slane %v4260, 1
        %v4421 = vrot.slane %v4261, 1
        %v4422 = vrot.slane %v4262, 1
        %v4423 = vrot.slane %v4263, 1
        %v4424 = vrot.slane %v4264, 1
        %v4425 = vrot.slane %v4265, 1
        %v4426 = vrot.slane %v4266, 1
        %v4427 = vrot.slane %v4267, 1
        %v4428 = vrot.slane %v4268, 1
        %v4429 = vrot.slane %v4269, 1
        %v4430 = vrot.slane %v4270, 1
        %v4431 = vrot.slane %v4271, 1
        %v4432 = vrot.slane %v4272, 1
        %v4433 = vrot.slane %v4273, 1
        %v4434 = vrot.slane %v4274, 1
        %v4435 = vrot.slane %v4275, 1
        %v4436 = vrot.slane %v4276, 1
        %v4437 = vrot.slane %v4277, 1
        %v4438 = vrot.slane %v4278, 1
        %v4439 = vrot.slane %v4279, 1
        %v4440 = vrot.slane %v4280, 1
        %v4441 = vrot.slane %v4281, 1
        %v4442 = vrot.slane %v4282, 1
        %v4443 = vrot.slane %v4283, 1
        %v4444 = vrot.slane %v4284, 1
        %v4445 = vrot.slane %v4285, 1
        %v4446 = vsel %vm925, %v4444, %v4445
        %v4447 = vsel %vm925, %v4443, %v4444
        %v4448 = vsel %vm925, %v4442, %v4443
        %v4449 = vsel %vm925, %v4441, %v4442
        %v4450 = vsel %vm925, %v4440, %v4441
        %v4451 = vsel %vm925, %v4439, %v4440
        %v4452 = vsel %vm925, %v4438, %v4439
        %v4453 = vsel %vm925, %v4437, %v4438
        %v4454 = vsel %vm925, %v4436, %v4437
        %v4455 = vsel %vm925, %v4435, %v4436
        %v4456 = vsel %vm925, %v4434, %v4435
        %v4457 = vsel %vm925, %v4433, %v4434
        %v4458 = vsel %vm925, %v4432, %v4433
        %v4459 = vsel %vm925, %v4431, %v4432
        %v4460 = vsel %vm925, %v4430, %v4431
        %v4461 = vsel %vm925, %v4429, %v4430
        %v4462 = vsel %vm925, %v4428, %v4429
        %v4463 = vsel %vm925, %v4427, %v4428
        %v4464 = vsel %vm925, %v4426, %v4427
        %v4465 = vsel %vm925, %v4425, %v4426
        %v4466 = vsel %vm925, %v4424, %v4425
        %v4467 = vsel %vm925, %v4423, %v4424
        %v4468 = vsel %vm925, %v4422, %v4423
        %v4469 = vsel %vm925, %v4421, %v4422
        %v4470 = vsel %vm925, %v4420, %v4421
        %v4471 = vsel %vm925, %v4419, %v4420
        %v4472 = vsel %vm925, %v4418, %v4419
        %v4473 = vsel %vm925, %v4417, %v4418
        %v4474 = vsel %vm925, %v4416, %v4417
        %v4475 = vsel %vm925, %v4415, %v4416
        %v4476 = vsel %vm925, %v4414, %v4415
        %v4477 = vsel %vm925, %v4445, %v4414
        %v4478 = vsel %vm1150, %v4446, 0.0
        %v4479 = vsel %vm1151, %v4477, 0.0
        %v4480 = vsel %vm1152, %v4476, 0.0
        %v4481 = vsel %vm1153, %v4475, 0.0
        %v4482 = vsel %vm1154, %v4474, 0.0
        %v4483 = vsel %vm1155, %v4473, 0.0
        %v4484 = vsel %vm1156, %v4472, 0.0
        %v4485 = vsel %vm1157, %v4471, 0.0
        %v4486 = vsel %vm1158, %v4470, 0.0
        %v4487 = vsel %vm1159, %v4469, 0.0
        %v4488 = vsel %vm1160, %v4468, 0.0
        %v4489 = vsel %vm1161, %v4467, 0.0
        %v4490 = vsel %vm1162, %v4466, 0.0
        %v4491 = vsel %vm1163, %v4465, 0.0
        %v4492 = vsel %vm1164, %v4464, 0.0
        %v4493 = vsel %vm1165, %v4463, 0.0
        %v4494 = vsel %vm1166, %v4462, 0.0
        %v4495 = vsel %vm1167, %v4461, 0.0
        %v4496 = vsel %vm1168, %v4460, 0.0
        %v4497 = vsel %vm1169, %v4459, 0.0
        %v4498 = vsel %vm1170, %v4458, 0.0
        %v4499 = vsel %vm1171, %v4457, 0.0
        %v4500 = vsel %vm1172, %v4456, 0.0
        %v4501 = vsel %vm1173, %v4455, 0.0
        %v4502 = vsel %vm1174, %v4454, 0.0
        %v4503 = vsel %vm1175, %v4453, 0.0
        %v4504 = vsel %vm1176, %v4452, 0.0
        %v4505 = vsel %vm1177, %v4451, 0.0
        %v4506 = vsel %vm1178, %v4450, 0.0
        %v4507 = vsel %vm1179, %v4449, 0.0
        %v4508 = vsel %vm1180, %v4448, 0.0
        %v4509 = vsel %vm1181, %v4447, 0.0
        %v4510 = vsel %vm1470, %v4349, 0.0
        %v4511 = vsel %vm1471, %v4348, 0.0
        %v4512 = vsel %vm1472, %v4347, 0.0
        %v4513 = vsel %vm1473, %v4346, 0.0
        %v4514 = vsel %vm1474, %v4345, 0.0
        %v4515 = vsel %vm1475, %v4344, 0.0
        %v4516 = vsel %vm1476, %v4343, 0.0
        %v4517 = vsel %vm1477, %v4342, 0.0
        %v4518 = vsel %vm1478, %v4341, 0.0
        %v4519 = vsel %vm1479, %v4340, 0.0
        %v4520 = vsel %vm1480, %v4339, 0.0
        %v4521 = vsel %vm1481, %v4338, 0.0
        %v4522 = vsel %vm1482, %v4337, 0.0
        %v4523 = vsel %vm1483, %v4336, 0.0
        %v4524 = vsel %vm1484, %v4335, 0.0
        %v4525 = vsel %vm1485, %v4334, 0.0
        %v4526 = vsel %vm1486, %v4333, 0.0
        %v4527 = vsel %vm1487, %v4332, 0.0
        %v4528 = vsel %vm1488, %v4331, 0.0
        %v4529 = vsel %vm1489, %v4330, 0.0
        %v4530 = vsel %vm1490, %v4329, 0.0
        %v4531 = vsel %vm1491, %v4328, 0.0
        %v4532 = vsel %vm1492, %v4327, 0.0
        %v4533 = vsel %vm1493, %v4326, 0.0
        %v4534 = vsel %vm1494, %v4325, 0.0
        %v4535 = vsel %vm1495, %v4324, 0.0
        %v4536 = vsel %vm1496, %v4323, 0.0
        %v4537 = vsel %vm1497, %v4322, 0.0
        %v4538 = vsel %vm1498, %v4321, 0.0
        %v4539 = vsel %vm1499, %v4320, 0.0
        %v4540 = vsel %vm1500, %v4319, 0.0
        %v4541 = vsel %vm1501, %v4318, 0.0
        %v4542 = vsel %vm1694, %v4476, 0.0
        %v4543 = vsel %vm1695, %v4475, 0.0
        %v4544 = vsel %vm1696, %v4474, 0.0
        %v4545 = vsel %vm1697, %v4473, 0.0
        %v4546 = vsel %vm1698, %v4472, 0.0
        %v4547 = vsel %vm1699, %v4471, 0.0
        %v4548 = vsel %vm1700, %v4470, 0.0
        %v4549 = vsel %vm1701, %v4469, 0.0
        %v4550 = vsel %vm1702, %v4468, 0.0
        %v4551 = vsel %vm1703, %v4467, 0.0
        %v4552 = vsel %vm1704, %v4466, 0.0
        %v4553 = vsel %vm1705, %v4465, 0.0
        %v4554 = vsel %vm1706, %v4464, 0.0
        %v4555 = vsel %vm1707, %v4463, 0.0
        %v4556 = vsel %vm1708, %v4462, 0.0
        %v4557 = vsel %vm1709, %v4461, 0.0
        %v4558 = vsel %vm1710, %v4460, 0.0
        %v4559 = vsel %vm1711, %v4459, 0.0
        %v4560 = vsel %vm1712, %v4458, 0.0
        %v4561 = vsel %vm1713, %v4457, 0.0
        %v4562 = vsel %vm1714, %v4456, 0.0
        %v4563 = vsel %vm1715, %v4455, 0.0
        %v4564 = vsel %vm1716, %v4454, 0.0
        %v4565 = vsel %vm1717, %v4453, 0.0
        %v4566 = vsel %vm1718, %v4452, 0.0
        %v4567 = vsel %vm1719, %v4451, 0.0
        %v4568 = vsel %vm1720, %v4450, 0.0
        %v4569 = vsel %vm1721, %v4449, 0.0
        %v4570 = vsel %vm1722, %v4448, 0.0
        %v4571 = vsel %vm1723, %v4447, 0.0
        %v4572 = vsel %vm1724, %v4446, 0.0
        %v4573 = vsel %vm1725, %v4477, 0.0
        %v4574 = vsel %vm2042, %v4347, 0.0
        %v4575 = vsel %vm2043, %v4346, 0.0
        %v4576 = vsel %vm2044, %v4345, 0.0
        %v4577 = vsel %vm2045, %v4344, 0.0
        %v4578 = vsel %vm2046, %v4343, 0.0
        %v4579 = vsel %vm2047, %v4342, 0.0
        %v4580 = vsel %vm2048, %v4341, 0.0
        %v4581 = vsel %vm2049, %v4340, 0.0
        %v4582 = vsel %vm2050, %v4339, 0.0
        %v4583 = vsel %vm2051, %v4338, 0.0
        %v4584 = vsel %vm2052, %v4337, 0.0
        %v4585 = vsel %vm2053, %v4336, 0.0
        %v4586 = vsel %vm2054, %v4335, 0.0
        %v4587 = vsel %vm2055, %v4334, 0.0
        %v4588 = vsel %vm2056, %v4333, 0.0
        %v4589 = vsel %vm2057, %v4332, 0.0
        %v4590 = vsel %vm2058, %v4331, 0.0
        %v4591 = vsel %vm2059, %v4330, 0.0
        %v4592 = vsel %vm2060, %v4329, 0.0
        %v4593 = vsel %vm2061, %v4328, 0.0
        %v4594 = vsel %vm2062, %v4327, 0.0
        %v4595 = vsel %vm2063, %v4326, 0.0
        %v4596 = vsel %vm2064, %v4325, 0.0
        %v4597 = vsel %vm2065, %v4324, 0.0
        %v4598 = vsel %vm2066, %v4323, 0.0
        %v4599 = vsel %vm2067, %v4322, 0.0
        %v4600 = vsel %vm2068, %v4321, 0.0
        %v4601 = vsel %vm2069, %v4320, 0.0
        %v4602 = vsel %vm2070, %v4319, 0.0
        %v4603 = vsel %vm2071, %v4318, 0.0
        %v4604 = vsel %vm2072, %v4349, 0.0
        %v4605 = vsel %vm2073, %v4348, 0.0
        %v4606 = vsel %vm2138, %v4256, 0.0
        %v4607 = vsel %vm2139, %v4257, 0.0
        %v4608 = vsel %vm2140, %v4258, 0.0
        %v4609 = vsel %vm2141, %v4259, 0.0
        %v4610 = vsel %vm2142, %v4260, 0.0
        %v4611 = vsel %vm2143, %v4261, 0.0
        %v4612 = vsel %vm2144, %v4262, 0.0
        %v4613 = vsel %vm2145, %v4263, 0.0
        %v4614 = vsel %vm2146, %v4264, 0.0
        %v4615 = vsel %vm2147, %v4265, 0.0
        %v4616 = vsel %vm2148, %v4266, 0.0
        %v4617 = vsel %vm2149, %v4267, 0.0
        %v4618 = vsel %vm2150, %v4268, 0.0
        %v4619 = vsel %vm2151, %v4269, 0.0
        %v4620 = vsel %vm2152, %v4270, 0.0
        %v4621 = vsel %vm2153, %v4271, 0.0
        %v4622 = vsel %vm2154, %v4272, 0.0
        %v4623 = vsel %vm2155, %v4273, 0.0
        %v4624 = vsel %vm2156, %v4274, 0.0
        %v4625 = vsel %vm2157, %v4275, 0.0
        %v4626 = vsel %vm2158, %v4276, 0.0
        %v4627 = vsel %vm2159, %v4277, 0.0
        %v4628 = vsel %vm2160, %v4278, 0.0
        %v4629 = vsel %vm2161, %v4279, 0.0
        %v4630 = vsel %vm2162, %v4280, 0.0
        %v4631 = vsel %vm2163, %v4281, 0.0
        %v4632 = vsel %vm2164, %v4282, 0.0
        %v4633 = vsel %vm2165, %v4283, 0.0
        %v4634 = vsel %vm2166, %v4284, 0.0
        %v4635 = vsel %vm2167, %v4285, 0.0
        %v4636 = vsel %vm2168, %v4254, 0.0
        %v4637 = vsel %vm2169, %v4255, 0.0
        %v4638 = vsel %vm2362, %v4474, 0.0
        %v4639 = vsel %vm2363, %v4473, 0.0
        %v4640 = vsel %vm2364, %v4472, 0.0
        %v4641 = vsel %vm2365, %v4471, 0.0
        %v4642 = vsel %vm2366, %v4470, 0.0
        %v4643 = vsel %vm2367, %v4469, 0.0
        %v4644 = vsel %vm2368, %v4468, 0.0
        %v4645 = vsel %vm2369, %v4467, 0.0
        %v4646 = vsel %vm2370, %v4466, 0.0
        %v4647 = vsel %vm2371, %v4465, 0.0
        %v4648 = vsel %vm2372, %v4464, 0.0
        %v4649 = vsel %vm2373, %v4463, 0.0
        %v4650 = vsel %vm2374, %v4462, 0.0
        %v4651 = vsel %vm2375, %v4461, 0.0
        %v4652 = vsel %vm2376, %v4460, 0.0
        %v4653 = vsel %vm2377, %v4459, 0.0
        %v4654 = vsel %vm2378, %v4458, 0.0
        %v4655 = vsel %vm2379, %v4457, 0.0
        %v4656 = vsel %vm2380, %v4456, 0.0
        %v4657 = vsel %vm2381, %v4455, 0.0
        %v4658 = vsel %vm2382, %v4454, 0.0
        %v4659 = vsel %vm2383, %v4453, 0.0
        %v4660 = vsel %vm2384, %v4452, 0.0
        %v4661 = vsel %vm2385, %v4451, 0.0
        %v4662 = vsel %vm2386, %v4450, 0.0
        %v4663 = vsel %vm2387, %v4449, 0.0
        %v4664 = vsel %vm2388, %v4448, 0.0
        %v4665 = vsel %vm2389, %v4447, 0.0
        %v4666 = vsel %vm2390, %v4446, 0.0
        %v4667 = vsel %vm2391, %v4477, 0.0
        %v4668 = vsel %vm2392, %v4476, 0.0
        %v4669 = vsel %vm2393, %v4475, 0.0
        %4702 = vrot.lane.b32.xlu0 %v4382, 32
        %v4703 = vpop.permute.xlu0 %4702
        %4704 = vrot.lane.b32.xlu0 %v4383, 32
        %v4705 = vpop.permute.xlu0 %4704
        %4706 = vrot.lane.b32.xlu0 %v4384, 32
        %v4707 = vpop.permute.xlu0 %4706
        %4708 = vrot.lane.b32.xlu0 %v4385, 32
        %v4709 = vpop.permute.xlu0 %4708
        %4710 = vrot.lane.b32.xlu0 %v4386, 32
        %v4711 = vpop.permute.xlu0 %4710
        %4712 = vrot.lane.b32.xlu0 %v4387, 32
        %v4713 = vpop.permute.xlu0 %4712
        %4714 = vrot.lane.b32.xlu0 %v4388, 32
        %v4715 = vpop.permute.xlu0 %4714
        %4716 = vrot.lane.b32.xlu0 %v4389, 32
        %v4717 = vpop.permute.xlu0 %4716
        %4718 = vrot.lane.b32.xlu0 %v4390, 32
        %v4719 = vpop.permute.xlu0 %4718
        %4720 = vrot.lane.b32.xlu0 %v4391, 32
        %v4721 = vpop.permute.xlu0 %4720
        %4722 = vrot.lane.b32.xlu0 %v4392, 32
        %v4723 = vpop.permute.xlu0 %4722
        %4724 = vrot.lane.b32.xlu0 %v4393, 32
        %v4725 = vpop.permute.xlu0 %4724
        %4726 = vrot.lane.b32.xlu0 %v4394, 32
        %v4727 = vpop.permute.xlu0 %4726
        %4728 = vrot.lane.b32.xlu0 %v4395, 32
        %v4729 = vpop.permute.xlu0 %4728
        %4730 = vrot.lane.b32.xlu0 %v4396, 32
        %v4731 = vpop.permute.xlu0 %4730
        %4732 = vrot.lane.b32.xlu0 %v4397, 32
        %v4733 = vpop.permute.xlu0 %4732
        %4734 = vrot.lane.b32.xlu0 %v4398, 32
        %v4735 = vpop.permute.xlu0 %4734
        %4736 = vrot.lane.b32.xlu0 %v4399, 32
        %v4737 = vpop.permute.xlu0 %4736
        %4738 = vrot.lane.b32.xlu0 %v4400, 32
        %v4739 = vpop.permute.xlu0 %4738
        %4740 = vrot.lane.b32.xlu0 %v4401, 32
        %v4741 = vpop.permute.xlu0 %4740
        %4742 = vrot.lane.b32.xlu0 %v4402, 32
        %v4743 = vpop.permute.xlu0 %4742
        %4744 = vrot.lane.b32.xlu0 %v4403, 32
        %v4745 = vpop.permute.xlu0 %4744
        %4746 = vrot.lane.b32.xlu0 %v4404, 32
        %v4747 = vpop.permute.xlu0 %4746
        %4748 = vrot.lane.b32.xlu0 %v4405, 32
        %v4749 = vpop.permute.xlu0 %4748
        %4750 = vrot.lane.b32.xlu0 %v4406, 32
        %v4751 = vpop.permute.xlu0 %4750
        %4752 = vrot.lane.b32.xlu0 %v4407, 32
        %v4753 = vpop.permute.xlu0 %4752
        %4754 = vrot.lane.b32.xlu0 %v4408, 32
        %v4755 = vpop.permute.xlu0 %4754
        %4756 = vrot.lane.b32.xlu0 %v4409, 32
        %v4757 = vpop.permute.xlu0 %4756
        %4758 = vrot.lane.b32.xlu0 %v4410, 32
        %v4759 = vpop.permute.xlu0 %4758
        %4760 = vrot.lane.b32.xlu0 %v4411, 32
        %v4761 = vpop.permute.xlu0 %4760
        %4762 = vrot.lane.b32.xlu0 %v4412, 32
        %v4763 = vpop.permute.xlu0 %4762
        %4764 = vrot.lane.b32.xlu0 %v4413, 32
        %v4765 = vpop.permute.xlu0 %4764
        %4830 = vrot.lane.b32.xlu0 %v4478, 64
        %v4831 = vpop.permute.xlu0 %4830
        %4832 = vrot.lane.b32.xlu0 %v4479, 64
        %v4833 = vpop.permute.xlu0 %4832
        %4834 = vrot.lane.b32.xlu0 %v4480, 64
        %v4835 = vpop.permute.xlu0 %4834
        %4836 = vrot.lane.b32.xlu0 %v4481, 64
        %v4837 = vpop.permute.xlu0 %4836
        %4838 = vrot.lane.b32.xlu0 %v4482, 64
        %v4839 = vpop.permute.xlu0 %4838
        %4840 = vrot.lane.b32.xlu0 %v4483, 64
        %v4841 = vpop.permute.xlu0 %4840
        %4842 = vrot.lane.b32.xlu0 %v4484, 64
        %v4843 = vpop.permute.xlu0 %4842
        %4844 = vrot.lane.b32.xlu0 %v4485, 64
        %v4845 = vpop.permute.xlu0 %4844
        %4846 = vrot.lane.b32.xlu0 %v4486, 64
        %v4847 = vpop.permute.xlu0 %4846
        %4848 = vrot.lane.b32.xlu0 %v4487, 64
        %v4849 = vpop.permute.xlu0 %4848
        %4850 = vrot.lane.b32.xlu0 %v4488, 64
        %v4851 = vpop.permute.xlu0 %4850
        %4852 = vrot.lane.b32.xlu0 %v4489, 64
        %v4853 = vpop.permute.xlu0 %4852
        %4854 = vrot.lane.b32.xlu0 %v4490, 64
        %v4855 = vpop.permute.xlu0 %4854
        %4856 = vrot.lane.b32.xlu0 %v4491, 64
        %v4857 = vpop.permute.xlu0 %4856
        %4858 = vrot.lane.b32.xlu0 %v4492, 64
        %v4859 = vpop.permute.xlu0 %4858
        %4860 = vrot.lane.b32.xlu0 %v4493, 64
        %v4861 = vpop.permute.xlu0 %4860
        %4862 = vrot.lane.b32.xlu0 %v4494, 64
        %v4863 = vpop.permute.xlu0 %4862
        %4864 = vrot.lane.b32.xlu0 %v4495, 64
        %v4865 = vpop.permute.xlu0 %4864
        %4866 = vrot.lane.b32.xlu0 %v4496, 64
        %v4867 = vpop.permute.xlu0 %4866
        %4868 = vrot.lane.b32.xlu0 %v4497, 64
        %v4869 = vpop.permute.xlu0 %4868
        %4870 = vrot.lane.b32.xlu0 %v4498, 64
        %v4871 = vpop.permute.xlu0 %4870
        %4872 = vrot.lane.b32.xlu0 %v4499, 64
        %v4873 = vpop.permute.xlu0 %4872
        %4874 = vrot.lane.b32.xlu0 %v4500, 64
        %v4875 = vpop.permute.xlu0 %4874
        %4876 = vrot.lane.b32.xlu0 %v4501, 64
        %v4877 = vpop.permute.xlu0 %4876
        %4878 = vrot.lane.b32.xlu0 %v4502, 64
        %v4879 = vpop.permute.xlu0 %4878
        %4880 = vrot.lane.b32.xlu0 %v4503, 64
        %v4881 = vpop.permute.xlu0 %4880
        %4882 = vrot.lane.b32.xlu0 %v4504, 64
        %v4883 = vpop.permute.xlu0 %4882
        %4884 = vrot.lane.b32.xlu0 %v4505, 64
        %v4885 = vpop.permute.xlu0 %4884
        %4886 = vrot.lane.b32.xlu0 %v4506, 64
        %v4887 = vpop.permute.xlu0 %4886
        %4888 = vrot.lane.b32.xlu0 %v4507, 64
        %v4889 = vpop.permute.xlu0 %4888
        %4890 = vrot.lane.b32.xlu0 %v4508, 64
        %v4891 = vpop.permute.xlu0 %4890
        %4892 = vrot.lane.b32.xlu0 %v4509, 64
        %v4893 = vpop.permute.xlu0 %4892
        %4958 = vrot.lane.b32.xlu0 %v4510, 96
        %v4959 = vpop.permute.xlu0 %4958
        %4960 = vrot.lane.b32.xlu0 %v4511, 96
        %v4961 = vpop.permute.xlu0 %4960
        %4962 = vrot.lane.b32.xlu0 %v4512, 96
        %v4963 = vpop.permute.xlu0 %4962
        %4964 = vrot.lane.b32.xlu0 %v4513, 96
        %v4965 = vpop.permute.xlu0 %4964
        %4966 = vrot.lane.b32.xlu0 %v4514, 96
        %v4967 = vpop.permute.xlu0 %4966
        %4968 = vrot.lane.b32.xlu0 %v4515, 96
        %v4969 = vpop.permute.xlu0 %4968
        %4970 = vrot.lane.b32.xlu0 %v4516, 96
        %v4971 = vpop.permute.xlu0 %4970
        %4972 = vrot.lane.b32.xlu0 %v4517, 96
        %v4973 = vpop.permute.xlu0 %4972
        %4974 = vrot.lane.b32.xlu0 %v4518, 96
        %v4975 = vpop.permute.xlu0 %4974
        %4976 = vrot.lane.b32.xlu0 %v4519, 96
        %v4977 = vpop.permute.xlu0 %4976
        %4978 = vrot.lane.b32.xlu0 %v4520, 96
        %v4979 = vpop.permute.xlu0 %4978
        %4980 = vrot.lane.b32.xlu0 %v4521, 96
        %v4981 = vpop.permute.xlu0 %4980
        %4982 = vrot.lane.b32.xlu0 %v4522, 96
        %v4983 = vpop.permute.xlu0 %4982
        %4984 = vrot.lane.b32.xlu0 %v4523, 96
        %v4985 = vpop.permute.xlu0 %4984
        %4986 = vrot.lane.b32.xlu0 %v4524, 96
        %v4987 = vpop.permute.xlu0 %4986
        %4988 = vrot.lane.b32.xlu0 %v4525, 96
        %v4989 = vpop.permute.xlu0 %4988
        %4990 = vrot.lane.b32.xlu0 %v4526, 96
        %v4991 = vpop.permute.xlu0 %4990
        %4992 = vrot.lane.b32.xlu0 %v4527, 96
        %v4993 = vpop.permute.xlu0 %4992
        %4994 = vrot.lane.b32.xlu0 %v4528, 96
        %v4995 = vpop.permute.xlu0 %4994
        %4996 = vrot.lane.b32.xlu0 %v4529, 96
        %v4997 = vpop.permute.xlu0 %4996
        %4998 = vrot.lane.b32.xlu0 %v4530, 96
        %v4999 = vpop.permute.xlu0 %4998
        %5000 = vrot.lane.b32.xlu0 %v4531, 96
        %v5001 = vpop.permute.xlu0 %5000
        %5002 = vrot.lane.b32.xlu0 %v4532, 96
        %v5003 = vpop.permute.xlu0 %5002
        %5004 = vrot.lane.b32.xlu0 %v4533, 96
        %v5005 = vpop.permute.xlu0 %5004
        %5006 = vrot.lane.b32.xlu0 %v4534, 96
        %v5007 = vpop.permute.xlu0 %5006
        %5008 = vrot.lane.b32.xlu0 %v4535, 96
        %v5009 = vpop.permute.xlu0 %5008
        %5010 = vrot.lane.b32.xlu0 %v4536, 96
        %v5011 = vpop.permute.xlu0 %5010
        %5012 = vrot.lane.b32.xlu0 %v4537, 96
        %v5013 = vpop.permute.xlu0 %5012
        %5014 = vrot.lane.b32.xlu0 %v4538, 96
        %v5015 = vpop.permute.xlu0 %5014
        %5016 = vrot.lane.b32.xlu0 %v4539, 96
        %v5017 = vpop.permute.xlu0 %5016
        %5018 = vrot.lane.b32.xlu0 %v4540, 96
        %v5019 = vpop.permute.xlu0 %5018
        %5020 = vrot.lane.b32.xlu0 %v4541, 96
        %v5021 = vpop.permute.xlu0 %5020
        %5086 = vrot.lane.b32.xlu0 %v4542, 32
        %v5087 = vpop.permute.xlu0 %5086
        %5088 = vrot.lane.b32.xlu0 %v4543, 32
        %v5089 = vpop.permute.xlu0 %5088
        %5090 = vrot.lane.b32.xlu0 %v4544, 32
        %v5091 = vpop.permute.xlu0 %5090
        %5092 = vrot.lane.b32.xlu0 %v4545, 32
        %v5093 = vpop.permute.xlu0 %5092
        %5094 = vrot.lane.b32.xlu0 %v4546, 32
        %v5095 = vpop.permute.xlu0 %5094
        %5096 = vrot.lane.b32.xlu0 %v4547, 32
        %v5097 = vpop.permute.xlu0 %5096
        %5098 = vrot.lane.b32.xlu0 %v4548, 32
        %v5099 = vpop.permute.xlu0 %5098
        %5100 = vrot.lane.b32.xlu0 %v4549, 32
        %v5101 = vpop.permute.xlu0 %5100
        %5102 = vrot.lane.b32.xlu0 %v4550, 32
        %v5103 = vpop.permute.xlu0 %5102
        %5104 = vrot.lane.b32.xlu0 %v4551, 32
        %v5105 = vpop.permute.xlu0 %5104
        %5106 = vrot.lane.b32.xlu0 %v4552, 32
        %v5107 = vpop.permute.xlu0 %5106
        %5108 = vrot.lane.b32.xlu0 %v4553, 32
        %v5109 = vpop.permute.xlu0 %5108
        %5110 = vrot.lane.b32.xlu0 %v4554, 32
        %v5111 = vpop.permute.xlu0 %5110
        %5112 = vrot.lane.b32.xlu0 %v4555, 32
        %v5113 = vpop.permute.xlu0 %5112
        %5114 = vrot.lane.b32.xlu0 %v4556, 32
        %v5115 = vpop.permute.xlu0 %5114
        %5116 = vrot.lane.b32.xlu0 %v4557, 32
        %v5117 = vpop.permute.xlu0 %5116
        %5118 = vrot.lane.b32.xlu0 %v4558, 32
        %v5119 = vpop.permute.xlu0 %5118
        %5120 = vrot.lane.b32.xlu0 %v4559, 32
        %v5121 = vpop.permute.xlu0 %5120
        %5122 = vrot.lane.b32.xlu0 %v4560, 32
        %v5123 = vpop.permute.xlu0 %5122
        %5124 = vrot.lane.b32.xlu0 %v4561, 32
        %v5125 = vpop.permute.xlu0 %5124
        %5126 = vrot.lane.b32.xlu0 %v4562, 32
        %v5127 = vpop.permute.xlu0 %5126
        %5128 = vrot.lane.b32.xlu0 %v4563, 32
        %v5129 = vpop.permute.xlu0 %5128
        %5130 = vrot.lane.b32.xlu0 %v4564, 32
        %v5131 = vpop.permute.xlu0 %5130
        %5132 = vrot.lane.b32.xlu0 %v4565, 32
        %v5133 = vpop.permute.xlu0 %5132
        %5134 = vrot.lane.b32.xlu0 %v4566, 32
        %v5135 = vpop.permute.xlu0 %5134
        %5136 = vrot.lane.b32.xlu0 %v4567, 32
        %v5137 = vpop.permute.xlu0 %5136
        %5138 = vrot.lane.b32.xlu0 %v4568, 32
        %v5139 = vpop.permute.xlu0 %5138
        %5140 = vrot.lane.b32.xlu0 %v4569, 32
        %v5141 = vpop.permute.xlu0 %5140
        %5142 = vrot.lane.b32.xlu0 %v4570, 32
        %v5143 = vpop.permute.xlu0 %5142
        %5144 = vrot.lane.b32.xlu0 %v4571, 32
        %v5145 = vpop.permute.xlu0 %5144
        %5146 = vrot.lane.b32.xlu0 %v4572, 32
        %v5147 = vpop.permute.xlu0 %5146
        %5148 = vrot.lane.b32.xlu0 %v4573, 32
        %v5149 = vpop.permute.xlu0 %5148
        %5214 = vrot.lane.b32.xlu0 %v4574, 64
        %v5215 = vpop.permute.xlu0 %5214
        %5216 = vrot.lane.b32.xlu0 %v4575, 64
        %v5217 = vpop.permute.xlu0 %5216
        %5218 = vrot.lane.b32.xlu0 %v4576, 64
        %v5219 = vpop.permute.xlu0 %5218
        %5220 = vrot.lane.b32.xlu0 %v4577, 64
        %v5221 = vpop.permute.xlu0 %5220
        %5222 = vrot.lane.b32.xlu0 %v4578, 64
        %v5223 = vpop.permute.xlu0 %5222
        %5224 = vrot.lane.b32.xlu0 %v4579, 64
        %v5225 = vpop.permute.xlu0 %5224
        %5226 = vrot.lane.b32.xlu0 %v4580, 64
        %v5227 = vpop.permute.xlu0 %5226
        %5228 = vrot.lane.b32.xlu0 %v4581, 64
        %v5229 = vpop.permute.xlu0 %5228
        %5230 = vrot.lane.b32.xlu0 %v4582, 64
        %v5231 = vpop.permute.xlu0 %5230
        %5232 = vrot.lane.b32.xlu0 %v4583, 64
        %v5233 = vpop.permute.xlu0 %5232
        %5234 = vrot.lane.b32.xlu0 %v4584, 64
        %v5235 = vpop.permute.xlu0 %5234
        %5236 = vrot.lane.b32.xlu0 %v4585, 64
        %v5237 = vpop.permute.xlu0 %5236
        %5238 = vrot.lane.b32.xlu0 %v4586, 64
        %v5239 = vpop.permute.xlu0 %5238
        %5240 = vrot.lane.b32.xlu0 %v4587, 64
        %v5241 = vpop.permute.xlu0 %5240
        %5242 = vrot.lane.b32.xlu0 %v4588, 64
        %v5243 = vpop.permute.xlu0 %5242
        %5244 = vrot.lane.b32.xlu0 %v4589, 64
        %v5245 = vpop.permute.xlu0 %5244
        %5246 = vrot.lane.b32.xlu0 %v4590, 64
        %v5247 = vpop.permute.xlu0 %5246
        %5248 = vrot.lane.b32.xlu0 %v4591, 64
        %v5249 = vpop.permute.xlu0 %5248
        %5250 = vrot.lane.b32.xlu0 %v4592, 64
        %v5251 = vpop.permute.xlu0 %5250
        %5252 = vrot.lane.b32.xlu0 %v4593, 64
        %v5253 = vpop.permute.xlu0 %5252
        %5254 = vrot.lane.b32.xlu0 %v4594, 64
        %v5255 = vpop.permute.xlu0 %5254
        %5256 = vrot.lane.b32.xlu0 %v4595, 64
        %v5257 = vpop.permute.xlu0 %5256
        %5258 = vrot.lane.b32.xlu0 %v4596, 64
        %v5259 = vpop.permute.xlu0 %5258
        %5260 = vrot.lane.b32.xlu0 %v4597, 64
        %v5261 = vpop.permute.xlu0 %5260
        %5262 = vrot.lane.b32.xlu0 %v4598, 64
        %v5263 = vpop.permute.xlu0 %5262
        %5264 = vrot.lane.b32.xlu0 %v4599, 64
        %v5265 = vpop.permute.xlu0 %5264
        %5266 = vrot.lane.b32.xlu0 %v4600, 64
        %v5267 = vpop.permute.xlu0 %5266
        %5268 = vrot.lane.b32.xlu0 %v4601, 64
        %v5269 = vpop.permute.xlu0 %5268
        %5270 = vrot.lane.b32.xlu0 %v4602, 64
        %v5271 = vpop.permute.xlu0 %5270
        %5272 = vrot.lane.b32.xlu0 %v4603, 64
        %v5273 = vpop.permute.xlu0 %5272
        %5274 = vrot.lane.b32.xlu0 %v4604, 64
        %v5275 = vpop.permute.xlu0 %5274
        %5276 = vrot.lane.b32.xlu0 %v4605, 64
        %v5277 = vpop.permute.xlu0 %5276
        %5342 = vrot.lane.b32.xlu0 %v4606, 96
        %v5343 = vpop.permute.xlu0 %5342
        %5344 = vrot.lane.b32.xlu0 %v4607, 96
        %v5345 = vpop.permute.xlu0 %5344
        %5346 = vrot.lane.b32.xlu0 %v4608, 96
        %v5347 = vpop.permute.xlu0 %5346
        %5348 = vrot.lane.b32.xlu0 %v4609, 96
        %v5349 = vpop.permute.xlu0 %5348
        %5350 = vrot.lane.b32.xlu0 %v4610, 96
        %v5351 = vpop.permute.xlu0 %5350
        %5352 = vrot.lane.b32.xlu0 %v4611, 96
        %v5353 = vpop.permute.xlu0 %5352
        %5354 = vrot.lane.b32.xlu0 %v4612, 96
        %v5355 = vpop.permute.xlu0 %5354
        %5356 = vrot.lane.b32.xlu0 %v4613, 96
        %v5357 = vpop.permute.xlu0 %5356
        %5358 = vrot.lane.b32.xlu0 %v4614, 96
        %v5359 = vpop.permute.xlu0 %5358
        %5360 = vrot.lane.b32.xlu0 %v4615, 96
        %v5361 = vpop.permute.xlu0 %5360
        %5362 = vrot.lane.b32.xlu0 %v4616, 96
        %v5363 = vpop.permute.xlu0 %5362
        %5364 = vrot.lane.b32.xlu0 %v4617, 96
        %v5365 = vpop.permute.xlu0 %5364
        %5366 = vrot.lane.b32.xlu0 %v4618, 96
        %v5367 = vpop.permute.xlu0 %5366
        %5368 = vrot.lane.b32.xlu0 %v4619, 96
        %v5369 = vpop.permute.xlu0 %5368
        %5370 = vrot.lane.b32.xlu0 %v4620, 96
        %v5371 = vpop.permute.xlu0 %5370
        %5372 = vrot.lane.b32.xlu0 %v4621, 96
        %v5373 = vpop.permute.xlu0 %5372
        %5374 = vrot.lane.b32.xlu0 %v4622, 96
        %v5375 = vpop.permute.xlu0 %5374
        %5376 = vrot.lane.b32.xlu0 %v4623, 96
        %v5377 = vpop.permute.xlu0 %5376
        %5378 = vrot.lane.b32.xlu0 %v4624, 96
        %v5379 = vpop.permute.xlu0 %5378
        %5380 = vrot.lane.b32.xlu0 %v4625, 96
        %v5381 = vpop.permute.xlu0 %5380
        %5382 = vrot.lane.b32.xlu0 %v4626, 96
        %v5383 = vpop.permute.xlu0 %5382
        %5384 = vrot.lane.b32.xlu0 %v4627, 96
        %v5385 = vpop.permute.xlu0 %5384
        %5386 = vrot.lane.b32.xlu0 %v4628, 96
        %v5387 = vpop.permute.xlu0 %5386
        %5388 = vrot.lane.b32.xlu0 %v4629, 96
        %v5389 = vpop.permute.xlu0 %5388
        %5390 = vrot.lane.b32.xlu0 %v4630, 96
        %v5391 = vpop.permute.xlu0 %5390
        %5392 = vrot.lane.b32.xlu0 %v4631, 96
        %v5393 = vpop.permute.xlu0 %5392
        %5394 = vrot.lane.b32.xlu0 %v4632, 96
        %v5395 = vpop.permute.xlu0 %5394
        %5396 = vrot.lane.b32.xlu0 %v4633, 96
        %v5397 = vpop.permute.xlu0 %5396
        %5398 = vrot.lane.b32.xlu0 %v4634, 96
        %v5399 = vpop.permute.xlu0 %5398
        %5400 = vrot.lane.b32.xlu0 %v4635, 96
        %v5401 = vpop.permute.xlu0 %5400
        %5402 = vrot.lane.b32.xlu0 %v4636, 96
        %v5403 = vpop.permute.xlu0 %5402
        %5404 = vrot.lane.b32.xlu0 %v4637, 96
        %v5405 = vpop.permute.xlu0 %5404
        %v5438 = vsel %vm3194, %v4350, %v4703
        %v5439 = vsel %vm3194, %v4351, %v4705
        %v5440 = vsel %vm3194, %v4352, %v4707
        %v5441 = vsel %vm3194, %v4353, %v4709
        %v5442 = vsel %vm3194, %v4354, %v4711
        %v5443 = vsel %vm3194, %v4355, %v4713
        %v5444 = vsel %vm3194, %v4356, %v4715
        %v5445 = vsel %vm3194, %v4357, %v4717
        %v5446 = vsel %vm3194, %v4358, %v4719
        %v5447 = vsel %vm3194, %v4359, %v4721
        %v5448 = vsel %vm3194, %v4360, %v4723
        %v5449 = vsel %vm3194, %v4361, %v4725
        %v5450 = vsel %vm3194, %v4362, %v4727
        %v5451 = vsel %vm3194, %v4363, %v4729
        %v5452 = vsel %vm3194, %v4364, %v4731
        %v5453 = vsel %vm3194, %v4365, %v4733
        %v5454 = vsel %vm3194, %v4366, %v4735
        %v5455 = vsel %vm3194, %v4367, %v4737
        %v5456 = vsel %vm3194, %v4368, %v4739
        %v5457 = vsel %vm3194, %v4369, %v4741
        %v5458 = vsel %vm3194, %v4370, %v4743
        %v5459 = vsel %vm3194, %v4371, %v4745
        %v5460 = vsel %vm3194, %v4372, %v4747
        %v5461 = vsel %vm3194, %v4373, %v4749
        %v5462 = vsel %vm3194, %v4374, %v4751
        %v5463 = vsel %vm3194, %v4375, %v4753
        %v5464 = vsel %vm3194, %v4376, %v4755
        %v5465 = vsel %vm3194, %v4377, %v4757
        %v5466 = vsel %vm3194, %v4378, %v4759
        %v5467 = vsel %vm3194, %v4379, %v4761
        %v5468 = vsel %vm3194, %v4380, %v4763
        %v5469 = vsel %vm3194, %v4381, %v4765
        %v5470 = vsel %vm3227, %v5438, %v4831
        %v5471 = vsel %vm3227, %v5439, %v4833
        %v5472 = vsel %vm3227, %v5440, %v4835
        %v5473 = vsel %vm3227, %v5441, %v4837
        %v5474 = vsel %vm3227, %v5442, %v4839
        %v5475 = vsel %vm3227, %v5443, %v4841
        %v5476 = vsel %vm3227, %v5444, %v4843
        %v5477 = vsel %vm3227, %v5445, %v4845
        %v5478 = vsel %vm3227, %v5446, %v4847
        %v5479 = vsel %vm3227, %v5447, %v4849
        %v5480 = vsel %vm3227, %v5448, %v4851
        %v5481 = vsel %vm3227, %v5449, %v4853
        %v5482 = vsel %vm3227, %v5450, %v4855
        %v5483 = vsel %vm3227, %v5451, %v4857
        %v5484 = vsel %vm3227, %v5452, %v4859
        %v5485 = vsel %vm3227, %v5453, %v4861
        %v5486 = vsel %vm3227, %v5454, %v4863
        %v5487 = vsel %vm3227, %v5455, %v4865
        %v5488 = vsel %vm3227, %v5456, %v4867
        %v5489 = vsel %vm3227, %v5457, %v4869
        %v5490 = vsel %vm3227, %v5458, %v4871
        %v5491 = vsel %vm3227, %v5459, %v4873
        %v5492 = vsel %vm3227, %v5460, %v4875
        %v5493 = vsel %vm3227, %v5461, %v4877
        %v5494 = vsel %vm3227, %v5462, %v4879
        %v5495 = vsel %vm3227, %v5463, %v4881
        %v5496 = vsel %vm3227, %v5464, %v4883
        %v5497 = vsel %vm3227, %v5465, %v4885
        %v5498 = vsel %vm3227, %v5466, %v4887
        %v5499 = vsel %vm3227, %v5467, %v4889
        %v5500 = vsel %vm3227, %v5468, %v4891
        %v5501 = vsel %vm3227, %v5469, %v4893
        %v5502 = vsel %vm3260, %v5470, %v4959
        %v5503 = vsel %vm3260, %v5471, %v4961
        %v5504 = vsel %vm3260, %v5472, %v4963
        %v5505 = vsel %vm3260, %v5473, %v4965
        %v5506 = vsel %vm3260, %v5474, %v4967
        %v5507 = vsel %vm3260, %v5475, %v4969
        %v5508 = vsel %vm3260, %v5476, %v4971
        %v5509 = vsel %vm3260, %v5477, %v4973
        %v5510 = vsel %vm3260, %v5478, %v4975
        %v5511 = vsel %vm3260, %v5479, %v4977
        %v5512 = vsel %vm3260, %v5480, %v4979
        %v5513 = vsel %vm3260, %v5481, %v4981
        %v5514 = vsel %vm3260, %v5482, %v4983
        %v5515 = vsel %vm3260, %v5483, %v4985
        %v5516 = vsel %vm3260, %v5484, %v4987
        %v5517 = vsel %vm3260, %v5485, %v4989
        %v5518 = vsel %vm3260, %v5486, %v4991
        %v5519 = vsel %vm3260, %v5487, %v4993
        %v5520 = vsel %vm3260, %v5488, %v4995
        %v5521 = vsel %vm3260, %v5489, %v4997
        %v5522 = vsel %vm3260, %v5490, %v4999
        %v5523 = vsel %vm3260, %v5491, %v5001
        %v5524 = vsel %vm3260, %v5492, %v5003
        %v5525 = vsel %vm3260, %v5493, %v5005
        %v5526 = vsel %vm3260, %v5494, %v5007
        %v5527 = vsel %vm3260, %v5495, %v5009
        %v5528 = vsel %vm3260, %v5496, %v5011
        %v5529 = vsel %vm3260, %v5497, %v5013
        %v5530 = vsel %vm3260, %v5498, %v5015
        %v5531 = vsel %vm3260, %v5499, %v5017
        %v5532 = vsel %vm3260, %v5500, %v5019
        %v5533 = vsel %vm3260, %v5501, %v5021
        %v5534 = vsel %vm3194, %v4254, %v5087
        %v5535 = vsel %vm3194, %v4255, %v5089
        %v5536 = vsel %vm3194, %v4256, %v5091
        %v5537 = vsel %vm3194, %v4257, %v5093
        %v5538 = vsel %vm3194, %v4258, %v5095
        %v5539 = vsel %vm3194, %v4259, %v5097
        %v5540 = vsel %vm3194, %v4260, %v5099
        %v5541 = vsel %vm3194, %v4261, %v5101
        %v5542 = vsel %vm3194, %v4262, %v5103
        %v5543 = vsel %vm3194, %v4263, %v5105
        %v5544 = vsel %vm3194, %v4264, %v5107
        %v5545 = vsel %vm3194, %v4265, %v5109
        %v5546 = vsel %vm3194, %v4266, %v5111
        %v5547 = vsel %vm3194, %v4267, %v5113
        %v5548 = vsel %vm3194, %v4268, %v5115
        %v5549 = vsel %vm3194, %v4269, %v5117
        %v5550 = vsel %vm3194, %v4270, %v5119
        %v5551 = vsel %vm3194, %v4271, %v5121
        %v5552 = vsel %vm3194, %v4272, %v5123
        %v5553 = vsel %vm3194, %v4273, %v5125
        %v5554 = vsel %vm3194, %v4274, %v5127
        %v5555 = vsel %vm3194, %v4275, %v5129
        %v5556 = vsel %vm3194, %v4276, %v5131
        %v5557 = vsel %vm3194, %v4277, %v5133
        %v5558 = vsel %vm3194, %v4278, %v5135
        %v5559 = vsel %vm3194, %v4279, %v5137
        %v5560 = vsel %vm3194, %v4280, %v5139
        %v5561 = vsel %vm3194, %v4281, %v5141
        %v5562 = vsel %vm3194, %v4282, %v5143
        %v5563 = vsel %vm3194, %v4283, %v5145
        %v5564 = vsel %vm3194, %v4284, %v5147
        %v5565 = vsel %vm3194, %v4285, %v5149
        %v5566 = vsel %vm3227, %v5534, %v5215
        %v5567 = vsel %vm3227, %v5535, %v5217
        %v5568 = vsel %vm3227, %v5536, %v5219
        %v5569 = vsel %vm3227, %v5537, %v5221
        %v5570 = vsel %vm3227, %v5538, %v5223
        %v5571 = vsel %vm3227, %v5539, %v5225
        %v5572 = vsel %vm3227, %v5540, %v5227
        %v5573 = vsel %vm3227, %v5541, %v5229
        %v5574 = vsel %vm3227, %v5542, %v5231
        %v5575 = vsel %vm3227, %v5543, %v5233
        %v5576 = vsel %vm3227, %v5544, %v5235
        %v5577 = vsel %vm3227, %v5545, %v5237
        %v5578 = vsel %vm3227, %v5546, %v5239
        %v5579 = vsel %vm3227, %v5547, %v5241
        %v5580 = vsel %vm3227, %v5548, %v5243
        %v5581 = vsel %vm3227, %v5549, %v5245
        %v5582 = vsel %vm3227, %v5550, %v5247
        %v5583 = vsel %vm3227, %v5551, %v5249
        %v5584 = vsel %vm3227, %v5552, %v5251
        %v5585 = vsel %vm3227, %v5553, %v5253
        %v5586 = vsel %vm3227, %v5554, %v5255
        %v5587 = vsel %vm3227, %v5555, %v5257
        %v5588 = vsel %vm3227, %v5556, %v5259
        %v5589 = vsel %vm3227, %v5557, %v5261
        %v5590 = vsel %vm3227, %v5558, %v5263
        %v5591 = vsel %vm3227, %v5559, %v5265
        %v5592 = vsel %vm3227, %v5560, %v5267
        %v5593 = vsel %vm3227, %v5561, %v5269
        %v5594 = vsel %vm3227, %v5562, %v5271
        %v5595 = vsel %vm3227, %v5563, %v5273
        %v5596 = vsel %vm3227, %v5564, %v5275
        %v5597 = vsel %vm3227, %v5565, %v5277
        %v5598 = vsel %vm3260, %v5566, %v5343
        %v5599 = vsel %vm3260, %v5567, %v5345
        %v5600 = vsel %vm3260, %v5568, %v5347
        %v5601 = vsel %vm3260, %v5569, %v5349
        %v5602 = vsel %vm3260, %v5570, %v5351
        %v5603 = vsel %vm3260, %v5571, %v5353
        %v5604 = vsel %vm3260, %v5572, %v5355
        %v5605 = vsel %vm3260, %v5573, %v5357
        %v5606 = vsel %vm3260, %v5574, %v5359
        %v5607 = vsel %vm3260, %v5575, %v5361
        %v5608 = vsel %vm3260, %v5576, %v5363
        %v5609 = vsel %vm3260, %v5577, %v5365
        %v5610 = vsel %vm3260, %v5578, %v5367
        %v5611 = vsel %vm3260, %v5579, %v5369
        %v5612 = vsel %vm3260, %v5580, %v5371
        %v5613 = vsel %vm3260, %v5581, %v5373
        %v5614 = vsel %vm3260, %v5582, %v5375
        %v5615 = vsel %vm3260, %v5583, %v5377
        %v5616 = vsel %vm3260, %v5584, %v5379
        %v5617 = vsel %vm3260, %v5585, %v5381
        %v5618 = vsel %vm3260, %v5586, %v5383
        %v5619 = vsel %vm3260, %v5587, %v5385
        %v5620 = vsel %vm3260, %v5588, %v5387
        %v5621 = vsel %vm3260, %v5589, %v5389
        %v5622 = vsel %vm3260, %v5590, %v5391
        %v5623 = vsel %vm3260, %v5591, %v5393
        %v5624 = vsel %vm3260, %v5592, %v5395
        %v5625 = vsel %vm3260, %v5593, %v5397
        %v5626 = vsel %vm3260, %v5594, %v5399
        %v5627 = vsel %vm3260, %v5595, %v5401
        %v5628 = vsel %vm3260, %v5596, %v5403
        %v5629 = vsel %vm3260, %v5597, %v5405
        %v5630 = vpack.c.bf16 %v5503, %v5502
        %v5631 = vpack.c.bf16 %v5599, %v5598
        %v5632 = vpack.c.bf16 %v4639, %v4638
        %v5633 = vpack.c.bf16 %v5505, %v5504
        %v5634 = vpack.c.bf16 %v5601, %v5600
        %v5635 = vpack.c.bf16 %v4641, %v4640
        %v5636 = vpack.c.bf16 %v5507, %v5506
        %v5637 = vpack.c.bf16 %v5603, %v5602
        %v5638 = vpack.c.bf16 %v4643, %v4642
        %v5639 = vpack.c.bf16 %v5509, %v5508
        %v5640 = vpack.c.bf16 %v5605, %v5604
        %v5641 = vpack.c.bf16 %v4645, %v4644
        %v5642 = vpack.c.bf16 %v5511, %v5510
        %v5643 = vpack.c.bf16 %v5607, %v5606
        %v5644 = vpack.c.bf16 %v4647, %v4646
        %v5645 = vpack.c.bf16 %v5513, %v5512
        %v5646 = vpack.c.bf16 %v5609, %v5608
        %v5647 = vpack.c.bf16 %v4649, %v4648
        %v5648 = vpack.c.bf16 %v5515, %v5514
        %v5649 = vpack.c.bf16 %v5611, %v5610
        %v5650 = vpack.c.bf16 %v4651, %v4650
        %v5651 = vpack.c.bf16 %v5517, %v5516
        %v5652 = vpack.c.bf16 %v5613, %v5612
        %v5653 = vpack.c.bf16 %v4653, %v4652
        %v5654 = vpack.c.bf16 %v5519, %v5518
        %v5655 = vpack.c.bf16 %v5615, %v5614
        %v5656 = vpack.c.bf16 %v4655, %v4654
        %v5657 = vpack.c.bf16 %v5521, %v5520
        %v5658 = vpack.c.bf16 %v5617, %v5616
        %v5659 = vpack.c.bf16 %v4657, %v4656
        %v5660 = vpack.c.bf16 %v5523, %v5522
        %v5661 = vpack.c.bf16 %v5619, %v5618
        %v5662 = vpack.c.bf16 %v4659, %v4658
        %v5663 = vpack.c.bf16 %v5525, %v5524
        %v5664 = vpack.c.bf16 %v5621, %v5620
        %v5665 = vpack.c.bf16 %v4661, %v4660
        %v5666 = vpack.c.bf16 %v5527, %v5526
        %v5667 = vpack.c.bf16 %v5623, %v5622
        %v5668 = vpack.c.bf16 %v4663, %v4662
        %v5669 = vpack.c.bf16 %v5529, %v5528
        %v5670 = vpack.c.bf16 %v5625, %v5624
        %v5671 = vpack.c.bf16 %v4665, %v4664
        %v5672 = vpack.c.bf16 %v5531, %v5530
        %v5673 = vpack.c.bf16 %v5627, %v5626
        %v5674 = vpack.c.bf16 %v4667, %v4666
        %v5675 = vpack.c.bf16 %v5533, %v5532
        %v5676 = vpack.c.bf16 %v5629, %v5628
        %v5677 = vpack.c.bf16 %v4669, %v4668
        %v5678 = vld [vmem:[%s3] sm:$0xf]
        %v5679 = vld [vmem:[%s3 + $0x4] sm:$0xf]
        %v5680 = vld [vmem:[%s3 + $0x8] sm:$0xf]
        %v5681 = vld [vmem:[%s3 + $0xc] sm:$0xf]
        %v5682 = vld [vmem:[%s3 + $0x10] sm:$0xf]
        %v5683 = vld [vmem:[%s3 + $0x14] sm:$0xf]
        %v5684 = vld [vmem:[%s3 + $0x18] sm:$0xf]
        %v5685 = vld [vmem:[%s3 + $0x1c] sm:$0xf]
        %v5686 = vld [vmem:[%s3 + $0x20] sm:$0xf]
        %v5687 = vld [vmem:[%s3 + $0x24] sm:$0xf]
        %v5688 = vld [vmem:[%s3 + $0x28] sm:$0xf]
        %v5689 = vld [vmem:[%s3 + $0x2c] sm:$0xf]
        %v5690 = vld [vmem:[%s3 + $0x30] sm:$0xf]
        %v5691 = vld [vmem:[%s3 + $0x34] sm:$0xf]
        %v5692 = vld [vmem:[%s3 + $0x38] sm:$0xf]
        %v5693 = vld [vmem:[%s3 + $0x3c] sm:$0xf]
        %v5694 = vld [vmem:[%s3 + $0x40] sm:$0xf]
        %v5695 = vld [vmem:[%s3 + $0x44] sm:$0xf]
        %v5696 = vld [vmem:[%s3 + $0x48] sm:$0xf]
        %v5697 = vld [vmem:[%s3 + $0x4c] sm:$0xf]
        %v5698 = vld [vmem:[%s3 + $0x50] sm:$0xf]
        %v5699 = vld [vmem:[%s3 + $0x54] sm:$0xf]
        %v5700 = vld [vmem:[%s3 + $0x58] sm:$0xf]
        %v5701 = vld [vmem:[%s3 + $0x5c] sm:$0xf]
        %v5702 = vld [vmem:[%s3 + $0x60] sm:$0xf]
        %v5703 = vld [vmem:[%s3 + $0x64] sm:$0xf]
        %v5704 = vld [vmem:[%s3 + $0x68] sm:$0xf]
        %v5705 = vld [vmem:[%s3 + $0x6c] sm:$0xf]
        %v5706 = vld [vmem:[%s3 + $0x70] sm:$0xf]
        %v5707 = vld [vmem:[%s3 + $0x74] sm:$0xf]
        %v5708 = vld [vmem:[%s3 + $0x78] sm:$0xf]
        %v5709 = vld [vmem:[%s3 + $0x7c] sm:$0xf]
        %v5710 = vld [vmem:[%s3 + $0x80] sm:$0xf]
        %v5711 = vld [vmem:[%s3 + $0x84] sm:$0xf]
        %v5712 = vld [vmem:[%s3 + $0x88] sm:$0xf]
        %v5713 = vld [vmem:[%s3 + $0x8c] sm:$0xf]
        %v5750 = vunpack.c.l.b16 %v5678
        %v5751 = vunpack.c.l.b16 %v5679
        %v5752 = vunpack.c.l.b16 %v5680
        %v5753 = vunpack.c.l.b16 %v5681
        %v5754 = vunpack.c.l.b16 %v5682
        %v5755 = vunpack.c.l.b16 %v5683
        %v5756 = vunpack.c.l.b16 %v5684
        %v5757 = vunpack.c.l.b16 %v5685
        %v5758 = vunpack.c.l.b16 %v5686
        %v5759 = vunpack.c.l.b16 %v5687
        %v5760 = vunpack.c.l.b16 %v5688
        %v5761 = vunpack.c.l.b16 %v5689
        %v5762 = vunpack.c.l.b16 %v5690
        %v5763 = vunpack.c.l.b16 %v5691
        %v5764 = vunpack.c.l.b16 %v5692
        %v5765 = vunpack.c.l.b16 %v5693
        %v5766 = vunpack.c.l.b16 %v5694
        %v5767 = vunpack.c.l.b16 %v5695
        %v5768 = vunpack.c.l.b16 %v5696
        %v5769 = vunpack.c.l.b16 %v5697
        %v5770 = vunpack.c.l.b16 %v5698
        %v5771 = vunpack.c.l.b16 %v5699
        %v5772 = vunpack.c.l.b16 %v5700
        %v5773 = vunpack.c.l.b16 %v5701
        %v5774 = vunpack.c.l.b16 %v5702
        %v5775 = vunpack.c.l.b16 %v5703
        %v5776 = vunpack.c.l.b16 %v5704
        %v5777 = vunpack.c.l.b16 %v5705
        %v5778 = vunpack.c.l.b16 %v5706
        %v5779 = vunpack.c.l.b16 %v5707
        %v5780 = vunpack.c.l.b16 %v5708
        %v5781 = vunpack.c.l.b16 %v5709
        %v5782 = vunpack.c.l.b16 %v5710
        %v5783 = vunpack.c.l.b16 %v5711
        %v5784 = vunpack.c.l.b16 %v5712
        %v5785 = vunpack.c.l.b16 %v5713
        %v5786 = vpack.c.b16 %v5751, %v5750
        %v5787 = vpack.c.b16 %v5753, %v5752
        %v5788 = vpack.c.b16 %v5755, %v5754
        %v5789 = vpack.c.b16 %v5757, %v5756
        %v5790 = vpack.c.b16 %v5759, %v5758
        %v5791 = vpack.c.b16 %v5761, %v5760
        %v5792 = vpack.c.b16 %v5763, %v5762
        %v5793 = vpack.c.b16 %v5765, %v5764
        %v5794 = vpack.c.b16 %v5767, %v5766
        %v5795 = vpack.c.b16 %v5769, %v5768
        %v5796 = vpack.c.b16 %v5771, %v5770
        %v5797 = vpack.c.b16 %v5773, %v5772
        %v5798 = vpack.c.b16 %v5775, %v5774
        %v5799 = vpack.c.b16 %v5777, %v5776
        %v5800 = vpack.c.b16 %v5779, %v5778
        %v5801 = vpack.c.b16 %v5781, %v5780
        %v5802 = vpack.c.b16 %v5783, %v5782
        %v5803 = vpack.c.b16 %v5785, %v5784
        %v5823 = vsel %vm3194, %v5632, 0
        %v5826 = vsel %vm3194, %v5635, 0
        %v5829 = vsel %vm3194, %v5638, 0
        %v5832 = vsel %vm3194, %v5641, 0
        %v5835 = vsel %vm3194, %v5644, 0
        %v5838 = vsel %vm3194, %v5647, 0
        %v5841 = vsel %vm3194, %v5650, 0
        %v5844 = vsel %vm3194, %v5653, 0
        %v5847 = vsel %vm3194, %v5656, 0
        %v5850 = vsel %vm3194, %v5659, 0
        %v5853 = vsel %vm3194, %v5662, 0
        %v5856 = vsel %vm3194, %v5665, 0
        %v5859 = vsel %vm3194, %v5668, 0
        %v5862 = vsel %vm3194, %v5671, 0
        %v5865 = vsel %vm3194, %v5674, 0
        %v5868 = vsel %vm3194, %v5677, 0
        %5870 = vmatprep.subr.bf16.mxu0 0
        %5871 = vmatpush1.bf16.msra.mxu0 %v5786
        %5872 = vmatprep.subr.bf16.mxu0 0
        %5873 = vmatpush1.bf16.msra.mxu0 %v5787
        %5874 = vmatprep.subr.bf16.mxu0 0
        %5875 = vmatpush1.bf16.msra.mxu0 %v5788
        %5876 = vmatprep.subr.bf16.mxu0 0
        %5877 = vmatpush1.bf16.msra.mxu0 %v5789
        %5878 = vmatprep.subr.bf16.mxu0 0
        %5879 = vmatpush1.bf16.msra.mxu0 %v5790
        %5880 = vmatprep.subr.bf16.mxu0 0
        %5881 = vmatpush1.bf16.msra.mxu0 %v5791
        %5882 = vmatprep.subr.bf16.mxu0 0
        %5883 = vmatpush1.bf16.msra.mxu0 %v5792
        %5884 = vmatprep.subr.bf16.mxu0 0
        %5885 = vmatpush1.bf16.msra.mxu0 %v5793
        %5886 = vmatprep.subr.bf16.mxu0 0
        %5887 = vmatpush1.bf16.msra.mxu0 %v5794
        %5888 = vmatprep.subr.bf16.mxu0 0
        %5889 = vmatpush1.bf16.msra.mxu0 %v5795
        %5890 = vmatprep.subr.bf16.mxu0 0
        %5891 = vmatpush1.bf16.msra.mxu0 %v5796
        %5892 = vmatprep.subr.bf16.mxu0 0
        %5893 = vmatpush1.bf16.msra.mxu0 %v5797
        %5894 = vmatprep.subr.bf16.mxu0 0
        %5895 = vmatpush1.bf16.msra.mxu0 %v5798
        %5896 = vmatprep.subr.bf16.mxu0 0
        %5897 = vmatpush1.bf16.msra.mxu0 %v5799
        %5898 = vmatprep.subr.bf16.mxu0 0
        %5899 = vmatpush1.bf16.msra.mxu0 %v5800
        %5900 = vmatprep.subr.bf16.mxu0 0
        %5901 = vmatpush1.bf16.msra.mxu0 %v5801
        %5902 = vmatprep.mubr.bf16.mxu0 %v5631
        %5903 = vmatmul.mubr.bf16.gmra.mrb[0].mxu0 %v5630
        %v5904 = vpop.f32.mrb[0].mxu0
        %v5905 = vadd.f32 0.0, %v5904
        %v5906 = vpop.f32.mrb[0].mxu0
        %v5907 = vpop.f32.mrb[0].mxu0
        %v5908 = vadd.f32 0.0, %v5907
        %v5909 = vpop.f32.mrb[0].mxu0
        %5910 = vmatprep.mubr.bf16.mxu0 %v5634
        %5911 = vmatmul.mubr.bf16.gmra.mrb[0].mxu0 %v5633
        %v5912 = vpop.f32.mrb[0].mxu0
        %v5913 = vadd.f32 0.0, %v5912
        %v5914 = vpop.f32.mrb[0].mxu0
        %v5915 = vpop.f32.mrb[0].mxu0
        %v5916 = vadd.f32 0.0, %v5915
        %v5917 = vpop.f32.mrb[0].mxu0
        %5918 = vmatprep.mubr.bf16.mxu0 %v5637
        %5919 = vmatmul.mubr.bf16.gmra.mrb[0].mxu0 %v5636
        %v5920 = vpop.f32.mrb[0].mxu0
        %v5921 = vadd.f32 0.0, %v5920
        %v5922 = vpop.f32.mrb[0].mxu0
        %v5923 = vpop.f32.mrb[0].mxu0
        %v5924 = vadd.f32 0.0, %v5923
        %v5925 = vpop.f32.mrb[0].mxu0
        %5926 = vmatprep.mubr.bf16.mxu0 %v5640
        %5927 = vmatmul.mubr.bf16.gmra.mrb[0].mxu0 %v5639
        %v5928 = vpop.f32.mrb[0].mxu0
        %v5929 = vadd.f32 0.0, %v5928
        %v5930 = vpop.f32.mrb[0].mxu0
        %v5931 = vpop.f32.mrb[0].mxu0
        %v5932 = vadd.f32 0.0, %v5931
        %v5933 = vpop.f32.mrb[0].mxu0
        %5934 = vmatprep.mubr.bf16.mxu0 %v5643
        %5935 = vmatmul.mubr.bf16.gmra.mrb[0].mxu0 %v5642
        %v5936 = vpop.f32.mrb[0].mxu0
        %v5937 = vadd.f32 0.0, %v5936
        %v5938 = vpop.f32.mrb[0].mxu0
        %v5939 = vpop.f32.mrb[0].mxu0
        %v5940 = vadd.f32 0.0, %v5939
        %v5941 = vpop.f32.mrb[0].mxu0
        %5942 = vmatprep.mubr.bf16.mxu0 %v5646
        %5943 = vmatmul.mubr.bf16.gmra.mrb[0].mxu0 %v5645
        %v5944 = vpop.f32.mrb[0].mxu0
        %v5945 = vadd.f32 0.0, %v5944
        %v5946 = vpop.f32.mrb[0].mxu0
        %v5947 = vpop.f32.mrb[0].mxu0
        %v5948 = vadd.f32 0.0, %v5947
        %v5949 = vpop.f32.mrb[0].mxu0
        %5950 = vmatprep.mubr.bf16.mxu0 %v5649
        %5951 = vmatmul.mubr.bf16.gmra.mrb[0].mxu0 %v5648
        %v5952 = vpop.f32.mrb[0].mxu0
        %v5953 = vadd.f32 0.0, %v5952
        %v5954 = vpop.f32.mrb[0].mxu0
        %v5955 = vpop.f32.mrb[0].mxu0
        %v5956 = vadd.f32 0.0, %v5955
        %v5957 = vpop.f32.mrb[0].mxu0
        %5958 = vmatprep.mubr.bf16.mxu0 %v5652
        %5959 = vmatmul.mubr.bf16.gmra.mrb[0].mxu0 %v5651
        %v5960 = vpop.f32.mrb[0].mxu0
        %v5961 = vadd.f32 0.0, %v5960
        %v5962 = vpop.f32.mrb[0].mxu0
        %v5963 = vpop.f32.mrb[0].mxu0
        %v5964 = vadd.f32 0.0, %v5963
        %v5965 = vpop.f32.mrb[0].mxu0
        %5966 = vmatprep.mubr.bf16.mxu0 %v5655
        %5967 = vmatmul.mubr.bf16.gmra.mrb[0].mxu0 %v5654
        %v5968 = vpop.f32.mrb[0].mxu0
        %v5969 = vadd.f32 0.0, %v5968
        %v5970 = vpop.f32.mrb[0].mxu0
        %v5971 = vpop.f32.mrb[0].mxu0
        %v5972 = vadd.f32 0.0, %v5971
        %v5973 = vpop.f32.mrb[0].mxu0
        %5974 = vmatprep.mubr.bf16.mxu0 %v5658
        %5975 = vmatmul.mubr.bf16.gmra.mrb[0].mxu0 %v5657
        %v5976 = vpop.f32.mrb[0].mxu0
        %v5977 = vadd.f32 0.0, %v5976
        %v5978 = vpop.f32.mrb[0].mxu0
        %v5979 = vpop.f32.mrb[0].mxu0
        %v5980 = vadd.f32 0.0, %v5979
        %v5981 = vpop.f32.mrb[0].mxu0
        %5982 = vmatprep.mubr.bf16.mxu0 %v5661
        %5983 = vmatmul.mubr.bf16.gmra.mrb[0].mxu0 %v5660
        %v5984 = vpop.f32.mrb[0].mxu0
        %v5985 = vadd.f32 0.0, %v5984
        %v5986 = vpop.f32.mrb[0].mxu0
        %v5987 = vpop.f32.mrb[0].mxu0
        %v5988 = vadd.f32 0.0, %v5987
        %v5989 = vpop.f32.mrb[0].mxu0
        %5990 = vmatprep.mubr.bf16.mxu0 %v5664
        %5991 = vmatmul.mubr.bf16.gmra.mrb[0].mxu0 %v5663
        %v5992 = vpop.f32.mrb[0].mxu0
        %v5993 = vadd.f32 0.0, %v5992
        %v5994 = vpop.f32.mrb[0].mxu0
        %v5995 = vpop.f32.mrb[0].mxu0
        %v5996 = vadd.f32 0.0, %v5995
        %v5997 = vpop.f32.mrb[0].mxu0
        %5998 = vmatprep.mubr.bf16.mxu0 %v5667
        %5999 = vmatmul.mubr.bf16.gmra.mrb[0].mxu0 %v5666
        %v6000 = vpop.f32.mrb[0].mxu0
        %v6001 = vadd.f32 0.0, %v6000
        %v6002 = vpop.f32.mrb[0].mxu0
        %v6003 = vpop.f32.mrb[0].mxu0
        %v6004 = vadd.f32 0.0, %v6003
        %v6005 = vpop.f32.mrb[0].mxu0
        %6006 = vmatprep.mubr.bf16.mxu0 %v5670
        %6007 = vmatmul.mubr.bf16.gmra.mrb[0].mxu0 %v5669
        %v6008 = vpop.f32.mrb[0].mxu0
        %v6009 = vadd.f32 0.0, %v6008
        %v6010 = vpop.f32.mrb[0].mxu0
        %v6011 = vpop.f32.mrb[0].mxu0
        %v6012 = vadd.f32 0.0, %v6011
        %v6013 = vpop.f32.mrb[0].mxu0
        %6014 = vmatprep.mubr.bf16.mxu0 %v5673
        %6015 = vmatmul.mubr.bf16.gmra.mrb[0].mxu0 %v5672
        %v6016 = vpop.f32.mrb[0].mxu0
        %v6017 = vadd.f32 0.0, %v6016
        %v6018 = vpop.f32.mrb[0].mxu0
        %v6019 = vpop.f32.mrb[0].mxu0
        %v6020 = vadd.f32 0.0, %v6019
        %v6021 = vpop.f32.mrb[0].mxu0
        %6022 = vmatprep.mubr.bf16.mxu0 %v5676
        %6023 = vmatmul.mubr.bf16.gmra.mrb[0].mxu0 %v5675
        %v6024 = vpop.f32.mrb[0].mxu0
        %v6025 = vadd.f32 0.0, %v6024
        %v6026 = vpop.f32.mrb[0].mxu0
        %v6027 = vpop.f32.mrb[0].mxu0
        %v6028 = vadd.f32 0.0, %v6027
        %v6029 = vpop.f32.mrb[0].mxu0
        %6030 = vdwg.mxu0
        %6031 = vmatprep.subr.bf16.mxu0 0
        %6032 = vmatpush1.bf16.msra.mxu0 %v5802
        %6033 = vmatprep.subr.bf16.mxu0 0
        %6034 = vmatpush1.bf16.msra.mxu0 %v5803
        %6035 = vmatprep.subr.bf16.mxu0 0
        %6036 = vmatpush1.bf16.msra.mxu0 0
        %6037 = vmatprep.subr.bf16.mxu0 0
        %6038 = vmatpush1.bf16.msra.mxu0 0
        %6039 = vmatprep.subr.bf16.mxu0 0
        %6040 = vmatpush1.bf16.msra.mxu0 0
        %6041 = vmatprep.subr.bf16.mxu0 0
        %6042 = vmatpush1.bf16.msra.mxu0 0
        %6043 = vmatprep.subr.bf16.mxu0 0
        %6044 = vmatpush1.bf16.msra.mxu0 0
        %6045 = vmatprep.subr.bf16.mxu0 0
        %6046 = vmatpush1.bf16.msra.mxu0 0
        %6047 = vmatprep.subr.bf16.mxu0 0
        %6048 = vmatpush1.bf16.msra.mxu0 0
        %6049 = vmatprep.subr.bf16.mxu0 0
        %6050 = vmatpush1.bf16.msra.mxu0 0
        %6051 = vmatprep.subr.bf16.mxu0 0
        %6052 = vmatpush1.bf16.msra.mxu0 0
        %6053 = vmatprep.subr.bf16.mxu0 0
        %6054 = vmatpush1.bf16.msra.mxu0 0
        %6055 = vmatprep.subr.bf16.mxu0 0
        %6056 = vmatpush1.bf16.msra.mxu0 0
        %6057 = vmatprep.subr.bf16.mxu0 0
        %6058 = vmatpush1.bf16.msra.mxu0 0
        %6059 = vmatprep.subr.bf16.mxu0 0
        %6060 = vmatpush1.bf16.msra.mxu0 0
        %6061 = vmatprep.subr.bf16.mxu0 0
        %6062 = vmatpush1.bf16.msra.mxu0 0
        %6063 = vmatprep.mubr.bf16.mxu0 0
        %6064 = vmatmul.mubr.bf16.gmra.mrb[0].mxu0 %v5823
        %v6065 = vpop.f32.mrb[0].mxu0
        %v6066 = vadd.f32 %v5905, %v6065
        %v6067 = vpop.f32.mrb[0].mxu0
        %v6068 = vpop.f32.mrb[0].mxu0
        %v6069 = vadd.f32 %v5908, %v6068
        %v6070 = vpop.f32.mrb[0].mxu0
        %6071 = vmatprep.mubr.bf16.mxu0 0
        %6072 = vmatmul.mubr.bf16.gmra.mrb[0].mxu0 %v5826
        %v6073 = vpop.f32.mrb[0].mxu0
        %v6074 = vadd.f32 %v5913, %v6073
        %v6075 = vpop.f32.mrb[0].mxu0
        %v6076 = vpop.f32.mrb[0].mxu0
        %v6077 = vadd.f32 %v5916, %v6076
        %v6078 = vpop.f32.mrb[0].mxu0
        %6079 = vmatprep.mubr.bf16.mxu0 0
        %6080 = vmatmul.mubr.bf16.gmra.mrb[0].mxu0 %v5829
        %v6081 = vpop.f32.mrb[0].mxu0
        %v6082 = vadd.f32 %v5921, %v6081
        %v6083 = vpop.f32.mrb[0].mxu0
        %v6084 = vpop.f32.mrb[0].mxu0
        %v6085 = vadd.f32 %v5924, %v6084
        %v6086 = vpop.f32.mrb[0].mxu0
        %6087 = vmatprep.mubr.bf16.mxu0 0
        %6088 = vmatmul.mubr.bf16.gmra.mrb[0].mxu0 %v5832
        %v6089 = vpop.f32.mrb[0].mxu0
        %v6090 = vadd.f32 %v5929, %v6089
        %v6091 = vpop.f32.mrb[0].mxu0
        %v6092 = vpop.f32.mrb[0].mxu0
        %v6093 = vadd.f32 %v5932, %v6092
        %v6094 = vpop.f32.mrb[0].mxu0
        %6095 = vmatprep.mubr.bf16.mxu0 0
        %6096 = vmatmul.mubr.bf16.gmra.mrb[0].mxu0 %v5835
        %v6097 = vpop.f32.mrb[0].mxu0
        %v6098 = vadd.f32 %v5937, %v6097
        %v6099 = vpop.f32.mrb[0].mxu0
        %v6100 = vpop.f32.mrb[0].mxu0
        %v6101 = vadd.f32 %v5940, %v6100
        %v6102 = vpop.f32.mrb[0].mxu0
        %6103 = vmatprep.mubr.bf16.mxu0 0
        %6104 = vmatmul.mubr.bf16.gmra.mrb[0].mxu0 %v5838
        %v6105 = vpop.f32.mrb[0].mxu0
        %v6106 = vadd.f32 %v5945, %v6105
        %v6107 = vpop.f32.mrb[0].mxu0
        %v6108 = vpop.f32.mrb[0].mxu0
        %v6109 = vadd.f32 %v5948, %v6108
        %v6110 = vpop.f32.mrb[0].mxu0
        %6111 = vmatprep.mubr.bf16.mxu0 0
        %6112 = vmatmul.mubr.bf16.gmra.mrb[0].mxu0 %v5841
        %v6113 = vpop.f32.mrb[0].mxu0
        %v6114 = vadd.f32 %v5953, %v6113
        %v6115 = vpop.f32.mrb[0].mxu0
        %v6116 = vpop.f32.mrb[0].mxu0
        %v6117 = vadd.f32 %v5956, %v6116
        %v6118 = vpop.f32.mrb[0].mxu0
        %6119 = vmatprep.mubr.bf16.mxu0 0
        %6120 = vmatmul.mubr.bf16.gmra.mrb[0].mxu0 %v5844
        %v6121 = vpop.f32.mrb[0].mxu0
        %v6122 = vadd.f32 %v5961, %v6121
        %v6123 = vpop.f32.mrb[0].mxu0
        %v6124 = vpop.f32.mrb[0].mxu0
        %v6125 = vadd.f32 %v5964, %v6124
        %v6126 = vpop.f32.mrb[0].mxu0
        %6127 = vmatprep.mubr.bf16.mxu0 0
        %6128 = vmatmul.mubr.bf16.gmra.mrb[0].mxu0 %v5847
        %v6129 = vpop.f32.mrb[0].mxu0
        %v6130 = vadd.f32 %v5969, %v6129
        %v6131 = vpop.f32.mrb[0].mxu0
        %v6132 = vpop.f32.mrb[0].mxu0
        %v6133 = vadd.f32 %v5972, %v6132
        %v6134 = vpop.f32.mrb[0].mxu0
        %6135 = vmatprep.mubr.bf16.mxu0 0
        %6136 = vmatmul.mubr.bf16.gmra.mrb[0].mxu0 %v5850
        %v6137 = vpop.f32.mrb[0].mxu0
        %v6138 = vadd.f32 %v5977, %v6137
        %v6139 = vpop.f32.mrb[0].mxu0
        %v6140 = vpop.f32.mrb[0].mxu0
        %v6141 = vadd.f32 %v5980, %v6140
        %v6142 = vpop.f32.mrb[0].mxu0
        %6143 = vmatprep.mubr.bf16.mxu0 0
        %6144 = vmatmul.mubr.bf16.gmra.mrb[0].mxu0 %v5853
        %v6145 = vpop.f32.mrb[0].mxu0
        %v6146 = vadd.f32 %v5985, %v6145
        %v6147 = vpop.f32.mrb[0].mxu0
        %v6148 = vpop.f32.mrb[0].mxu0
        %v6149 = vadd.f32 %v5988, %v6148
        %v6150 = vpop.f32.mrb[0].mxu0
        %6151 = vmatprep.mubr.bf16.mxu0 0
        %6152 = vmatmul.mubr.bf16.gmra.mrb[0].mxu0 %v5856
        %v6153 = vpop.f32.mrb[0].mxu0
        %v6154 = vadd.f32 %v5993, %v6153
        %v6155 = vpop.f32.mrb[0].mxu0
        %v6156 = vpop.f32.mrb[0].mxu0
        %v6157 = vadd.f32 %v5996, %v6156
        %v6158 = vpop.f32.mrb[0].mxu0
        %6159 = vmatprep.mubr.bf16.mxu0 0
        %6160 = vmatmul.mubr.bf16.gmra.mrb[0].mxu0 %v5859
        %v6161 = vpop.f32.mrb[0].mxu0
        %v6162 = vadd.f32 %v6001, %v6161
        %v6163 = vpop.f32.mrb[0].mxu0
        %v6164 = vpop.f32.mrb[0].mxu0
        %v6165 = vadd.f32 %v6004, %v6164
        %v6166 = vpop.f32.mrb[0].mxu0
        %6167 = vmatprep.mubr.bf16.mxu0 0
        %6168 = vmatmul.mubr.bf16.gmra.mrb[0].mxu0 %v5862
        %v6169 = vpop.f32.mrb[0].mxu0
        %v6170 = vadd.f32 %v6009, %v6169
        %v6171 = vpop.f32.mrb[0].mxu0
        %v6172 = vpop.f32.mrb[0].mxu0
        %v6173 = vadd.f32 %v6012, %v6172
        %v6174 = vpop.f32.mrb[0].mxu0
        %6175 = vmatprep.mubr.bf16.mxu0 0
        %6176 = vmatmul.mubr.bf16.gmra.mrb[0].mxu0 %v5865
        %v6177 = vpop.f32.mrb[0].mxu0
        %v6178 = vadd.f32 %v6017, %v6177
        %v6179 = vpop.f32.mrb[0].mxu0
        %v6180 = vpop.f32.mrb[0].mxu0
        %v6181 = vadd.f32 %v6020, %v6180
        %v6182 = vpop.f32.mrb[0].mxu0
        %6183 = vmatprep.mubr.bf16.mxu0 0
        %6184 = vmatmul.mubr.bf16.gmra.mrb[0].mxu0 %v5868
        %v6185 = vpop.f32.mrb[0].mxu0
        %v6186 = vadd.f32 %v6025, %v6185
        %v6187 = vpop.f32.mrb[0].mxu0
        %v6188 = vpop.f32.mrb[0].mxu0
        %v6189 = vadd.f32 %v6028, %v6188
        %v6190 = vpop.f32.mrb[0].mxu0
        %6191 = vdwg.mxu0
        %v6192 = vsel %vm3194, %v6066, 0.0
        %v6193 = vsel %vm3194, %v6069, 0.0
        %v6194 = vadd.f32 %v6192, %v6193
        %v6195 = vsel %vm3194, %v6074, 0.0
        %v6196 = vadd.f32 %v6194, %v6195
        %v6197 = vsel %vm3194, %v6077, 0.0
        %v6198 = vadd.f32 %v6196, %v6197
        %v6199 = vsel %vm3194, %v6082, 0.0
        %v6200 = vadd.f32 %v6198, %v6199
        %v6201 = vsel %vm3194, %v6085, 0.0
        %v6202 = vadd.f32 %v6200, %v6201
        %v6203 = vsel %vm3194, %v6090, 0.0
        %v6204 = vadd.f32 %v6202, %v6203
        %v6205 = vsel %vm3194, %v6093, 0.0
        %v6206 = vadd.f32 %v6204, %v6205
        %v6207 = vsel %vm3194, %v6098, 0.0
        %v6208 = vadd.f32 %v6206, %v6207
        %v6209 = vsel %vm3194, %v6101, 0.0
        %v6210 = vadd.f32 %v6208, %v6209
        %v6211 = vsel %vm3194, %v6106, 0.0
        %v6212 = vadd.f32 %v6210, %v6211
        %v6213 = vsel %vm3194, %v6109, 0.0
        %v6214 = vadd.f32 %v6212, %v6213
        %v6215 = vsel %vm3194, %v6114, 0.0
        %v6216 = vadd.f32 %v6214, %v6215
        %v6217 = vsel %vm3194, %v6117, 0.0
        %v6218 = vadd.f32 %v6216, %v6217
        %v6219 = vsel %vm3194, %v6122, 0.0
        %v6220 = vadd.f32 %v6218, %v6219
        %v6221 = vsel %vm3194, %v6125, 0.0
        %v6222 = vadd.f32 %v6220, %v6221
        %v6223 = vsel %vm3194, %v6130, 0.0
        %v6224 = vadd.f32 %v6222, %v6223
        %v6225 = vsel %vm3194, %v6133, 0.0
        %v6226 = vadd.f32 %v6224, %v6225
        %v6227 = vsel %vm3194, %v6138, 0.0
        %v6228 = vadd.f32 %v6226, %v6227
        %v6229 = vsel %vm3194, %v6141, 0.0
        %v6230 = vadd.f32 %v6228, %v6229
        %v6231 = vsel %vm3194, %v6146, 0.0
        %v6232 = vadd.f32 %v6230, %v6231
        %v6233 = vsel %vm3194, %v6149, 0.0
        %v6234 = vadd.f32 %v6232, %v6233
        %v6235 = vsel %vm3194, %v6154, 0.0
        %v6236 = vadd.f32 %v6234, %v6235
        %v6237 = vsel %vm3194, %v6157, 0.0
        %v6238 = vadd.f32 %v6236, %v6237
        %v6239 = vsel %vm3194, %v6162, 0.0
        %v6240 = vadd.f32 %v6238, %v6239
        %v6241 = vsel %vm3194, %v6165, 0.0
        %v6242 = vadd.f32 %v6240, %v6241
        %v6243 = vsel %vm3194, %v6170, 0.0
        %v6244 = vadd.f32 %v6242, %v6243
        %v6245 = vsel %vm3194, %v6173, 0.0
        %v6246 = vadd.f32 %v6244, %v6245
        %v6247 = vsel %vm3194, %v6178, 0.0
        %v6248 = vadd.f32 %v6246, %v6247
        %v6249 = vsel %vm3194, %v6181, 0.0
        %v6250 = vadd.f32 %v6248, %v6249
        %v6251 = vsel %vm3194, %v6186, 0.0
        %v6252 = vadd.f32 %v6250, %v6251
        %v6253 = vsel %vm3194, %v6189, 0.0
        %v6254 = vadd.f32 %v6252, %v6253
        %v6255 = vrot.slane %v6254, 4
        %v6256 = vadd.f32 %v6254, %v6255
        %v6257 = vrot.slane %v6256, 2
        %v6258 = vadd.f32 %v6256, %v6257
        %v6259 = vrot.slane %v6258, 1
        %v6260 = vadd.f32 %v6258, %v6259
        %v6261 = vmul.f32 %v6260, %v4020
        %v6262 = vsub.f32 %v6066, %v6261
        %v6263 = vsub.f32 %v6069, %v6261
        %v6264 = vsub.f32 %v6074, %v6261
        %v6265 = vsub.f32 %v6077, %v6261
        %v6266 = vsub.f32 %v6082, %v6261
        %v6267 = vsub.f32 %v6085, %v6261
        %v6268 = vsub.f32 %v6090, %v6261
        %v6269 = vsub.f32 %v6093, %v6261
        %v6270 = vsub.f32 %v6098, %v6261
        %v6271 = vsub.f32 %v6101, %v6261
        %v6272 = vsub.f32 %v6106, %v6261
        %v6273 = vsub.f32 %v6109, %v6261
        %v6274 = vsub.f32 %v6114, %v6261
        %v6275 = vsub.f32 %v6117, %v6261
        %v6276 = vsub.f32 %v6122, %v6261
        %v6277 = vsub.f32 %v6125, %v6261
        %v6278 = vsub.f32 %v6130, %v6261
        %v6279 = vsub.f32 %v6133, %v6261
        %v6280 = vsub.f32 %v6138, %v6261
        %v6281 = vsub.f32 %v6141, %v6261
        %v6282 = vsub.f32 %v6146, %v6261
        %v6283 = vsub.f32 %v6149, %v6261
        %v6284 = vsub.f32 %v6154, %v6261
        %v6285 = vsub.f32 %v6157, %v6261
        %v6286 = vsub.f32 %v6162, %v6261
        %v6287 = vsub.f32 %v6165, %v6261
        %v6288 = vsub.f32 %v6170, %v6261
        %v6289 = vsub.f32 %v6173, %v6261
        %v6290 = vsub.f32 %v6178, %v6261
        %v6291 = vsub.f32 %v6181, %v6261
        %v6292 = vsub.f32 %v6186, %v6261
        %v6293 = vsub.f32 %v6189, %v6261
        %v6294 = vmul.f32 %v6262, %v6262
        %v6295 = vmul.f32 %v6263, %v6263
        %v6296 = vmul.f32 %v6264, %v6264
        %v6297 = vmul.f32 %v6265, %v6265
        %v6298 = vmul.f32 %v6266, %v6266
        %v6299 = vmul.f32 %v6267, %v6267
        %v6300 = vmul.f32 %v6268, %v6268
        %v6301 = vmul.f32 %v6269, %v6269
        %v6302 = vmul.f32 %v6270, %v6270
        %v6303 = vmul.f32 %v6271, %v6271
        %v6304 = vmul.f32 %v6272, %v6272
        %v6305 = vmul.f32 %v6273, %v6273
        %v6306 = vmul.f32 %v6274, %v6274
        %v6307 = vmul.f32 %v6275, %v6275
        %v6308 = vmul.f32 %v6276, %v6276
        %v6309 = vmul.f32 %v6277, %v6277
        %v6310 = vmul.f32 %v6278, %v6278
        %v6311 = vmul.f32 %v6279, %v6279
        %v6312 = vmul.f32 %v6280, %v6280
        %v6313 = vmul.f32 %v6281, %v6281
        %v6314 = vmul.f32 %v6282, %v6282
        %v6315 = vmul.f32 %v6283, %v6283
        %v6316 = vmul.f32 %v6284, %v6284
        %v6317 = vmul.f32 %v6285, %v6285
        %v6318 = vmul.f32 %v6286, %v6286
        %v6319 = vmul.f32 %v6287, %v6287
        %v6320 = vmul.f32 %v6288, %v6288
        %v6321 = vmul.f32 %v6289, %v6289
        %v6322 = vmul.f32 %v6290, %v6290
        %v6323 = vmul.f32 %v6291, %v6291
        %v6324 = vmul.f32 %v6292, %v6292
        %v6325 = vmul.f32 %v6293, %v6293
        %v6326 = vsel %vm3194, %v6294, 0.0
        %v6327 = vsel %vm3194, %v6295, 0.0
        %v6328 = vadd.f32 %v6326, %v6327
        %v6329 = vsel %vm3194, %v6296, 0.0
        %v6330 = vadd.f32 %v6328, %v6329
        %v6331 = vsel %vm3194, %v6297, 0.0
        %v6332 = vadd.f32 %v6330, %v6331
        %v6333 = vsel %vm3194, %v6298, 0.0
        %v6334 = vadd.f32 %v6332, %v6333
        %v6335 = vsel %vm3194, %v6299, 0.0
        %v6336 = vadd.f32 %v6334, %v6335
        %v6337 = vsel %vm3194, %v6300, 0.0
        %v6338 = vadd.f32 %v6336, %v6337
        %v6339 = vsel %vm3194, %v6301, 0.0
        %v6340 = vadd.f32 %v6338, %v6339
        %v6341 = vsel %vm3194, %v6302, 0.0
        %v6342 = vadd.f32 %v6340, %v6341
        %v6343 = vsel %vm3194, %v6303, 0.0
        %v6344 = vadd.f32 %v6342, %v6343
        %v6345 = vsel %vm3194, %v6304, 0.0
        %v6346 = vadd.f32 %v6344, %v6345
        %v6347 = vsel %vm3194, %v6305, 0.0
        %v6348 = vadd.f32 %v6346, %v6347
        %v6349 = vsel %vm3194, %v6306, 0.0
        %v6350 = vadd.f32 %v6348, %v6349
        %v6351 = vsel %vm3194, %v6307, 0.0
        %v6352 = vadd.f32 %v6350, %v6351
        %v6353 = vsel %vm3194, %v6308, 0.0
        %v6354 = vadd.f32 %v6352, %v6353
        %v6355 = vsel %vm3194, %v6309, 0.0
        %v6356 = vadd.f32 %v6354, %v6355
        %v6357 = vsel %vm3194, %v6310, 0.0
        %v6358 = vadd.f32 %v6356, %v6357
        %v6359 = vsel %vm3194, %v6311, 0.0
        %v6360 = vadd.f32 %v6358, %v6359
        %v6361 = vsel %vm3194, %v6312, 0.0
        %v6362 = vadd.f32 %v6360, %v6361
        %v6363 = vsel %vm3194, %v6313, 0.0
        %v6364 = vadd.f32 %v6362, %v6363
        %v6365 = vsel %vm3194, %v6314, 0.0
        %v6366 = vadd.f32 %v6364, %v6365
        %v6367 = vsel %vm3194, %v6315, 0.0
        %v6368 = vadd.f32 %v6366, %v6367
        %v6369 = vsel %vm3194, %v6316, 0.0
        %v6370 = vadd.f32 %v6368, %v6369
        %v6371 = vsel %vm3194, %v6317, 0.0
        %v6372 = vadd.f32 %v6370, %v6371
        %v6373 = vsel %vm3194, %v6318, 0.0
        %v6374 = vadd.f32 %v6372, %v6373
        %v6375 = vsel %vm3194, %v6319, 0.0
        %v6376 = vadd.f32 %v6374, %v6375
        %v6377 = vsel %vm3194, %v6320, 0.0
        %v6378 = vadd.f32 %v6376, %v6377
        %v6379 = vsel %vm3194, %v6321, 0.0
        %v6380 = vadd.f32 %v6378, %v6379
        %v6381 = vsel %vm3194, %v6322, 0.0
        %v6382 = vadd.f32 %v6380, %v6381
        %v6383 = vsel %vm3194, %v6323, 0.0
        %v6384 = vadd.f32 %v6382, %v6383
        %v6385 = vsel %vm3194, %v6324, 0.0
        %v6386 = vadd.f32 %v6384, %v6385
        %v6387 = vsel %vm3194, %v6325, 0.0
        %v6388 = vadd.f32 %v6386, %v6387
        %v6389 = vrot.slane %v6388, 4
        %v6390 = vadd.f32 %v6388, %v6389
        %v6391 = vrot.slane %v6390, 2
        %v6392 = vadd.f32 %v6390, %v6391
        %v6393 = vrot.slane %v6392, 1
        %v6394 = vadd.f32 %v6392, %v6393
        %v6395 = vmul.f32 %v6394, %v4020
        %v6396 = vadd.f32 %v6395, 1e-05
        %v6397 = vrsqrt.pop %v6396
        %v6398 = vmul.f32 %v6262, %v6397
        %v6399 = vmul.f32 %v6263, %v6397
        %v6400 = vmul.f32 %v6264, %v6397
        %v6401 = vmul.f32 %v6265, %v6397
        %v6402 = vmul.f32 %v6266, %v6397
        %v6403 = vmul.f32 %v6267, %v6397
        %v6404 = vmul.f32 %v6268, %v6397
        %v6405 = vmul.f32 %v6269, %v6397
        %v6406 = vmul.f32 %v6270, %v6397
        %v6407 = vmul.f32 %v6271, %v6397
        %v6408 = vmul.f32 %v6272, %v6397
        %v6409 = vmul.f32 %v6273, %v6397
        %v6410 = vmul.f32 %v6274, %v6397
        %v6411 = vmul.f32 %v6275, %v6397
        %v6412 = vmul.f32 %v6276, %v6397
        %v6413 = vmul.f32 %v6277, %v6397
        %v6414 = vmul.f32 %v6278, %v6397
        %v6415 = vmul.f32 %v6279, %v6397
        %v6416 = vmul.f32 %v6280, %v6397
        %v6417 = vmul.f32 %v6281, %v6397
        %v6418 = vmul.f32 %v6282, %v6397
        %v6419 = vmul.f32 %v6283, %v6397
        %v6420 = vmul.f32 %v6284, %v6397
        %v6421 = vmul.f32 %v6285, %v6397
        %v6422 = vmul.f32 %v6286, %v6397
        %v6423 = vmul.f32 %v6287, %v6397
        %v6424 = vmul.f32 %v6288, %v6397
        %v6425 = vmul.f32 %v6289, %v6397
        %v6426 = vmul.f32 %v6290, %v6397
        %v6427 = vmul.f32 %v6291, %v6397
        %v6428 = vmul.f32 %v6292, %v6397
        %v6429 = vmul.f32 %v6293, %v6397
        %v6430 = vsel %vm3194, %v6398, 0.0
        %v6431 = vsel %vm3194, %v6399, 0.0
        %v6432 = vadd.f32 %v6430, %v6431
        %v6433 = vsel %vm3194, %v6400, 0.0
        %v6434 = vadd.f32 %v6432, %v6433
        %v6435 = vsel %vm3194, %v6401, 0.0
        %v6436 = vadd.f32 %v6434, %v6435
        %v6437 = vsel %vm3194, %v6402, 0.0
        %v6438 = vadd.f32 %v6436, %v6437
        %v6439 = vsel %vm3194, %v6403, 0.0
        %v6440 = vadd.f32 %v6438, %v6439
        %v6441 = vsel %vm3194, %v6404, 0.0
        %v6442 = vadd.f32 %v6440, %v6441
        %v6443 = vsel %vm3194, %v6405, 0.0
        %v6444 = vadd.f32 %v6442, %v6443
        %v6445 = vsel %vm3194, %v6406, 0.0
        %v6446 = vadd.f32 %v6444, %v6445
        %v6447 = vsel %vm3194, %v6407, 0.0
        %v6448 = vadd.f32 %v6446, %v6447
        %v6449 = vsel %vm3194, %v6408, 0.0
        %v6450 = vadd.f32 %v6448, %v6449
        %v6451 = vsel %vm3194, %v6409, 0.0
        %v6452 = vadd.f32 %v6450, %v6451
        %v6453 = vsel %vm3194, %v6410, 0.0
        %v6454 = vadd.f32 %v6452, %v6453
        %v6455 = vsel %vm3194, %v6411, 0.0
        %v6456 = vadd.f32 %v6454, %v6455
        %v6457 = vsel %vm3194, %v6412, 0.0
        %v6458 = vadd.f32 %v6456, %v6457
        %v6459 = vsel %vm3194, %v6413, 0.0
        %v6460 = vadd.f32 %v6458, %v6459
        %v6461 = vsel %vm3194, %v6414, 0.0
        %v6462 = vadd.f32 %v6460, %v6461
        %v6463 = vsel %vm3194, %v6415, 0.0
        %v6464 = vadd.f32 %v6462, %v6463
        %v6465 = vsel %vm3194, %v6416, 0.0
        %v6466 = vadd.f32 %v6464, %v6465
        %v6467 = vsel %vm3194, %v6417, 0.0
        %v6468 = vadd.f32 %v6466, %v6467
        %v6469 = vsel %vm3194, %v6418, 0.0
        %v6470 = vadd.f32 %v6468, %v6469
        %v6471 = vsel %vm3194, %v6419, 0.0
        %v6472 = vadd.f32 %v6470, %v6471
        %v6473 = vsel %vm3194, %v6420, 0.0
        %v6474 = vadd.f32 %v6472, %v6473
        %v6475 = vsel %vm3194, %v6421, 0.0
        %v6476 = vadd.f32 %v6474, %v6475
        %v6477 = vsel %vm3194, %v6422, 0.0
        %v6478 = vadd.f32 %v6476, %v6477
        %v6479 = vsel %vm3194, %v6423, 0.0
        %v6480 = vadd.f32 %v6478, %v6479
        %v6481 = vsel %vm3194, %v6424, 0.0
        %v6482 = vadd.f32 %v6480, %v6481
        %v6483 = vsel %vm3194, %v6425, 0.0
        %v6484 = vadd.f32 %v6482, %v6483
        %v6485 = vsel %vm3194, %v6426, 0.0
        %v6486 = vadd.f32 %v6484, %v6485
        %v6487 = vsel %vm3194, %v6427, 0.0
        %v6488 = vadd.f32 %v6486, %v6487
        %v6489 = vsel %vm3194, %v6428, 0.0
        %v6490 = vadd.f32 %v6488, %v6489
        %v6491 = vsel %vm3194, %v6429, 0.0
        %v6492 = vadd.f32 %v6490, %v6491
        %v6493 = vrot.slane %v6492, 4
        %v6494 = vadd.f32 %v6492, %v6493
        %v6495 = vrot.slane %v6494, 2
        %v6496 = vadd.f32 %v6494, %v6495
        %v6497 = vrot.slane %v6496, 1
        %v6498 = vadd.f32 %v6496, %v6497
        %v6499 = vmul.f32 %v6498, %v4020
        %v6500 = vpack.c.bf16 %v6499, %v6499
        %v6501 = vld [vmem:[%s4] sm:$0xf]
        %v6502 = vld [vmem:[%s4 + $0x4] sm:$0xf]
        %v6503 = vld [vmem:[%s4 + $0x8] sm:$0xf]
        %v6504 = vld [vmem:[%s4 + $0xc] sm:$0xf]
        %v6509 = vunpack.c.l.b16 %v6501
        %v6510 = vunpack.c.l.b16 %v6502
        %v6511 = vunpack.c.l.b16 %v6503
        %v6512 = vunpack.c.l.b16 %v6504
        %v6513 = vpack.c.b16 %v6510, %v6509
        %v6514 = vpack.c.b16 %v6512, %v6511
        %v6518 = vsel %vm3194, %v6500, 0
        %6520 = vmatprep.subr.bf16.mxu0 0
        %6521 = vmatpush1.bf16.msra.mxu0 %v6513
        %6522 = vmatprep.subr.bf16.mxu0 0
        %6523 = vmatpush1.bf16.msra.mxu0 %v6514
        %6524 = vmatprep.subr.bf16.mxu0 0
        %6525 = vmatpush1.bf16.msra.mxu0 0
        %6526 = vmatprep.subr.bf16.mxu0 0
        %6527 = vmatpush1.bf16.msra.mxu0 0
        %6528 = vmatprep.subr.bf16.mxu0 0
        %6529 = vmatpush1.bf16.msra.mxu0 0
        %6530 = vmatprep.subr.bf16.mxu0 0
        %6531 = vmatpush1.bf16.msra.mxu0 0
        %6532 = vmatprep.subr.bf16.mxu0 0
        %6533 = vmatpush1.bf16.msra.mxu0 0
        %6534 = vmatprep.subr.bf16.mxu0 0
        %6535 = vmatpush1.bf16.msra.mxu0 0
        %6536 = vmatprep.subr.bf16.mxu0 0
        %6537 = vmatpush1.bf16.msra.mxu0 0
        %6538 = vmatprep.subr.bf16.mxu0 0
        %6539 = vmatpush1.bf16.msra.mxu0 0
        %6540 = vmatprep.subr.bf16.mxu0 0
        %6541 = vmatpush1.bf16.msra.mxu0 0
        %6542 = vmatprep.subr.bf16.mxu0 0
        %6543 = vmatpush1.bf16.msra.mxu0 0
        %6544 = vmatprep.subr.bf16.mxu0 0
        %6545 = vmatpush1.bf16.msra.mxu0 0
        %6546 = vmatprep.subr.bf16.mxu0 0
        %6547 = vmatpush1.bf16.msra.mxu0 0
        %6548 = vmatprep.subr.bf16.mxu0 0
        %6549 = vmatpush1.bf16.msra.mxu0 0
        %6550 = vmatprep.subr.bf16.mxu0 0
        %6551 = vmatpush1.bf16.msra.mxu0 0
        %6552 = vmatprep.mubr.bf16.mxu0 0
        %6553 = vmatmul.mubr.bf16.gmra.mrb[0].mxu0 %v6518
        %v6554 = vpop.f32.mrb[0].mxu0
        %v6555 = vadd.f32 0.0, %v6554
        %v6556 = vpop.f32.mrb[0].mxu0
        %v6557 = vpop.f32.mrb[0].mxu0
        %v6558 = vpop.f32.mrb[0].mxu0
        %6559 = vdwg.mxu0
        %v6560 = vmax.f32 %v6555, 0.0
        %v6561 = vpack.c.bf16 %v6560, %v6560
        %v6562 = vld [vmem:[%s5] sm:$0x1]
        %vm6563 = vcmask 15360
        %v6565 = vsel %vm6563, %v6561, 0
        %vm6567 = vcmask 1040384
        %v6569 = vsel %vm6567, %v6562, 0
        %6571 = vmatprep.subr.bf16.mxu0 0
        %6572 = vmatpush1.bf16.msra.mxu0 %v6569
        %6573 = vmatprep.subr.bf16.mxu0 0
        %6574 = vmatpush1.bf16.msra.mxu0 0
        %6575 = vmatprep.subr.bf16.mxu0 0
        %6576 = vmatpush1.bf16.msra.mxu0 0
        %6577 = vmatprep.subr.bf16.mxu0 0
        %6578 = vmatpush1.bf16.msra.mxu0 0
        %6579 = vmatprep.subr.bf16.mxu0 0
        %6580 = vmatpush1.bf16.msra.mxu0 0
        %6581 = vmatprep.subr.bf16.mxu0 0
        %6582 = vmatpush1.bf16.msra.mxu0 0
        %6583 = vmatprep.subr.bf16.mxu0 0
        %6584 = vmatpush1.bf16.msra.mxu0 0
        %6585 = vmatprep.subr.bf16.mxu0 0
        %6586 = vmatpush1.bf16.msra.mxu0 0
        %6587 = vmatprep.subr.bf16.mxu0 0
        %6588 = vmatpush1.bf16.msra.mxu0 0
        %6589 = vmatprep.subr.bf16.mxu0 0
        %6590 = vmatpush1.bf16.msra.mxu0 0
        %6591 = vmatprep.subr.bf16.mxu0 0
        %6592 = vmatpush1.bf16.msra.mxu0 0
        %6593 = vmatprep.subr.bf16.mxu0 0
        %6594 = vmatpush1.bf16.msra.mxu0 0
        %6595 = vmatprep.subr.bf16.mxu0 0
        %6596 = vmatpush1.bf16.msra.mxu0 0
        %6597 = vmatprep.subr.bf16.mxu0 0
        %6598 = vmatpush1.bf16.msra.mxu0 0
        %6599 = vmatprep.subr.bf16.mxu0 0
        %6600 = vmatpush1.bf16.msra.mxu0 0
        %6601 = vmatprep.subr.bf16.mxu0 0
        %6602 = vmatpush1.bf16.msra.mxu0 0
        %6603 = vmatprep.mubr.bf16.mxu0 0
        %6604 = vmatmul.mubr.bf16.gmra.mrb[0].mxu0 %v6565
        %v6605 = vpop.f32.mrb[0].mxu0
        %v6606 = vadd.f32 0.0, %v6605
        %v6607 = vpop.f32.mrb[0].mxu0
        %v6608 = vpop.f32.mrb[0].mxu0
        %v6609 = vpop.f32.mrb[0].mxu0
        %6610 = vdwg.mxu0
        %v6611 = vsub.f32 0.0, %v6606
        %v6612 = vmul.f32 %v6611, 1.442695
        %v6613 = vpow.pop %v6612
        %v6614 = vadd.f32 %v6613, 1.0
        %v6615 = vrcp.pop %v6614
        %v6616 = vmul.f32 1.0, %v6615
        %v6617 = vlaneseq
        %v6618 = vshrl.u32 %v6617, 7
        %v6619 = vsub.s32 0, %v6618
        %v6620 = vrot.slane %v6616, %v6619
        %v6621 = vmul.f32 %v6398, %v6620
        %v6622 = vmul.f32 %v6399, %v6620
        %v6623 = vmul.f32 %v6400, %v6620
        %v6624 = vmul.f32 %v6401, %v6620
        %v6625 = vmul.f32 %v6402, %v6620
        %v6626 = vmul.f32 %v6403, %v6620
        %v6627 = vmul.f32 %v6404, %v6620
        %v6628 = vmul.f32 %v6405, %v6620
        %v6629 = vmul.f32 %v6406, %v6620
        %v6630 = vmul.f32 %v6407, %v6620
        %v6631 = vmul.f32 %v6408, %v6620
        %v6632 = vmul.f32 %v6409, %v6620
        %v6633 = vmul.f32 %v6410, %v6620
        %v6634 = vmul.f32 %v6411, %v6620
        %v6635 = vmul.f32 %v6412, %v6620
        %v6636 = vmul.f32 %v6413, %v6620
        %v6637 = vmul.f32 %v6414, %v6620
        %v6638 = vmul.f32 %v6415, %v6620
        %v6639 = vmul.f32 %v6416, %v6620
        %v6640 = vmul.f32 %v6417, %v6620
        %v6641 = vmul.f32 %v6418, %v6620
        %v6642 = vmul.f32 %v6419, %v6620
        %v6643 = vmul.f32 %v6420, %v6620
        %v6644 = vmul.f32 %v6421, %v6620
        %v6645 = vmul.f32 %v6422, %v6620
        %v6646 = vmul.f32 %v6423, %v6620
        %v6647 = vmul.f32 %v6424, %v6620
        %v6648 = vmul.f32 %v6425, %v6620
        %v6649 = vmul.f32 %v6426, %v6620
        %v6650 = vmul.f32 %v6427, %v6620
        %v6651 = vmul.f32 %v6428, %v6620
        %v6652 = vmul.f32 %v6429, %v6620
        %v6653 = vadd.f32 %v6621, %v283
        %v6654 = vadd.f32 %v6622, %v284
        %v6655 = vadd.f32 %v6623, %v285
        %v6656 = vadd.f32 %v6624, %v286
        %v6657 = vadd.f32 %v6625, %v287
        %v6658 = vadd.f32 %v6626, %v288
        %v6659 = vadd.f32 %v6627, %v289
        %v6660 = vadd.f32 %v6628, %v290
        %v6661 = vadd.f32 %v6629, %v291
        %v6662 = vadd.f32 %v6630, %v292
        %v6663 = vadd.f32 %v6631, %v293
        %v6664 = vadd.f32 %v6632, %v294
        %v6665 = vadd.f32 %v6633, %v295
        %v6666 = vadd.f32 %v6634, %v296
        %v6667 = vadd.f32 %v6635, %v297
        %v6668 = vadd.f32 %v6636, %v298
        %v6669 = vadd.f32 %v6637, %v299
        %v6670 = vadd.f32 %v6638, %v300
        %v6671 = vadd.f32 %v6639, %v301
        %v6672 = vadd.f32 %v6640, %v302
        %v6673 = vadd.f32 %v6641, %v303
        %v6674 = vadd.f32 %v6642, %v304
        %v6675 = vadd.f32 %v6643, %v305
        %v6676 = vadd.f32 %v6644, %v306
        %v6677 = vadd.f32 %v6645, %v307
        %v6678 = vadd.f32 %v6646, %v308
        %v6679 = vadd.f32 %v6647, %v309
        %v6680 = vadd.f32 %v6648, %v310
        %v6681 = vadd.f32 %v6649, %v311
        %v6682 = vadd.f32 %v6650, %v312
        %v6683 = vadd.f32 %v6651, %v313
        %v6684 = vadd.f32 %v6652, %v314
        %vm6685 = vcmp.ge.f32.partialorder %v6653, 0.0
        %vm6686 = vcmp.ge.f32.partialorder %v6654, 0.0
        %vm6687 = vcmp.ge.f32.partialorder %v6655, 0.0
        %vm6688 = vcmp.ge.f32.partialorder %v6656, 0.0
        %vm6689 = vcmp.ge.f32.partialorder %v6657, 0.0
        %vm6690 = vcmp.ge.f32.partialorder %v6658, 0.0
        %vm6691 = vcmp.ge.f32.partialorder %v6659, 0.0
        %vm6692 = vcmp.ge.f32.partialorder %v6660, 0.0
        %vm6693 = vcmp.ge.f32.partialorder %v6661, 0.0
        %vm6694 = vcmp.ge.f32.partialorder %v6662, 0.0
        %vm6695 = vcmp.ge.f32.partialorder %v6663, 0.0
        %vm6696 = vcmp.ge.f32.partialorder %v6664, 0.0
        %vm6697 = vcmp.ge.f32.partialorder %v6665, 0.0
        %vm6698 = vcmp.ge.f32.partialorder %v6666, 0.0
        %vm6699 = vcmp.ge.f32.partialorder %v6667, 0.0
        %vm6700 = vcmp.ge.f32.partialorder %v6668, 0.0
        %vm6701 = vcmp.ge.f32.partialorder %v6669, 0.0
        %vm6702 = vcmp.ge.f32.partialorder %v6670, 0.0
        %vm6703 = vcmp.ge.f32.partialorder %v6671, 0.0
        %vm6704 = vcmp.ge.f32.partialorder %v6672, 0.0
        %vm6705 = vcmp.ge.f32.partialorder %v6673, 0.0
        %vm6706 = vcmp.ge.f32.partialorder %v6674, 0.0
        %vm6707 = vcmp.ge.f32.partialorder %v6675, 0.0
        %vm6708 = vcmp.ge.f32.partialorder %v6676, 0.0
        %vm6709 = vcmp.ge.f32.partialorder %v6677, 0.0
        %vm6710 = vcmp.ge.f32.partialorder %v6678, 0.0
        %vm6711 = vcmp.ge.f32.partialorder %v6679, 0.0
        %vm6712 = vcmp.ge.f32.partialorder %v6680, 0.0
        %vm6713 = vcmp.ge.f32.partialorder %v6681, 0.0
        %vm6714 = vcmp.ge.f32.partialorder %v6682, 0.0
        %vm6715 = vcmp.ge.f32.partialorder %v6683, 0.0
        %vm6716 = vcmp.ge.f32.partialorder %v6684, 0.0
        %v6717 = vmul.f32 %v6653, 0.01
        %v6718 = vmul.f32 %v6654, 0.01
        %v6719 = vmul.f32 %v6655, 0.01
        %v6720 = vmul.f32 %v6656, 0.01
        %v6721 = vmul.f32 %v6657, 0.01
        %v6722 = vmul.f32 %v6658, 0.01
        %v6723 = vmul.f32 %v6659, 0.01
        %v6724 = vmul.f32 %v6660, 0.01
        %v6725 = vmul.f32 %v6661, 0.01
        %v6726 = vmul.f32 %v6662, 0.01
        %v6727 = vmul.f32 %v6663, 0.01
        %v6728 = vmul.f32 %v6664, 0.01
        %v6729 = vmul.f32 %v6665, 0.01
        %v6730 = vmul.f32 %v6666, 0.01
        %v6731 = vmul.f32 %v6667, 0.01
        %v6732 = vmul.f32 %v6668, 0.01
        %v6733 = vmul.f32 %v6669, 0.01
        %v6734 = vmul.f32 %v6670, 0.01
        %v6735 = vmul.f32 %v6671, 0.01
        %v6736 = vmul.f32 %v6672, 0.01
        %v6737 = vmul.f32 %v6673, 0.01
        %v6738 = vmul.f32 %v6674, 0.01
        %v6739 = vmul.f32 %v6675, 0.01
        %v6740 = vmul.f32 %v6676, 0.01
        %v6741 = vmul.f32 %v6677, 0.01
        %v6742 = vmul.f32 %v6678, 0.01
        %v6743 = vmul.f32 %v6679, 0.01
        %v6744 = vmul.f32 %v6680, 0.01
        %v6745 = vmul.f32 %v6681, 0.01
        %v6746 = vmul.f32 %v6682, 0.01
        %v6747 = vmul.f32 %v6683, 0.01
        %v6748 = vmul.f32 %v6684, 0.01
        %v6749 = vsel %vm6685, %v6653, %v6717
        %v6750 = vsel %vm6686, %v6654, %v6718
        %v6751 = vsel %vm6687, %v6655, %v6719
        %v6752 = vsel %vm6688, %v6656, %v6720
        %v6753 = vsel %vm6689, %v6657, %v6721
        %v6754 = vsel %vm6690, %v6658, %v6722
        %v6755 = vsel %vm6691, %v6659, %v6723
        %v6756 = vsel %vm6692, %v6660, %v6724
        %v6757 = vsel %vm6693, %v6661, %v6725
        %v6758 = vsel %vm6694, %v6662, %v6726
        %v6759 = vsel %vm6695, %v6663, %v6727
        %v6760 = vsel %vm6696, %v6664, %v6728
        %v6761 = vsel %vm6697, %v6665, %v6729
        %v6762 = vsel %vm6698, %v6666, %v6730
        %v6763 = vsel %vm6699, %v6667, %v6731
        %v6764 = vsel %vm6700, %v6668, %v6732
        %v6765 = vsel %vm6701, %v6669, %v6733
        %v6766 = vsel %vm6702, %v6670, %v6734
        %v6767 = vsel %vm6703, %v6671, %v6735
        %v6768 = vsel %vm6704, %v6672, %v6736
        %v6769 = vsel %vm6705, %v6673, %v6737
        %v6770 = vsel %vm6706, %v6674, %v6738
        %v6771 = vsel %vm6707, %v6675, %v6739
        %v6772 = vsel %vm6708, %v6676, %v6740
        %v6773 = vsel %vm6709, %v6677, %v6741
        %v6774 = vsel %vm6710, %v6678, %v6742
        %v6775 = vsel %vm6711, %v6679, %v6743
        %v6776 = vsel %vm6712, %v6680, %v6744
        %v6777 = vsel %vm6713, %v6681, %v6745
        %v6778 = vsel %vm6714, %v6682, %v6746
        %v6779 = vsel %vm6715, %v6683, %v6747
        %v6780 = vsel %vm6716, %v6684, %v6748
        %6781 = vst.msk [vmem:[%s244] sm:$0xff] %vm3194, %v6749
        %6782 = vst.msk [vmem:[%s244 + $0x8] sm:$0xff] %vm3194, %v6750
        %6783 = vst.msk [vmem:[%s244 + $0x10] sm:$0xff] %vm3194, %v6751
        %6784 = vst.msk [vmem:[%s244 + $0x18] sm:$0xff] %vm3194, %v6752
        %6785 = vst.msk [vmem:[%s244 + $0x20] sm:$0xff] %vm3194, %v6753
        %6786 = vst.msk [vmem:[%s244 + $0x28] sm:$0xff] %vm3194, %v6754
        %6787 = vst.msk [vmem:[%s244 + $0x30] sm:$0xff] %vm3194, %v6755
        %6788 = vst.msk [vmem:[%s244 + $0x38] sm:$0xff] %vm3194, %v6756
        %6789 = vst.msk [vmem:[%s244 + $0x40] sm:$0xff] %vm3194, %v6757
        %6790 = vst.msk [vmem:[%s244 + $0x48] sm:$0xff] %vm3194, %v6758
        %6791 = vst.msk [vmem:[%s244 + $0x50] sm:$0xff] %vm3194, %v6759
        %6792 = vst.msk [vmem:[%s244 + $0x58] sm:$0xff] %vm3194, %v6760
        %6793 = vst.msk [vmem:[%s244 + $0x60] sm:$0xff] %vm3194, %v6761
        %6794 = vst.msk [vmem:[%s244 + $0x68] sm:$0xff] %vm3194, %v6762
        %6795 = vst.msk [vmem:[%s244 + $0x70] sm:$0xff] %vm3194, %v6763
        %6796 = vst.msk [vmem:[%s244 + $0x78] sm:$0xff] %vm3194, %v6764
        %6797 = vst.msk [vmem:[%s244 + $0x80] sm:$0xff] %vm3194, %v6765
        %6798 = vst.msk [vmem:[%s244 + $0x88] sm:$0xff] %vm3194, %v6766
        %6799 = vst.msk [vmem:[%s244 + $0x90] sm:$0xff] %vm3194, %v6767
        %6800 = vst.msk [vmem:[%s244 + $0x98] sm:$0xff] %vm3194, %v6768
        %6801 = vst.msk [vmem:[%s244 + $0xa0] sm:$0xff] %vm3194, %v6769
        %6802 = vst.msk [vmem:[%s244 + $0xa8] sm:$0xff] %vm3194, %v6770
        %6803 = vst.msk [vmem:[%s244 + $0xb0] sm:$0xff] %vm3194, %v6771
        %6804 = vst.msk [vmem:[%s244 + $0xb8] sm:$0xff] %vm3194, %v6772
        %6805 = vst.msk [vmem:[%s244 + $0xc0] sm:$0xff] %vm3194, %v6773
        %6806 = vst.msk [vmem:[%s244 + $0xc8] sm:$0xff] %vm3194, %v6774
        %6807 = vst.msk [vmem:[%s244 + $0xd0] sm:$0xff] %vm3194, %v6775
        %6808 = vst.msk [vmem:[%s244 + $0xd8] sm:$0xff] %vm3194, %v6776
        %6809 = vst.msk [vmem:[%s244 + $0xe0] sm:$0xff] %vm3194, %v6777
        %6810 = vst.msk [vmem:[%s244 + $0xe8] sm:$0xff] %vm3194, %v6778
        %6811 = vst.msk [vmem:[%s244 + $0xf0] sm:$0xff] %vm3194, %v6779
        %6812 = vst.msk [vmem:[%s244 + $0xf8] sm:$0xff] %vm3194, %v6780
        %s6813 = sand.u32 %s159, 1
        %s6814 = scalar_lea.sflag [#allocation3], %s6813
        %s6815 = sand.u32 %s159, 1
        %s6816 = smul.addr %s6815, 256
        %s6817 = scalar_lea.vmem [#allocation2], %s6816
        // Predicated region
        $region45: #{pre_up_block.5} parent=43 // pred_check
          %p6818 = pneg %p169
        $region46: #{pre_up_block.5} parent=43 // pred_check_branch
          %6820 = sbr.rel (%p6818) target = $region48
        $region47: #{pre_up_block.5} parent=43 // pred_region
          %s6822 = ssub.s32 4096, 4096
          %6823 = vsyncadd %s6814, %s6822
          %s6824 = smul.addr %s20, 32
          %s6825 = smul.addr %s6824, 128
          %s6826 = scalar_lea.hbm %s6, %s6825
          %s6827 = sshll.u32 %s6817, 4
          %s6828 = int_to_ptr.vmem [resolvable:$true] %s6827
          %6833 = dma.vmem_to_hbm [thread:$0]  %s6828, 4096, %s6826, %s6814, 128, 128, 8
        $region48: #{pre_up_block.5} parent=43 // pred_fallthru
          _
      $region44: #{pre_up_block.5} parent=5 // pred_fallthru
        _
      %p6834 = scmp.le.s32.totalorder 2, %s15
      // Predicated region
      $region49: #{pre_up_block.5} parent=5 // pred_check
        %p6835 = pneg %p6834
      $region50: #{pre_up_block.5} parent=5 // pred_check_branch
        %6837 = sbr.rel (%p6835) target = $region52
      $region51: #{pre_up_block.5} parent=5 // pred_region
        %s6838 = ssub.s32 %s15, 2
        // Predicated region
        $region53: #{pre_up_block.5} parent=51 // pred_check
          %p6839 = pneg %p175
        $region54: #{pre_up_block.5} parent=51 // pred_check_branch
          %6841 = sbr.rel (%p6839) target = $region56
        $region55: #{pre_up_block.5} parent=51 // pred_region
          %s6842 = sand.u32 %s160, 1
          %s6843 = scalar_lea.sflag [#allocation3], %s6842
          %s6844 = sand.u32 %s160, 1
          %s6845 = smul.addr %s6844, 256
          %s6846 = scalar_lea.vmem [#allocation2], %s6845
          %6847 = dma.done %s6843, 4096
        $region56: #{pre_up_block.5} parent=51 // pred_fallthru
          _
      $region52: #{pre_up_block.5} parent=5 // pred_fallthru
        _
    $region6: #{pre_up_block.5} parent=1 // loop_footer
      %s19 = sadd.s32 1, %s15
    $region7: #{pre_up_block.5} parent=1 // loop_footer_branch
      %14 = sbr.rel target = $region3
    $region8: #{pre_up_block.5} parent=1 // loop_exit
      _
    %6848 = vsyncpa [#allocation3], 1
    %s6849 = scalar_lea.sflag [#allocation3], 1
    %6850 = vsyncpa %s6849, 1

</llo_original>
